<compile_context>
chip_gen: v5e
topology: v5e:2x2
jax: 0.10.0
libtpu: 0.0.40
codegen_flags: <defaults>
</compile_context>

<pallas_src>
import functools

import jax
import jax.numpy as jnp
import numpy as np
from jax.experimental import pallas as pl
from jax.experimental.pallas import tpu as pltpu

BN_EPS = 1e-5
VMEM_LIMIT = 32 * 1024 * 1024  # explicit scoped-VMEM cap; safe on v5e/v6e/v7x
MAX_TILE_N = 2048              # keeps the (tile_n, 1024) f32 conv3 tile at ~8 MiB


def _round_up(x, m):
    return (x + m - 1) // m * m


def _cdiv(a, b):
    return (a + b - 1) // b


# --------------------------------------------------------------------------
# Kernel 1: fused per-point MLP (+optional bmm with trans) + max over points
# --------------------------------------------------------------------------
def _point_mlp_max_kernel(*refs, has_trans, last_relu):
    if has_trans:
        (x_ref, t_ref, w1_ref, b1_ref, w2_ref, b2_ref,
         w3_ref, b3_ref, o_ref) = refs
    else:
        (x_ref, w1_ref, b1_ref, w2_ref, b2_ref,
         w3_ref, b3_ref, o_ref) = refs
        t_ref = None

    n = pl.program_id(1)
    n_last = pl.num_programs(1) - 1

    # init the resident (1,1,1024) max accumulator at the first point tile
    @pl.when(n == 0)
    def _():
        o_ref[...] = jnp.full(o_ref.shape, -jnp.inf, dtype=o_ref.dtype)

    x = x_ref[0].astype(jnp.float32)               # (tile_n, 3)

    if has_trans:
        # torch.bmm(x^T, trans): K=3 contraction done as 3 VPU FMAs (MXU stays clean)
        t = t_ref[0]                               # (3, 3) f32
        x = (x[:, 0:1] * t[0:1, :] + x[:, 1:2] * t[1:2, :]
             + x[:, 2:3] * t[2:3, :])              # (tile_n, 3)

    # conv1 (Cin=3): 3 broadcast FMAs on the VPU instead of a K=3 matmul
    w1 = w1_ref[...]                               # (3, 64) f32
    h = (x[:, 0:1] * w1[0:1, :] + x[:, 1:2] * w1[1:2, :]
         + x[:, 2:3] * w1[2:3, :])
    h = jnp.maximum(h + b1_ref[...], 0.0)          # BN1 fold + ReLU

    # conv2: 64 -> 128 (bf16 MXU, f32 acc)
    h = jnp.maximum(
        jnp.dot(h.astype(jnp.bfloat16), w2_ref[...],
                preferred_element_type=jnp.float32) + b2_ref[...], 0.0)

    # conv3: 128 -> 1024, RAW matmul only.  Bias (and ReLU on the STN path)
    # commute with max-over-points and are applied once in the last-tile
    # epilogue below -- saves two VPU passes over (tile_n, 1024) per tile.
    h = jnp.dot(h.astype(jnp.bfloat16), w3_ref[...],
                preferred_element_type=jnp.float32)

    # single max pass over the conv3 output (padded rows duplicate a real
    # point, so no masking is needed)
    tile_max = jnp.max(h, axis=0, keepdims=True)   # (1, 1024)
    o_ref[...] = jnp.maximum(o_ref[...], tile_max.reshape(o_ref.shape))

    # last-tile epilogue: fold BN3 bias (and STN-path ReLU) into the global max
    @pl.when(n == n_last)
    def _():
        v = o_ref[...] + b3_ref[...].reshape((1,) + b3_ref.shape)
        if last_relu:
            v = jnp.maximum(v, 0.0)
        o_ref[...] = v


def point_mlp_max(x_bnc, l1, l2, l3, *, trans=None, last_relu):
    """Fused per-point MLP + max-over-points.  x_bnc: (B, N, 3) f32 -> (B, 1024) f32."""
    orig_B, N, C = x_bnc.shape
    B = orig_B

    # v7x megacore: with B == 1 the batch ("parallel") axis cannot shard across
    # the two TensorCores, so pre-split the point reduction into 2 groups.
    # (Harmless on single-TC v5e/v6e: one extra jnp.maximum over (1, 1024).)
    split = 2 if (B == 1 and N >= 1024) else 1
    if split > 1:
        n_half = _round_up(_cdiv(N, split), 8)
        pad = n_half * split - N
        if pad:
            x_bnc = jnp.pad(x_bnc, ((0, 0), (0, pad), (0, 0)), mode='edge')
        x_bnc = x_bnc.reshape(B * split, n_half, C)
        if trans is not None:
            trans = jnp.repeat(trans, split, axis=0)
        B, N = B * split, n_half

    # Big point tiles: per-grid-step overhead (~0.35 us) rivals the per-tile MXU
    # time at small tiles; MAX_TILE_N=2048 keeps the conv3 f32 intermediate ~8 MiB.
    n_tiles = max(1, _cdiv(N, MAX_TILE_N))
    tile_n = _round_up(_cdiv(N, n_tiles), 8)
    n_pad = tile_n * n_tiles
    if n_pad != N:
        # edge-pad with a duplicated real point: max-neutral, no in-kernel mask
        x_bnc = jnp.pad(x_bnc, ((0, 0), (0, n_pad - N), (0, 0)), mode='edge')
    has_trans = trans is not None

    kernel = functools.partial(_point_mlp_max_kernel,
                               has_trans=has_trans, last_relu=last_relu)

    def const_spec(shape):
        nd = len(shape)
        return pl.BlockSpec(shape, lambda b, n, _nd=nd: (0,) * _nd)

    in_specs = [pl.BlockSpec((1, tile_n, C), lambda b, n: (b, n, 0))]
    operands = [x_bnc]
    if has_trans:
        in_specs.append(pl.BlockSpec((1, 3, 3), lambda b, n: (b, 0, 0)))
        operands.append(trans)
    for arr in (l1[0], l1[1], l2[0], l2[1], l3[0], l3[1]):
        in_specs.append(const_spec(arr.shape))
        operands.append(arr)

    c1, c2, c3 = l1[0].shape[1], l2[0].shape[1], l3[0].shape[1]
    flops = 2 * B * n_pad * (C * c1 + c1 * c2 + c2 * c3)
    if has_trans:
        flops += 2 * B * n_pad * C * C
    bytes_accessed = int(
        x_bnc.size * x_bnc.dtype.itemsize
        + B * c3 * 4
        + sum(int(np.prod(a.shape)) * a.dtype.itemsize for a in operands[1:]))

    out = pl.pallas_call(
        kernel,
        out_shape=jax.ShapeDtypeStruct((B, 1, c3), jnp.float32),
        grid=(B, n_tiles),
        in_specs=in_specs,
        out_specs=pl.BlockSpec((1, 1, c3), lambda b, n: (b, 0, 0)),
        compiler_params=pltpu.CompilerParams(
            dimension_semantics=("parallel", "arbitrary"),
            vmem_limit_bytes=VMEM_LIMIT),
        cost_estimate=pl.CostEstimate(
            flops=int(flops), transcendentals=0, bytes_accessed=bytes_accessed),
    )(*operands)

    out = out.reshape(B, c3)
    if split > 1:
        out = out.reshape(orig_B, split, c3).max(axis=1)
    return out


# --------------------------------------------------------------------------
# Kernel 2: fused FC stack (1024->512->256->K), optional log_softmax epilogue
# --------------------------------------------------------------------------
def _fc_stack_kernel(g_ref, w1_ref, b1_ref, w2_ref, b2_ref, w3_ref, b3_ref, o_ref,
                     *, log_softmax):
    h = g_ref[...]                                 # (B, 1024) f32
    h = jnp.maximum(
        jnp.dot(h.astype(jnp.bfloat16), w1_ref[...],
                preferred_element_type=jnp.float32) + b1_ref[...], 0.0)
    # TODO(synk): Dropout(p=0.3) on the cls path is identity in eval mode.
    h = jnp.maximum(
        jnp.dot(h.astype(jnp.bfloat16), w2_ref[...],
                preferred_element_type=jnp.float32) + b2_ref[...], 0.0)
    # keep the whole stack on the bf16 MXU path with f32 accumulation
    logits = (jnp.dot(h.astype(jnp.bfloat16), w3_ref[...],
                      preferred_element_type=jnp.float32) + b3_ref[...])
    if log_softmax:
        m = jnp.max(logits, axis=-1, keepdims=True)
        lse = m + jnp.log(jnp.sum(jnp.exp(logits - m), axis=-1, keepdims=True))
        logits = logits - lse
    o_ref[...] = logits


def _full_spec(shape):
    nd = len(shape)
    return pl.BlockSpec(shape, lambda i, _nd=nd: (0,) * _nd)


def fc_stack(g, l1, l2, l3, *, log_softmax):
    B = g.shape[0]
    K = l3[0].shape[1]
    return pl.pallas_call(
        functools.partial(_fc_stack_kernel, log_softmax=log_softmax),
        out_shape=jax.ShapeDtypeStruct((B, K), jnp.float32),
        grid=(1,),
        in_specs=[_full_spec(g.shape),
                  _full_spec(l1[0].shape), _full_spec(l1[1].shape),
                  _full_spec(l2[0].shape), _full_spec(l2[1].shape),
                  _full_spec(l3[0].shape), _full_spec(l3[1].shape)],
        out_specs=_full_spec((B, K)),
        compiler_params=pltpu.CompilerParams(
            dimension_semantics=("arbitrary",),
            vmem_limit_bytes=VMEM_LIMIT),
    )(g, l1[0], l1[1], l2[0], l2[1], l3[0], l3[1])


# --------------------------------------------------------------------------
# Deterministic parameter construction (BN folded, bf16 weights on MXU path)
# --------------------------------------------------------------------------
def _layer(key, cin, cout, bn, w_dtype=jnp.bfloat16):
    k1, k2 = jax.random.split(key)
    w = jax.random.normal(k1, (cin, cout), jnp.float32) * (1.0 / np.sqrt(cin))
    b = jax.random.normal(k2, (1, cout), jnp.float32) * 0.05
    if bn:
        # eval-mode BN, default running stats: y = (Wx + b) / sqrt(1 + eps)
        s = 1.0 / np.sqrt(1.0 + BN_EPS)
        w = w * s
        b = b * s
    return w.astype(w_dtype), b


def init_params(key, k_classes=2):
    keys = jax.random.split(key, 12)
    p = {}
    # STN3d
    p['stn_c1'] = _layer(keys[0], 3, 64, bn=True, w_dtype=jnp.float32)
    p['stn_c2'] = _layer(keys[1], 64, 128, bn=True)
    p['stn_c3'] = _layer(keys[2], 128, 1024, bn=True)
    p['stn_f1'] = _layer(keys[3], 1024, 512, bn=True)
    p['stn_f2'] = _layer(keys[4], 512, 256, bn=True)
    w, b = _layer(keys[5], 256, 9, bn=False)        # bf16 weight, f32 bias
    # fold the constant identity added after fc3 into its bias (kept in f32)
    p['stn_f3'] = (w, b + jnp.eye(3, dtype=jnp.float32).reshape(1, 9))
    # PointNetfeat
    p['feat_c1'] = _layer(keys[6], 3, 64, bn=True, w_dtype=jnp.float32)
    p['feat_c2'] = _layer(keys[7], 64, 128, bn=True)
    p['feat_c3'] = _layer(keys[8], 128, 1024, bn=True)
    # PointNetCls head
    p['cls_f1'] = _layer(keys[9], 1024, 512, bn=True)
    p['cls_f2'] = _layer(keys[10], 512, 256, bn=True)
    p['cls_f3'] = _layer(keys[11], 256, k_classes, bn=False)
    return p


# --------------------------------------------------------------------------
# Forward pass
# --------------------------------------------------------------------------
def pointnet_cls_forward(x, p):
    # x: (B, 3, N) float32 (PyTorch NCW layout)
    B, _, N = x.shape
    x_bnc = jnp.transpose(x, (0, 2, 1)).astype(jnp.float32)     # (B, N, 3)

    # ---- STN3d: fused per-point MLP + max, then fused FC stack (+identity) ----
    g = point_mlp_max(x_bnc, p['stn_c1'], p['stn_c2'], p['stn_c3'],
                      trans=None, last_relu=True)               # (B, 1024)
    trans = fc_stack(g, p['stn_f1'], p['stn_f2'], p['stn_f3'],
                     log_softmax=False).reshape(B, 3, 3)        # (B, 3, 3)

    # ---- PointNetfeat: fused bmm + per-point MLP (last layer BN only) + max ----
    g = point_mlp_max(x_bnc, p['feat_c1'], p['feat_c2'], p['feat_c3'],
                      trans=trans, last_relu=False)             # (B, 1024)

    # ---- classification head: fc1->bn->relu, fc2->(dropout)->bn->relu, fc3, log_softmax
    log_probs = fc_stack(g, p['cls_f1'], p['cls_f2'], p['cls_f3'],
                         log_softmax=True)                      # (B, k)
    return log_probs, trans, None   # trans_feat=None (feature_transform=False)


if __name__ == "__main__":
    key = jax.random.PRNGKey(0)
    k_params, k_x = jax.random.split(key)

    B, N = 2, 16                                  # small batch, 16 points
    params = init_params(k_params, k_classes=2)
    x = jax.random.normal(k_x, (B, 3, N), jnp.float32)

    fwd = jax.jit(pointnet_cls_forward)
    log_probs, trans, trans_feat = fwd(x, params)
    jax.block_until_ready((log_probs, trans))

    assert log_probs.shape == (B, 2)
    assert trans.shape == (B, 3, 3)
    assert trans_feat is None
    # log_softmax sanity: rows sum to 1 in prob space
    assert np.allclose(np.exp(np.asarray(log_probs)).sum(axis=1), 1.0, atol=1e-3)
    print("KERNEL_OK")
</pallas_src>

<mosaic_0001>
module attributes {stable_mosaic.version = 11 : i64} {
  func.func @_point_mlp_max_kernel(%arg0: i32, %arg1: i32, %arg2: memref<1x16x3xf32, #tpu.memory_space<vmem>>, %arg3: memref<3x64xf32, #tpu.memory_space<vmem>>, %arg4: memref<1x64xf32, #tpu.memory_space<vmem>>, %arg5: memref<64x128xbf16, #tpu.memory_space<vmem>>, %arg6: memref<1x128xf32, #tpu.memory_space<vmem>>, %arg7: memref<128x1024xbf16, #tpu.memory_space<vmem>>, %arg8: memref<1x1024xf32, #tpu.memory_space<vmem>>, %arg9: memref<1x1x1024xf32, #tpu.memory_space<vmem>>) attributes {dimension_semantics = [#tpu.dimension_semantics<parallel>, #tpu.dimension_semantics<arbitrary>], iteration_bounds = array<i64: 2, 1>, scalar_prefetch = 0 : i64, scratch_operands = 0 : i64, tpu.core_type = #tpu.core_type<tc>, window_params = [{transform_indices = @transform_0, window_bounds = array<i64: 1, 16, 3>}, {pipeline_mode = #tpu.pipeline_mode<synchronous>, transform_indices = @transform_1, window_bounds = array<i64: 3, 64>}, {pipeline_mode = #tpu.pipeline_mode<synchronous>, transform_indices = @transform_2, window_bounds = array<i64: 1, 64>}, {pipeline_mode = #tpu.pipeline_mode<synchronous>, transform_indices = @transform_3, window_bounds = array<i64: 64, 128>}, {pipeline_mode = #tpu.pipeline_mode<synchronous>, transform_indices = @transform_4, window_bounds = array<i64: 1, 128>}, {pipeline_mode = #tpu.pipeline_mode<synchronous>, transform_indices = @transform_5, window_bounds = array<i64: 128, 1024>}, {pipeline_mode = #tpu.pipeline_mode<synchronous>, transform_indices = @transform_6, window_bounds = array<i64: 1, 1024>}, {transform_indices = @transform_7, window_bounds = array<i64: 1, 1, 1024>}]} {
    %c0_i32 = arith.constant 0 : i32
    %0 = arith.cmpi eq, %arg1, %c0_i32 : i32
    %1 = arith.extui %0 : i1 to i32
    %c0_i32_0 = arith.constant 0 : i32
    %2 = arith.cmpi ne, %1, %c0_i32_0 : i32
    scf.if %2 {
      %cst_25 = arith.constant 0xFF800000 : f32
      %48 = vector.broadcast %cst_25 : f32 to vector<1x1x1024xf32>
      %c0_26 = arith.constant 0 : index
      %c0_27 = arith.constant 0 : index
      %c0_28 = arith.constant 0 : index
      %49 = vector.load %arg9[%c0_26, %c0_27, %c0_28] : memref<1x1x1024xf32, #tpu.memory_space<vmem>>, vector<1x1x1024xf32>
      tpu.vector_store %arg9[%c0_26, %c0_27, %c0_28], %48 {strides = array<i32>} : memref<1x1x1024xf32, #tpu.memory_space<vmem>>, vector<1x1x1024xf32>,
    } else {
    }
    %c0 = arith.constant 0 : index
    %c0_1 = arith.constant 0 : index
    %c0_2 = arith.constant 0 : index
    %3 = vector.load %arg2[%c0, %c0_1, %c0_2] : memref<1x16x3xf32, #tpu.memory_space<vmem>>, vector<1x16x3xf32>
    %4 = vector.shape_cast %3 : vector<1x16x3xf32> to vector<16x3xf32>
    %c0_3 = arith.constant 0 : index
    %c0_4 = arith.constant 0 : index
    %5 = vector.load %arg3[%c0_3, %c0_4] : memref<3x64xf32, #tpu.memory_space<vmem>>, vector<3x64xf32>
    %6 = vector.extract_strided_slice %4 {offsets = [0, 0], sizes = [16, 1], strides = [1, 1]} : vector<16x3xf32> to vector<16x1xf32>
    %7 = vector.extract_strided_slice %5 {offsets = [0, 0], sizes = [1, 64], strides = [1, 1]} : vector<3x64xf32> to vector<1x64xf32>
    %8 = vector.broadcast %6 : vector<16x1xf32> to vector<16x64xf32>
    %9 = vector.broadcast %7 : vector<1x64xf32> to vector<16x64xf32>
    %10 = arith.mulf %8, %9 : vector<16x64xf32>
    %11 = vector.extract_strided_slice %4 {offsets = [0, 1], sizes = [16, 1], strides = [1, 1]} : vector<16x3xf32> to vector<16x1xf32>
    %12 = vector.extract_strided_slice %5 {offsets = [1, 0], sizes = [1, 64], strides = [1, 1]} : vector<3x64xf32> to vector<1x64xf32>
    %13 = vector.broadcast %11 : vector<16x1xf32> to vector<16x64xf32>
    %14 = vector.broadcast %12 : vector<1x64xf32> to vector<16x64xf32>
    %15 = arith.mulf %13, %14 : vector<16x64xf32>
    %16 = arith.addf %10, %15 : vector<16x64xf32>
    %17 = vector.extract_strided_slice %4 {offsets = [0, 2], sizes = [16, 1], strides = [1, 1]} : vector<16x3xf32> to vector<16x1xf32>
    %18 = vector.extract_strided_slice %5 {offsets = [2, 0], sizes = [1, 64], strides = [1, 1]} : vector<3x64xf32> to vector<1x64xf32>
    %19 = vector.broadcast %17 : vector<16x1xf32> to vector<16x64xf32>
    %20 = vector.broadcast %18 : vector<1x64xf32> to vector<16x64xf32>
    %21 = arith.mulf %19, %20 : vector<16x64xf32>
    %22 = arith.addf %16, %21 : vector<16x64xf32>
    %c0_5 = arith.constant 0 : index
    %c0_6 = arith.constant 0 : index
    %23 = vector.load %arg4[%c0_5, %c0_6] : memref<1x64xf32, #tpu.memory_space<vmem>>, vector<1x64xf32>
    %24 = vector.broadcast %23 : vector<1x64xf32> to vector<16x64xf32>
    %25 = arith.addf %22, %24 : vector<16x64xf32>
    %cst = arith.constant 0.000000e+00 : f32
    %26 = vector.broadcast %cst : f32 to vector<16x64xf32>
    %27 = arith.maximumf %25, %26 : vector<16x64xf32>
    %28 = arith.truncf %27 : vector<16x64xf32> to vector<16x64xbf16>
    %c0_7 = arith.constant 0 : index
    %c0_8 = arith.constant 0 : index
    %29 = vector.load %arg5[%c0_7, %c0_8] : memref<64x128xbf16, #tpu.memory_space<vmem>>, vector<64x128xbf16>
    %cst_9 = arith.constant dense<0.000000e+00> : vector<16x128xf32>
    %30 = tpu.matmul %28, %29, %cst_9 {dimension_numbers = #tpu.dot_dimension_numbers<[1], [0], [0], [1], [0, 0, 1, 1], [], []>} : vector<16x64xbf16>, vector<64x128xbf16>, vector<16x128xf32> -> vector<16x128xf32>
    %c0_10 = arith.constant 0 : index
    %c0_11 = arith.constant 0 : index
    %31 = vector.load %arg6[%c0_10, %c0_11] : memref<1x128xf32, #tpu.memory_space<vmem>>, vector<1x128xf32>
    %32 = vector.broadcast %31 : vector<1x128xf32> to vector<16x128xf32>
    %33 = arith.addf %30, %32 : vector<16x128xf32>
    %cst_12 = arith.constant 0.000000e+00 : f32
    %34 = vector.broadcast %cst_12 : f32 to vector<16x128xf32>
    %35 = arith.maximumf %33, %34 : vector<16x128xf32>
    %36 = arith.truncf %35 : vector<16x128xf32> to vector<16x128xbf16>
    %c0_13 = arith.constant 0 : index
    %c0_14 = arith.constant 0 : index
    %37 = vector.load %arg7[%c0_13, %c0_14] : memref<128x1024xbf16, #tpu.memory_space<vmem>>, vector<128x1024xbf16>
    %cst_15 = arith.constant dense<0.000000e+00> : vector<16x1024xf32>
    %38 = tpu.matmul %36, %37, %cst_15 {dimension_numbers = #tpu.dot_dimension_numbers<[1], [0], [0], [1], [0, 0, 1, 1], [], []>} : vector<16x128xbf16>, vector<128x1024xbf16>, vector<16x1024xf32> -> vector<16x1024xf32>
    %cst_16 = arith.constant dense<0xFF800000> : vector<1024xf32>
    %39 = vector.multi_reduction <maximumf>, %38, %cst_16 [0] : vector<16x1024xf32> to vector<1024xf32>
    %40 = vector.shape_cast %39 : vector<1024xf32> to vector<1x1024xf32>
    %c0_17 = arith.constant 0 : index
    %c0_18 = arith.constant 0 : index
    %c0_19 = arith.constant 0 : index
    %41 = vector.load %arg9[%c0_17, %c0_18, %c0_19] : memref<1x1x1024xf32, #tpu.memory_space<vmem>>, vector<1x1x1024xf32>
    %42 = vector.shape_cast %40 : vector<1x1024xf32> to vector<1x1x1024xf32>
    %43 = arith.maximumf %41, %42 : vector<1x1x1024xf32>
    %c0_20 = arith.constant 0 : index
    %c0_21 = arith.constant 0 : index
    %c0_22 = arith.constant 0 : index
    %44 = vector.load %arg9[%c0_20, %c0_21, %c0_22] : memref<1x1x1024xf32, #tpu.memory_space<vmem>>, vector<1x1x1024xf32>
    tpu.vector_store %arg9[%c0_20, %c0_21, %c0_22], %43 {strides = array<i32>} : memref<1x1x1024xf32, #tpu.memory_space<vmem>>, vector<1x1x1024xf32>,
    %c0_i32_23 = arith.constant 0 : i32
    %45 = arith.cmpi eq, %arg1, %c0_i32_23 : i32
    %46 = arith.extui %45 : i1 to i32
    %c0_i32_24 = arith.constant 0 : i32
    %47 = arith.cmpi ne, %46, %c0_i32_24 : i32
    scf.if %47 {
      %c0_25 = arith.constant 0 : index
      %c0_26 = arith.constant 0 : index
      %c0_27 = arith.constant 0 : index
      %48 = vector.load %arg9[%c0_25, %c0_26, %c0_27] : memref<1x1x1024xf32, #tpu.memory_space<vmem>>, vector<1x1x1024xf32>
      %c0_28 = arith.constant 0 : index
      %c0_29 = arith.constant 0 : index
      %49 = vector.load %arg8[%c0_28, %c0_29] : memref<1x1024xf32, #tpu.memory_space<vmem>>, vector<1x1024xf32>
      %50 = vector.shape_cast %49 : vector<1x1024xf32> to vector<1x1x1024xf32>
      %51 = arith.addf %48, %50 : vector<1x1x1024xf32>
      %cst_30 = arith.constant 0.000000e+00 : f32
      %52 = vector.broadcast %cst_30 : f32 to vector<1x1x1024xf32>
      %53 = arith.maximumf %51, %52 : vector<1x1x1024xf32>
      %c0_31 = arith.constant 0 : index
      %c0_32 = arith.constant 0 : index
      %c0_33 = arith.constant 0 : index
      %54 = vector.load %arg9[%c0_31, %c0_32, %c0_33] : memref<1x1x1024xf32, #tpu.memory_space<vmem>>, vector<1x1x1024xf32>
      tpu.vector_store %arg9[%c0_31, %c0_32, %c0_33], %53 {strides = array<i32>} : memref<1x1x1024xf32, #tpu.memory_space<vmem>>, vector<1x1x1024xf32>,
    } else {
    }
    return
  }
  func.func @transform_0(%arg0: i32, %arg1: i32) -> (i32, i32, i32) {
    %c0_i32 = arith.constant 0 : i32
    %c0_i32_0 = arith.constant 0 : i32
    return %arg0, %arg1, %c0_i32 : i32, i32, i32
  }
  func.func @transform_1(%arg0: i32, %arg1: i32) -> (i32, i32) {
    %c0_i32 = arith.constant 0 : i32
    %c0_i32_0 = arith.constant 0 : i32
    %c0_i32_1 = arith.constant 0 : i32
    return %c0_i32, %c0_i32_0 : i32, i32
  }
  func.func @transform_2(%arg0: i32, %arg1: i32) -> (i32, i32) {
    %c0_i32 = arith.constant 0 : i32
    %c0_i32_0 = arith.constant 0 : i32
    %c0_i32_1 = arith.constant 0 : i32
    return %c0_i32, %c0_i32_0 : i32, i32
  }
  func.func @transform_3(%arg0: i32, %arg1: i32) -> (i32, i32) {
    %c0_i32 = arith.constant 0 : i32
    %c0_i32_0 = arith.constant 0 : i32
    %c0_i32_1 = arith.constant 0 : i32
    return %c0_i32, %c0_i32_0 : i32, i32
  }
  func.func @transform_4(%arg0: i32, %arg1: i32) -> (i32, i32) {
    %c0_i32 = arith.constant 0 : i32
    %c0_i32_0 = arith.constant 0 : i32
    %c0_i32_1 = arith.constant 0 : i32
    return %c0_i32, %c0_i32_0 : i32, i32
  }
  func.func @transform_5(%arg0: i32, %arg1: i32) -> (i32, i32) {
    %c0_i32 = arith.constant 0 : i32
    %c0_i32_0 = arith.constant 0 : i32
    %c0_i32_1 = arith.constant 0 : i32
    return %c0_i32, %c0_i32_0 : i32, i32
  }
  func.func @transform_6(%arg0: i32, %arg1: i32) -> (i32, i32) {
    %c0_i32 = arith.constant 0 : i32
    %c0_i32_0 = arith.constant 0 : i32
    %c0_i32_1 = arith.constant 0 : i32
    return %c0_i32, %c0_i32_0 : i32, i32
  }
  func.func @transform_7(%arg0: i32, %arg1: i32) -> (i32, i32, i32) {
    %c0_i32 = arith.constant 0 : i32
    %c0_i32_0 = arith.constant 0 : i32
    %c0_i32_1 = arith.constant 0 : i32
    return %arg0, %c0_i32, %c0_i32_0 : i32, i32, i32
  }
}

module attributes {stable_mosaic.version = 11 : i64} {
  func.func @_fc_stack_kernel(%arg0: i32, %arg1: memref<2x1024xf32, #tpu.memory_space<vmem>>, %arg2: memref<1024x512xbf16, #tpu.memory_space<vmem>>, %arg3: memref<1x512xf32, #tpu.memory_space<vmem>>, %arg4: memref<512x256xbf16, #tpu.memory_space<vmem>>, %arg5: memref<1x256xf32, #tpu.memory_space<vmem>>, %arg6: memref<256x9xbf16, #tpu.memory_space<vmem>>, %arg7: memref<1x9xf32, #tpu.memory_space<vmem>>, %arg8: memref<2x9xf32, #tpu.memory_space<vmem>>) attributes {dimension_semantics = [#tpu.dimension_semantics<arbitrary>], iteration_bounds = array<i64: 1>, scalar_prefetch = 0 : i64, scratch_operands = 0 : i64, tpu.core_type = #tpu.core_type<tc>, window_params = [{pipeline_mode = #tpu.pipeline_mode<synchronous>, transform_indices = @transform_0, window_bounds = array<i64: 2, 1024>}, {pipeline_mode = #tpu.pipeline_mode<synchronous>, transform_indices = @transform_1, window_bounds = array<i64: 1024, 512>}, {pipeline_mode = #tpu.pipeline_mode<synchronous>, transform_indices = @transform_2, window_bounds = array<i64: 1, 512>}, {pipeline_mode = #tpu.pipeline_mode<synchronous>, transform_indices = @transform_3, window_bounds = array<i64: 512, 256>}, {pipeline_mode = #tpu.pipeline_mode<synchronous>, transform_indices = @transform_4, window_bounds = array<i64: 1, 256>}, {pipeline_mode = #tpu.pipeline_mode<synchronous>, transform_indices = @transform_5, window_bounds = array<i64: 256, 9>}, {pipeline_mode = #tpu.pipeline_mode<synchronous>, transform_indices = @transform_6, window_bounds = array<i64: 1, 9>}, {pipeline_mode = #tpu.pipeline_mode<synchronous>, transform_indices = @transform_7, window_bounds = array<i64: 2, 9>}]} {
    %c0 = arith.constant 0 : index
    %c0_0 = arith.constant 0 : index
    %0 = vector.load %arg1[%c0, %c0_0] : memref<2x1024xf32, #tpu.memory_space<vmem>>, vector<2x1024xf32>
    %1 = arith.truncf %0 : vector<2x1024xf32> to vector<2x1024xbf16>
    %c0_1 = arith.constant 0 : index
    %c0_2 = arith.constant 0 : index
    %2 = vector.load %arg2[%c0_1, %c0_2] : memref<1024x512xbf16, #tpu.memory_space<vmem>>, vector<1024x512xbf16>
    %cst = arith.constant dense<0.000000e+00> : vector<2x512xf32>
    %3 = tpu.matmul %1, %2, %cst {dimension_numbers = #tpu.dot_dimension_numbers<[1], [0], [0], [1], [0, 0, 1, 1], [], []>} : vector<2x1024xbf16>, vector<1024x512xbf16>, vector<2x512xf32> -> vector<2x512xf32>
    %c0_3 = arith.constant 0 : index
    %c0_4 = arith.constant 0 : index
    %4 = vector.load %arg3[%c0_3, %c0_4] : memref<1x512xf32, #tpu.memory_space<vmem>>, vector<1x512xf32>
    %5 = vector.broadcast %4 : vector<1x512xf32> to vector<2x512xf32>
    %6 = arith.addf %3, %5 : vector<2x512xf32>
    %cst_5 = arith.constant 0.000000e+00 : f32
    %7 = vector.broadcast %cst_5 : f32 to vector<2x512xf32>
    %8 = arith.maximumf %6, %7 : vector<2x512xf32>
    %9 = arith.truncf %8 : vector<2x512xf32> to vector<2x512xbf16>
    %c0_6 = arith.constant 0 : index
    %c0_7 = arith.constant 0 : index
    %10 = vector.load %arg4[%c0_6, %c0_7] : memref<512x256xbf16, #tpu.memory_space<vmem>>, vector<512x256xbf16>
    %cst_8 = arith.constant dense<0.000000e+00> : vector<2x256xf32>
    %11 = tpu.matmul %9, %10, %cst_8 {dimension_numbers = #tpu.dot_dimension_numbers<[1], [0], [0], [1], [0, 0, 1, 1], [], []>} : vector<2x512xbf16>, vector<512x256xbf16>, vector<2x256xf32> -> vector<2x256xf32>
    %c0_9 = arith.constant 0 : index
    %c0_10 = arith.constant 0 : index
    %12 = vector.load %arg5[%c0_9, %c0_10] : memref<1x256xf32, #tpu.memory_space<vmem>>, vector<1x256xf32>
    %13 = vector.broadcast %12 : vector<1x256xf32> to vector<2x256xf32>
    %14 = arith.addf %11, %13 : vector<2x256xf32>
    %cst_11 = arith.constant 0.000000e+00 : f32
    %15 = vector.broadcast %cst_11 : f32 to vector<2x256xf32>
    %16 = arith.maximumf %14, %15 : vector<2x256xf32>
    %17 = arith.truncf %16 : vector<2x256xf32> to vector<2x256xbf16>
    %c0_12 = arith.constant 0 : index
    %c0_13 = arith.constant 0 : index
    %18 = vector.load %arg6[%c0_12, %c0_13] : memref<256x9xbf16, #tpu.memory_space<vmem>>, vector<256x9xbf16>
    %cst_14 = arith.constant dense<0.000000e+00> : vector<2x9xf32>
    %19 = tpu.matmul %17, %18, %cst_14 {dimension_numbers = #tpu.dot_dimension_numbers<[1], [0], [0], [1], [0, 0, 1, 1], [], []>} : vector<2x256xbf16>, vector<256x9xbf16>, vector<2x9xf32> -> vector<2x9xf32>
    %c0_15 = arith.constant 0 : index
    %c0_16 = arith.constant 0 : index
    %20 = vector.load %arg7[%c0_15, %c0_16] : memref<1x9xf32, #tpu.memory_space<vmem>>, vector<1x9xf32>
    %21 = vector.broadcast %20 : vector<1x9xf32> to vector<2x9xf32>
    %22 = arith.addf %19, %21 : vector<2x9xf32>
    %c0_17 = arith.constant 0 : index
    %c0_18 = arith.constant 0 : index
    %23 = vector.load %arg8[%c0_17, %c0_18] : memref<2x9xf32, #tpu.memory_space<vmem>>, vector<2x9xf32>
    tpu.vector_store %arg8[%c0_17, %c0_18], %22 {strides = array<i32>} : memref<2x9xf32, #tpu.memory_space<vmem>>, vector<2x9xf32>,
    return
  }
  func.func @transform_0(%arg0: i32) -> (i32, i32) {
    %c0_i32 = arith.constant 0 : i32
    %c0_i32_0 = arith.constant 0 : i32
    %c0_i32_1 = arith.constant 0 : i32
    return %c0_i32, %c0_i32_0 : i32, i32
  }
  func.func @transform_1(%arg0: i32) -> (i32, i32) {
    %c0_i32 = arith.constant 0 : i32
    %c0_i32_0 = arith.constant 0 : i32
    %c0_i32_1 = arith.constant 0 : i32
    return %c0_i32, %c0_i32_0 : i32, i32
  }
  func.func @transform_2(%arg0: i32) -> (i32, i32) {
    %c0_i32 = arith.constant 0 : i32
    %c0_i32_0 = arith.constant 0 : i32
    %c0_i32_1 = arith.constant 0 : i32
    return %c0_i32, %c0_i32_0 : i32, i32
  }
  func.func @transform_3(%arg0: i32) -> (i32, i32) {
    %c0_i32 = arith.constant 0 : i32
    %c0_i32_0 = arith.constant 0 : i32
    %c0_i32_1 = arith.constant 0 : i32
    return %c0_i32, %c0_i32_0 : i32, i32
  }
  func.func @transform_4(%arg0: i32) -> (i32, i32) {
    %c0_i32 = arith.constant 0 : i32
    %c0_i32_0 = arith.constant 0 : i32
    %c0_i32_1 = arith.constant 0 : i32
    return %c0_i32, %c0_i32_0 : i32, i32
  }
  func.func @transform_5(%arg0: i32) -> (i32, i32) {
    %c0_i32 = arith.constant 0 : i32
    %c0_i32_0 = arith.constant 0 : i32
    %c0_i32_1 = arith.constant 0 : i32
    return %c0_i32, %c0_i32_0 : i32, i32
  }
  func.func @transform_6(%arg0: i32) -> (i32, i32) {
    %c0_i32 = arith.constant 0 : i32
    %c0_i32_0 = arith.constant 0 : i32
    %c0_i32_1 = arith.constant 0 : i32
    return %c0_i32, %c0_i32_0 : i32, i32
  }
  func.func @transform_7(%arg0: i32) -> (i32, i32) {
    %c0_i32 = arith.constant 0 : i32
    %c0_i32_0 = arith.constant 0 : i32
    %c0_i32_1 = arith.constant 0 : i32
    return %c0_i32, %c0_i32_0 : i32, i32
  }
}

module attributes {stable_mosaic.version = 11 : i64} {
  func.func @_point_mlp_max_kernel(%arg0: i32, %arg1: i32, %arg2: memref<1x16x3xf32, #tpu.memory_space<vmem>>, %arg3: memref<1x3x3xf32, #tpu.memory_space<vmem>>, %arg4: memref<3x64xf32, #tpu.memory_space<vmem>>, %arg5: memref<1x64xf32, #tpu.memory_space<vmem>>, %arg6: memref<64x128xbf16, #tpu.memory_space<vmem>>, %arg7: memref<1x128xf32, #tpu.memory_space<vmem>>, %arg8: memref<128x1024xbf16, #tpu.memory_space<vmem>>, %arg9: memref<1x1024xf32, #tpu.memory_space<vmem>>, %arg10: memref<1x1x1024xf32, #tpu.memory_space<vmem>>) attributes {dimension_semantics = [#tpu.dimension_semantics<parallel>, #tpu.dimension_semantics<arbitrary>], iteration_bounds = array<i64: 2, 1>, scalar_prefetch = 0 : i64, scratch_operands = 0 : i64, tpu.core_type = #tpu.core_type<tc>, window_params = [{transform_indices = @transform_0, window_bounds = array<i64: 1, 16, 3>}, {transform_indices = @transform_1, window_bounds = array<i64: 1, 3, 3>}, {pipeline_mode = #tpu.pipeline_mode<synchronous>, transform_indices = @transform_2, window_bounds = array<i64: 3, 64>}, {pipeline_mode = #tpu.pipeline_mode<synchronous>, transform_indices = @transform_3, window_bounds = array<i64: 1, 64>}, {pipeline_mode = #tpu.pipeline_mode<synchronous>, transform_indices = @transform_4, window_bounds = array<i64: 64, 128>}, {pipeline_mode = #tpu.pipeline_mode<synchronous>, transform_indices = @transform_5, window_bounds = array<i64: 1, 128>}, {pipeline_mode = #tpu.pipeline_mode<synchronous>, transform_indices = @transform_6, window_bounds = array<i64: 128, 1024>}, {pipeline_mode = #tpu.pipeline_mode<synchronous>, transform_indices = @transform_7, window_bounds = array<i64: 1, 1024>}, {transform_indices = @transform_8, window_bounds = array<i64: 1, 1, 1024>}]} {
    %c0_i32 = arith.constant 0 : i32
    %0 = arith.cmpi eq, %arg1, %c0_i32 : i32
    %1 = arith.extui %0 : i1 to i32
    %c0_i32_0 = arith.constant 0 : i32
    %2 = arith.cmpi ne, %1, %c0_i32_0 : i32
    scf.if %2 {
      %cst_28 = arith.constant 0xFF800000 : f32
      %67 = vector.broadcast %cst_28 : f32 to vector<1x1x1024xf32>
      %c0_29 = arith.constant 0 : index
      %c0_30 = arith.constant 0 : index
      %c0_31 = arith.constant 0 : index
      %68 = vector.load %arg10[%c0_29, %c0_30, %c0_31] : memref<1x1x1024xf32, #tpu.memory_space<vmem>>, vector<1x1x1024xf32>
      tpu.vector_store %arg10[%c0_29, %c0_30, %c0_31], %67 {strides = array<i32>} : memref<1x1x1024xf32, #tpu.memory_space<vmem>>, vector<1x1x1024xf32>,
    } else {
    }
    %c0 = arith.constant 0 : index
    %c0_1 = arith.constant 0 : index
    %c0_2 = arith.constant 0 : index
    %3 = vector.load %arg2[%c0, %c0_1, %c0_2] : memref<1x16x3xf32, #tpu.memory_space<vmem>>, vector<1x16x3xf32>
    %4 = vector.shape_cast %3 : vector<1x16x3xf32> to vector<16x3xf32>
    %c0_3 = arith.constant 0 : index
    %c0_4 = arith.constant 0 : index
    %c0_5 = arith.constant 0 : index
    %5 = vector.load %arg3[%c0_3, %c0_4, %c0_5] : memref<1x3x3xf32, #tpu.memory_space<vmem>>, vector<1x3x3xf32>
    %6 = vector.shape_cast %5 : vector<1x3x3xf32> to vector<3x3xf32>
    %7 = vector.extract_strided_slice %4 {offsets = [0, 0], sizes = [16, 1], strides = [1, 1]} : vector<16x3xf32> to vector<16x1xf32>
    %8 = vector.extract_strided_slice %6 {offsets = [0, 0], sizes = [1, 3], strides = [1, 1]} : vector<3x3xf32> to vector<1x3xf32>
    %9 = vector.broadcast %7 : vector<16x1xf32> to vector<16x3xf32>
    %10 = vector.broadcast %8 : vector<1x3xf32> to vector<16x3xf32>
    %11 = arith.mulf %9, %10 : vector<16x3xf32>
    %12 = vector.extract_strided_slice %4 {offsets = [0, 1], sizes = [16, 1], strides = [1, 1]} : vector<16x3xf32> to vector<16x1xf32>
    %13 = vector.extract_strided_slice %6 {offsets = [1, 0], sizes = [1, 3], strides = [1, 1]} : vector<3x3xf32> to vector<1x3xf32>
    %14 = vector.broadcast %12 : vector<16x1xf32> to vector<16x3xf32>
    %15 = vector.broadcast %13 : vector<1x3xf32> to vector<16x3xf32>
    %16 = arith.mulf %14, %15 : vector<16x3xf32>
    %17 = arith.addf %11, %16 : vector<16x3xf32>
    %18 = vector.extract_strided_slice %4 {offsets = [0, 2], sizes = [16, 1], strides = [1, 1]} : vector<16x3xf32> to vector<16x1xf32>
    %19 = vector.extract_strided_slice %6 {offsets = [2, 0], sizes = [1, 3], strides = [1, 1]} : vector<3x3xf32> to vector<1x3xf32>
    %20 = vector.broadcast %18 : vector<16x1xf32> to vector<16x3xf32>
    %21 = vector.broadcast %19 : vector<1x3xf32> to vector<16x3xf32>
    %22 = arith.mulf %20, %21 : vector<16x3xf32>
    %23 = arith.addf %17, %22 : vector<16x3xf32>
    %c0_6 = arith.constant 0 : index
    %c0_7 = arith.constant 0 : index
    %24 = vector.load %arg4[%c0_6, %c0_7] : memref<3x64xf32, #tpu.memory_space<vmem>>, vector<3x64xf32>
    %25 = vector.extract_strided_slice %23 {offsets = [0, 0], sizes = [16, 1], strides = [1, 1]} : vector<16x3xf32> to vector<16x1xf32>
    %26 = vector.extract_strided_slice %24 {offsets = [0, 0], sizes = [1, 64], strides = [1, 1]} : vector<3x64xf32> to vector<1x64xf32>
    %27 = vector.broadcast %25 : vector<16x1xf32> to vector<16x64xf32>
    %28 = vector.broadcast %26 : vector<1x64xf32> to vector<16x64xf32>
    %29 = arith.mulf %27, %28 : vector<16x64xf32>
    %30 = vector.extract_strided_slice %23 {offsets = [0, 1], sizes = [16, 1], strides = [1, 1]} : vector<16x3xf32> to vector<16x1xf32>
    %31 = vector.extract_strided_slice %24 {offsets = [1, 0], sizes = [1, 64], strides = [1, 1]} : vector<3x64xf32> to vector<1x64xf32>
    %32 = vector.broadcast %30 : vector<16x1xf32> to vector<16x64xf32>
    %33 = vector.broadcast %31 : vector<1x64xf32> to vector<16x64xf32>
    %34 = arith.mulf %32, %33 : vector<16x64xf32>
    %35 = arith.addf %29, %34 : vector<16x64xf32>
    %36 = vector.extract_strided_slice %23 {offsets = [0, 2], sizes = [16, 1], strides = [1, 1]} : vector<16x3xf32> to vector<16x1xf32>
    %37 = vector.extract_strided_slice %24 {offsets = [2, 0], sizes = [1, 64], strides = [1, 1]} : vector<3x64xf32> to vector<1x64xf32>
    %38 = vector.broadcast %36 : vector<16x1xf32> to vector<16x64xf32>
    %39 = vector.broadcast %37 : vector<1x64xf32> to vector<16x64xf32>
    %40 = arith.mulf %38, %39 : vector<16x64xf32>
    %41 = arith.addf %35, %40 : vector<16x64xf32>
    %c0_8 = arith.constant 0 : index
    %c0_9 = arith.constant 0 : index
    %42 = vector.load %arg5[%c0_8, %c0_9] : memref<1x64xf32, #tpu.memory_space<vmem>>, vector<1x64xf32>
    %43 = vector.broadcast %42 : vector<1x64xf32> to vector<16x64xf32>
    %44 = arith.addf %41, %43 : vector<16x64xf32>
    %cst = arith.constant 0.000000e+00 : f32
    %45 = vector.broadcast %cst : f32 to vector<16x64xf32>
    %46 = arith.maximumf %44, %45 : vector<16x64xf32>
    %47 = arith.truncf %46 : vector<16x64xf32> to vector<16x64xbf16>
    %c0_10 = arith.constant 0 : index
    %c0_11 = arith.constant 0 : index
    %48 = vector.load %arg6[%c0_10, %c0_11] : memref<64x128xbf16, #tpu.memory_space<vmem>>, vector<64x128xbf16>
    %cst_12 = arith.constant dense<0.000000e+00> : vector<16x128xf32>
    %49 = tpu.matmul %47, %48, %cst_12 {dimension_numbers = #tpu.dot_dimension_numbers<[1], [0], [0], [1], [0, 0, 1, 1], [], []>} : vector<16x64xbf16>, vector<64x128xbf16>, vector<16x128xf32> -> vector<16x128xf32>
    %c0_13 = arith.constant 0 : index
    %c0_14 = arith.constant 0 : index
    %50 = vector.load %arg7[%c0_13, %c0_14] : memref<1x128xf32, #tpu.memory_space<vmem>>, vector<1x128xf32>
    %51 = vector.broadcast %50 : vector<1x128xf32> to vector<16x128xf32>
    %52 = arith.addf %49, %51 : vector<16x128xf32>
    %cst_15 = arith.constant 0.000000e+00 : f32
    %53 = vector.broadcast %cst_15 : f32 to vector<16x128xf32>
    %54 = arith.maximumf %52, %53 : vector<16x128xf32>
    %55 = arith.truncf %54 : vector<16x128xf32> to vector<16x128xbf16>
    %c0_16 = arith.constant 0 : index
    %c0_17 = arith.constant 0 : index
    %56 = vector.load %arg8[%c0_16, %c0_17] : memref<128x1024xbf16, #tpu.memory_space<vmem>>, vector<128x1024xbf16>
    %cst_18 = arith.constant dense<0.000000e+00> : vector<16x1024xf32>
    %57 = tpu.matmul %55, %56, %cst_18 {dimension_numbers = #tpu.dot_dimension_numbers<[1], [0], [0], [1], [0, 0, 1, 1], [], []>} : vector<16x128xbf16>, vector<128x1024xbf16>, vector<16x1024xf32> -> vector<16x1024xf32>
    %cst_19 = arith.constant dense<0xFF800000> : vector<1024xf32>
    %58 = vector.multi_reduction <maximumf>, %57, %cst_19 [0] : vector<16x1024xf32> to vector<1024xf32>
    %59 = vector.shape_cast %58 : vector<1024xf32> to vector<1x1024xf32>
    %c0_20 = arith.constant 0 : index
    %c0_21 = arith.constant 0 : index
    %c0_22 = arith.constant 0 : index
    %60 = vector.load %arg10[%c0_20, %c0_21, %c0_22] : memref<1x1x1024xf32, #tpu.memory_space<vmem>>, vector<1x1x1024xf32>
    %61 = vector.shape_cast %59 : vector<1x1024xf32> to vector<1x1x1024xf32>
    %62 = arith.maximumf %60, %61 : vector<1x1x1024xf32>
    %c0_23 = arith.constant 0 : index
    %c0_24 = arith.constant 0 : index
    %c0_25 = arith.constant 0 : index
    %63 = vector.load %arg10[%c0_23, %c0_24, %c0_25] : memref<1x1x1024xf32, #tpu.memory_space<vmem>>, vector<1x1x1024xf32>
    tpu.vector_store %arg10[%c0_23, %c0_24, %c0_25], %62 {strides = array<i32>} : memref<1x1x1024xf32, #tpu.memory_space<vmem>>, vector<1x1x1024xf32>,
    %c0_i32_26 = arith.constant 0 : i32
    %64 = arith.cmpi eq, %arg1, %c0_i32_26 : i32
    %65 = arith.extui %64 : i1 to i32
    %c0_i32_27 = arith.constant 0 : i32
    %66 = arith.cmpi ne, %65, %c0_i32_27 : i32
    scf.if %66 {
      %c0_28 = arith.constant 0 : index
      %c0_29 = arith.constant 0 : index
      %c0_30 = arith.constant 0 : index
      %67 = vector.load %arg10[%c0_28, %c0_29, %c0_30] : memref<1x1x1024xf32, #tpu.memory_space<vmem>>, vector<1x1x1024xf32>
      %c0_31 = arith.constant 0 : index
      %c0_32 = arith.constant 0 : index
      %68 = vector.load %arg9[%c0_31, %c0_32] : memref<1x1024xf32, #tpu.memory_space<vmem>>, vector<1x1024xf32>
      %69 = vector.shape_cast %68 : vector<1x1024xf32> to vector<1x1x1024xf32>
      %70 = arith.addf %67, %69 : vector<1x1x1024xf32>
      %c0_33 = arith.constant 0 : index
      %c0_34 = arith.constant 0 : index
      %c0_35 = arith.constant 0 : index
      %71 = vector.load %arg10[%c0_33, %c0_34, %c0_35] : memref<1x1x1024xf32, #tpu.memory_space<vmem>>, vector<1x1x1024xf32>
      tpu.vector_store %arg10[%c0_33, %c0_34, %c0_35], %70 {strides = array<i32>} : memref<1x1x1024xf32, #tpu.memory_space<vmem>>, vector<1x1x1024xf32>,
    } else {
    }
    return
  }
  func.func @transform_0(%arg0: i32, %arg1: i32) -> (i32, i32, i32) {
    %c0_i32 = arith.constant 0 : i32
    %c0_i32_0 = arith.constant 0 : i32
    return %arg0, %arg1, %c0_i32 : i32, i32, i32
  }
  func.func @transform_1(%arg0: i32, %arg1: i32) -> (i32, i32, i32) {
    %c0_i32 = arith.constant 0 : i32
    %c0_i32_0 = arith.constant 0 : i32
    %c0_i32_1 = arith.constant 0 : i32
    return %arg0, %c0_i32, %c0_i32_0 : i32, i32, i32
  }
  func.func @transform_2(%arg0: i32, %arg1: i32) -> (i32, i32) {
    %c0_i32 = arith.constant 0 : i32
    %c0_i32_0 = arith.constant 0 : i32
    %c0_i32_1 = arith.constant 0 : i32
    return %c0_i32, %c0_i32_0 : i32, i32
  }
  func.func @transform_3(%arg0: i32, %arg1: i32) -> (i32, i32) {
    %c0_i32 = arith.constant 0 : i32
    %c0_i32_0 = arith.constant 0 : i32
    %c0_i32_1 = arith.constant 0 : i32
    return %c0_i32, %c0_i32_0 : i32, i32
  }
  func.func @transform_4(%arg0: i32, %arg1: i32) -> (i32, i32) {
    %c0_i32 = arith.constant 0 : i32
    %c0_i32_0 = arith.constant 0 : i32
    %c0_i32_1 = arith.constant 0 : i32
    return %c0_i32, %c0_i32_0 : i32, i32
  }
  func.func @transform_5(%arg0: i32, %arg1: i32) -> (i32, i32) {
    %c0_i32 = arith.constant 0 : i32
    %c0_i32_0 = arith.constant 0 : i32
    %c0_i32_1 = arith.constant 0 : i32
    return %c0_i32, %c0_i32_0 : i32, i32
  }
  func.func @transform_6(%arg0: i32, %arg1: i32) -> (i32, i32) {
    %c0_i32 = arith.constant 0 : i32
    %c0_i32_0 = arith.constant 0 : i32
    %c0_i32_1 = arith.constant 0 : i32
    return %c0_i32, %c0_i32_0 : i32, i32
  }
  func.func @transform_7(%arg0: i32, %arg1: i32) -> (i32, i32) {
    %c0_i32 = arith.constant 0 : i32
    %c0_i32_0 = arith.constant 0 : i32
    %c0_i32_1 = arith.constant 0 : i32
    return %c0_i32, %c0_i32_0 : i32, i32
  }
  func.func @transform_8(%arg0: i32, %arg1: i32) -> (i32, i32, i32) {
    %c0_i32 = arith.constant 0 : i32
    %c0_i32_0 = arith.constant 0 : i32
    %c0_i32_1 = arith.constant 0 : i32
    return %arg0, %c0_i32, %c0_i32_0 : i32, i32, i32
  }
}

module attributes {stable_mosaic.version = 11 : i64} {
  func.func @_fc_stack_kernel(%arg0: i32, %arg1: memref<2x1024xf32, #tpu.memory_space<vmem>>, %arg2: memref<1024x512xbf16, #tpu.memory_space<vmem>>, %arg3: memref<1x512xf32, #tpu.memory_space<vmem>>, %arg4: memref<512x256xbf16, #tpu.memory_space<vmem>>, %arg5: memref<1x256xf32, #tpu.memory_space<vmem>>, %arg6: memref<256x2xbf16, #tpu.memory_space<vmem>>, %arg7: memref<1x2xf32, #tpu.memory_space<vmem>>, %arg8: memref<2x2xf32, #tpu.memory_space<vmem>>) attributes {dimension_semantics = [#tpu.dimension_semantics<arbitrary>], iteration_bounds = array<i64: 1>, scalar_prefetch = 0 : i64, scratch_operands = 0 : i64, tpu.core_type = #tpu.core_type<tc>, window_params = [{pipeline_mode = #tpu.pipeline_mode<synchronous>, transform_indices = @transform_0, window_bounds = array<i64: 2, 1024>}, {pipeline_mode = #tpu.pipeline_mode<synchronous>, transform_indices = @transform_1, window_bounds = array<i64: 1024, 512>}, {pipeline_mode = #tpu.pipeline_mode<synchronous>, transform_indices = @transform_2, window_bounds = array<i64: 1, 512>}, {pipeline_mode = #tpu.pipeline_mode<synchronous>, transform_indices = @transform_3, window_bounds = array<i64: 512, 256>}, {pipeline_mode = #tpu.pipeline_mode<synchronous>, transform_indices = @transform_4, window_bounds = array<i64: 1, 256>}, {pipeline_mode = #tpu.pipeline_mode<synchronous>, transform_indices = @transform_5, window_bounds = array<i64: 256, 2>}, {pipeline_mode = #tpu.pipeline_mode<synchronous>, transform_indices = @transform_6, window_bounds = array<i64: 1, 2>}, {pipeline_mode = #tpu.pipeline_mode<synchronous>, transform_indices = @transform_7, window_bounds = array<i64: 2, 2>}]} {
    %c0 = arith.constant 0 : index
    %c0_0 = arith.constant 0 : index
    %0 = vector.load %arg1[%c0, %c0_0] : memref<2x1024xf32, #tpu.memory_space<vmem>>, vector<2x1024xf32>
    %1 = arith.truncf %0 : vector<2x1024xf32> to vector<2x1024xbf16>
    %c0_1 = arith.constant 0 : index
    %c0_2 = arith.constant 0 : index
    %2 = vector.load %arg2[%c0_1, %c0_2] : memref<1024x512xbf16, #tpu.memory_space<vmem>>, vector<1024x512xbf16>
    %cst = arith.constant dense<0.000000e+00> : vector<2x512xf32>
    %3 = tpu.matmul %1, %2, %cst {dimension_numbers = #tpu.dot_dimension_numbers<[1], [0], [0], [1], [0, 0, 1, 1], [], []>} : vector<2x1024xbf16>, vector<1024x512xbf16>, vector<2x512xf32> -> vector<2x512xf32>
    %c0_3 = arith.constant 0 : index
    %c0_4 = arith.constant 0 : index
    %4 = vector.load %arg3[%c0_3, %c0_4] : memref<1x512xf32, #tpu.memory_space<vmem>>, vector<1x512xf32>
    %5 = vector.broadcast %4 : vector<1x512xf32> to vector<2x512xf32>
    %6 = arith.addf %3, %5 : vector<2x512xf32>
    %cst_5 = arith.constant 0.000000e+00 : f32
    %7 = vector.broadcast %cst_5 : f32 to vector<2x512xf32>
    %8 = arith.maximumf %6, %7 : vector<2x512xf32>
    %9 = arith.truncf %8 : vector<2x512xf32> to vector<2x512xbf16>
    %c0_6 = arith.constant 0 : index
    %c0_7 = arith.constant 0 : index
    %10 = vector.load %arg4[%c0_6, %c0_7] : memref<512x256xbf16, #tpu.memory_space<vmem>>, vector<512x256xbf16>
    %cst_8 = arith.constant dense<0.000000e+00> : vector<2x256xf32>
    %11 = tpu.matmul %9, %10, %cst_8 {dimension_numbers = #tpu.dot_dimension_numbers<[1], [0], [0], [1], [0, 0, 1, 1], [], []>} : vector<2x512xbf16>, vector<512x256xbf16>, vector<2x256xf32> -> vector<2x256xf32>
    %c0_9 = arith.constant 0 : index
    %c0_10 = arith.constant 0 : index
    %12 = vector.load %arg5[%c0_9, %c0_10] : memref<1x256xf32, #tpu.memory_space<vmem>>, vector<1x256xf32>
    %13 = vector.broadcast %12 : vector<1x256xf32> to vector<2x256xf32>
    %14 = arith.addf %11, %13 : vector<2x256xf32>
    %cst_11 = arith.constant 0.000000e+00 : f32
    %15 = vector.broadcast %cst_11 : f32 to vector<2x256xf32>
    %16 = arith.maximumf %14, %15 : vector<2x256xf32>
    %17 = arith.truncf %16 : vector<2x256xf32> to vector<2x256xbf16>
    %c0_12 = arith.constant 0 : index
    %c0_13 = arith.constant 0 : index
    %18 = vector.load %arg6[%c0_12, %c0_13] : memref<256x2xbf16, #tpu.memory_space<vmem>>, vector<256x2xbf16>
    %cst_14 = arith.constant dense<0.000000e+00> : vector<2x2xf32>
    %19 = tpu.matmul %17, %18, %cst_14 {dimension_numbers = #tpu.dot_dimension_numbers<[1], [0], [0], [1], [0, 0, 1, 1], [], []>} : vector<2x256xbf16>, vector<256x2xbf16>, vector<2x2xf32> -> vector<2x2xf32>
    %c0_15 = arith.constant 0 : index
    %c0_16 = arith.constant 0 : index
    %20 = vector.load %arg7[%c0_15, %c0_16] : memref<1x2xf32, #tpu.memory_space<vmem>>, vector<1x2xf32>
    %21 = vector.broadcast %20 : vector<1x2xf32> to vector<2x2xf32>
    %22 = arith.addf %19, %21 : vector<2x2xf32>
    %cst_17 = arith.constant dense<0xFF800000> : vector<2xf32>
    %23 = vector.multi_reduction <maximumf>, %22, %cst_17 [1] : vector<2x2xf32> to vector<2xf32>
    %24 = vector.shape_cast %23 : vector<2xf32> to vector<2x1xf32>
    %25 = vector.broadcast %24 : vector<2x1xf32> to vector<2x2xf32>
    %26 = arith.subf %22, %25 : vector<2x2xf32>
    %27 = math.exp %26 : vector<2x2xf32>
    %cst_18 = arith.constant dense<0.000000e+00> : vector<2xf32>
    %28 = vector.multi_reduction <add>, %27, %cst_18 [1] : vector<2x2xf32> to vector<2xf32>
    %29 = vector.shape_cast %28 : vector<2xf32> to vector<2x1xf32>
    %30 = math.log %29 : vector<2x1xf32>
    %31 = arith.addf %24, %30 : vector<2x1xf32>
    %32 = vector.broadcast %31 : vector<2x1xf32> to vector<2x2xf32>
    %33 = arith.subf %22, %32 : vector<2x2xf32>
    %c0_19 = arith.constant 0 : index
    %c0_20 = arith.constant 0 : index
    %34 = vector.load %arg8[%c0_19, %c0_20] : memref<2x2xf32, #tpu.memory_space<vmem>>, vector<2x2xf32>
    tpu.vector_store %arg8[%c0_19, %c0_20], %33 {strides = array<i32>} : memref<2x2xf32, #tpu.memory_space<vmem>>, vector<2x2xf32>,
    return
  }
  func.func @transform_0(%arg0: i32) -> (i32, i32) {
    %c0_i32 = arith.constant 0 : i32
    %c0_i32_0 = arith.constant 0 : i32
    %c0_i32_1 = arith.constant 0 : i32
    return %c0_i32, %c0_i32_0 : i32, i32
  }
  func.func @transform_1(%arg0: i32) -> (i32, i32) {
    %c0_i32 = arith.constant 0 : i32
    %c0_i32_0 = arith.constant 0 : i32
    %c0_i32_1 = arith.constant 0 : i32
    return %c0_i32, %c0_i32_0 : i32, i32
  }
  func.func @transform_2(%arg0: i32) -> (i32, i32) {
    %c0_i32 = arith.constant 0 : i32
    %c0_i32_0 = arith.constant 0 : i32
    %c0_i32_1 = arith.constant 0 : i32
    return %c0_i32, %c0_i32_0 : i32, i32
  }
  func.func @transform_3(%arg0: i32) -> (i32, i32) {
    %c0_i32 = arith.constant 0 : i32
    %c0_i32_0 = arith.constant 0 : i32
    %c0_i32_1 = arith.constant 0 : i32
    return %c0_i32, %c0_i32_0 : i32, i32
  }
  func.func @transform_4(%arg0: i32) -> (i32, i32) {
    %c0_i32 = arith.constant 0 : i32
    %c0_i32_0 = arith.constant 0 : i32
    %c0_i32_1 = arith.constant 0 : i32
    return %c0_i32, %c0_i32_0 : i32, i32
  }
  func.func @transform_5(%arg0: i32) -> (i32, i32) {
    %c0_i32 = arith.constant 0 : i32
    %c0_i32_0 = arith.constant 0 : i32
    %c0_i32_1 = arith.constant 0 : i32
    return %c0_i32, %c0_i32_0 : i32, i32
  }
  func.func @transform_6(%arg0: i32) -> (i32, i32) {
    %c0_i32 = arith.constant 0 : i32
    %c0_i32_0 = arith.constant 0 : i32
    %c0_i32_1 = arith.constant 0 : i32
    return %c0_i32, %c0_i32_0 : i32, i32
  }
  func.func @transform_7(%arg0: i32) -> (i32, i32) {
    %c0_i32 = arith.constant 0 : i32
    %c0_i32_0 = arith.constant 0 : i32
    %c0_i32_1 = arith.constant 0 : i32
    return %c0_i32, %c0_i32_0 : i32, i32
  }
}

</mosaic_0001>

<llo_original>
// kernel: pointnet_cls_forward.4
$region0: #{pointnet_cls_forward.4}
  #allocation0 [shape = 'u32[]', space=smem, size = 0x4, offset = 0x4, fixed_abs, tag = 'smem constant byte address 0x4 - core index']
  #allocation1 [shape = 'u32[72,128]{1,0:T(1,128)}', space=vmem, size = 0x9000, scoped, tag = 'internal scratch']
  %s0 = inlined_call_operand.vmem [shape: f32[2,16,3], index: 0, kind: input, shape index: {}]
  %s1 = inlined_call_operand.vmem [shape: f32[3,64], index: 1, kind: input, shape index: {}]
  %s2 = inlined_call_operand.vmem [shape: f32[1,64], index: 2, kind: input, shape index: {}]
  %s3 = inlined_call_operand.vmem [shape: bf16[64,128], index: 3, kind: input, shape index: {}]
  %s4 = inlined_call_operand.vmem [shape: f32[1,128], index: 4, kind: input, shape index: {}]
  %s5 = inlined_call_operand.hbm [shape: bf16[128,1024], index: 5, kind: input, shape index: {}]
  %s6 = inlined_call_operand.vmem [shape: f32[1,1024], index: 6, kind: input, shape index: {}]
  %s7 = inlined_call_operand.vmem [shape: f32[2,1,1024], index: 7, kind: output, shape index: {}]
  %s8 = sld [smem:[#allocation0]]
  $region73: #{pointnet_cls_forward.4} parent=0
    _
  %s10 = ssub.s32 1, %s8
  %s11 = scalar_select 0, %s10, %s8
  $region1: #{pointnet_cls_forward.4} parent=0
    #allocation2 [shape = 'u8[262144]{0}', space=vmem, size = 0x40000, scoped, tag = 'input window, operand 5, single buffered']
    #allocation3 [shape = 's32[2]{0}', space=sflag, size = 0x8, scoped, tag = 'scoped memory for pointnet_cls_forward.4']
    %12 = vsyncpa [#allocation3], 0
    loop: start=0, step=1, limit=4
    $region2: #{pointnet_cls_forward.4} parent=1 // loop_pre_header
      _
    $region3: #{pointnet_cls_forward.4} parent=1 // loop_header
      %s14 = sphi 0, %s18
      %p15 = scmp.ge.s32.totalorder %s14, 4
      %s21 = sphi 0, %s33
      %s22 = sphi 0, %s29
      %s23 = sphi 0, %s21
      %s24 = sphi 0, %s22
      %s25 = sphi 0, %s23
      %s26 = sphi 0, %s24
      %s38 = sphi 0, %s40
      %s41 = sphi 0, %s38
      %s42 = sphi 0, %s41
      %s58 = sphi 0, %s42
      %s62 = sphi 0, %s62
      %s64 = sphi 0, %s62
      %s65 = sphi 0, %s64
      %s79 = sphi 0, %s65
      %s83 = sphi 0, %s83
      %s85 = sphi 0, %s83
      %s86 = sphi 0, %s85
      %s100 = sphi 0, %s86
      %s104 = sphi 0, %s104
      %s106 = sphi 0, %s104
      %s107 = sphi 0, %s106
      %s121 = sphi 0, %s107
      %s125 = sphi 0, %s125
      %s127 = sphi 0, %s125
      %s128 = sphi 0, %s127
      %s142 = sphi 0, %s128
      %s146 = sphi 0, %s146
      %s148 = sphi 0, %s146
      %s149 = sphi 0, %s148
      %s163 = sphi 0, %s149
      %s167 = sphi 0, %s167
      %s169 = sphi 0, %s167
      %s170 = sphi 0, %s169
      %s184 = sphi 0, %s170
      %s190 = sphi 0, %s192
      %s193 = sphi 0, %s190
      %s194 = sphi 0, %s193
      %s210 = sphi 0, %s194
    $region4: #{pointnet_cls_forward.4} parent=1 // loop_header_branch
      %17 = sbr.rel (%p15) target = $region8
    $region5: #{pointnet_cls_forward.4} parent=1 // loop_body
      %s19 = ssub.s32 %s14, 1
      %s20 = ssub.s32 %s14, 2
      %s27 = sadd.s32 1, %s22
      %p28 = scmp.ge.s32.totalorder %s27, 1
      %s29 = scalar_select %p28, 0, %s27
      %s30 = sadd.s32 1, %s21
      %s31 = scalar_select %p28, %s30, %s21
      %p32 = scmp.ge.s32.totalorder %s31, 2
      %s33 = scalar_select %p32, 0, %s31
      %s34 = ssub.s32 %s21, %s33
      %s35 = ssub.s32 %s22, %s29
      %s36 = sor.u32 %s34, %s35
      %p37 = scmp.eq.s32.totalorder %s36, 0
      %s39 = sadd.s32 %s38, 1
      %s40 = scalar_select %p37, %s38, %s39
      %p43 = pneg %p37
      %p44 = scmp.eq.s32.totalorder %s14, 1
      %p45 = por %p43, %p44
      %p46 = scmp.ne.s32.totalorder %s38, %s41
      %p47 = scmp.eq.s32.totalorder %s14, 0
      %p48 = por %p46, %p47
      %p49 = scmp.ne.s32.totalorder %s38, %s41
      %p50 = scmp.eq.s32.totalorder %s19, 1
      %p51 = por %p49, %p50
      %p52 = scmp.ne.s32.totalorder %s41, %s42
      %p53 = scmp.eq.s32.totalorder %s19, 0
      %p54 = por %p52, %p53
      %p55 = scmp.ne.s32.totalorder %s41, %s42
      %p56 = scmp.eq.s32.totalorder %s20, 1
      %p57 = por %p55, %p56
      %p59 = scmp.ne.s32.totalorder %s42, %s58
      %p60 = scmp.eq.s32.totalorder %s20, 0
      %p61 = por %p59, %p60
      %s63 = sadd.s32 %s62, 1
      %p66 = scmp.eq.s32.totalorder %s14, 1
      %p67 = scmp.ne.s32.totalorder %s62, %s64
      %p68 = scmp.eq.s32.totalorder %s14, 0
      %p69 = por %p67, %p68
      %p70 = scmp.ne.s32.totalorder %s62, %s64
      %p71 = scmp.eq.s32.totalorder %s19, 1
      %p72 = por %p70, %p71
      %p73 = scmp.ne.s32.totalorder %s64, %s65
      %p74 = scmp.eq.s32.totalorder %s19, 0
      %p75 = por %p73, %p74
      %p76 = scmp.ne.s32.totalorder %s64, %s65
      %p77 = scmp.eq.s32.totalorder %s20, 1
      %p78 = por %p76, %p77
      %p80 = scmp.ne.s32.totalorder %s65, %s79
      %p81 = scmp.eq.s32.totalorder %s20, 0
      %p82 = por %p80, %p81
      %s84 = sadd.s32 %s83, 1
      %p87 = scmp.eq.s32.totalorder %s14, 1
      %p88 = scmp.ne.s32.totalorder %s83, %s85
      %p89 = scmp.eq.s32.totalorder %s14, 0
      %p90 = por %p88, %p89
      %p91 = scmp.ne.s32.totalorder %s83, %s85
      %p92 = scmp.eq.s32.totalorder %s19, 1
      %p93 = por %p91, %p92
      %p94 = scmp.ne.s32.totalorder %s85, %s86
      %p95 = scmp.eq.s32.totalorder %s19, 0
      %p96 = por %p94, %p95
      %p97 = scmp.ne.s32.totalorder %s85, %s86
      %p98 = scmp.eq.s32.totalorder %s20, 1
      %p99 = por %p97, %p98
      %p101 = scmp.ne.s32.totalorder %s86, %s100
      %p102 = scmp.eq.s32.totalorder %s20, 0
      %p103 = por %p101, %p102
      %s105 = sadd.s32 %s104, 1
      %p108 = scmp.eq.s32.totalorder %s14, 1
      %p109 = scmp.ne.s32.totalorder %s104, %s106
      %p110 = scmp.eq.s32.totalorder %s14, 0
      %p111 = por %p109, %p110
      %p112 = scmp.ne.s32.totalorder %s104, %s106
      %p113 = scmp.eq.s32.totalorder %s19, 1
      %p114 = por %p112, %p113
      %p115 = scmp.ne.s32.totalorder %s106, %s107
      %p116 = scmp.eq.s32.totalorder %s19, 0
      %p117 = por %p115, %p116
      %p118 = scmp.ne.s32.totalorder %s106, %s107
      %p119 = scmp.eq.s32.totalorder %s20, 1
      %p120 = por %p118, %p119
      %p122 = scmp.ne.s32.totalorder %s107, %s121
      %p123 = scmp.eq.s32.totalorder %s20, 0
      %p124 = por %p122, %p123
      %s126 = sadd.s32 %s125, 1
      %p129 = scmp.eq.s32.totalorder %s14, 1
      %p130 = scmp.ne.s32.totalorder %s125, %s127
      %p131 = scmp.eq.s32.totalorder %s14, 0
      %p132 = por %p130, %p131
      %p133 = scmp.ne.s32.totalorder %s125, %s127
      %p134 = scmp.eq.s32.totalorder %s19, 1
      %p135 = por %p133, %p134
      %p136 = scmp.ne.s32.totalorder %s127, %s128
      %p137 = scmp.eq.s32.totalorder %s19, 0
      %p138 = por %p136, %p137
      %p139 = scmp.ne.s32.totalorder %s127, %s128
      %p140 = scmp.eq.s32.totalorder %s20, 1
      %p141 = por %p139, %p140
      %p143 = scmp.ne.s32.totalorder %s128, %s142
      %p144 = scmp.eq.s32.totalorder %s20, 0
      %p145 = por %p143, %p144
      %s147 = sadd.s32 %s146, 1
      %p150 = scmp.eq.s32.totalorder %s14, 1
      %p151 = scmp.ne.s32.totalorder %s146, %s148
      %p152 = scmp.eq.s32.totalorder %s14, 0
      %p153 = por %p151, %p152
      %p154 = scmp.ne.s32.totalorder %s146, %s148
      %p155 = scmp.eq.s32.totalorder %s19, 1
      %p156 = por %p154, %p155
      %p157 = scmp.ne.s32.totalorder %s148, %s149
      %p158 = scmp.eq.s32.totalorder %s19, 0
      %p159 = por %p157, %p158
      %p160 = scmp.ne.s32.totalorder %s148, %s149
      %p161 = scmp.eq.s32.totalorder %s20, 1
      %p162 = por %p160, %p161
      %p164 = scmp.ne.s32.totalorder %s149, %s163
      %p165 = scmp.eq.s32.totalorder %s20, 0
      %p166 = por %p164, %p165
      %s168 = sadd.s32 %s167, 1
      %p171 = scmp.eq.s32.totalorder %s14, 1
      %p172 = scmp.ne.s32.totalorder %s167, %s169
      %p173 = scmp.eq.s32.totalorder %s14, 0
      %p174 = por %p172, %p173
      %p175 = scmp.ne.s32.totalorder %s167, %s169
      %p176 = scmp.eq.s32.totalorder %s19, 1
      %p177 = por %p175, %p176
      %p178 = scmp.ne.s32.totalorder %s169, %s170
      %p179 = scmp.eq.s32.totalorder %s19, 0
      %p180 = por %p178, %p179
      %p181 = scmp.ne.s32.totalorder %s169, %s170
      %p182 = scmp.eq.s32.totalorder %s20, 1
      %p183 = por %p181, %p182
      %p185 = scmp.ne.s32.totalorder %s170, %s184
      %p186 = scmp.eq.s32.totalorder %s20, 0
      %p187 = por %p185, %p186
      %s188 = ssub.s32 %s21, %s33
      %p189 = scmp.eq.s32.totalorder %s188, 0
      %s191 = sadd.s32 %s190, 1
      %s192 = scalar_select %p189, %s190, %s191
      %p195 = pneg %p189
      %p196 = scmp.eq.s32.totalorder %s14, 1
      %p197 = por %p195, %p196
      %p198 = scmp.ne.s32.totalorder %s190, %s193
      %p199 = scmp.eq.s32.totalorder %s14, 0
      %p200 = por %p198, %p199
      %p201 = scmp.ne.s32.totalorder %s190, %s193
      %p202 = scmp.eq.s32.totalorder %s19, 1
      %p203 = por %p201, %p202
      %p204 = scmp.ne.s32.totalorder %s193, %s194
      %p205 = scmp.eq.s32.totalorder %s19, 0
      %p206 = por %p204, %p205
      %p207 = scmp.ne.s32.totalorder %s193, %s194
      %p208 = scmp.eq.s32.totalorder %s20, 1
      %p209 = por %p207, %p208
      %p211 = scmp.ne.s32.totalorder %s194, %s210
      %p212 = scmp.eq.s32.totalorder %s20, 0
      %p213 = por %p211, %p212
      %p214 = scmp.le.s32.totalorder 1, %s14
      %p215 = scmp.lt.s32.totalorder %s14, 3
      %p216 = pnand %p214, %p215
      %p217 = pneg %p216
      // Predicated region
      $region9: #{pointnet_cls_forward.4} parent=5 // pred_check
        _
      $region10: #{pointnet_cls_forward.4} parent=5 // pred_check_branch
        %219 = sbr.rel (%p216) target = $region12
      $region11: #{pointnet_cls_forward.4} parent=5 // pred_region
        %s220 = ssub.s32 %s14, 1
        // Predicated region
        $region13: #{pointnet_cls_forward.4} parent=11 // pred_check
          %p221 = pneg %p75
        $region14: #{pointnet_cls_forward.4} parent=11 // pred_check_branch
          %223 = sbr.rel (%p221) target = $region16
        $region15: #{pointnet_cls_forward.4} parent=11 // pred_region
          _
        $region16: #{pointnet_cls_forward.4} parent=11 // pred_fallthru
          _
        // Predicated region
        $region17: #{pointnet_cls_forward.4} parent=11 // pred_check
          %p224 = pneg %p96
        $region18: #{pointnet_cls_forward.4} parent=11 // pred_check_branch
          %226 = sbr.rel (%p224) target = $region20
        $region19: #{pointnet_cls_forward.4} parent=11 // pred_region
          _
        $region20: #{pointnet_cls_forward.4} parent=11 // pred_fallthru
          _
        // Predicated region
        $region21: #{pointnet_cls_forward.4} parent=11 // pred_check
          %p227 = pneg %p117
        $region22: #{pointnet_cls_forward.4} parent=11 // pred_check_branch
          %229 = sbr.rel (%p227) target = $region24
        $region23: #{pointnet_cls_forward.4} parent=11 // pred_region
          _
        $region24: #{pointnet_cls_forward.4} parent=11 // pred_fallthru
          _
        // Predicated region
        $region25: #{pointnet_cls_forward.4} parent=11 // pred_check
          %p230 = pneg %p138
        $region26: #{pointnet_cls_forward.4} parent=11 // pred_check_branch
          %232 = sbr.rel (%p230) target = $region28
        $region27: #{pointnet_cls_forward.4} parent=11 // pred_region
          _
        $region28: #{pointnet_cls_forward.4} parent=11 // pred_fallthru
          _
        // Predicated region
        $region29: #{pointnet_cls_forward.4} parent=11 // pred_check
          %p233 = pneg %p159
        $region30: #{pointnet_cls_forward.4} parent=11 // pred_check_branch
          %235 = sbr.rel (%p233) target = $region32
        $region31: #{pointnet_cls_forward.4} parent=11 // pred_region
          %237 = vsyncadd [#allocation3], 0
          %s238 = sshll.u32 %s5, 4
          %s239 = int_to_ptr.hbm [resolvable:$true] %s238
          %s240 = sshll.u32 [#allocation2], 4
          %s241 = int_to_ptr.vmem [resolvable:$true] %s240
          %246 = dma.hbm_to_vmem [thread:$0]  %s239, 8192, %s241, [#allocation3], 512, 512, 32
        $region32: #{pointnet_cls_forward.4} parent=11 // pred_fallthru
          _
        // Predicated region
        $region33: #{pointnet_cls_forward.4} parent=11 // pred_check
          %p247 = pneg %p180
        $region34: #{pointnet_cls_forward.4} parent=11 // pred_check_branch
          %249 = sbr.rel (%p247) target = $region36
        $region35: #{pointnet_cls_forward.4} parent=11 // pred_region
          _
        $region36: #{pointnet_cls_forward.4} parent=11 // pred_fallthru
          _
      $region12: #{pointnet_cls_forward.4} parent=5 // pred_fallthru
        _
      %p250 = scmp.lt.s32.totalorder %s14, 2
      // Predicated region
      $region37: #{pointnet_cls_forward.4} parent=5 // pred_check
        %p251 = pneg %p250
      $region38: #{pointnet_cls_forward.4} parent=5 // pred_check_branch
        %253 = sbr.rel (%p251) target = $region40
      $region39: #{pointnet_cls_forward.4} parent=5 // pred_region
        // Predicated region
        $region41: #{pointnet_cls_forward.4} parent=39 // pred_check
          %p254 = pneg %p48
        $region42: #{pointnet_cls_forward.4} parent=39 // pred_check_branch
          %256 = sbr.rel (%p254) target = $region44
        $region43: #{pointnet_cls_forward.4} parent=39 // pred_region
          %s257 = smul.u32 2, %s22
          %p258 = scmp.lt.s32.totalorder %s21, 1
          %s259 = scalar_select %p258, %s21, 1
          %p260 = scmp.lt.s32.totalorder %s257, 1
          %s261 = scalar_select %p260, %s257, 1
          %s262 = smul.addr %s259, 2
          %s263 = sadd.s32 %s261, %s262
          %s264 = smul.addr %s263, 8
          %s265 = scalar_lea.vmem %s0, %s264
          %s266 = smul.u32 2, %s22
        $region44: #{pointnet_cls_forward.4} parent=39 // pred_fallthru
          _
      $region40: #{pointnet_cls_forward.4} parent=5 // pred_fallthru
        _
      %p267 = scmp.le.s32.totalorder 1, %s14
      %p268 = scmp.lt.s32.totalorder %s14, 3
      %p269 = pnand %p267, %p268
      %p270 = pneg %p269
      // Predicated region
      $region45: #{pointnet_cls_forward.4} parent=5 // pred_check
        _
      $region46: #{pointnet_cls_forward.4} parent=5 // pred_check_branch
        %272 = sbr.rel (%p269) target = $region48
      $region47: #{pointnet_cls_forward.4} parent=5 // pred_region
        %s273 = ssub.s32 %s14, 1
        // Predicated region
        $region49: #{pointnet_cls_forward.4} parent=47 // pred_check
          %p274 = pneg %p159
        $region50: #{pointnet_cls_forward.4} parent=47 // pred_check_branch
          %276 = sbr.rel (%p274) target = $region52
        $region51: #{pointnet_cls_forward.4} parent=47 // pred_region
          %278 = dma.done [#allocation3], 8192
        $region52: #{pointnet_cls_forward.4} parent=47 // pred_fallthru
          _
        %s279 = smul.u32 2, %s24
        %p280 = scmp.lt.s32.totalorder %s23, 1
        %s281 = scalar_select %p280, %s23, 1
        %p282 = scmp.lt.s32.totalorder %s279, 1
        %s283 = scalar_select %p282, %s279, 1
        %s284 = smul.addr %s281, 2
        %s285 = sadd.s32 %s283, %s284
        %s286 = smul.addr %s285, 8
        %s287 = scalar_lea.vmem %s0, %s286
        %p288 = pneg %p54
        %p289 = pneg %p51
        %p290 = pneg %p75
        %p291 = pneg %p72
        %p292 = pneg %p96
        %p293 = pneg %p93
        %p294 = pneg %p117
        %p295 = pneg %p114
        %p296 = pneg %p138
        %p297 = pneg %p135
        %p298 = pneg %p159
        %p299 = pneg %p156
        %p300 = pneg %p180
        %p301 = pneg %p177
        %p302 = pneg %p206
        %p303 = pneg %p203
        %p304 = scmp.lt.s32.totalorder %s23, 1
        %s305 = scalar_select %p304, %s23, 1
        %s306 = smul.addr %s305, 8
        %s307 = scalar_lea.vmem %s7, %s306
        %s308 = smul.u32 2, %s24
        %p309 = scmp.lt.s32.totalorder %s23, 1
        %s310 = scalar_select %p309, %s23, 1
        %p311 = scmp.lt.s32.totalorder %s308, 1
        %s312 = scalar_select %p311, %s308, 1
        %s313 = smul.addr %s310, 2
        %s314 = sadd.s32 %s312, %s313
        %s315 = smul.addr %s314, 8
        %s316 = scalar_lea.vmem %s0, %s315
        %s317 = smul.u32 2, %s24
        %p318 = scmp.lt.s32.totalorder %s23, 1
        %s319 = scalar_select %p318, %s23, 1
        %s320 = smul.addr %s319, 8
        %s321 = scalar_lea.vmem %s7, %s320
        %p323 = scmp.eq.s32.totalorder %s24, 0
        // Predicated region
        $region53: #{pointnet_cls_forward.4} parent=47 // pred_check
          %p324 = pneg %p323
        $region54: #{pointnet_cls_forward.4} parent=47 // pred_check_branch
          %326 = sbr.rel (%p324) target = $region56
        $region55: #{pointnet_cls_forward.4} parent=47 // pred_region
          %327 = vst [vmem:[%s321] sm:$0xff] -inf
        $region56: #{pointnet_cls_forward.4} parent=47 // pred_fallthru
          _
        %v328 = vld [vmem:[%s316] sm:$0xff]
        %v329 = vld [vmem:[%s316 + $0x8] sm:$0xff]
        %v330 = vld [vmem:[%s1] sm:$0x7]
        %332 = vset.pattern.permute.xlu0 0
        %333 = vperm.xlu0 %332, %v328
        %v334 = vpop.permute.xlu0 %333
        %337 = vset.pattern.permute.xlu0 0
        %338 = vperm.xlu0 %337, %v329
        %v339 = vpop.permute.xlu0 %338
        %v341 = vperm.slane %v330, 0
        %v342 = vmul.f32 %v334, %v341
        %v343 = vmul.f32 %v339, %v341
        %344 = vset.pattern.permute.xlu0 1
        %345 = vperm.xlu0 %344, %v328
        %v346 = vpop.permute.xlu0 %345
        %348 = vset.pattern.permute.xlu0 1
        %349 = vperm.xlu0 %348, %v329
        %v350 = vpop.permute.xlu0 %349
        %v352 = vperm.slane %v330, 1
        %v353 = vmul.f32 %v346, %v352
        %v354 = vmul.f32 %v350, %v352
        %v355 = vadd.f32 %v342, %v353
        %v356 = vadd.f32 %v343, %v354
        %357 = vset.pattern.permute.xlu0 2
        %358 = vperm.xlu0 %357, %v328
        %v359 = vpop.permute.xlu0 %358
        %361 = vset.pattern.permute.xlu0 2
        %362 = vperm.xlu0 %361, %v329
        %v363 = vpop.permute.xlu0 %362
        %v365 = vperm.slane %v330, 2
        %v366 = vmul.f32 %v359, %v365
        %v367 = vmul.f32 %v363, %v365
        %v368 = vadd.f32 %v355, %v366
        %v369 = vadd.f32 %v356, %v367
        %v370 = vld [vmem:[%s2] sm:$0x1]
        %v372 = vperm.slane %v370, 0
        %v374 = vadd.f32 %v368, %v372
        %v375 = vadd.f32 %v369, %v372
        %v376 = vmax.f32 %v374, 0.0
        %v377 = vmax.f32 %v375, 0.0
        %v378 = vpack.c.bf16 %v377, %v376
        %v379 = vld [vmem:[%s3] sm:$0xf]
        %v380 = vld [vmem:[%s3 + $0x4] sm:$0xf]
        %v381 = vld [vmem:[%s3 + $0x8] sm:$0xf]
        %v382 = vld [vmem:[%s3 + $0xc] sm:$0xf]
        %v383 = vld [vmem:[%s3 + $0x10] sm:$0xf]
        %v384 = vld [vmem:[%s3 + $0x14] sm:$0xf]
        %v385 = vld [vmem:[%s3 + $0x18] sm:$0xf]
        %v386 = vld [vmem:[%s3 + $0x1c] sm:$0xf]
        %v387 = vld [vmem:[%s4] sm:$0x1]
        %v389 = vperm.slane %v387, 0
        %v399 = vunpack.c.l.b16 %v379
        %v400 = vunpack.c.l.b16 %v380
        %v401 = vunpack.c.l.b16 %v381
        %v402 = vunpack.c.l.b16 %v382
        %v403 = vunpack.c.l.b16 %v383
        %v404 = vunpack.c.l.b16 %v384
        %v405 = vunpack.c.l.b16 %v385
        %v406 = vunpack.c.l.b16 %v386
        %v407 = vpack.c.b16 %v400, %v399
        %v408 = vpack.c.b16 %v402, %v401
        %v409 = vpack.c.b16 %v404, %v403
        %v410 = vpack.c.b16 %v406, %v405
        %vm415 = vcmask 523264
        %v417 = vsel %vm415, %v378, 0
        %419 = vmatpush.bf16.msra.mxu0 0
        %420 = vmatpush.bf16.msra.mxu0 0
        %421 = vmatpush.bf16.msra.mxu0 0
        %422 = vmatpush.bf16.msra.mxu0 0
        %423 = vmatpush.bf16.msra.mxu0 %v410
        %424 = vmatpush.bf16.msra.mxu0 %v409
        %425 = vmatpush.bf16.msra.mxu0 %v408
        %426 = vmatpush.bf16.msra.mxu0 %v407
        %427 = vmatmul.bf16.gmra.mxu0 %v417
        %v428 = vpop.f32.mrf.mxu0
        %v429 = vadd.f32 %v389, %v428
        %v430 = vpop.f32.mrf.mxu0
        %v431 = vadd.f32 %v389, %v430
        %432 = vdwg.mxu0
        %v433 = vmax.f32 %v429, 0.0
        %v434 = vmax.f32 %v431, 0.0
        %v435 = vpack.c.bf16 %v434, %v433
        %v436 = vld [vmem:[#allocation2] sm:$0xff]
        %v437 = vld [vmem:[#allocation2 + $0x8] sm:$0xff]
        %v438 = vld [vmem:[#allocation2 + $0x10] sm:$0xff]
        %v439 = vld [vmem:[#allocation2 + $0x18] sm:$0xff]
        %v440 = vld [vmem:[#allocation2 + $0x20] sm:$0xff]
        %v441 = vld [vmem:[#allocation2 + $0x28] sm:$0xff]
        %v442 = vld [vmem:[#allocation2 + $0x30] sm:$0xff]
        %v443 = vld [vmem:[#allocation2 + $0x38] sm:$0xff]
        %v444 = vld [vmem:[#allocation2 + $0x40] sm:$0xff]
        %v445 = vld [vmem:[#allocation2 + $0x48] sm:$0xff]
        %v446 = vld [vmem:[#allocation2 + $0x50] sm:$0xff]
        %v447 = vld [vmem:[#allocation2 + $0x58] sm:$0xff]
        %v448 = vld [vmem:[#allocation2 + $0x60] sm:$0xff]
        %v449 = vld [vmem:[#allocation2 + $0x68] sm:$0xff]
        %v450 = vld [vmem:[#allocation2 + $0x70] sm:$0xff]
        %v451 = vld [vmem:[#allocation2 + $0x78] sm:$0xff]
        %v452 = vld [vmem:[#allocation2 + $0x80] sm:$0xff]
        %v453 = vld [vmem:[#allocation2 + $0x88] sm:$0xff]
        %v454 = vld [vmem:[#allocation2 + $0x90] sm:$0xff]
        %v455 = vld [vmem:[#allocation2 + $0x98] sm:$0xff]
        %v456 = vld [vmem:[#allocation2 + $0xa0] sm:$0xff]
        %v457 = vld [vmem:[#allocation2 + $0xa8] sm:$0xff]
        %v458 = vld [vmem:[#allocation2 + $0xb0] sm:$0xff]
        %v459 = vld [vmem:[#allocation2 + $0xb8] sm:$0xff]
        %v460 = vld [vmem:[#allocation2 + $0xc0] sm:$0xff]
        %v461 = vld [vmem:[#allocation2 + $0xc8] sm:$0xff]
        %v462 = vld [vmem:[#allocation2 + $0xd0] sm:$0xff]
        %v463 = vld [vmem:[#allocation2 + $0xd8] sm:$0xff]
        %v464 = vld [vmem:[#allocation2 + $0xe0] sm:$0xff]
        %v465 = vld [vmem:[#allocation2 + $0xe8] sm:$0xff]
        %v466 = vld [vmem:[#allocation2 + $0xf0] sm:$0xff]
        %v467 = vld [vmem:[#allocation2 + $0xf8] sm:$0xff]
        %v468 = vld [vmem:[#allocation2 + $0x100] sm:$0xff]
        %v469 = vld [vmem:[#allocation2 + $0x108] sm:$0xff]
        %v470 = vld [vmem:[#allocation2 + $0x110] sm:$0xff]
        %v471 = vld [vmem:[#allocation2 + $0x118] sm:$0xff]
        %v472 = vld [vmem:[#allocation2 + $0x120] sm:$0xff]
        %v473 = vld [vmem:[#allocation2 + $0x128] sm:$0xff]
        %v474 = vld [vmem:[#allocation2 + $0x130] sm:$0xff]
        %v475 = vld [vmem:[#allocation2 + $0x138] sm:$0xff]
        %v476 = vld [vmem:[#allocation2 + $0x140] sm:$0xff]
        %v477 = vld [vmem:[#allocation2 + $0x148] sm:$0xff]
        %v478 = vld [vmem:[#allocation2 + $0x150] sm:$0xff]
        %v479 = vld [vmem:[#allocation2 + $0x158] sm:$0xff]
        %v480 = vld [vmem:[#allocation2 + $0x160] sm:$0xff]
        %v481 = vld [vmem:[#allocation2 + $0x168] sm:$0xff]
        %v482 = vld [vmem:[#allocation2 + $0x170] sm:$0xff]
        %v483 = vld [vmem:[#allocation2 + $0x178] sm:$0xff]
        %v484 = vld [vmem:[#allocation2 + $0x180] sm:$0xff]
        %v485 = vld [vmem:[#allocation2 + $0x188] sm:$0xff]
        %v486 = vld [vmem:[#allocation2 + $0x190] sm:$0xff]
        %v487 = vld [vmem:[#allocation2 + $0x198] sm:$0xff]
        %v488 = vld [vmem:[#allocation2 + $0x1a0] sm:$0xff]
        %v489 = vld [vmem:[#allocation2 + $0x1a8] sm:$0xff]
        %v490 = vld [vmem:[#allocation2 + $0x1b0] sm:$0xff]
        %v491 = vld [vmem:[#allocation2 + $0x1b8] sm:$0xff]
        %v492 = vld [vmem:[#allocation2 + $0x1c0] sm:$0xff]
        %v493 = vld [vmem:[#allocation2 + $0x1c8] sm:$0xff]
        %v494 = vld [vmem:[#allocation2 + $0x1d0] sm:$0xff]
        %v495 = vld [vmem:[#allocation2 + $0x1d8] sm:$0xff]
        %v496 = vld [vmem:[#allocation2 + $0x1e0] sm:$0xff]
        %v497 = vld [vmem:[#allocation2 + $0x1e8] sm:$0xff]
        %v498 = vld [vmem:[#allocation2 + $0x1f0] sm:$0xff]
        %v499 = vld [vmem:[#allocation2 + $0x1f8] sm:$0xff]
        %v564 = vunpack.c.l.b16 %v436
        %v565 = vunpack.c.h.b16 %v436
        %v566 = vunpack.c.l.b16 %v437
        %v567 = vunpack.c.h.b16 %v437
        %v568 = vunpack.c.l.b16 %v438
        %v569 = vunpack.c.h.b16 %v438
        %v570 = vunpack.c.l.b16 %v439
        %v571 = vunpack.c.h.b16 %v439
        %v572 = vunpack.c.l.b16 %v440
        %v573 = vunpack.c.h.b16 %v440
        %v574 = vunpack.c.l.b16 %v441
        %v575 = vunpack.c.h.b16 %v441
        %v576 = vunpack.c.l.b16 %v442
        %v577 = vunpack.c.h.b16 %v442
        %v578 = vunpack.c.l.b16 %v443
        %v579 = vunpack.c.h.b16 %v443
        %v580 = vunpack.c.l.b16 %v444
        %v581 = vunpack.c.h.b16 %v444
        %v582 = vunpack.c.l.b16 %v445
        %v583 = vunpack.c.h.b16 %v445
        %v584 = vunpack.c.l.b16 %v446
        %v585 = vunpack.c.h.b16 %v446
        %v586 = vunpack.c.l.b16 %v447
        %v587 = vunpack.c.h.b16 %v447
        %v588 = vunpack.c.l.b16 %v448
        %v589 = vunpack.c.h.b16 %v448
        %v590 = vunpack.c.l.b16 %v449
        %v591 = vunpack.c.h.b16 %v449
        %v592 = vunpack.c.l.b16 %v450
        %v593 = vunpack.c.h.b16 %v450
        %v594 = vunpack.c.l.b16 %v451
        %v595 = vunpack.c.h.b16 %v451
        %v596 = vunpack.c.l.b16 %v452
        %v597 = vunpack.c.h.b16 %v452
        %v598 = vunpack.c.l.b16 %v453
        %v599 = vunpack.c.h.b16 %v453
        %v600 = vunpack.c.l.b16 %v454
        %v601 = vunpack.c.h.b16 %v454
        %v602 = vunpack.c.l.b16 %v455
        %v603 = vunpack.c.h.b16 %v455
        %v604 = vunpack.c.l.b16 %v456
        %v605 = vunpack.c.h.b16 %v456
        %v606 = vunpack.c.l.b16 %v457
        %v607 = vunpack.c.h.b16 %v457
        %v608 = vunpack.c.l.b16 %v458
        %v609 = vunpack.c.h.b16 %v458
        %v610 = vunpack.c.l.b16 %v459
        %v611 = vunpack.c.h.b16 %v459
        %v612 = vunpack.c.l.b16 %v460
        %v613 = vunpack.c.h.b16 %v460
        %v614 = vunpack.c.l.b16 %v461
        %v615 = vunpack.c.h.b16 %v461
        %v616 = vunpack.c.l.b16 %v462
        %v617 = vunpack.c.h.b16 %v462
        %v618 = vunpack.c.l.b16 %v463
        %v619 = vunpack.c.h.b16 %v463
        %v620 = vunpack.c.l.b16 %v464
        %v621 = vunpack.c.h.b16 %v464
        %v622 = vunpack.c.l.b16 %v465
        %v623 = vunpack.c.h.b16 %v465
        %v624 = vunpack.c.l.b16 %v466
        %v625 = vunpack.c.h.b16 %v466
        %v626 = vunpack.c.l.b16 %v467
        %v627 = vunpack.c.h.b16 %v467
        %v628 = vunpack.c.l.b16 %v468
        %v629 = vunpack.c.h.b16 %v468
        %v630 = vunpack.c.l.b16 %v469
        %v631 = vunpack.c.h.b16 %v469
        %v632 = vunpack.c.l.b16 %v470
        %v633 = vunpack.c.h.b16 %v470
        %v634 = vunpack.c.l.b16 %v471
        %v635 = vunpack.c.h.b16 %v471
        %v636 = vunpack.c.l.b16 %v472
        %v637 = vunpack.c.h.b16 %v472
        %v638 = vunpack.c.l.b16 %v473
        %v639 = vunpack.c.h.b16 %v473
        %v640 = vunpack.c.l.b16 %v474
        %v641 = vunpack.c.h.b16 %v474
        %v642 = vunpack.c.l.b16 %v475
        %v643 = vunpack.c.h.b16 %v475
        %v644 = vunpack.c.l.b16 %v476
        %v645 = vunpack.c.h.b16 %v476
        %v646 = vunpack.c.l.b16 %v477
        %v647 = vunpack.c.h.b16 %v477
        %v648 = vunpack.c.l.b16 %v478
        %v649 = vunpack.c.h.b16 %v478
        %v650 = vunpack.c.l.b16 %v479
        %v651 = vunpack.c.h.b16 %v479
        %v652 = vunpack.c.l.b16 %v480
        %v653 = vunpack.c.h.b16 %v480
        %v654 = vunpack.c.l.b16 %v481
        %v655 = vunpack.c.h.b16 %v481
        %v656 = vunpack.c.l.b16 %v482
        %v657 = vunpack.c.h.b16 %v482
        %v658 = vunpack.c.l.b16 %v483
        %v659 = vunpack.c.h.b16 %v483
        %v660 = vunpack.c.l.b16 %v484
        %v661 = vunpack.c.h.b16 %v484
        %v662 = vunpack.c.l.b16 %v485
        %v663 = vunpack.c.h.b16 %v485
        %v664 = vunpack.c.l.b16 %v486
        %v665 = vunpack.c.h.b16 %v486
        %v666 = vunpack.c.l.b16 %v487
        %v667 = vunpack.c.h.b16 %v487
        %v668 = vunpack.c.l.b16 %v488
        %v669 = vunpack.c.h.b16 %v488
        %v670 = vunpack.c.l.b16 %v489
        %v671 = vunpack.c.h.b16 %v489
        %v672 = vunpack.c.l.b16 %v490
        %v673 = vunpack.c.h.b16 %v490
        %v674 = vunpack.c.l.b16 %v491
        %v675 = vunpack.c.h.b16 %v491
        %v676 = vunpack.c.l.b16 %v492
        %v677 = vunpack.c.h.b16 %v492
        %v678 = vunpack.c.l.b16 %v493
        %v679 = vunpack.c.h.b16 %v493
        %v680 = vunpack.c.l.b16 %v494
        %v681 = vunpack.c.h.b16 %v494
        %v682 = vunpack.c.l.b16 %v495
        %v683 = vunpack.c.h.b16 %v495
        %v684 = vunpack.c.l.b16 %v496
        %v685 = vunpack.c.h.b16 %v496
        %v686 = vunpack.c.l.b16 %v497
        %v687 = vunpack.c.h.b16 %v497
        %v688 = vunpack.c.l.b16 %v498
        %v689 = vunpack.c.h.b16 %v498
        %v690 = vunpack.c.l.b16 %v499
        %v691 = vunpack.c.h.b16 %v499
        %v692 = vpack.c.b16 %v572, %v564
        %v693 = vpack.c.b16 %v573, %v565
        %v694 = vpack.c.b16 %v574, %v566
        %v695 = vpack.c.b16 %v575, %v567
        %v696 = vpack.c.b16 %v576, %v568
        %v697 = vpack.c.b16 %v577, %v569
        %v698 = vpack.c.b16 %v578, %v570
        %v699 = vpack.c.b16 %v579, %v571
        %v700 = vpack.c.b16 %v588, %v580
        %v701 = vpack.c.b16 %v589, %v581
        %v702 = vpack.c.b16 %v590, %v582
        %v703 = vpack.c.b16 %v591, %v583
        %v704 = vpack.c.b16 %v592, %v584
        %v705 = vpack.c.b16 %v593, %v585
        %v706 = vpack.c.b16 %v594, %v586
        %v707 = vpack.c.b16 %v595, %v587
        %v708 = vpack.c.b16 %v604, %v596
        %v709 = vpack.c.b16 %v605, %v597
        %v710 = vpack.c.b16 %v606, %v598
        %v711 = vpack.c.b16 %v607, %v599
        %v712 = vpack.c.b16 %v608, %v600
        %v713 = vpack.c.b16 %v609, %v601
        %v714 = vpack.c.b16 %v610, %v602
        %v715 = vpack.c.b16 %v611, %v603
        %v716 = vpack.c.b16 %v620, %v612
        %v717 = vpack.c.b16 %v621, %v613
        %v718 = vpack.c.b16 %v622, %v614
        %v719 = vpack.c.b16 %v623, %v615
        %v720 = vpack.c.b16 %v624, %v616
        %v721 = vpack.c.b16 %v625, %v617
        %v722 = vpack.c.b16 %v626, %v618
        %v723 = vpack.c.b16 %v627, %v619
        %v724 = vpack.c.b16 %v636, %v628
        %v725 = vpack.c.b16 %v637, %v629
        %v726 = vpack.c.b16 %v638, %v630
        %v727 = vpack.c.b16 %v639, %v631
        %v728 = vpack.c.b16 %v640, %v632
        %v729 = vpack.c.b16 %v641, %v633
        %v730 = vpack.c.b16 %v642, %v634
        %v731 = vpack.c.b16 %v643, %v635
        %v732 = vpack.c.b16 %v652, %v644
        %v733 = vpack.c.b16 %v653, %v645
        %v734 = vpack.c.b16 %v654, %v646
        %v735 = vpack.c.b16 %v655, %v647
        %v736 = vpack.c.b16 %v656, %v648
        %v737 = vpack.c.b16 %v657, %v649
        %v738 = vpack.c.b16 %v658, %v650
        %v739 = vpack.c.b16 %v659, %v651
        %v740 = vpack.c.b16 %v668, %v660
        %v741 = vpack.c.b16 %v669, %v661
        %v742 = vpack.c.b16 %v670, %v662
        %v743 = vpack.c.b16 %v671, %v663
        %v744 = vpack.c.b16 %v672, %v664
        %v745 = vpack.c.b16 %v673, %v665
        %v746 = vpack.c.b16 %v674, %v666
        %v747 = vpack.c.b16 %v675, %v667
        %v748 = vpack.c.b16 %v684, %v676
        %v749 = vpack.c.b16 %v685, %v677
        %v750 = vpack.c.b16 %v686, %v678
        %v751 = vpack.c.b16 %v687, %v679
        %v752 = vpack.c.b16 %v688, %v680
        %v753 = vpack.c.b16 %v689, %v681
        %v754 = vpack.c.b16 %v690, %v682
        %v755 = vpack.c.b16 %v691, %v683
        %820 = vmatpush.bf16.msra.mxu0 %v748
        %821 = vmatpush.bf16.msra.mxu0 %v740
        %822 = vmatpush.bf16.msra.mxu0 %v732
        %823 = vmatpush.bf16.msra.mxu0 %v724
        %824 = vmatpush.bf16.msra.mxu0 %v716
        %825 = vmatpush.bf16.msra.mxu0 %v708
        %826 = vmatpush.bf16.msra.mxu0 %v700
        %827 = vmatpush.bf16.msra.mxu0 %v692
        %828 = vmatmul.bf16.gmra.mxu0 %v435
        %v829 = vpop.f32.mrf.mxu0
        %v830 = vadd.f32 0.0, %v829
        %v831 = vpop.f32.mrf.mxu0
        %v832 = vadd.f32 0.0, %v831
        %833 = vdwg.mxu0
        %834 = vmatpush.bf16.msra.mxu0 %v749
        %835 = vmatpush.bf16.msra.mxu0 %v741
        %836 = vmatpush.bf16.msra.mxu0 %v733
        %837 = vmatpush.bf16.msra.mxu0 %v725
        %838 = vmatpush.bf16.msra.mxu0 %v717
        %839 = vmatpush.bf16.msra.mxu0 %v709
        %840 = vmatpush.bf16.msra.mxu0 %v701
        %841 = vmatpush.bf16.msra.mxu0 %v693
        %842 = vmatmul.bf16.gmra.mxu0 %v435
        %v843 = vpop.f32.mrf.mxu0
        %v844 = vadd.f32 0.0, %v843
        %v845 = vpop.f32.mrf.mxu0
        %v846 = vadd.f32 0.0, %v845
        %847 = vdwg.mxu0
        %848 = vmatpush.bf16.msra.mxu0 %v750
        %849 = vmatpush.bf16.msra.mxu0 %v742
        %850 = vmatpush.bf16.msra.mxu0 %v734
        %851 = vmatpush.bf16.msra.mxu0 %v726
        %852 = vmatpush.bf16.msra.mxu0 %v718
        %853 = vmatpush.bf16.msra.mxu0 %v710
        %854 = vmatpush.bf16.msra.mxu0 %v702
        %855 = vmatpush.bf16.msra.mxu0 %v694
        %856 = vmatmul.bf16.gmra.mxu0 %v435
        %v857 = vpop.f32.mrf.mxu0
        %v858 = vadd.f32 0.0, %v857
        %v859 = vpop.f32.mrf.mxu0
        %v860 = vadd.f32 0.0, %v859
        %861 = vdwg.mxu0
        %862 = vmatpush.bf16.msra.mxu0 %v751
        %863 = vmatpush.bf16.msra.mxu0 %v743
        %864 = vmatpush.bf16.msra.mxu0 %v735
        %865 = vmatpush.bf16.msra.mxu0 %v727
        %866 = vmatpush.bf16.msra.mxu0 %v719
        %867 = vmatpush.bf16.msra.mxu0 %v711
        %868 = vmatpush.bf16.msra.mxu0 %v703
        %869 = vmatpush.bf16.msra.mxu0 %v695
        %870 = vmatmul.bf16.gmra.mxu0 %v435
        %v871 = vpop.f32.mrf.mxu0
        %v872 = vadd.f32 0.0, %v871
        %v873 = vpop.f32.mrf.mxu0
        %v874 = vadd.f32 0.0, %v873
        %875 = vdwg.mxu0
        %876 = vmatpush.bf16.msra.mxu0 %v752
        %877 = vmatpush.bf16.msra.mxu0 %v744
        %878 = vmatpush.bf16.msra.mxu0 %v736
        %879 = vmatpush.bf16.msra.mxu0 %v728
        %880 = vmatpush.bf16.msra.mxu0 %v720
        %881 = vmatpush.bf16.msra.mxu0 %v712
        %882 = vmatpush.bf16.msra.mxu0 %v704
        %883 = vmatpush.bf16.msra.mxu0 %v696
        %884 = vmatmul.bf16.gmra.mxu0 %v435
        %v885 = vpop.f32.mrf.mxu0
        %v886 = vadd.f32 0.0, %v885
        %v887 = vpop.f32.mrf.mxu0
        %v888 = vadd.f32 0.0, %v887
        %889 = vdwg.mxu0
        %890 = vmatpush.bf16.msra.mxu0 %v753
        %891 = vmatpush.bf16.msra.mxu0 %v745
        %892 = vmatpush.bf16.msra.mxu0 %v737
        %893 = vmatpush.bf16.msra.mxu0 %v729
        %894 = vmatpush.bf16.msra.mxu0 %v721
        %895 = vmatpush.bf16.msra.mxu0 %v713
        %896 = vmatpush.bf16.msra.mxu0 %v705
        %897 = vmatpush.bf16.msra.mxu0 %v697
        %898 = vmatmul.bf16.gmra.mxu0 %v435
        %v899 = vpop.f32.mrf.mxu0
        %v900 = vadd.f32 0.0, %v899
        %v901 = vpop.f32.mrf.mxu0
        %v902 = vadd.f32 0.0, %v901
        %903 = vdwg.mxu0
        %904 = vmatpush.bf16.msra.mxu0 %v754
        %905 = vmatpush.bf16.msra.mxu0 %v746
        %906 = vmatpush.bf16.msra.mxu0 %v738
        %907 = vmatpush.bf16.msra.mxu0 %v730
        %908 = vmatpush.bf16.msra.mxu0 %v722
        %909 = vmatpush.bf16.msra.mxu0 %v714
        %910 = vmatpush.bf16.msra.mxu0 %v706
        %911 = vmatpush.bf16.msra.mxu0 %v698
        %912 = vmatmul.bf16.gmra.mxu0 %v435
        %v913 = vpop.f32.mrf.mxu0
        %v914 = vadd.f32 0.0, %v913
        %v915 = vpop.f32.mrf.mxu0
        %v916 = vadd.f32 0.0, %v915
        %917 = vdwg.mxu0
        %918 = vmatpush.bf16.msra.mxu0 %v755
        %919 = vmatpush.bf16.msra.mxu0 %v747
        %920 = vmatpush.bf16.msra.mxu0 %v739
        %921 = vmatpush.bf16.msra.mxu0 %v731
        %922 = vmatpush.bf16.msra.mxu0 %v723
        %923 = vmatpush.bf16.msra.mxu0 %v715
        %924 = vmatpush.bf16.msra.mxu0 %v707
        %925 = vmatpush.bf16.msra.mxu0 %v699
        %926 = vmatmul.bf16.gmra.mxu0 %v435
        %v927 = vpop.f32.mrf.mxu0
        %v928 = vadd.f32 0.0, %v927
        %v929 = vpop.f32.mrf.mxu0
        %v930 = vadd.f32 0.0, %v929
        %931 = vdwg.mxu0
        %v932 = vmax.f32 %v830, %v832
        %v933 = vrot.slane %v932, 4
        %v934 = vmax.f32 %v932, %v933
        %v935 = vrot.slane %v934, 2
        %v936 = vmax.f32 %v934, %v935
        %v937 = vrot.slane %v936, 1
        %v938 = vmax.f32 %v936, %v937
        %v939 = vmax.f32 %v844, %v846
        %v940 = vrot.slane %v939, 4
        %v941 = vmax.f32 %v939, %v940
        %v942 = vrot.slane %v941, 2
        %v943 = vmax.f32 %v941, %v942
        %v944 = vrot.slane %v943, 1
        %v945 = vmax.f32 %v943, %v944
        %v946 = vmax.f32 %v858, %v860
        %v947 = vrot.slane %v946, 4
        %v948 = vmax.f32 %v946, %v947
        %v949 = vrot.slane %v948, 2
        %v950 = vmax.f32 %v948, %v949
        %v951 = vrot.slane %v950, 1
        %v952 = vmax.f32 %v950, %v951
        %v953 = vmax.f32 %v872, %v874
        %v954 = vrot.slane %v953, 4
        %v955 = vmax.f32 %v953, %v954
        %v956 = vrot.slane %v955, 2
        %v957 = vmax.f32 %v955, %v956
        %v958 = vrot.slane %v957, 1
        %v959 = vmax.f32 %v957, %v958
        %v960 = vmax.f32 %v886, %v888
        %v961 = vrot.slane %v960, 4
        %v962 = vmax.f32 %v960, %v961
        %v963 = vrot.slane %v962, 2
        %v964 = vmax.f32 %v962, %v963
        %v965 = vrot.slane %v964, 1
        %v966 = vmax.f32 %v964, %v965
        %v967 = vmax.f32 %v900, %v902
        %v968 = vrot.slane %v967, 4
        %v969 = vmax.f32 %v967, %v968
        %v970 = vrot.slane %v969, 2
        %v971 = vmax.f32 %v969, %v970
        %v972 = vrot.slane %v971, 1
        %v973 = vmax.f32 %v971, %v972
        %v974 = vmax.f32 %v914, %v916
        %v975 = vrot.slane %v974, 4
        %v976 = vmax.f32 %v974, %v975
        %v977 = vrot.slane %v976, 2
        %v978 = vmax.f32 %v976, %v977
        %v979 = vrot.slane %v978, 1
        %v980 = vmax.f32 %v978, %v979
        %v981 = vmax.f32 %v928, %v930
        %v982 = vrot.slane %v981, 4
        %v983 = vmax.f32 %v981, %v982
        %v984 = vrot.slane %v983, 2
        %v985 = vmax.f32 %v983, %v984
        %v986 = vrot.slane %v985, 1
        %v987 = vmax.f32 %v985, %v986
        %v988 = vld [vmem:[%s321] sm:$0xff]
        %v997 = vrot.slane %v945, 7
        %v998 = vrot.slane %v952, 6
        %v999 = vrot.slane %v959, 5
        %v1000 = vrot.slane %v966, 4
        %v1001 = vrot.slane %v973, 3
        %v1002 = vrot.slane %v980, 2
        %v1003 = vrot.slane %v987, 1
        %vm1004 = vcmask 1040384
        %v1005 = vsel %vm1004, %v938, %v997
        %vm1006 = vcmask 1042434
        %v1007 = vsel %vm1006, %v998, %v999
        %vm1008 = vcmask 1041408
        %v1009 = vsel %vm1008, %v1005, %v1007
        %vm1010 = vcmask 1044484
        %v1011 = vsel %vm1010, %v1000, %v1001
        %vm1012 = vcmask 1046534
        %v1013 = vsel %vm1012, %v1002, %v1003
        %vm1014 = vcmask 1045508
        %v1015 = vsel %vm1014, %v1011, %v1013
        %vm1016 = vcmask 1043456
        %v1017 = vsel %vm1016, %v1009, %v1015
        %v1019 = vmax.f32 %v988, %v1017
        %1020 = vst [vmem:[%s321] sm:$0xff] %v1019
        // Predicated region
        $region57: #{pointnet_cls_forward.4} parent=47 // pred_check
          %p1021 = pneg %p323
        $region58: #{pointnet_cls_forward.4} parent=47 // pred_check_branch
          %1023 = sbr.rel (%p1021) target = $region60
        $region59: #{pointnet_cls_forward.4} parent=47 // pred_region
          %v1024 = vld [vmem:[%s321] sm:$0xff]
          %v1025 = vld [vmem:[%s6] sm:$0xff]
          %v1026 = vadd.f32 %v1024, %v1025
          %v1027 = vmax.f32 %v1026, 0.0
          %1028 = vst [vmem:[%s321] sm:$0xff] %v1027
        $region60: #{pointnet_cls_forward.4} parent=47 // pred_fallthru
          _
        %p1029 = scmp.lt.s32.totalorder %s23, 1
        %s1030 = scalar_select %p1029, %s23, 1
        %s1031 = smul.addr %s1030, 8
        %s1032 = scalar_lea.vmem %s7, %s1031
        // Predicated region
        $region61: #{pointnet_cls_forward.4} parent=47 // pred_check
          %p1033 = pneg %p203
        $region62: #{pointnet_cls_forward.4} parent=47 // pred_check_branch
          %1035 = sbr.rel (%p1033) target = $region64
        $region63: #{pointnet_cls_forward.4} parent=47 // pred_region
          _
        $region64: #{pointnet_cls_forward.4} parent=47 // pred_fallthru
          _
      $region48: #{pointnet_cls_forward.4} parent=5 // pred_fallthru
        _
      %p1036 = scmp.le.s32.totalorder 2, %s14
      // Predicated region
      $region65: #{pointnet_cls_forward.4} parent=5 // pred_check
        %p1037 = pneg %p1036
      $region66: #{pointnet_cls_forward.4} parent=5 // pred_check_branch
        %1039 = sbr.rel (%p1037) target = $region68
      $region67: #{pointnet_cls_forward.4} parent=5 // pred_region
        %s1040 = ssub.s32 %s14, 2
        // Predicated region
        $region69: #{pointnet_cls_forward.4} parent=67 // pred_check
          %p1041 = pneg %p209
        $region70: #{pointnet_cls_forward.4} parent=67 // pred_check_branch
          %1043 = sbr.rel (%p1041) target = $region72
        $region71: #{pointnet_cls_forward.4} parent=67 // pred_region
          %p1044 = scmp.lt.s32.totalorder %s25, 1
          %s1045 = scalar_select %p1044, %s25, 1
          %s1046 = smul.addr %s1045, 8
          %s1047 = scalar_lea.vmem %s7, %s1046
        $region72: #{pointnet_cls_forward.4} parent=67 // pred_fallthru
          _
      $region68: #{pointnet_cls_forward.4} parent=5 // pred_fallthru
        _
    $region6: #{pointnet_cls_forward.4} parent=1 // loop_footer
      %s18 = sadd.s32 1, %s14
    $region7: #{pointnet_cls_forward.4} parent=1 // loop_footer_branch
      %13 = sbr.rel target = $region3
    $region8: #{pointnet_cls_forward.4} parent=1 // loop_exit
      _
    %1048 = vsyncpa [#allocation3], 1
    %s1049 = scalar_lea.sflag [#allocation3], 1
    %1050 = vsyncpa %s1049, 1

// kernel: pointnet_cls_forward.6
$region0: #{pointnet_cls_forward.6}
  #allocation0 [shape = 'u32[]', space=smem, size = 0x4, offset = 0x4, fixed_abs, tag = 'smem constant byte address 0x4 - core index']
  #allocation1 [shape = 'u32[72,128]{1,0:T(1,128)}', space=vmem, size = 0x9000, scoped, tag = 'internal scratch']
  %s0 = inlined_call_operand.vmem [shape: f32[2,16,3], index: 0, kind: input, shape index: {}]
  %s1 = inlined_call_operand.vmem [shape: f32[2,3,3], index: 1, kind: input, shape index: {}]
  %s2 = inlined_call_operand.vmem [shape: f32[3,64], index: 2, kind: input, shape index: {}]
  %s3 = inlined_call_operand.vmem [shape: f32[1,64], index: 3, kind: input, shape index: {}]
  %s4 = inlined_call_operand.vmem [shape: bf16[64,128], index: 4, kind: input, shape index: {}]
  %s5 = inlined_call_operand.vmem [shape: f32[1,128], index: 5, kind: input, shape index: {}]
  %s6 = inlined_call_operand.vmem [shape: bf16[128,1024], index: 6, kind: input, shape index: {}]
  %s7 = inlined_call_operand.vmem [shape: f32[1,1024], index: 7, kind: input, shape index: {}]
  %s8 = inlined_call_operand.vmem [shape: f32[2,1,1024], index: 8, kind: output, shape index: {}]
  %s9 = sld [smem:[#allocation0]]
  $region73: #{pointnet_cls_forward.6} parent=0
    _
  %s11 = ssub.s32 1, %s9
  %s12 = scalar_select 0, %s11, %s9
  loop: start=0, step=1, limit=4
  $region2: #{pointnet_cls_forward.6} parent=0 // loop_pre_header
    _
  $region3: #{pointnet_cls_forward.6} parent=0 // loop_header
    %s14 = sphi 0, %s18
    %p15 = scmp.ge.s32.totalorder %s14, 4
    %s21 = sphi 0, %s33
    %s22 = sphi 0, %s29
    %s23 = sphi 0, %s21
    %s24 = sphi 0, %s22
    %s25 = sphi 0, %s23
    %s26 = sphi 0, %s24
    %s38 = sphi 0, %s40
    %s41 = sphi 0, %s38
    %s42 = sphi 0, %s41
    %s58 = sphi 0, %s42
    %s64 = sphi 0, %s66
    %s67 = sphi 0, %s64
    %s68 = sphi 0, %s67
    %s84 = sphi 0, %s68
    %s88 = sphi 0, %s88
    %s90 = sphi 0, %s88
    %s91 = sphi 0, %s90
    %s105 = sphi 0, %s91
    %s109 = sphi 0, %s109
    %s111 = sphi 0, %s109
    %s112 = sphi 0, %s111
    %s126 = sphi 0, %s112
    %s130 = sphi 0, %s130
    %s132 = sphi 0, %s130
    %s133 = sphi 0, %s132
    %s147 = sphi 0, %s133
    %s151 = sphi 0, %s151
    %s153 = sphi 0, %s151
    %s154 = sphi 0, %s153
    %s168 = sphi 0, %s154
    %s172 = sphi 0, %s172
    %s174 = sphi 0, %s172
    %s175 = sphi 0, %s174
    %s189 = sphi 0, %s175
    %s193 = sphi 0, %s193
    %s195 = sphi 0, %s193
    %s196 = sphi 0, %s195
    %s210 = sphi 0, %s196
    %s216 = sphi 0, %s218
    %s219 = sphi 0, %s216
    %s220 = sphi 0, %s219
    %s236 = sphi 0, %s220
  $region4: #{pointnet_cls_forward.6} parent=0 // loop_header_branch
    %17 = sbr.rel (%p15) target = $region8
  $region5: #{pointnet_cls_forward.6} parent=0 // loop_body
    %s19 = ssub.s32 %s14, 1
    %s20 = ssub.s32 %s14, 2
    %s27 = sadd.s32 1, %s22
    %p28 = scmp.ge.s32.totalorder %s27, 1
    %s29 = scalar_select %p28, 0, %s27
    %s30 = sadd.s32 1, %s21
    %s31 = scalar_select %p28, %s30, %s21
    %p32 = scmp.ge.s32.totalorder %s31, 2
    %s33 = scalar_select %p32, 0, %s31
    %s34 = ssub.s32 %s21, %s33
    %s35 = ssub.s32 %s22, %s29
    %s36 = sor.u32 %s34, %s35
    %p37 = scmp.eq.s32.totalorder %s36, 0
    %s39 = sadd.s32 %s38, 1
    %s40 = scalar_select %p37, %s38, %s39
    %p43 = pneg %p37
    %p44 = scmp.eq.s32.totalorder %s14, 1
    %p45 = por %p43, %p44
    %p46 = scmp.ne.s32.totalorder %s38, %s41
    %p47 = scmp.eq.s32.totalorder %s14, 0
    %p48 = por %p46, %p47
    %p49 = scmp.ne.s32.totalorder %s38, %s41
    %p50 = scmp.eq.s32.totalorder %s19, 1
    %p51 = por %p49, %p50
    %p52 = scmp.ne.s32.totalorder %s41, %s42
    %p53 = scmp.eq.s32.totalorder %s19, 0
    %p54 = por %p52, %p53
    %p55 = scmp.ne.s32.totalorder %s41, %s42
    %p56 = scmp.eq.s32.totalorder %s20, 1
    %p57 = por %p55, %p56
    %p59 = scmp.ne.s32.totalorder %s42, %s58
    %p60 = scmp.eq.s32.totalorder %s20, 0
    %p61 = por %p59, %p60
    %s62 = ssub.s32 %s21, %s33
    %p63 = scmp.eq.s32.totalorder %s62, 0
    %s65 = sadd.s32 %s64, 1
    %s66 = scalar_select %p63, %s64, %s65
    %p69 = pneg %p63
    %p70 = scmp.eq.s32.totalorder %s14, 1
    %p71 = por %p69, %p70
    %p72 = scmp.ne.s32.totalorder %s64, %s67
    %p73 = scmp.eq.s32.totalorder %s14, 0
    %p74 = por %p72, %p73
    %p75 = scmp.ne.s32.totalorder %s64, %s67
    %p76 = scmp.eq.s32.totalorder %s19, 1
    %p77 = por %p75, %p76
    %p78 = scmp.ne.s32.totalorder %s67, %s68
    %p79 = scmp.eq.s32.totalorder %s19, 0
    %p80 = por %p78, %p79
    %p81 = scmp.ne.s32.totalorder %s67, %s68
    %p82 = scmp.eq.s32.totalorder %s20, 1
    %p83 = por %p81, %p82
    %p85 = scmp.ne.s32.totalorder %s68, %s84
    %p86 = scmp.eq.s32.totalorder %s20, 0
    %p87 = por %p85, %p86
    %s89 = sadd.s32 %s88, 1
    %p92 = scmp.eq.s32.totalorder %s14, 1
    %p93 = scmp.ne.s32.totalorder %s88, %s90
    %p94 = scmp.eq.s32.totalorder %s14, 0
    %p95 = por %p93, %p94
    %p96 = scmp.ne.s32.totalorder %s88, %s90
    %p97 = scmp.eq.s32.totalorder %s19, 1
    %p98 = por %p96, %p97
    %p99 = scmp.ne.s32.totalorder %s90, %s91
    %p100 = scmp.eq.s32.totalorder %s19, 0
    %p101 = por %p99, %p100
    %p102 = scmp.ne.s32.totalorder %s90, %s91
    %p103 = scmp.eq.s32.totalorder %s20, 1
    %p104 = por %p102, %p103
    %p106 = scmp.ne.s32.totalorder %s91, %s105
    %p107 = scmp.eq.s32.totalorder %s20, 0
    %p108 = por %p106, %p107
    %s110 = sadd.s32 %s109, 1
    %p113 = scmp.eq.s32.totalorder %s14, 1
    %p114 = scmp.ne.s32.totalorder %s109, %s111
    %p115 = scmp.eq.s32.totalorder %s14, 0
    %p116 = por %p114, %p115
    %p117 = scmp.ne.s32.totalorder %s109, %s111
    %p118 = scmp.eq.s32.totalorder %s19, 1
    %p119 = por %p117, %p118
    %p120 = scmp.ne.s32.totalorder %s111, %s112
    %p121 = scmp.eq.s32.totalorder %s19, 0
    %p122 = por %p120, %p121
    %p123 = scmp.ne.s32.totalorder %s111, %s112
    %p124 = scmp.eq.s32.totalorder %s20, 1
    %p125 = por %p123, %p124
    %p127 = scmp.ne.s32.totalorder %s112, %s126
    %p128 = scmp.eq.s32.totalorder %s20, 0
    %p129 = por %p127, %p128
    %s131 = sadd.s32 %s130, 1
    %p134 = scmp.eq.s32.totalorder %s14, 1
    %p135 = scmp.ne.s32.totalorder %s130, %s132
    %p136 = scmp.eq.s32.totalorder %s14, 0
    %p137 = por %p135, %p136
    %p138 = scmp.ne.s32.totalorder %s130, %s132
    %p139 = scmp.eq.s32.totalorder %s19, 1
    %p140 = por %p138, %p139
    %p141 = scmp.ne.s32.totalorder %s132, %s133
    %p142 = scmp.eq.s32.totalorder %s19, 0
    %p143 = por %p141, %p142
    %p144 = scmp.ne.s32.totalorder %s132, %s133
    %p145 = scmp.eq.s32.totalorder %s20, 1
    %p146 = por %p144, %p145
    %p148 = scmp.ne.s32.totalorder %s133, %s147
    %p149 = scmp.eq.s32.totalorder %s20, 0
    %p150 = por %p148, %p149
    %s152 = sadd.s32 %s151, 1
    %p155 = scmp.eq.s32.totalorder %s14, 1
    %p156 = scmp.ne.s32.totalorder %s151, %s153
    %p157 = scmp.eq.s32.totalorder %s14, 0
    %p158 = por %p156, %p157
    %p159 = scmp.ne.s32.totalorder %s151, %s153
    %p160 = scmp.eq.s32.totalorder %s19, 1
    %p161 = por %p159, %p160
    %p162 = scmp.ne.s32.totalorder %s153, %s154
    %p163 = scmp.eq.s32.totalorder %s19, 0
    %p164 = por %p162, %p163
    %p165 = scmp.ne.s32.totalorder %s153, %s154
    %p166 = scmp.eq.s32.totalorder %s20, 1
    %p167 = por %p165, %p166
    %p169 = scmp.ne.s32.totalorder %s154, %s168
    %p170 = scmp.eq.s32.totalorder %s20, 0
    %p171 = por %p169, %p170
    %s173 = sadd.s32 %s172, 1
    %p176 = scmp.eq.s32.totalorder %s14, 1
    %p177 = scmp.ne.s32.totalorder %s172, %s174
    %p178 = scmp.eq.s32.totalorder %s14, 0
    %p179 = por %p177, %p178
    %p180 = scmp.ne.s32.totalorder %s172, %s174
    %p181 = scmp.eq.s32.totalorder %s19, 1
    %p182 = por %p180, %p181
    %p183 = scmp.ne.s32.totalorder %s174, %s175
    %p184 = scmp.eq.s32.totalorder %s19, 0
    %p185 = por %p183, %p184
    %p186 = scmp.ne.s32.totalorder %s174, %s175
    %p187 = scmp.eq.s32.totalorder %s20, 1
    %p188 = por %p186, %p187
    %p190 = scmp.ne.s32.totalorder %s175, %s189
    %p191 = scmp.eq.s32.totalorder %s20, 0
    %p192 = por %p190, %p191
    %s194 = sadd.s32 %s193, 1
    %p197 = scmp.eq.s32.totalorder %s14, 1
    %p198 = scmp.ne.s32.totalorder %s193, %s195
    %p199 = scmp.eq.s32.totalorder %s14, 0
    %p200 = por %p198, %p199
    %p201 = scmp.ne.s32.totalorder %s193, %s195
    %p202 = scmp.eq.s32.totalorder %s19, 1
    %p203 = por %p201, %p202
    %p204 = scmp.ne.s32.totalorder %s195, %s196
    %p205 = scmp.eq.s32.totalorder %s19, 0
    %p206 = por %p204, %p205
    %p207 = scmp.ne.s32.totalorder %s195, %s196
    %p208 = scmp.eq.s32.totalorder %s20, 1
    %p209 = por %p207, %p208
    %p211 = scmp.ne.s32.totalorder %s196, %s210
    %p212 = scmp.eq.s32.totalorder %s20, 0
    %p213 = por %p211, %p212
    %s214 = ssub.s32 %s21, %s33
    %p215 = scmp.eq.s32.totalorder %s214, 0
    %s217 = sadd.s32 %s216, 1
    %s218 = scalar_select %p215, %s216, %s217
    %p221 = pneg %p215
    %p222 = scmp.eq.s32.totalorder %s14, 1
    %p223 = por %p221, %p222
    %p224 = scmp.ne.s32.totalorder %s216, %s219
    %p225 = scmp.eq.s32.totalorder %s14, 0
    %p226 = por %p224, %p225
    %p227 = scmp.ne.s32.totalorder %s216, %s219
    %p228 = scmp.eq.s32.totalorder %s19, 1
    %p229 = por %p227, %p228
    %p230 = scmp.ne.s32.totalorder %s219, %s220
    %p231 = scmp.eq.s32.totalorder %s19, 0
    %p232 = por %p230, %p231
    %p233 = scmp.ne.s32.totalorder %s219, %s220
    %p234 = scmp.eq.s32.totalorder %s20, 1
    %p235 = por %p233, %p234
    %p237 = scmp.ne.s32.totalorder %s220, %s236
    %p238 = scmp.eq.s32.totalorder %s20, 0
    %p239 = por %p237, %p238
    %p240 = scmp.le.s32.totalorder 1, %s14
    %p241 = scmp.lt.s32.totalorder %s14, 3
    %p242 = pnand %p240, %p241
    %p243 = pneg %p242
    // Predicated region
    $region9: #{pointnet_cls_forward.6} parent=5 // pred_check
      _
    $region10: #{pointnet_cls_forward.6} parent=5 // pred_check_branch
      %245 = sbr.rel (%p242) target = $region12
    $region11: #{pointnet_cls_forward.6} parent=5 // pred_region
      %s246 = ssub.s32 %s14, 1
      // Predicated region
      $region13: #{pointnet_cls_forward.6} parent=11 // pred_check
        %p247 = pneg %p101
      $region14: #{pointnet_cls_forward.6} parent=11 // pred_check_branch
        %249 = sbr.rel (%p247) target = $region16
      $region15: #{pointnet_cls_forward.6} parent=11 // pred_region
        _
      $region16: #{pointnet_cls_forward.6} parent=11 // pred_fallthru
        _
      // Predicated region
      $region17: #{pointnet_cls_forward.6} parent=11 // pred_check
        %p250 = pneg %p122
      $region18: #{pointnet_cls_forward.6} parent=11 // pred_check_branch
        %252 = sbr.rel (%p250) target = $region20
      $region19: #{pointnet_cls_forward.6} parent=11 // pred_region
        _
      $region20: #{pointnet_cls_forward.6} parent=11 // pred_fallthru
        _
      // Predicated region
      $region21: #{pointnet_cls_forward.6} parent=11 // pred_check
        %p253 = pneg %p143
      $region22: #{pointnet_cls_forward.6} parent=11 // pred_check_branch
        %255 = sbr.rel (%p253) target = $region24
      $region23: #{pointnet_cls_forward.6} parent=11 // pred_region
        _
      $region24: #{pointnet_cls_forward.6} parent=11 // pred_fallthru
        _
      // Predicated region
      $region25: #{pointnet_cls_forward.6} parent=11 // pred_check
        %p256 = pneg %p164
      $region26: #{pointnet_cls_forward.6} parent=11 // pred_check_branch
        %258 = sbr.rel (%p256) target = $region28
      $region27: #{pointnet_cls_forward.6} parent=11 // pred_region
        _
      $region28: #{pointnet_cls_forward.6} parent=11 // pred_fallthru
        _
      // Predicated region
      $region29: #{pointnet_cls_forward.6} parent=11 // pred_check
        %p259 = pneg %p185
      $region30: #{pointnet_cls_forward.6} parent=11 // pred_check_branch
        %261 = sbr.rel (%p259) target = $region32
      $region31: #{pointnet_cls_forward.6} parent=11 // pred_region
        _
      $region32: #{pointnet_cls_forward.6} parent=11 // pred_fallthru
        _
      // Predicated region
      $region33: #{pointnet_cls_forward.6} parent=11 // pred_check
        %p262 = pneg %p206
      $region34: #{pointnet_cls_forward.6} parent=11 // pred_check_branch
        %264 = sbr.rel (%p262) target = $region36
      $region35: #{pointnet_cls_forward.6} parent=11 // pred_region
        _
      $region36: #{pointnet_cls_forward.6} parent=11 // pred_fallthru
        _
    $region12: #{pointnet_cls_forward.6} parent=5 // pred_fallthru
      _
    %p265 = scmp.lt.s32.totalorder %s14, 2
    // Predicated region
    $region37: #{pointnet_cls_forward.6} parent=5 // pred_check
      %p266 = pneg %p265
    $region38: #{pointnet_cls_forward.6} parent=5 // pred_check_branch
      %268 = sbr.rel (%p266) target = $region40
    $region39: #{pointnet_cls_forward.6} parent=5 // pred_region
      // Predicated region
      $region41: #{pointnet_cls_forward.6} parent=39 // pred_check
        %p269 = pneg %p48
      $region42: #{pointnet_cls_forward.6} parent=39 // pred_check_branch
        %271 = sbr.rel (%p269) target = $region44
      $region43: #{pointnet_cls_forward.6} parent=39 // pred_region
        %s272 = smul.u32 2, %s22
        %p273 = scmp.lt.s32.totalorder %s21, 1
        %s274 = scalar_select %p273, %s21, 1
        %p275 = scmp.lt.s32.totalorder %s272, 1
        %s276 = scalar_select %p275, %s272, 1
        %s277 = smul.addr %s274, 2
        %s278 = sadd.s32 %s276, %s277
        %s279 = smul.addr %s278, 8
        %s280 = scalar_lea.vmem %s0, %s279
        %s281 = smul.u32 2, %s22
      $region44: #{pointnet_cls_forward.6} parent=39 // pred_fallthru
        _
      // Predicated region
      $region45: #{pointnet_cls_forward.6} parent=39 // pred_check
        %p282 = pneg %p74
      $region46: #{pointnet_cls_forward.6} parent=39 // pred_check_branch
        %284 = sbr.rel (%p282) target = $region48
      $region47: #{pointnet_cls_forward.6} parent=39 // pred_region
        %p285 = scmp.lt.s32.totalorder %s21, 1
        %s286 = scalar_select %p285, %s21, 1
        %s287 = smul.addr %s286, 4
        %s288 = scalar_lea.vmem %s1, %s287
      $region48: #{pointnet_cls_forward.6} parent=39 // pred_fallthru
        _
    $region40: #{pointnet_cls_forward.6} parent=5 // pred_fallthru
      _
    %p289 = scmp.le.s32.totalorder 1, %s14
    %p290 = scmp.lt.s32.totalorder %s14, 3
    %p291 = pnand %p289, %p290
    %p292 = pneg %p291
    // Predicated region
    $region49: #{pointnet_cls_forward.6} parent=5 // pred_check
      _
    $region50: #{pointnet_cls_forward.6} parent=5 // pred_check_branch
      %294 = sbr.rel (%p291) target = $region52
    $region51: #{pointnet_cls_forward.6} parent=5 // pred_region
      %s295 = ssub.s32 %s14, 1
      %s296 = smul.u32 2, %s24
      %p297 = scmp.lt.s32.totalorder %s23, 1
      %s298 = scalar_select %p297, %s23, 1
      %p299 = scmp.lt.s32.totalorder %s296, 1
      %s300 = scalar_select %p299, %s296, 1
      %s301 = smul.addr %s298, 2
      %s302 = sadd.s32 %s300, %s301
      %s303 = smul.addr %s302, 8
      %s304 = scalar_lea.vmem %s0, %s303
      %p305 = pneg %p54
      %p306 = pneg %p51
      %p307 = scmp.lt.s32.totalorder %s23, 1
      %s308 = scalar_select %p307, %s23, 1
      %s309 = smul.addr %s308, 4
      %s310 = scalar_lea.vmem %s1, %s309
      %p311 = pneg %p80
      %p312 = pneg %p77
      %p313 = pneg %p101
      %p314 = pneg %p98
      %p315 = pneg %p122
      %p316 = pneg %p119
      %p317 = pneg %p143
      %p318 = pneg %p140
      %p319 = pneg %p164
      %p320 = pneg %p161
      %p321 = pneg %p185
      %p322 = pneg %p182
      %p323 = pneg %p206
      %p324 = pneg %p203
      %p325 = pneg %p232
      %p326 = pneg %p229
      %p327 = scmp.lt.s32.totalorder %s23, 1
      %s328 = scalar_select %p327, %s23, 1
      %s329 = smul.addr %s328, 8
      %s330 = scalar_lea.vmem %s8, %s329
      %s331 = smul.u32 2, %s24
      %p332 = scmp.lt.s32.totalorder %s23, 1
      %s333 = scalar_select %p332, %s23, 1
      %p334 = scmp.lt.s32.totalorder %s331, 1
      %s335 = scalar_select %p334, %s331, 1
      %s336 = smul.addr %s333, 2
      %s337 = sadd.s32 %s335, %s336
      %s338 = smul.addr %s337, 8
      %s339 = scalar_lea.vmem %s0, %s338
      %s340 = smul.u32 2, %s24
      %p341 = scmp.lt.s32.totalorder %s23, 1
      %s342 = scalar_select %p341, %s23, 1
      %s343 = smul.addr %s342, 4
      %s344 = scalar_lea.vmem %s1, %s343
      %p345 = scmp.lt.s32.totalorder %s23, 1
      %s346 = scalar_select %p345, %s23, 1
      %s347 = smul.addr %s346, 8
      %s348 = scalar_lea.vmem %s8, %s347
      %p350 = scmp.eq.s32.totalorder %s24, 0
      // Predicated region
      $region53: #{pointnet_cls_forward.6} parent=51 // pred_check
        %p351 = pneg %p350
      $region54: #{pointnet_cls_forward.6} parent=51 // pred_check_branch
        %353 = sbr.rel (%p351) target = $region56
      $region55: #{pointnet_cls_forward.6} parent=51 // pred_region
        %354 = vst [vmem:[%s348] sm:$0xff] -inf
      $region56: #{pointnet_cls_forward.6} parent=51 // pred_fallthru
        _
      %v355 = vld [vmem:[%s339] sm:$0xff]
      %v356 = vld [vmem:[%s339 + $0x8] sm:$0xff]
      %v357 = vld [vmem:[%s344] sm:$0x7]
      %359 = vset.pattern.permute.xlu0 0
      %360 = vperm.xlu0 %359, %v355
      %v361 = vpop.permute.xlu0 %360
      %364 = vset.pattern.permute.xlu0 0
      %365 = vperm.xlu0 %364, %v356
      %v366 = vpop.permute.xlu0 %365
      %v368 = vperm.slane %v357, 0
      %v369 = vmul.f32 %v361, %v368
      %v370 = vmul.f32 %v366, %v368
      %371 = vset.pattern.permute.xlu0 1
      %372 = vperm.xlu0 %371, %v355
      %v373 = vpop.permute.xlu0 %372
      %375 = vset.pattern.permute.xlu0 1
      %376 = vperm.xlu0 %375, %v356
      %v377 = vpop.permute.xlu0 %376
      %v379 = vperm.slane %v357, 1
      %v380 = vmul.f32 %v373, %v379
      %v381 = vmul.f32 %v377, %v379
      %v382 = vadd.f32 %v369, %v380
      %v383 = vadd.f32 %v370, %v381
      %384 = vset.pattern.permute.xlu0 2
      %385 = vperm.xlu0 %384, %v355
      %v386 = vpop.permute.xlu0 %385
      %388 = vset.pattern.permute.xlu0 2
      %389 = vperm.xlu0 %388, %v356
      %v390 = vpop.permute.xlu0 %389
      %v392 = vperm.slane %v357, 2
      %v393 = vmul.f32 %v386, %v392
      %v394 = vmul.f32 %v390, %v392
      %v395 = vadd.f32 %v382, %v393
      %v396 = vadd.f32 %v383, %v394
      %v397 = vld [vmem:[%s2] sm:$0x7]
      %399 = vset.pattern.permute.xlu0 0
      %400 = vperm.xlu0 %399, %v395
      %v401 = vpop.permute.xlu0 %400
      %404 = vset.pattern.permute.xlu0 0
      %405 = vperm.xlu0 %404, %v396
      %v406 = vpop.permute.xlu0 %405
      %v408 = vperm.slane %v397, 0
      %v409 = vmul.f32 %v401, %v408
      %v410 = vmul.f32 %v406, %v408
      %411 = vset.pattern.permute.xlu0 1
      %412 = vperm.xlu0 %411, %v395
      %v413 = vpop.permute.xlu0 %412
      %415 = vset.pattern.permute.xlu0 1
      %416 = vperm.xlu0 %415, %v396
      %v417 = vpop.permute.xlu0 %416
      %v419 = vperm.slane %v397, 1
      %v420 = vmul.f32 %v413, %v419
      %v421 = vmul.f32 %v417, %v419
      %v422 = vadd.f32 %v409, %v420
      %v423 = vadd.f32 %v410, %v421
      %424 = vset.pattern.permute.xlu0 2
      %425 = vperm.xlu0 %424, %v395
      %v426 = vpop.permute.xlu0 %425
      %428 = vset.pattern.permute.xlu0 2
      %429 = vperm.xlu0 %428, %v396
      %v430 = vpop.permute.xlu0 %429
      %v432 = vperm.slane %v397, 2
      %v433 = vmul.f32 %v426, %v432
      %v434 = vmul.f32 %v430, %v432
      %v435 = vadd.f32 %v422, %v433
      %v436 = vadd.f32 %v423, %v434
      %v437 = vld [vmem:[%s3] sm:$0x1]
      %v439 = vperm.slane %v437, 0
      %v441 = vadd.f32 %v435, %v439
      %v442 = vadd.f32 %v436, %v439
      %v443 = vmax.f32 %v441, 0.0
      %v444 = vmax.f32 %v442, 0.0
      %v445 = vpack.c.bf16 %v444, %v443
      %v446 = vld [vmem:[%s4] sm:$0xf]
      %v447 = vld [vmem:[%s4 + $0x4] sm:$0xf]
      %v448 = vld [vmem:[%s4 + $0x8] sm:$0xf]
      %v449 = vld [vmem:[%s4 + $0xc] sm:$0xf]
      %v450 = vld [vmem:[%s4 + $0x10] sm:$0xf]
      %v451 = vld [vmem:[%s4 + $0x14] sm:$0xf]
      %v452 = vld [vmem:[%s4 + $0x18] sm:$0xf]
      %v453 = vld [vmem:[%s4 + $0x1c] sm:$0xf]
      %v454 = vld [vmem:[%s5] sm:$0x1]
      %v456 = vperm.slane %v454, 0
      %v466 = vunpack.c.l.b16 %v446
      %v467 = vunpack.c.l.b16 %v447
      %v468 = vunpack.c.l.b16 %v448
      %v469 = vunpack.c.l.b16 %v449
      %v470 = vunpack.c.l.b16 %v450
      %v471 = vunpack.c.l.b16 %v451
      %v472 = vunpack.c.l.b16 %v452
      %v473 = vunpack.c.l.b16 %v453
      %v474 = vpack.c.b16 %v467, %v466
      %v475 = vpack.c.b16 %v469, %v468
      %v476 = vpack.c.b16 %v471, %v470
      %v477 = vpack.c.b16 %v473, %v472
      %vm482 = vcmask 523264
      %v484 = vsel %vm482, %v445, 0
      %486 = vmatpush.bf16.msra.mxu0 0
      %487 = vmatpush.bf16.msra.mxu0 0
      %488 = vmatpush.bf16.msra.mxu0 0
      %489 = vmatpush.bf16.msra.mxu0 0
      %490 = vmatpush.bf16.msra.mxu0 %v477
      %491 = vmatpush.bf16.msra.mxu0 %v476
      %492 = vmatpush.bf16.msra.mxu0 %v475
      %493 = vmatpush.bf16.msra.mxu0 %v474
      %494 = vmatmul.bf16.gmra.mxu0 %v484
      %v495 = vpop.f32.mrf.mxu0
      %v496 = vadd.f32 %v456, %v495
      %v497 = vpop.f32.mrf.mxu0
      %v498 = vadd.f32 %v456, %v497
      %499 = vdwg.mxu0
      %v500 = vmax.f32 %v496, 0.0
      %v501 = vmax.f32 %v498, 0.0
      %v502 = vpack.c.bf16 %v501, %v500
      %v503 = vld [vmem:[%s6] sm:$0xff]
      %v504 = vld [vmem:[%s6 + $0x8] sm:$0xff]
      %v505 = vld [vmem:[%s6 + $0x10] sm:$0xff]
      %v506 = vld [vmem:[%s6 + $0x18] sm:$0xff]
      %v507 = vld [vmem:[%s6 + $0x20] sm:$0xff]
      %v508 = vld [vmem:[%s6 + $0x28] sm:$0xff]
      %v509 = vld [vmem:[%s6 + $0x30] sm:$0xff]
      %v510 = vld [vmem:[%s6 + $0x38] sm:$0xff]
      %v511 = vld [vmem:[%s6 + $0x40] sm:$0xff]
      %v512 = vld [vmem:[%s6 + $0x48] sm:$0xff]
      %v513 = vld [vmem:[%s6 + $0x50] sm:$0xff]
      %v514 = vld [vmem:[%s6 + $0x58] sm:$0xff]
      %v515 = vld [vmem:[%s6 + $0x60] sm:$0xff]
      %v516 = vld [vmem:[%s6 + $0x68] sm:$0xff]
      %v517 = vld [vmem:[%s6 + $0x70] sm:$0xff]
      %v518 = vld [vmem:[%s6 + $0x78] sm:$0xff]
      %v519 = vld [vmem:[%s6 + $0x80] sm:$0xff]
      %v520 = vld [vmem:[%s6 + $0x88] sm:$0xff]
      %v521 = vld [vmem:[%s6 + $0x90] sm:$0xff]
      %v522 = vld [vmem:[%s6 + $0x98] sm:$0xff]
      %v523 = vld [vmem:[%s6 + $0xa0] sm:$0xff]
      %v524 = vld [vmem:[%s6 + $0xa8] sm:$0xff]
      %v525 = vld [vmem:[%s6 + $0xb0] sm:$0xff]
      %v526 = vld [vmem:[%s6 + $0xb8] sm:$0xff]
      %v527 = vld [vmem:[%s6 + $0xc0] sm:$0xff]
      %v528 = vld [vmem:[%s6 + $0xc8] sm:$0xff]
      %v529 = vld [vmem:[%s6 + $0xd0] sm:$0xff]
      %v530 = vld [vmem:[%s6 + $0xd8] sm:$0xff]
      %v531 = vld [vmem:[%s6 + $0xe0] sm:$0xff]
      %v532 = vld [vmem:[%s6 + $0xe8] sm:$0xff]
      %v533 = vld [vmem:[%s6 + $0xf0] sm:$0xff]
      %v534 = vld [vmem:[%s6 + $0xf8] sm:$0xff]
      %v535 = vld [vmem:[%s6 + $0x100] sm:$0xff]
      %v536 = vld [vmem:[%s6 + $0x108] sm:$0xff]
      %v537 = vld [vmem:[%s6 + $0x110] sm:$0xff]
      %v538 = vld [vmem:[%s6 + $0x118] sm:$0xff]
      %v539 = vld [vmem:[%s6 + $0x120] sm:$0xff]
      %v540 = vld [vmem:[%s6 + $0x128] sm:$0xff]
      %v541 = vld [vmem:[%s6 + $0x130] sm:$0xff]
      %v542 = vld [vmem:[%s6 + $0x138] sm:$0xff]
      %v543 = vld [vmem:[%s6 + $0x140] sm:$0xff]
      %v544 = vld [vmem:[%s6 + $0x148] sm:$0xff]
      %v545 = vld [vmem:[%s6 + $0x150] sm:$0xff]
      %v546 = vld [vmem:[%s6 + $0x158] sm:$0xff]
      %v547 = vld [vmem:[%s6 + $0x160] sm:$0xff]
      %v548 = vld [vmem:[%s6 + $0x168] sm:$0xff]
      %v549 = vld [vmem:[%s6 + $0x170] sm:$0xff]
      %v550 = vld [vmem:[%s6 + $0x178] sm:$0xff]
      %v551 = vld [vmem:[%s6 + $0x180] sm:$0xff]
      %v552 = vld [vmem:[%s6 + $0x188] sm:$0xff]
      %v553 = vld [vmem:[%s6 + $0x190] sm:$0xff]
      %v554 = vld [vmem:[%s6 + $0x198] sm:$0xff]
      %v555 = vld [vmem:[%s6 + $0x1a0] sm:$0xff]
      %v556 = vld [vmem:[%s6 + $0x1a8] sm:$0xff]
      %v557 = vld [vmem:[%s6 + $0x1b0] sm:$0xff]
      %v558 = vld [vmem:[%s6 + $0x1b8] sm:$0xff]
      %v559 = vld [vmem:[%s6 + $0x1c0] sm:$0xff]
      %v560 = vld [vmem:[%s6 + $0x1c8] sm:$0xff]
      %v561 = vld [vmem:[%s6 + $0x1d0] sm:$0xff]
      %v562 = vld [vmem:[%s6 + $0x1d8] sm:$0xff]
      %v563 = vld [vmem:[%s6 + $0x1e0] sm:$0xff]
      %v564 = vld [vmem:[%s6 + $0x1e8] sm:$0xff]
      %v565 = vld [vmem:[%s6 + $0x1f0] sm:$0xff]
      %v566 = vld [vmem:[%s6 + $0x1f8] sm:$0xff]
      %v631 = vunpack.c.l.b16 %v503
      %v632 = vunpack.c.h.b16 %v503
      %v633 = vunpack.c.l.b16 %v504
      %v634 = vunpack.c.h.b16 %v504
      %v635 = vunpack.c.l.b16 %v505
      %v636 = vunpack.c.h.b16 %v505
      %v637 = vunpack.c.l.b16 %v506
      %v638 = vunpack.c.h.b16 %v506
      %v639 = vunpack.c.l.b16 %v507
      %v640 = vunpack.c.h.b16 %v507
      %v641 = vunpack.c.l.b16 %v508
      %v642 = vunpack.c.h.b16 %v508
      %v643 = vunpack.c.l.b16 %v509
      %v644 = vunpack.c.h.b16 %v509
      %v645 = vunpack.c.l.b16 %v510
      %v646 = vunpack.c.h.b16 %v510
      %v647 = vunpack.c.l.b16 %v511
      %v648 = vunpack.c.h.b16 %v511
      %v649 = vunpack.c.l.b16 %v512
      %v650 = vunpack.c.h.b16 %v512
      %v651 = vunpack.c.l.b16 %v513
      %v652 = vunpack.c.h.b16 %v513
      %v653 = vunpack.c.l.b16 %v514
      %v654 = vunpack.c.h.b16 %v514
      %v655 = vunpack.c.l.b16 %v515
      %v656 = vunpack.c.h.b16 %v515
      %v657 = vunpack.c.l.b16 %v516
      %v658 = vunpack.c.h.b16 %v516
      %v659 = vunpack.c.l.b16 %v517
      %v660 = vunpack.c.h.b16 %v517
      %v661 = vunpack.c.l.b16 %v518
      %v662 = vunpack.c.h.b16 %v518
      %v663 = vunpack.c.l.b16 %v519
      %v664 = vunpack.c.h.b16 %v519
      %v665 = vunpack.c.l.b16 %v520
      %v666 = vunpack.c.h.b16 %v520
      %v667 = vunpack.c.l.b16 %v521
      %v668 = vunpack.c.h.b16 %v521
      %v669 = vunpack.c.l.b16 %v522
      %v670 = vunpack.c.h.b16 %v522
      %v671 = vunpack.c.l.b16 %v523
      %v672 = vunpack.c.h.b16 %v523
      %v673 = vunpack.c.l.b16 %v524
      %v674 = vunpack.c.h.b16 %v524
      %v675 = vunpack.c.l.b16 %v525
      %v676 = vunpack.c.h.b16 %v525
      %v677 = vunpack.c.l.b16 %v526
      %v678 = vunpack.c.h.b16 %v526
      %v679 = vunpack.c.l.b16 %v527
      %v680 = vunpack.c.h.b16 %v527
      %v681 = vunpack.c.l.b16 %v528
      %v682 = vunpack.c.h.b16 %v528
      %v683 = vunpack.c.l.b16 %v529
      %v684 = vunpack.c.h.b16 %v529
      %v685 = vunpack.c.l.b16 %v530
      %v686 = vunpack.c.h.b16 %v530
      %v687 = vunpack.c.l.b16 %v531
      %v688 = vunpack.c.h.b16 %v531
      %v689 = vunpack.c.l.b16 %v532
      %v690 = vunpack.c.h.b16 %v532
      %v691 = vunpack.c.l.b16 %v533
      %v692 = vunpack.c.h.b16 %v533
      %v693 = vunpack.c.l.b16 %v534
      %v694 = vunpack.c.h.b16 %v534
      %v695 = vunpack.c.l.b16 %v535
      %v696 = vunpack.c.h.b16 %v535
      %v697 = vunpack.c.l.b16 %v536
      %v698 = vunpack.c.h.b16 %v536
      %v699 = vunpack.c.l.b16 %v537
      %v700 = vunpack.c.h.b16 %v537
      %v701 = vunpack.c.l.b16 %v538
      %v702 = vunpack.c.h.b16 %v538
      %v703 = vunpack.c.l.b16 %v539
      %v704 = vunpack.c.h.b16 %v539
      %v705 = vunpack.c.l.b16 %v540
      %v706 = vunpack.c.h.b16 %v540
      %v707 = vunpack.c.l.b16 %v541
      %v708 = vunpack.c.h.b16 %v541
      %v709 = vunpack.c.l.b16 %v542
      %v710 = vunpack.c.h.b16 %v542
      %v711 = vunpack.c.l.b16 %v543
      %v712 = vunpack.c.h.b16 %v543
      %v713 = vunpack.c.l.b16 %v544
      %v714 = vunpack.c.h.b16 %v544
      %v715 = vunpack.c.l.b16 %v545
      %v716 = vunpack.c.h.b16 %v545
      %v717 = vunpack.c.l.b16 %v546
      %v718 = vunpack.c.h.b16 %v546
      %v719 = vunpack.c.l.b16 %v547
      %v720 = vunpack.c.h.b16 %v547
      %v721 = vunpack.c.l.b16 %v548
      %v722 = vunpack.c.h.b16 %v548
      %v723 = vunpack.c.l.b16 %v549
      %v724 = vunpack.c.h.b16 %v549
      %v725 = vunpack.c.l.b16 %v550
      %v726 = vunpack.c.h.b16 %v550
      %v727 = vunpack.c.l.b16 %v551
      %v728 = vunpack.c.h.b16 %v551
      %v729 = vunpack.c.l.b16 %v552
      %v730 = vunpack.c.h.b16 %v552
      %v731 = vunpack.c.l.b16 %v553
      %v732 = vunpack.c.h.b16 %v553
      %v733 = vunpack.c.l.b16 %v554
      %v734 = vunpack.c.h.b16 %v554
      %v735 = vunpack.c.l.b16 %v555
      %v736 = vunpack.c.h.b16 %v555
      %v737 = vunpack.c.l.b16 %v556
      %v738 = vunpack.c.h.b16 %v556
      %v739 = vunpack.c.l.b16 %v557
      %v740 = vunpack.c.h.b16 %v557
      %v741 = vunpack.c.l.b16 %v558
      %v742 = vunpack.c.h.b16 %v558
      %v743 = vunpack.c.l.b16 %v559
      %v744 = vunpack.c.h.b16 %v559
      %v745 = vunpack.c.l.b16 %v560
      %v746 = vunpack.c.h.b16 %v560
      %v747 = vunpack.c.l.b16 %v561
      %v748 = vunpack.c.h.b16 %v561
      %v749 = vunpack.c.l.b16 %v562
      %v750 = vunpack.c.h.b16 %v562
      %v751 = vunpack.c.l.b16 %v563
      %v752 = vunpack.c.h.b16 %v563
      %v753 = vunpack.c.l.b16 %v564
      %v754 = vunpack.c.h.b16 %v564
      %v755 = vunpack.c.l.b16 %v565
      %v756 = vunpack.c.h.b16 %v565
      %v757 = vunpack.c.l.b16 %v566
      %v758 = vunpack.c.h.b16 %v566
      %v759 = vpack.c.b16 %v639, %v631
      %v760 = vpack.c.b16 %v640, %v632
      %v761 = vpack.c.b16 %v641, %v633
      %v762 = vpack.c.b16 %v642, %v634
      %v763 = vpack.c.b16 %v643, %v635
      %v764 = vpack.c.b16 %v644, %v636
      %v765 = vpack.c.b16 %v645, %v637
      %v766 = vpack.c.b16 %v646, %v638
      %v767 = vpack.c.b16 %v655, %v647
      %v768 = vpack.c.b16 %v656, %v648
      %v769 = vpack.c.b16 %v657, %v649
      %v770 = vpack.c.b16 %v658, %v650
      %v771 = vpack.c.b16 %v659, %v651
      %v772 = vpack.c.b16 %v660, %v652
      %v773 = vpack.c.b16 %v661, %v653
      %v774 = vpack.c.b16 %v662, %v654
      %v775 = vpack.c.b16 %v671, %v663
      %v776 = vpack.c.b16 %v672, %v664
      %v777 = vpack.c.b16 %v673, %v665
      %v778 = vpack.c.b16 %v674, %v666
      %v779 = vpack.c.b16 %v675, %v667
      %v780 = vpack.c.b16 %v676, %v668
      %v781 = vpack.c.b16 %v677, %v669
      %v782 = vpack.c.b16 %v678, %v670
      %v783 = vpack.c.b16 %v687, %v679
      %v784 = vpack.c.b16 %v688, %v680
      %v785 = vpack.c.b16 %v689, %v681
      %v786 = vpack.c.b16 %v690, %v682
      %v787 = vpack.c.b16 %v691, %v683
      %v788 = vpack.c.b16 %v692, %v684
      %v789 = vpack.c.b16 %v693, %v685
      %v790 = vpack.c.b16 %v694, %v686
      %v791 = vpack.c.b16 %v703, %v695
      %v792 = vpack.c.b16 %v704, %v696
      %v793 = vpack.c.b16 %v705, %v697
      %v794 = vpack.c.b16 %v706, %v698
      %v795 = vpack.c.b16 %v707, %v699
      %v796 = vpack.c.b16 %v708, %v700
      %v797 = vpack.c.b16 %v709, %v701
      %v798 = vpack.c.b16 %v710, %v702
      %v799 = vpack.c.b16 %v719, %v711
      %v800 = vpack.c.b16 %v720, %v712
      %v801 = vpack.c.b16 %v721, %v713
      %v802 = vpack.c.b16 %v722, %v714
      %v803 = vpack.c.b16 %v723, %v715
      %v804 = vpack.c.b16 %v724, %v716
      %v805 = vpack.c.b16 %v725, %v717
      %v806 = vpack.c.b16 %v726, %v718
      %v807 = vpack.c.b16 %v735, %v727
      %v808 = vpack.c.b16 %v736, %v728
      %v809 = vpack.c.b16 %v737, %v729
      %v810 = vpack.c.b16 %v738, %v730
      %v811 = vpack.c.b16 %v739, %v731
      %v812 = vpack.c.b16 %v740, %v732
      %v813 = vpack.c.b16 %v741, %v733
      %v814 = vpack.c.b16 %v742, %v734
      %v815 = vpack.c.b16 %v751, %v743
      %v816 = vpack.c.b16 %v752, %v744
      %v817 = vpack.c.b16 %v753, %v745
      %v818 = vpack.c.b16 %v754, %v746
      %v819 = vpack.c.b16 %v755, %v747
      %v820 = vpack.c.b16 %v756, %v748
      %v821 = vpack.c.b16 %v757, %v749
      %v822 = vpack.c.b16 %v758, %v750
      %887 = vmatpush.bf16.msra.mxu0 %v815
      %888 = vmatpush.bf16.msra.mxu0 %v807
      %889 = vmatpush.bf16.msra.mxu0 %v799
      %890 = vmatpush.bf16.msra.mxu0 %v791
      %891 = vmatpush.bf16.msra.mxu0 %v783
      %892 = vmatpush.bf16.msra.mxu0 %v775
      %893 = vmatpush.bf16.msra.mxu0 %v767
      %894 = vmatpush.bf16.msra.mxu0 %v759
      %895 = vmatmul.bf16.gmra.mxu0 %v502
      %v896 = vpop.f32.mrf.mxu0
      %v897 = vadd.f32 0.0, %v896
      %v898 = vpop.f32.mrf.mxu0
      %v899 = vadd.f32 0.0, %v898
      %900 = vdwg.mxu0
      %901 = vmatpush.bf16.msra.mxu0 %v816
      %902 = vmatpush.bf16.msra.mxu0 %v808
      %903 = vmatpush.bf16.msra.mxu0 %v800
      %904 = vmatpush.bf16.msra.mxu0 %v792
      %905 = vmatpush.bf16.msra.mxu0 %v784
      %906 = vmatpush.bf16.msra.mxu0 %v776
      %907 = vmatpush.bf16.msra.mxu0 %v768
      %908 = vmatpush.bf16.msra.mxu0 %v760
      %909 = vmatmul.bf16.gmra.mxu0 %v502
      %v910 = vpop.f32.mrf.mxu0
      %v911 = vadd.f32 0.0, %v910
      %v912 = vpop.f32.mrf.mxu0
      %v913 = vadd.f32 0.0, %v912
      %914 = vdwg.mxu0
      %915 = vmatpush.bf16.msra.mxu0 %v817
      %916 = vmatpush.bf16.msra.mxu0 %v809
      %917 = vmatpush.bf16.msra.mxu0 %v801
      %918 = vmatpush.bf16.msra.mxu0 %v793
      %919 = vmatpush.bf16.msra.mxu0 %v785
      %920 = vmatpush.bf16.msra.mxu0 %v777
      %921 = vmatpush.bf16.msra.mxu0 %v769
      %922 = vmatpush.bf16.msra.mxu0 %v761
      %923 = vmatmul.bf16.gmra.mxu0 %v502
      %v924 = vpop.f32.mrf.mxu0
      %v925 = vadd.f32 0.0, %v924
      %v926 = vpop.f32.mrf.mxu0
      %v927 = vadd.f32 0.0, %v926
      %928 = vdwg.mxu0
      %929 = vmatpush.bf16.msra.mxu0 %v818
      %930 = vmatpush.bf16.msra.mxu0 %v810
      %931 = vmatpush.bf16.msra.mxu0 %v802
      %932 = vmatpush.bf16.msra.mxu0 %v794
      %933 = vmatpush.bf16.msra.mxu0 %v786
      %934 = vmatpush.bf16.msra.mxu0 %v778
      %935 = vmatpush.bf16.msra.mxu0 %v770
      %936 = vmatpush.bf16.msra.mxu0 %v762
      %937 = vmatmul.bf16.gmra.mxu0 %v502
      %v938 = vpop.f32.mrf.mxu0
      %v939 = vadd.f32 0.0, %v938
      %v940 = vpop.f32.mrf.mxu0
      %v941 = vadd.f32 0.0, %v940
      %942 = vdwg.mxu0
      %943 = vmatpush.bf16.msra.mxu0 %v819
      %944 = vmatpush.bf16.msra.mxu0 %v811
      %945 = vmatpush.bf16.msra.mxu0 %v803
      %946 = vmatpush.bf16.msra.mxu0 %v795
      %947 = vmatpush.bf16.msra.mxu0 %v787
      %948 = vmatpush.bf16.msra.mxu0 %v779
      %949 = vmatpush.bf16.msra.mxu0 %v771
      %950 = vmatpush.bf16.msra.mxu0 %v763
      %951 = vmatmul.bf16.gmra.mxu0 %v502
      %v952 = vpop.f32.mrf.mxu0
      %v953 = vadd.f32 0.0, %v952
      %v954 = vpop.f32.mrf.mxu0
      %v955 = vadd.f32 0.0, %v954
      %956 = vdwg.mxu0
      %957 = vmatpush.bf16.msra.mxu0 %v820
      %958 = vmatpush.bf16.msra.mxu0 %v812
      %959 = vmatpush.bf16.msra.mxu0 %v804
      %960 = vmatpush.bf16.msra.mxu0 %v796
      %961 = vmatpush.bf16.msra.mxu0 %v788
      %962 = vmatpush.bf16.msra.mxu0 %v780
      %963 = vmatpush.bf16.msra.mxu0 %v772
      %964 = vmatpush.bf16.msra.mxu0 %v764
      %965 = vmatmul.bf16.gmra.mxu0 %v502
      %v966 = vpop.f32.mrf.mxu0
      %v967 = vadd.f32 0.0, %v966
      %v968 = vpop.f32.mrf.mxu0
      %v969 = vadd.f32 0.0, %v968
      %970 = vdwg.mxu0
      %971 = vmatpush.bf16.msra.mxu0 %v821
      %972 = vmatpush.bf16.msra.mxu0 %v813
      %973 = vmatpush.bf16.msra.mxu0 %v805
      %974 = vmatpush.bf16.msra.mxu0 %v797
      %975 = vmatpush.bf16.msra.mxu0 %v789
      %976 = vmatpush.bf16.msra.mxu0 %v781
      %977 = vmatpush.bf16.msra.mxu0 %v773
      %978 = vmatpush.bf16.msra.mxu0 %v765
      %979 = vmatmul.bf16.gmra.mxu0 %v502
      %v980 = vpop.f32.mrf.mxu0
      %v981 = vadd.f32 0.0, %v980
      %v982 = vpop.f32.mrf.mxu0
      %v983 = vadd.f32 0.0, %v982
      %984 = vdwg.mxu0
      %985 = vmatpush.bf16.msra.mxu0 %v822
      %986 = vmatpush.bf16.msra.mxu0 %v814
      %987 = vmatpush.bf16.msra.mxu0 %v806
      %988 = vmatpush.bf16.msra.mxu0 %v798
      %989 = vmatpush.bf16.msra.mxu0 %v790
      %990 = vmatpush.bf16.msra.mxu0 %v782
      %991 = vmatpush.bf16.msra.mxu0 %v774
      %992 = vmatpush.bf16.msra.mxu0 %v766
      %993 = vmatmul.bf16.gmra.mxu0 %v502
      %v994 = vpop.f32.mrf.mxu0
      %v995 = vadd.f32 0.0, %v994
      %v996 = vpop.f32.mrf.mxu0
      %v997 = vadd.f32 0.0, %v996
      %998 = vdwg.mxu0
      %v999 = vmax.f32 %v897, %v899
      %v1000 = vrot.slane %v999, 4
      %v1001 = vmax.f32 %v999, %v1000
      %v1002 = vrot.slane %v1001, 2
      %v1003 = vmax.f32 %v1001, %v1002
      %v1004 = vrot.slane %v1003, 1
      %v1005 = vmax.f32 %v1003, %v1004
      %v1006 = vmax.f32 %v911, %v913
      %v1007 = vrot.slane %v1006, 4
      %v1008 = vmax.f32 %v1006, %v1007
      %v1009 = vrot.slane %v1008, 2
      %v1010 = vmax.f32 %v1008, %v1009
      %v1011 = vrot.slane %v1010, 1
      %v1012 = vmax.f32 %v1010, %v1011
      %v1013 = vmax.f32 %v925, %v927
      %v1014 = vrot.slane %v1013, 4
      %v1015 = vmax.f32 %v1013, %v1014
      %v1016 = vrot.slane %v1015, 2
      %v1017 = vmax.f32 %v1015, %v1016
      %v1018 = vrot.slane %v1017, 1
      %v1019 = vmax.f32 %v1017, %v1018
      %v1020 = vmax.f32 %v939, %v941
      %v1021 = vrot.slane %v1020, 4
      %v1022 = vmax.f32 %v1020, %v1021
      %v1023 = vrot.slane %v1022, 2
      %v1024 = vmax.f32 %v1022, %v1023
      %v1025 = vrot.slane %v1024, 1
      %v1026 = vmax.f32 %v1024, %v1025
      %v1027 = vmax.f32 %v953, %v955
      %v1028 = vrot.slane %v1027, 4
      %v1029 = vmax.f32 %v1027, %v1028
      %v1030 = vrot.slane %v1029, 2
      %v1031 = vmax.f32 %v1029, %v1030
      %v1032 = vrot.slane %v1031, 1
      %v1033 = vmax.f32 %v1031, %v1032
      %v1034 = vmax.f32 %v967, %v969
      %v1035 = vrot.slane %v1034, 4
      %v1036 = vmax.f32 %v1034, %v1035
      %v1037 = vrot.slane %v1036, 2
      %v1038 = vmax.f32 %v1036, %v1037
      %v1039 = vrot.slane %v1038, 1
      %v1040 = vmax.f32 %v1038, %v1039
      %v1041 = vmax.f32 %v981, %v983
      %v1042 = vrot.slane %v1041, 4
      %v1043 = vmax.f32 %v1041, %v1042
      %v1044 = vrot.slane %v1043, 2
      %v1045 = vmax.f32 %v1043, %v1044
      %v1046 = vrot.slane %v1045, 1
      %v1047 = vmax.f32 %v1045, %v1046
      %v1048 = vmax.f32 %v995, %v997
      %v1049 = vrot.slane %v1048, 4
      %v1050 = vmax.f32 %v1048, %v1049
      %v1051 = vrot.slane %v1050, 2
      %v1052 = vmax.f32 %v1050, %v1051
      %v1053 = vrot.slane %v1052, 1
      %v1054 = vmax.f32 %v1052, %v1053
      %v1055 = vld [vmem:[%s348] sm:$0xff]
      %v1064 = vrot.slane %v1012, 7
      %v1065 = vrot.slane %v1019, 6
      %v1066 = vrot.slane %v1026, 5
      %v1067 = vrot.slane %v1033, 4
      %v1068 = vrot.slane %v1040, 3
      %v1069 = vrot.slane %v1047, 2
      %v1070 = vrot.slane %v1054, 1
      %vm1071 = vcmask 1040384
      %v1072 = vsel %vm1071, %v1005, %v1064
      %vm1073 = vcmask 1042434
      %v1074 = vsel %vm1073, %v1065, %v1066
      %vm1075 = vcmask 1041408
      %v1076 = vsel %vm1075, %v1072, %v1074
      %vm1077 = vcmask 1044484
      %v1078 = vsel %vm1077, %v1067, %v1068
      %vm1079 = vcmask 1046534
      %v1080 = vsel %vm1079, %v1069, %v1070
      %vm1081 = vcmask 1045508
      %v1082 = vsel %vm1081, %v1078, %v1080
      %vm1083 = vcmask 1043456
      %v1084 = vsel %vm1083, %v1076, %v1082
      %v1086 = vmax.f32 %v1055, %v1084
      %1087 = vst [vmem:[%s348] sm:$0xff] %v1086
      // Predicated region
      $region57: #{pointnet_cls_forward.6} parent=51 // pred_check
        %p1088 = pneg %p350
      $region58: #{pointnet_cls_forward.6} parent=51 // pred_check_branch
        %1090 = sbr.rel (%p1088) target = $region60
      $region59: #{pointnet_cls_forward.6} parent=51 // pred_region
        %v1091 = vld [vmem:[%s348] sm:$0xff]
        %v1092 = vld [vmem:[%s7] sm:$0xff]
        %v1093 = vadd.f32 %v1091, %v1092
        %1094 = vst [vmem:[%s348] sm:$0xff] %v1093
      $region60: #{pointnet_cls_forward.6} parent=51 // pred_fallthru
        _
      %p1095 = scmp.lt.s32.totalorder %s23, 1
      %s1096 = scalar_select %p1095, %s23, 1
      %s1097 = smul.addr %s1096, 8
      %s1098 = scalar_lea.vmem %s8, %s1097
      // Predicated region
      $region61: #{pointnet_cls_forward.6} parent=51 // pred_check
        %p1099 = pneg %p229
      $region62: #{pointnet_cls_forward.6} parent=51 // pred_check_branch
        %1101 = sbr.rel (%p1099) target = $region64
      $region63: #{pointnet_cls_forward.6} parent=51 // pred_region
        _
      $region64: #{pointnet_cls_forward.6} parent=51 // pred_fallthru
        _
    $region52: #{pointnet_cls_forward.6} parent=5 // pred_fallthru
      _
    %p1102 = scmp.le.s32.totalorder 2, %s14
    // Predicated region
    $region65: #{pointnet_cls_forward.6} parent=5 // pred_check
      %p1103 = pneg %p1102
    $region66: #{pointnet_cls_forward.6} parent=5 // pred_check_branch
      %1105 = sbr.rel (%p1103) target = $region68
    $region67: #{pointnet_cls_forward.6} parent=5 // pred_region
      %s1106 = ssub.s32 %s14, 2
      // Predicated region
      $region69: #{pointnet_cls_forward.6} parent=67 // pred_check
        %p1107 = pneg %p235
      $region70: #{pointnet_cls_forward.6} parent=67 // pred_check_branch
        %1109 = sbr.rel (%p1107) target = $region72
      $region71: #{pointnet_cls_forward.6} parent=67 // pred_region
        %p1110 = scmp.lt.s32.totalorder %s25, 1
        %s1111 = scalar_select %p1110, %s25, 1
        %s1112 = smul.addr %s1111, 8
        %s1113 = scalar_lea.vmem %s8, %s1112
      $region72: #{pointnet_cls_forward.6} parent=67 // pred_fallthru
        _
    $region68: #{pointnet_cls_forward.6} parent=5 // pred_fallthru
      _
  $region6: #{pointnet_cls_forward.6} parent=0 // loop_footer
    %s18 = sadd.s32 1, %s14
  $region7: #{pointnet_cls_forward.6} parent=0 // loop_footer_branch
    %13 = sbr.rel target = $region3
  $region8: #{pointnet_cls_forward.6} parent=0 // loop_exit
    _

// kernel: pointnet_cls_forward.5
$region0: #{pointnet_cls_forward.5}
  #allocation0 [shape = 'u32[]', space=smem, size = 0x4, offset = 0x4, fixed_abs, tag = 'smem constant byte address 0x4 - core index']
  #allocation1 [shape = 'u32[72,128]{1,0:T(1,128)}', space=vmem, size = 0x9000, scoped, tag = 'internal scratch']
  %s0 = inlined_call_operand.vmem [shape: f32[2,1024], index: 0, kind: input, shape index: {}]
  %s1 = inlined_call_operand.hbm [shape: bf16[1024,512], index: 1, kind: input, shape index: {}]
  %s2 = inlined_call_operand.vmem [shape: f32[1,512], index: 2, kind: input, shape index: {}]
  %s3 = inlined_call_operand.hbm [shape: bf16[512,256], index: 3, kind: input, shape index: {}]
  %s4 = inlined_call_operand.vmem [shape: f32[1,256], index: 4, kind: input, shape index: {}]
  %s5 = inlined_call_operand.vmem [shape: bf16[256,9], index: 5, kind: input, shape index: {}]
  %s6 = inlined_call_operand.vmem [shape: f32[1,9], index: 6, kind: input, shape index: {}]
  %s7 = inlined_call_operand.vmem [shape: f32[2,9], index: 7, kind: output, shape index: {}]
  %s8 = sld [smem:[#allocation0]]
  $region46: #{pointnet_cls_forward.5} parent=0
    _
  %s10 = ssub.s32 1, %s8
  %s11 = scalar_select 0, %s10, %s8
  $region1: #{pointnet_cls_forward.5} parent=0
    #allocation2 [shape = 'u8[1048576]{0}', space=vmem, size = 0x100000, scoped, tag = 'input window, operand 1, single buffered']
    #allocation3 [shape = 's32[1]{0}', space=sflag, size = 0x4, scoped, tag = 'scoped memory for pointnet_cls_forward.5']
    #allocation4 [shape = 'u8[262144]{0}', space=vmem, size = 0x40000, scoped, tag = 'input window, operand 3, single buffered']
    #allocation5 [shape = 's32[1]{0}', space=sflag, size = 0x4, scoped, tag = 'scoped memory for pointnet_cls_forward.5']
    %12 = vsyncpa [#allocation3], 0
    %13 = vsyncpa [#allocation5], 0
    // Predicated region
    $region2: #{pointnet_cls_forward.5} parent=1 // pred_check
      _
    $region3: #{pointnet_cls_forward.5} parent=1 // pred_check_branch
      %15 = sbr.rel (0) target = $region5
    $region4: #{pointnet_cls_forward.5} parent=1 // pred_region
      _
    $region5: #{pointnet_cls_forward.5} parent=1 // pred_fallthru
      _
    // Predicated region
    $region6: #{pointnet_cls_forward.5} parent=1 // pred_check
      _
    $region7: #{pointnet_cls_forward.5} parent=1 // pred_check_branch
      %17 = sbr.rel (0) target = $region9
    $region8: #{pointnet_cls_forward.5} parent=1 // pred_region
      %19 = vsyncadd [#allocation3], 0
      %s20 = sshll.u32 %s1, 4
      %s21 = int_to_ptr.hbm [resolvable:$true] %s20
      %s22 = sshll.u32 [#allocation2], 4
      %s23 = int_to_ptr.vmem [resolvable:$true] %s22
      %28 = dma.hbm_to_vmem [thread:$0]  %s21, 32768, %s23, [#allocation3], 256, 256, 16
    $region9: #{pointnet_cls_forward.5} parent=1 // pred_fallthru
      _
    // Predicated region
    $region10: #{pointnet_cls_forward.5} parent=1 // pred_check
      _
    $region11: #{pointnet_cls_forward.5} parent=1 // pred_check_branch
      %30 = sbr.rel (0) target = $region13
    $region12: #{pointnet_cls_forward.5} parent=1 // pred_region
      _
    $region13: #{pointnet_cls_forward.5} parent=1 // pred_fallthru
      _
    // Predicated region
    $region14: #{pointnet_cls_forward.5} parent=1 // pred_check
      _
    $region15: #{pointnet_cls_forward.5} parent=1 // pred_check_branch
      %32 = sbr.rel (0) target = $region17
    $region16: #{pointnet_cls_forward.5} parent=1 // pred_region
      %34 = vsyncadd [#allocation5], 0
      %s35 = sshll.u32 %s3, 4
      %s36 = int_to_ptr.hbm [resolvable:$true] %s35
      %s37 = sshll.u32 [#allocation4], 4
      %s38 = int_to_ptr.vmem [resolvable:$true] %s37
      %43 = dma.hbm_to_vmem [thread:$0]  %s36, 8192, %s38, [#allocation5], 128, 128, 8
    $region17: #{pointnet_cls_forward.5} parent=1 // pred_fallthru
      _
    // Predicated region
    $region18: #{pointnet_cls_forward.5} parent=1 // pred_check
      _
    $region19: #{pointnet_cls_forward.5} parent=1 // pred_check_branch
      %45 = sbr.rel (0) target = $region21
    $region20: #{pointnet_cls_forward.5} parent=1 // pred_region
      _
    $region21: #{pointnet_cls_forward.5} parent=1 // pred_fallthru
      _
    // Predicated region
    $region22: #{pointnet_cls_forward.5} parent=1 // pred_check
      _
    $region23: #{pointnet_cls_forward.5} parent=1 // pred_check_branch
      %47 = sbr.rel (0) target = $region25
    $region24: #{pointnet_cls_forward.5} parent=1 // pred_region
      _
    $region25: #{pointnet_cls_forward.5} parent=1 // pred_fallthru
      _
    // Predicated region
    $region26: #{pointnet_cls_forward.5} parent=1 // pred_check
      _
    $region27: #{pointnet_cls_forward.5} parent=1 // pred_check_branch
      %49 = sbr.rel (0) target = $region29
    $region28: #{pointnet_cls_forward.5} parent=1 // pred_region
      _
    $region29: #{pointnet_cls_forward.5} parent=1 // pred_fallthru
      _
    // Predicated region
    $region30: #{pointnet_cls_forward.5} parent=1 // pred_check
      _
    $region31: #{pointnet_cls_forward.5} parent=1 // pred_check_branch
      %51 = sbr.rel (0) target = $region33
    $region32: #{pointnet_cls_forward.5} parent=1 // pred_region
      %53 = dma.done [#allocation3], 32768
    $region33: #{pointnet_cls_forward.5} parent=1 // pred_fallthru
      _
    // Predicated region
    $region34: #{pointnet_cls_forward.5} parent=1 // pred_check
      _
    $region35: #{pointnet_cls_forward.5} parent=1 // pred_check_branch
      %55 = sbr.rel (0) target = $region37
    $region36: #{pointnet_cls_forward.5} parent=1 // pred_region
      %57 = dma.done [#allocation5], 8192
    $region37: #{pointnet_cls_forward.5} parent=1 // pred_fallthru
      _
    %v58 = vld [vmem:[%s0] sm:$0xff]
    %v59 = vld [vmem:[%s0 + $0x8] sm:$0xff]
    %62 = vst [vmem:[#allocation1] ss:$4 sm:$0xff] %v58
    %s63 = scalar_lea.vmem [#allocation1], 32
    %64 = vst [vmem:[%s63] ss:$4 sm:$0xff] %v59
    %v65 = vld.sshfl [vmem:[#allocation1] sm:$0xff pattern:$0x73625140]
    %v66 = vld.sshfl [vmem:[#allocation1 + $0x8] sm:$0xff pattern:$0x73625140]
    %v67 = vld.sshfl [vmem:[#allocation1 + $0x10] sm:$0xff pattern:$0x73625140]
    %v68 = vld.sshfl [vmem:[#allocation1 + $0x18] sm:$0xff pattern:$0x73625140]
    %v69 = vld.sshfl [vmem:[#allocation1 + $0x20] sm:$0xff pattern:$0x73625140]
    %v70 = vld.sshfl [vmem:[#allocation1 + $0x28] sm:$0xff pattern:$0x73625140]
    %v71 = vld.sshfl [vmem:[#allocation1 + $0x30] sm:$0xff pattern:$0x73625140]
    %v72 = vld.sshfl [vmem:[#allocation1 + $0x38] sm:$0xff pattern:$0x73625140]
    %v81 = vpack.c.bf16 %v65, %v65
    %v82 = vpack.c.bf16 %v66, %v66
    %v83 = vpack.c.bf16 %v67, %v67
    %v84 = vpack.c.bf16 %v68, %v68
    %v85 = vpack.c.bf16 %v69, %v69
    %v86 = vpack.c.bf16 %v70, %v70
    %v87 = vpack.c.bf16 %v71, %v71
    %v88 = vpack.c.bf16 %v72, %v72
    %v89 = vld [vmem:[#allocation2] sm:$0xff]
    %v90 = vld [vmem:[#allocation2 + $0x8] sm:$0xff]
    %v91 = vld [vmem:[#allocation2 + $0x10] sm:$0xff]
    %v92 = vld [vmem:[#allocation2 + $0x18] sm:$0xff]
    %v93 = vld [vmem:[#allocation2 + $0x20] sm:$0xff]
    %v94 = vld [vmem:[#allocation2 + $0x28] sm:$0xff]
    %v95 = vld [vmem:[#allocation2 + $0x30] sm:$0xff]
    %v96 = vld [vmem:[#allocation2 + $0x38] sm:$0xff]
    %v97 = vld [vmem:[#allocation2 + $0x40] sm:$0xff]
    %v98 = vld [vmem:[#allocation2 + $0x48] sm:$0xff]
    %v99 = vld [vmem:[#allocation2 + $0x50] sm:$0xff]
    %v100 = vld [vmem:[#allocation2 + $0x58] sm:$0xff]
    %v101 = vld [vmem:[#allocation2 + $0x60] sm:$0xff]
    %v102 = vld [vmem:[#allocation2 + $0x68] sm:$0xff]
    %v103 = vld [vmem:[#allocation2 + $0x70] sm:$0xff]
    %v104 = vld [vmem:[#allocation2 + $0x78] sm:$0xff]
    %v105 = vld [vmem:[#allocation2 + $0x80] sm:$0xff]
    %v106 = vld [vmem:[#allocation2 + $0x88] sm:$0xff]
    %v107 = vld [vmem:[#allocation2 + $0x90] sm:$0xff]
    %v108 = vld [vmem:[#allocation2 + $0x98] sm:$0xff]
    %v109 = vld [vmem:[#allocation2 + $0xa0] sm:$0xff]
    %v110 = vld [vmem:[#allocation2 + $0xa8] sm:$0xff]
    %v111 = vld [vmem:[#allocation2 + $0xb0] sm:$0xff]
    %v112 = vld [vmem:[#allocation2 + $0xb8] sm:$0xff]
    %v113 = vld [vmem:[#allocation2 + $0xc0] sm:$0xff]
    %v114 = vld [vmem:[#allocation2 + $0xc8] sm:$0xff]
    %v115 = vld [vmem:[#allocation2 + $0xd0] sm:$0xff]
    %v116 = vld [vmem:[#allocation2 + $0xd8] sm:$0xff]
    %v117 = vld [vmem:[#allocation2 + $0xe0] sm:$0xff]
    %v118 = vld [vmem:[#allocation2 + $0xe8] sm:$0xff]
    %v119 = vld [vmem:[#allocation2 + $0xf0] sm:$0xff]
    %v120 = vld [vmem:[#allocation2 + $0xf8] sm:$0xff]
    %v121 = vld [vmem:[#allocation2 + $0x100] sm:$0xff]
    %v122 = vld [vmem:[#allocation2 + $0x108] sm:$0xff]
    %v123 = vld [vmem:[#allocation2 + $0x110] sm:$0xff]
    %v124 = vld [vmem:[#allocation2 + $0x118] sm:$0xff]
    %v125 = vld [vmem:[#allocation2 + $0x120] sm:$0xff]
    %v126 = vld [vmem:[#allocation2 + $0x128] sm:$0xff]
    %v127 = vld [vmem:[#allocation2 + $0x130] sm:$0xff]
    %v128 = vld [vmem:[#allocation2 + $0x138] sm:$0xff]
    %v129 = vld [vmem:[#allocation2 + $0x140] sm:$0xff]
    %v130 = vld [vmem:[#allocation2 + $0x148] sm:$0xff]
    %v131 = vld [vmem:[#allocation2 + $0x150] sm:$0xff]
    %v132 = vld [vmem:[#allocation2 + $0x158] sm:$0xff]
    %v133 = vld [vmem:[#allocation2 + $0x160] sm:$0xff]
    %v134 = vld [vmem:[#allocation2 + $0x168] sm:$0xff]
    %v135 = vld [vmem:[#allocation2 + $0x170] sm:$0xff]
    %v136 = vld [vmem:[#allocation2 + $0x178] sm:$0xff]
    %v137 = vld [vmem:[#allocation2 + $0x180] sm:$0xff]
    %v138 = vld [vmem:[#allocation2 + $0x188] sm:$0xff]
    %v139 = vld [vmem:[#allocation2 + $0x190] sm:$0xff]
    %v140 = vld [vmem:[#allocation2 + $0x198] sm:$0xff]
    %v141 = vld [vmem:[#allocation2 + $0x1a0] sm:$0xff]
    %v142 = vld [vmem:[#allocation2 + $0x1a8] sm:$0xff]
    %v143 = vld [vmem:[#allocation2 + $0x1b0] sm:$0xff]
    %v144 = vld [vmem:[#allocation2 + $0x1b8] sm:$0xff]
    %v145 = vld [vmem:[#allocation2 + $0x1c0] sm:$0xff]
    %v146 = vld [vmem:[#allocation2 + $0x1c8] sm:$0xff]
    %v147 = vld [vmem:[#allocation2 + $0x1d0] sm:$0xff]
    %v148 = vld [vmem:[#allocation2 + $0x1d8] sm:$0xff]
    %v149 = vld [vmem:[#allocation2 + $0x1e0] sm:$0xff]
    %v150 = vld [vmem:[#allocation2 + $0x1e8] sm:$0xff]
    %v151 = vld [vmem:[#allocation2 + $0x1f0] sm:$0xff]
    %v152 = vld [vmem:[#allocation2 + $0x1f8] sm:$0xff]
    %v153 = vld [vmem:[#allocation2 + $0x200] sm:$0xff]
    %v154 = vld [vmem:[#allocation2 + $0x208] sm:$0xff]
    %v155 = vld [vmem:[#allocation2 + $0x210] sm:$0xff]
    %v156 = vld [vmem:[#allocation2 + $0x218] sm:$0xff]
    %v157 = vld [vmem:[#allocation2 + $0x220] sm:$0xff]
    %v158 = vld [vmem:[#allocation2 + $0x228] sm:$0xff]
    %v159 = vld [vmem:[#allocation2 + $0x230] sm:$0xff]
    %v160 = vld [vmem:[#allocation2 + $0x238] sm:$0xff]
    %v161 = vld [vmem:[#allocation2 + $0x240] sm:$0xff]
    %v162 = vld [vmem:[#allocation2 + $0x248] sm:$0xff]
    %v163 = vld [vmem:[#allocation2 + $0x250] sm:$0xff]
    %v164 = vld [vmem:[#allocation2 + $0x258] sm:$0xff]
    %v165 = vld [vmem:[#allocation2 + $0x260] sm:$0xff]
    %v166 = vld [vmem:[#allocation2 + $0x268] sm:$0xff]
    %v167 = vld [vmem:[#allocation2 + $0x270] sm:$0xff]
    %v168 = vld [vmem:[#allocation2 + $0x278] sm:$0xff]
    %v169 = vld [vmem:[#allocation2 + $0x280] sm:$0xff]
    %v170 = vld [vmem:[#allocation2 + $0x288] sm:$0xff]
    %v171 = vld [vmem:[#allocation2 + $0x290] sm:$0xff]
    %v172 = vld [vmem:[#allocation2 + $0x298] sm:$0xff]
    %v173 = vld [vmem:[#allocation2 + $0x2a0] sm:$0xff]
    %v174 = vld [vmem:[#allocation2 + $0x2a8] sm:$0xff]
    %v175 = vld [vmem:[#allocation2 + $0x2b0] sm:$0xff]
    %v176 = vld [vmem:[#allocation2 + $0x2b8] sm:$0xff]
    %v177 = vld [vmem:[#allocation2 + $0x2c0] sm:$0xff]
    %v178 = vld [vmem:[#allocation2 + $0x2c8] sm:$0xff]
    %v179 = vld [vmem:[#allocation2 + $0x2d0] sm:$0xff]
    %v180 = vld [vmem:[#allocation2 + $0x2d8] sm:$0xff]
    %v181 = vld [vmem:[#allocation2 + $0x2e0] sm:$0xff]
    %v182 = vld [vmem:[#allocation2 + $0x2e8] sm:$0xff]
    %v183 = vld [vmem:[#allocation2 + $0x2f0] sm:$0xff]
    %v184 = vld [vmem:[#allocation2 + $0x2f8] sm:$0xff]
    %v185 = vld [vmem:[#allocation2 + $0x300] sm:$0xff]
    %v186 = vld [vmem:[#allocation2 + $0x308] sm:$0xff]
    %v187 = vld [vmem:[#allocation2 + $0x310] sm:$0xff]
    %v188 = vld [vmem:[#allocation2 + $0x318] sm:$0xff]
    %v189 = vld [vmem:[#allocation2 + $0x320] sm:$0xff]
    %v190 = vld [vmem:[#allocation2 + $0x328] sm:$0xff]
    %v191 = vld [vmem:[#allocation2 + $0x330] sm:$0xff]
    %v192 = vld [vmem:[#allocation2 + $0x338] sm:$0xff]
    %v193 = vld [vmem:[#allocation2 + $0x340] sm:$0xff]
    %v194 = vld [vmem:[#allocation2 + $0x348] sm:$0xff]
    %v195 = vld [vmem:[#allocation2 + $0x350] sm:$0xff]
    %v196 = vld [vmem:[#allocation2 + $0x358] sm:$0xff]
    %v197 = vld [vmem:[#allocation2 + $0x360] sm:$0xff]
    %v198 = vld [vmem:[#allocation2 + $0x368] sm:$0xff]
    %v199 = vld [vmem:[#allocation2 + $0x370] sm:$0xff]
    %v200 = vld [vmem:[#allocation2 + $0x378] sm:$0xff]
    %v201 = vld [vmem:[#allocation2 + $0x380] sm:$0xff]
    %v202 = vld [vmem:[#allocation2 + $0x388] sm:$0xff]
    %v203 = vld [vmem:[#allocation2 + $0x390] sm:$0xff]
    %v204 = vld [vmem:[#allocation2 + $0x398] sm:$0xff]
    %v205 = vld [vmem:[#allocation2 + $0x3a0] sm:$0xff]
    %v206 = vld [vmem:[#allocation2 + $0x3a8] sm:$0xff]
    %v207 = vld [vmem:[#allocation2 + $0x3b0] sm:$0xff]
    %v208 = vld [vmem:[#allocation2 + $0x3b8] sm:$0xff]
    %v209 = vld [vmem:[#allocation2 + $0x3c0] sm:$0xff]
    %v210 = vld [vmem:[#allocation2 + $0x3c8] sm:$0xff]
    %v211 = vld [vmem:[#allocation2 + $0x3d0] sm:$0xff]
    %v212 = vld [vmem:[#allocation2 + $0x3d8] sm:$0xff]
    %v213 = vld [vmem:[#allocation2 + $0x3e0] sm:$0xff]
    %v214 = vld [vmem:[#allocation2 + $0x3e8] sm:$0xff]
    %v215 = vld [vmem:[#allocation2 + $0x3f0] sm:$0xff]
    %v216 = vld [vmem:[#allocation2 + $0x3f8] sm:$0xff]
    %v217 = vld [vmem:[#allocation2 + $0x400] sm:$0xff]
    %v218 = vld [vmem:[#allocation2 + $0x408] sm:$0xff]
    %v219 = vld [vmem:[#allocation2 + $0x410] sm:$0xff]
    %v220 = vld [vmem:[#allocation2 + $0x418] sm:$0xff]
    %v221 = vld [vmem:[#allocation2 + $0x420] sm:$0xff]
    %v222 = vld [vmem:[#allocation2 + $0x428] sm:$0xff]
    %v223 = vld [vmem:[#allocation2 + $0x430] sm:$0xff]
    %v224 = vld [vmem:[#allocation2 + $0x438] sm:$0xff]
    %v225 = vld [vmem:[#allocation2 + $0x440] sm:$0xff]
    %v226 = vld [vmem:[#allocation2 + $0x448] sm:$0xff]
    %v227 = vld [vmem:[#allocation2 + $0x450] sm:$0xff]
    %v228 = vld [vmem:[#allocation2 + $0x458] sm:$0xff]
    %v229 = vld [vmem:[#allocation2 + $0x460] sm:$0xff]
    %v230 = vld [vmem:[#allocation2 + $0x468] sm:$0xff]
    %v231 = vld [vmem:[#allocation2 + $0x470] sm:$0xff]
    %v232 = vld [vmem:[#allocation2 + $0x478] sm:$0xff]
    %v233 = vld [vmem:[#allocation2 + $0x480] sm:$0xff]
    %v234 = vld [vmem:[#allocation2 + $0x488] sm:$0xff]
    %v235 = vld [vmem:[#allocation2 + $0x490] sm:$0xff]
    %v236 = vld [vmem:[#allocation2 + $0x498] sm:$0xff]
    %v237 = vld [vmem:[#allocation2 + $0x4a0] sm:$0xff]
    %v238 = vld [vmem:[#allocation2 + $0x4a8] sm:$0xff]
    %v239 = vld [vmem:[#allocation2 + $0x4b0] sm:$0xff]
    %v240 = vld [vmem:[#allocation2 + $0x4b8] sm:$0xff]
    %v241 = vld [vmem:[#allocation2 + $0x4c0] sm:$0xff]
    %v242 = vld [vmem:[#allocation2 + $0x4c8] sm:$0xff]
    %v243 = vld [vmem:[#allocation2 + $0x4d0] sm:$0xff]
    %v244 = vld [vmem:[#allocation2 + $0x4d8] sm:$0xff]
    %v245 = vld [vmem:[#allocation2 + $0x4e0] sm:$0xff]
    %v246 = vld [vmem:[#allocation2 + $0x4e8] sm:$0xff]
    %v247 = vld [vmem:[#allocation2 + $0x4f0] sm:$0xff]
    %v248 = vld [vmem:[#allocation2 + $0x4f8] sm:$0xff]
    %v249 = vld [vmem:[#allocation2 + $0x500] sm:$0xff]
    %v250 = vld [vmem:[#allocation2 + $0x508] sm:$0xff]
    %v251 = vld [vmem:[#allocation2 + $0x510] sm:$0xff]
    %v252 = vld [vmem:[#allocation2 + $0x518] sm:$0xff]
    %v253 = vld [vmem:[#allocation2 + $0x520] sm:$0xff]
    %v254 = vld [vmem:[#allocation2 + $0x528] sm:$0xff]
    %v255 = vld [vmem:[#allocation2 + $0x530] sm:$0xff]
    %v256 = vld [vmem:[#allocation2 + $0x538] sm:$0xff]
    %v257 = vld [vmem:[#allocation2 + $0x540] sm:$0xff]
    %v258 = vld [vmem:[#allocation2 + $0x548] sm:$0xff]
    %v259 = vld [vmem:[#allocation2 + $0x550] sm:$0xff]
    %v260 = vld [vmem:[#allocation2 + $0x558] sm:$0xff]
    %v261 = vld [vmem:[#allocation2 + $0x560] sm:$0xff]
    %v262 = vld [vmem:[#allocation2 + $0x568] sm:$0xff]
    %v263 = vld [vmem:[#allocation2 + $0x570] sm:$0xff]
    %v264 = vld [vmem:[#allocation2 + $0x578] sm:$0xff]
    %v265 = vld [vmem:[#allocation2 + $0x580] sm:$0xff]
    %v266 = vld [vmem:[#allocation2 + $0x588] sm:$0xff]
    %v267 = vld [vmem:[#allocation2 + $0x590] sm:$0xff]
    %v268 = vld [vmem:[#allocation2 + $0x598] sm:$0xff]
    %v269 = vld [vmem:[#allocation2 + $0x5a0] sm:$0xff]
    %v270 = vld [vmem:[#allocation2 + $0x5a8] sm:$0xff]
    %v271 = vld [vmem:[#allocation2 + $0x5b0] sm:$0xff]
    %v272 = vld [vmem:[#allocation2 + $0x5b8] sm:$0xff]
    %v273 = vld [vmem:[#allocation2 + $0x5c0] sm:$0xff]
    %v274 = vld [vmem:[#allocation2 + $0x5c8] sm:$0xff]
    %v275 = vld [vmem:[#allocation2 + $0x5d0] sm:$0xff]
    %v276 = vld [vmem:[#allocation2 + $0x5d8] sm:$0xff]
    %v277 = vld [vmem:[#allocation2 + $0x5e0] sm:$0xff]
    %v278 = vld [vmem:[#allocation2 + $0x5e8] sm:$0xff]
    %v279 = vld [vmem:[#allocation2 + $0x5f0] sm:$0xff]
    %v280 = vld [vmem:[#allocation2 + $0x5f8] sm:$0xff]
    %v281 = vld [vmem:[#allocation2 + $0x600] sm:$0xff]
    %v282 = vld [vmem:[#allocation2 + $0x608] sm:$0xff]
    %v283 = vld [vmem:[#allocation2 + $0x610] sm:$0xff]
    %v284 = vld [vmem:[#allocation2 + $0x618] sm:$0xff]
    %v285 = vld [vmem:[#allocation2 + $0x620] sm:$0xff]
    %v286 = vld [vmem:[#allocation2 + $0x628] sm:$0xff]
    %v287 = vld [vmem:[#allocation2 + $0x630] sm:$0xff]
    %v288 = vld [vmem:[#allocation2 + $0x638] sm:$0xff]
    %v289 = vld [vmem:[#allocation2 + $0x640] sm:$0xff]
    %v290 = vld [vmem:[#allocation2 + $0x648] sm:$0xff]
    %v291 = vld [vmem:[#allocation2 + $0x650] sm:$0xff]
    %v292 = vld [vmem:[#allocation2 + $0x658] sm:$0xff]
    %v293 = vld [vmem:[#allocation2 + $0x660] sm:$0xff]
    %v294 = vld [vmem:[#allocation2 + $0x668] sm:$0xff]
    %v295 = vld [vmem:[#allocation2 + $0x670] sm:$0xff]
    %v296 = vld [vmem:[#allocation2 + $0x678] sm:$0xff]
    %v297 = vld [vmem:[#allocation2 + $0x680] sm:$0xff]
    %v298 = vld [vmem:[#allocation2 + $0x688] sm:$0xff]
    %v299 = vld [vmem:[#allocation2 + $0x690] sm:$0xff]
    %v300 = vld [vmem:[#allocation2 + $0x698] sm:$0xff]
    %v301 = vld [vmem:[#allocation2 + $0x6a0] sm:$0xff]
    %v302 = vld [vmem:[#allocation2 + $0x6a8] sm:$0xff]
    %v303 = vld [vmem:[#allocation2 + $0x6b0] sm:$0xff]
    %v304 = vld [vmem:[#allocation2 + $0x6b8] sm:$0xff]
    %v305 = vld [vmem:[#allocation2 + $0x6c0] sm:$0xff]
    %v306 = vld [vmem:[#allocation2 + $0x6c8] sm:$0xff]
    %v307 = vld [vmem:[#allocation2 + $0x6d0] sm:$0xff]
    %v308 = vld [vmem:[#allocation2 + $0x6d8] sm:$0xff]
    %v309 = vld [vmem:[#allocation2 + $0x6e0] sm:$0xff]
    %v310 = vld [vmem:[#allocation2 + $0x6e8] sm:$0xff]
    %v311 = vld [vmem:[#allocation2 + $0x6f0] sm:$0xff]
    %v312 = vld [vmem:[#allocation2 + $0x6f8] sm:$0xff]
    %v313 = vld [vmem:[#allocation2 + $0x700] sm:$0xff]
    %v314 = vld [vmem:[#allocation2 + $0x708] sm:$0xff]
    %v315 = vld [vmem:[#allocation2 + $0x710] sm:$0xff]
    %v316 = vld [vmem:[#allocation2 + $0x718] sm:$0xff]
    %v317 = vld [vmem:[#allocation2 + $0x720] sm:$0xff]
    %v318 = vld [vmem:[#allocation2 + $0x728] sm:$0xff]
    %v319 = vld [vmem:[#allocation2 + $0x730] sm:$0xff]
    %v320 = vld [vmem:[#allocation2 + $0x738] sm:$0xff]
    %v321 = vld [vmem:[#allocation2 + $0x740] sm:$0xff]
    %v322 = vld [vmem:[#allocation2 + $0x748] sm:$0xff]
    %v323 = vld [vmem:[#allocation2 + $0x750] sm:$0xff]
    %v324 = vld [vmem:[#allocation2 + $0x758] sm:$0xff]
    %v325 = vld [vmem:[#allocation2 + $0x760] sm:$0xff]
    %v326 = vld [vmem:[#allocation2 + $0x768] sm:$0xff]
    %v327 = vld [vmem:[#allocation2 + $0x770] sm:$0xff]
    %v328 = vld [vmem:[#allocation2 + $0x778] sm:$0xff]
    %v329 = vld [vmem:[#allocation2 + $0x780] sm:$0xff]
    %v330 = vld [vmem:[#allocation2 + $0x788] sm:$0xff]
    %v331 = vld [vmem:[#allocation2 + $0x790] sm:$0xff]
    %v332 = vld [vmem:[#allocation2 + $0x798] sm:$0xff]
    %v333 = vld [vmem:[#allocation2 + $0x7a0] sm:$0xff]
    %v334 = vld [vmem:[#allocation2 + $0x7a8] sm:$0xff]
    %v335 = vld [vmem:[#allocation2 + $0x7b0] sm:$0xff]
    %v336 = vld [vmem:[#allocation2 + $0x7b8] sm:$0xff]
    %v337 = vld [vmem:[#allocation2 + $0x7c0] sm:$0xff]
    %v338 = vld [vmem:[#allocation2 + $0x7c8] sm:$0xff]
    %v339 = vld [vmem:[#allocation2 + $0x7d0] sm:$0xff]
    %v340 = vld [vmem:[#allocation2 + $0x7d8] sm:$0xff]
    %v341 = vld [vmem:[#allocation2 + $0x7e0] sm:$0xff]
    %v342 = vld [vmem:[#allocation2 + $0x7e8] sm:$0xff]
    %v343 = vld [vmem:[#allocation2 + $0x7f0] sm:$0xff]
    %v344 = vld [vmem:[#allocation2 + $0x7f8] sm:$0xff]
    %v345 = vld [vmem:[%s2] sm:$0xf]
    %v347 = vperm.slane %v345, 0
    %v348 = vperm.slane %v345, 1
    %v349 = vperm.slane %v345, 2
    %v350 = vperm.slane %v345, 3
    %v611 = vunpack.c.l.b16 %v89
    %v612 = vunpack.c.h.b16 %v89
    %v613 = vunpack.c.l.b16 %v90
    %v614 = vunpack.c.h.b16 %v90
    %v615 = vunpack.c.l.b16 %v91
    %v616 = vunpack.c.h.b16 %v91
    %v617 = vunpack.c.l.b16 %v92
    %v618 = vunpack.c.h.b16 %v92
    %v619 = vunpack.c.l.b16 %v93
    %v620 = vunpack.c.h.b16 %v93
    %v621 = vunpack.c.l.b16 %v94
    %v622 = vunpack.c.h.b16 %v94
    %v623 = vunpack.c.l.b16 %v95
    %v624 = vunpack.c.h.b16 %v95
    %v625 = vunpack.c.l.b16 %v96
    %v626 = vunpack.c.h.b16 %v96
    %v627 = vunpack.c.l.b16 %v97
    %v628 = vunpack.c.h.b16 %v97
    %v629 = vunpack.c.l.b16 %v98
    %v630 = vunpack.c.h.b16 %v98
    %v631 = vunpack.c.l.b16 %v99
    %v632 = vunpack.c.h.b16 %v99
    %v633 = vunpack.c.l.b16 %v100
    %v634 = vunpack.c.h.b16 %v100
    %v635 = vunpack.c.l.b16 %v101
    %v636 = vunpack.c.h.b16 %v101
    %v637 = vunpack.c.l.b16 %v102
    %v638 = vunpack.c.h.b16 %v102
    %v639 = vunpack.c.l.b16 %v103
    %v640 = vunpack.c.h.b16 %v103
    %v641 = vunpack.c.l.b16 %v104
    %v642 = vunpack.c.h.b16 %v104
    %v643 = vunpack.c.l.b16 %v105
    %v644 = vunpack.c.h.b16 %v105
    %v645 = vunpack.c.l.b16 %v106
    %v646 = vunpack.c.h.b16 %v106
    %v647 = vunpack.c.l.b16 %v107
    %v648 = vunpack.c.h.b16 %v107
    %v649 = vunpack.c.l.b16 %v108
    %v650 = vunpack.c.h.b16 %v108
    %v651 = vunpack.c.l.b16 %v109
    %v652 = vunpack.c.h.b16 %v109
    %v653 = vunpack.c.l.b16 %v110
    %v654 = vunpack.c.h.b16 %v110
    %v655 = vunpack.c.l.b16 %v111
    %v656 = vunpack.c.h.b16 %v111
    %v657 = vunpack.c.l.b16 %v112
    %v658 = vunpack.c.h.b16 %v112
    %v659 = vunpack.c.l.b16 %v113
    %v660 = vunpack.c.h.b16 %v113
    %v661 = vunpack.c.l.b16 %v114
    %v662 = vunpack.c.h.b16 %v114
    %v663 = vunpack.c.l.b16 %v115
    %v664 = vunpack.c.h.b16 %v115
    %v665 = vunpack.c.l.b16 %v116
    %v666 = vunpack.c.h.b16 %v116
    %v667 = vunpack.c.l.b16 %v117
    %v668 = vunpack.c.h.b16 %v117
    %v669 = vunpack.c.l.b16 %v118
    %v670 = vunpack.c.h.b16 %v118
    %v671 = vunpack.c.l.b16 %v119
    %v672 = vunpack.c.h.b16 %v119
    %v673 = vunpack.c.l.b16 %v120
    %v674 = vunpack.c.h.b16 %v120
    %v675 = vunpack.c.l.b16 %v121
    %v676 = vunpack.c.h.b16 %v121
    %v677 = vunpack.c.l.b16 %v122
    %v678 = vunpack.c.h.b16 %v122
    %v679 = vunpack.c.l.b16 %v123
    %v680 = vunpack.c.h.b16 %v123
    %v681 = vunpack.c.l.b16 %v124
    %v682 = vunpack.c.h.b16 %v124
    %v683 = vunpack.c.l.b16 %v125
    %v684 = vunpack.c.h.b16 %v125
    %v685 = vunpack.c.l.b16 %v126
    %v686 = vunpack.c.h.b16 %v126
    %v687 = vunpack.c.l.b16 %v127
    %v688 = vunpack.c.h.b16 %v127
    %v689 = vunpack.c.l.b16 %v128
    %v690 = vunpack.c.h.b16 %v128
    %v691 = vunpack.c.l.b16 %v129
    %v692 = vunpack.c.h.b16 %v129
    %v693 = vunpack.c.l.b16 %v130
    %v694 = vunpack.c.h.b16 %v130
    %v695 = vunpack.c.l.b16 %v131
    %v696 = vunpack.c.h.b16 %v131
    %v697 = vunpack.c.l.b16 %v132
    %v698 = vunpack.c.h.b16 %v132
    %v699 = vunpack.c.l.b16 %v133
    %v700 = vunpack.c.h.b16 %v133
    %v701 = vunpack.c.l.b16 %v134
    %v702 = vunpack.c.h.b16 %v134
    %v703 = vunpack.c.l.b16 %v135
    %v704 = vunpack.c.h.b16 %v135
    %v705 = vunpack.c.l.b16 %v136
    %v706 = vunpack.c.h.b16 %v136
    %v707 = vunpack.c.l.b16 %v137
    %v708 = vunpack.c.h.b16 %v137
    %v709 = vunpack.c.l.b16 %v138
    %v710 = vunpack.c.h.b16 %v138
    %v711 = vunpack.c.l.b16 %v139
    %v712 = vunpack.c.h.b16 %v139
    %v713 = vunpack.c.l.b16 %v140
    %v714 = vunpack.c.h.b16 %v140
    %v715 = vunpack.c.l.b16 %v141
    %v716 = vunpack.c.h.b16 %v141
    %v717 = vunpack.c.l.b16 %v142
    %v718 = vunpack.c.h.b16 %v142
    %v719 = vunpack.c.l.b16 %v143
    %v720 = vunpack.c.h.b16 %v143
    %v721 = vunpack.c.l.b16 %v144
    %v722 = vunpack.c.h.b16 %v144
    %v723 = vunpack.c.l.b16 %v145
    %v724 = vunpack.c.h.b16 %v145
    %v725 = vunpack.c.l.b16 %v146
    %v726 = vunpack.c.h.b16 %v146
    %v727 = vunpack.c.l.b16 %v147
    %v728 = vunpack.c.h.b16 %v147
    %v729 = vunpack.c.l.b16 %v148
    %v730 = vunpack.c.h.b16 %v148
    %v731 = vunpack.c.l.b16 %v149
    %v732 = vunpack.c.h.b16 %v149
    %v733 = vunpack.c.l.b16 %v150
    %v734 = vunpack.c.h.b16 %v150
    %v735 = vunpack.c.l.b16 %v151
    %v736 = vunpack.c.h.b16 %v151
    %v737 = vunpack.c.l.b16 %v152
    %v738 = vunpack.c.h.b16 %v152
    %v739 = vunpack.c.l.b16 %v153
    %v740 = vunpack.c.h.b16 %v153
    %v741 = vunpack.c.l.b16 %v154
    %v742 = vunpack.c.h.b16 %v154
    %v743 = vunpack.c.l.b16 %v155
    %v744 = vunpack.c.h.b16 %v155
    %v745 = vunpack.c.l.b16 %v156
    %v746 = vunpack.c.h.b16 %v156
    %v747 = vunpack.c.l.b16 %v157
    %v748 = vunpack.c.h.b16 %v157
    %v749 = vunpack.c.l.b16 %v158
    %v750 = vunpack.c.h.b16 %v158
    %v751 = vunpack.c.l.b16 %v159
    %v752 = vunpack.c.h.b16 %v159
    %v753 = vunpack.c.l.b16 %v160
    %v754 = vunpack.c.h.b16 %v160
    %v755 = vunpack.c.l.b16 %v161
    %v756 = vunpack.c.h.b16 %v161
    %v757 = vunpack.c.l.b16 %v162
    %v758 = vunpack.c.h.b16 %v162
    %v759 = vunpack.c.l.b16 %v163
    %v760 = vunpack.c.h.b16 %v163
    %v761 = vunpack.c.l.b16 %v164
    %v762 = vunpack.c.h.b16 %v164
    %v763 = vunpack.c.l.b16 %v165
    %v764 = vunpack.c.h.b16 %v165
    %v765 = vunpack.c.l.b16 %v166
    %v766 = vunpack.c.h.b16 %v166
    %v767 = vunpack.c.l.b16 %v167
    %v768 = vunpack.c.h.b16 %v167
    %v769 = vunpack.c.l.b16 %v168
    %v770 = vunpack.c.h.b16 %v168
    %v771 = vunpack.c.l.b16 %v169
    %v772 = vunpack.c.h.b16 %v169
    %v773 = vunpack.c.l.b16 %v170
    %v774 = vunpack.c.h.b16 %v170
    %v775 = vunpack.c.l.b16 %v171
    %v776 = vunpack.c.h.b16 %v171
    %v777 = vunpack.c.l.b16 %v172
    %v778 = vunpack.c.h.b16 %v172
    %v779 = vunpack.c.l.b16 %v173
    %v780 = vunpack.c.h.b16 %v173
    %v781 = vunpack.c.l.b16 %v174
    %v782 = vunpack.c.h.b16 %v174
    %v783 = vunpack.c.l.b16 %v175
    %v784 = vunpack.c.h.b16 %v175
    %v785 = vunpack.c.l.b16 %v176
    %v786 = vunpack.c.h.b16 %v176
    %v787 = vunpack.c.l.b16 %v177
    %v788 = vunpack.c.h.b16 %v177
    %v789 = vunpack.c.l.b16 %v178
    %v790 = vunpack.c.h.b16 %v178
    %v791 = vunpack.c.l.b16 %v179
    %v792 = vunpack.c.h.b16 %v179
    %v793 = vunpack.c.l.b16 %v180
    %v794 = vunpack.c.h.b16 %v180
    %v795 = vunpack.c.l.b16 %v181
    %v796 = vunpack.c.h.b16 %v181
    %v797 = vunpack.c.l.b16 %v182
    %v798 = vunpack.c.h.b16 %v182
    %v799 = vunpack.c.l.b16 %v183
    %v800 = vunpack.c.h.b16 %v183
    %v801 = vunpack.c.l.b16 %v184
    %v802 = vunpack.c.h.b16 %v184
    %v803 = vunpack.c.l.b16 %v185
    %v804 = vunpack.c.h.b16 %v185
    %v805 = vunpack.c.l.b16 %v186
    %v806 = vunpack.c.h.b16 %v186
    %v807 = vunpack.c.l.b16 %v187
    %v808 = vunpack.c.h.b16 %v187
    %v809 = vunpack.c.l.b16 %v188
    %v810 = vunpack.c.h.b16 %v188
    %v811 = vunpack.c.l.b16 %v189
    %v812 = vunpack.c.h.b16 %v189
    %v813 = vunpack.c.l.b16 %v190
    %v814 = vunpack.c.h.b16 %v190
    %v815 = vunpack.c.l.b16 %v191
    %v816 = vunpack.c.h.b16 %v191
    %v817 = vunpack.c.l.b16 %v192
    %v818 = vunpack.c.h.b16 %v192
    %v819 = vunpack.c.l.b16 %v193
    %v820 = vunpack.c.h.b16 %v193
    %v821 = vunpack.c.l.b16 %v194
    %v822 = vunpack.c.h.b16 %v194
    %v823 = vunpack.c.l.b16 %v195
    %v824 = vunpack.c.h.b16 %v195
    %v825 = vunpack.c.l.b16 %v196
    %v826 = vunpack.c.h.b16 %v196
    %v827 = vunpack.c.l.b16 %v197
    %v828 = vunpack.c.h.b16 %v197
    %v829 = vunpack.c.l.b16 %v198
    %v830 = vunpack.c.h.b16 %v198
    %v831 = vunpack.c.l.b16 %v199
    %v832 = vunpack.c.h.b16 %v199
    %v833 = vunpack.c.l.b16 %v200
    %v834 = vunpack.c.h.b16 %v200
    %v835 = vunpack.c.l.b16 %v201
    %v836 = vunpack.c.h.b16 %v201
    %v837 = vunpack.c.l.b16 %v202
    %v838 = vunpack.c.h.b16 %v202
    %v839 = vunpack.c.l.b16 %v203
    %v840 = vunpack.c.h.b16 %v203
    %v841 = vunpack.c.l.b16 %v204
    %v842 = vunpack.c.h.b16 %v204
    %v843 = vunpack.c.l.b16 %v205
    %v844 = vunpack.c.h.b16 %v205
    %v845 = vunpack.c.l.b16 %v206
    %v846 = vunpack.c.h.b16 %v206
    %v847 = vunpack.c.l.b16 %v207
    %v848 = vunpack.c.h.b16 %v207
    %v849 = vunpack.c.l.b16 %v208
    %v850 = vunpack.c.h.b16 %v208
    %v851 = vunpack.c.l.b16 %v209
    %v852 = vunpack.c.h.b16 %v209
    %v853 = vunpack.c.l.b16 %v210
    %v854 = vunpack.c.h.b16 %v210
    %v855 = vunpack.c.l.b16 %v211
    %v856 = vunpack.c.h.b16 %v211
    %v857 = vunpack.c.l.b16 %v212
    %v858 = vunpack.c.h.b16 %v212
    %v859 = vunpack.c.l.b16 %v213
    %v860 = vunpack.c.h.b16 %v213
    %v861 = vunpack.c.l.b16 %v214
    %v862 = vunpack.c.h.b16 %v214
    %v863 = vunpack.c.l.b16 %v215
    %v864 = vunpack.c.h.b16 %v215
    %v865 = vunpack.c.l.b16 %v216
    %v866 = vunpack.c.h.b16 %v216
    %v867 = vunpack.c.l.b16 %v217
    %v868 = vunpack.c.h.b16 %v217
    %v869 = vunpack.c.l.b16 %v218
    %v870 = vunpack.c.h.b16 %v218
    %v871 = vunpack.c.l.b16 %v219
    %v872 = vunpack.c.h.b16 %v219
    %v873 = vunpack.c.l.b16 %v220
    %v874 = vunpack.c.h.b16 %v220
    %v875 = vunpack.c.l.b16 %v221
    %v876 = vunpack.c.h.b16 %v221
    %v877 = vunpack.c.l.b16 %v222
    %v878 = vunpack.c.h.b16 %v222
    %v879 = vunpack.c.l.b16 %v223
    %v880 = vunpack.c.h.b16 %v223
    %v881 = vunpack.c.l.b16 %v224
    %v882 = vunpack.c.h.b16 %v224
    %v883 = vunpack.c.l.b16 %v225
    %v884 = vunpack.c.h.b16 %v225
    %v885 = vunpack.c.l.b16 %v226
    %v886 = vunpack.c.h.b16 %v226
    %v887 = vunpack.c.l.b16 %v227
    %v888 = vunpack.c.h.b16 %v227
    %v889 = vunpack.c.l.b16 %v228
    %v890 = vunpack.c.h.b16 %v228
    %v891 = vunpack.c.l.b16 %v229
    %v892 = vunpack.c.h.b16 %v229
    %v893 = vunpack.c.l.b16 %v230
    %v894 = vunpack.c.h.b16 %v230
    %v895 = vunpack.c.l.b16 %v231
    %v896 = vunpack.c.h.b16 %v231
    %v897 = vunpack.c.l.b16 %v232
    %v898 = vunpack.c.h.b16 %v232
    %v899 = vunpack.c.l.b16 %v233
    %v900 = vunpack.c.h.b16 %v233
    %v901 = vunpack.c.l.b16 %v234
    %v902 = vunpack.c.h.b16 %v234
    %v903 = vunpack.c.l.b16 %v235
    %v904 = vunpack.c.h.b16 %v235
    %v905 = vunpack.c.l.b16 %v236
    %v906 = vunpack.c.h.b16 %v236
    %v907 = vunpack.c.l.b16 %v237
    %v908 = vunpack.c.h.b16 %v237
    %v909 = vunpack.c.l.b16 %v238
    %v910 = vunpack.c.h.b16 %v238
    %v911 = vunpack.c.l.b16 %v239
    %v912 = vunpack.c.h.b16 %v239
    %v913 = vunpack.c.l.b16 %v240
    %v914 = vunpack.c.h.b16 %v240
    %v915 = vunpack.c.l.b16 %v241
    %v916 = vunpack.c.h.b16 %v241
    %v917 = vunpack.c.l.b16 %v242
    %v918 = vunpack.c.h.b16 %v242
    %v919 = vunpack.c.l.b16 %v243
    %v920 = vunpack.c.h.b16 %v243
    %v921 = vunpack.c.l.b16 %v244
    %v922 = vunpack.c.h.b16 %v244
    %v923 = vunpack.c.l.b16 %v245
    %v924 = vunpack.c.h.b16 %v245
    %v925 = vunpack.c.l.b16 %v246
    %v926 = vunpack.c.h.b16 %v246
    %v927 = vunpack.c.l.b16 %v247
    %v928 = vunpack.c.h.b16 %v247
    %v929 = vunpack.c.l.b16 %v248
    %v930 = vunpack.c.h.b16 %v248
    %v931 = vunpack.c.l.b16 %v249
    %v932 = vunpack.c.h.b16 %v249
    %v933 = vunpack.c.l.b16 %v250
    %v934 = vunpack.c.h.b16 %v250
    %v935 = vunpack.c.l.b16 %v251
    %v936 = vunpack.c.h.b16 %v251
    %v937 = vunpack.c.l.b16 %v252
    %v938 = vunpack.c.h.b16 %v252
    %v939 = vunpack.c.l.b16 %v253
    %v940 = vunpack.c.h.b16 %v253
    %v941 = vunpack.c.l.b16 %v254
    %v942 = vunpack.c.h.b16 %v254
    %v943 = vunpack.c.l.b16 %v255
    %v944 = vunpack.c.h.b16 %v255
    %v945 = vunpack.c.l.b16 %v256
    %v946 = vunpack.c.h.b16 %v256
    %v947 = vunpack.c.l.b16 %v257
    %v948 = vunpack.c.h.b16 %v257
    %v949 = vunpack.c.l.b16 %v258
    %v950 = vunpack.c.h.b16 %v258
    %v951 = vunpack.c.l.b16 %v259
    %v952 = vunpack.c.h.b16 %v259
    %v953 = vunpack.c.l.b16 %v260
    %v954 = vunpack.c.h.b16 %v260
    %v955 = vunpack.c.l.b16 %v261
    %v956 = vunpack.c.h.b16 %v261
    %v957 = vunpack.c.l.b16 %v262
    %v958 = vunpack.c.h.b16 %v262
    %v959 = vunpack.c.l.b16 %v263
    %v960 = vunpack.c.h.b16 %v263
    %v961 = vunpack.c.l.b16 %v264
    %v962 = vunpack.c.h.b16 %v264
    %v963 = vunpack.c.l.b16 %v265
    %v964 = vunpack.c.h.b16 %v265
    %v965 = vunpack.c.l.b16 %v266
    %v966 = vunpack.c.h.b16 %v266
    %v967 = vunpack.c.l.b16 %v267
    %v968 = vunpack.c.h.b16 %v267
    %v969 = vunpack.c.l.b16 %v268
    %v970 = vunpack.c.h.b16 %v268
    %v971 = vunpack.c.l.b16 %v269
    %v972 = vunpack.c.h.b16 %v269
    %v973 = vunpack.c.l.b16 %v270
    %v974 = vunpack.c.h.b16 %v270
    %v975 = vunpack.c.l.b16 %v271
    %v976 = vunpack.c.h.b16 %v271
    %v977 = vunpack.c.l.b16 %v272
    %v978 = vunpack.c.h.b16 %v272
    %v979 = vunpack.c.l.b16 %v273
    %v980 = vunpack.c.h.b16 %v273
    %v981 = vunpack.c.l.b16 %v274
    %v982 = vunpack.c.h.b16 %v274
    %v983 = vunpack.c.l.b16 %v275
    %v984 = vunpack.c.h.b16 %v275
    %v985 = vunpack.c.l.b16 %v276
    %v986 = vunpack.c.h.b16 %v276
    %v987 = vunpack.c.l.b16 %v277
    %v988 = vunpack.c.h.b16 %v277
    %v989 = vunpack.c.l.b16 %v278
    %v990 = vunpack.c.h.b16 %v278
    %v991 = vunpack.c.l.b16 %v279
    %v992 = vunpack.c.h.b16 %v279
    %v993 = vunpack.c.l.b16 %v280
    %v994 = vunpack.c.h.b16 %v280
    %v995 = vunpack.c.l.b16 %v281
    %v996 = vunpack.c.h.b16 %v281
    %v997 = vunpack.c.l.b16 %v282
    %v998 = vunpack.c.h.b16 %v282
    %v999 = vunpack.c.l.b16 %v283
    %v1000 = vunpack.c.h.b16 %v283
    %v1001 = vunpack.c.l.b16 %v284
    %v1002 = vunpack.c.h.b16 %v284
    %v1003 = vunpack.c.l.b16 %v285
    %v1004 = vunpack.c.h.b16 %v285
    %v1005 = vunpack.c.l.b16 %v286
    %v1006 = vunpack.c.h.b16 %v286
    %v1007 = vunpack.c.l.b16 %v287
    %v1008 = vunpack.c.h.b16 %v287
    %v1009 = vunpack.c.l.b16 %v288
    %v1010 = vunpack.c.h.b16 %v288
    %v1011 = vunpack.c.l.b16 %v289
    %v1012 = vunpack.c.h.b16 %v289
    %v1013 = vunpack.c.l.b16 %v290
    %v1014 = vunpack.c.h.b16 %v290
    %v1015 = vunpack.c.l.b16 %v291
    %v1016 = vunpack.c.h.b16 %v291
    %v1017 = vunpack.c.l.b16 %v292
    %v1018 = vunpack.c.h.b16 %v292
    %v1019 = vunpack.c.l.b16 %v293
    %v1020 = vunpack.c.h.b16 %v293
    %v1021 = vunpack.c.l.b16 %v294
    %v1022 = vunpack.c.h.b16 %v294
    %v1023 = vunpack.c.l.b16 %v295
    %v1024 = vunpack.c.h.b16 %v295
    %v1025 = vunpack.c.l.b16 %v296
    %v1026 = vunpack.c.h.b16 %v296
    %v1027 = vunpack.c.l.b16 %v297
    %v1028 = vunpack.c.h.b16 %v297
    %v1029 = vunpack.c.l.b16 %v298
    %v1030 = vunpack.c.h.b16 %v298
    %v1031 = vunpack.c.l.b16 %v299
    %v1032 = vunpack.c.h.b16 %v299
    %v1033 = vunpack.c.l.b16 %v300
    %v1034 = vunpack.c.h.b16 %v300
    %v1035 = vunpack.c.l.b16 %v301
    %v1036 = vunpack.c.h.b16 %v301
    %v1037 = vunpack.c.l.b16 %v302
    %v1038 = vunpack.c.h.b16 %v302
    %v1039 = vunpack.c.l.b16 %v303
    %v1040 = vunpack.c.h.b16 %v303
    %v1041 = vunpack.c.l.b16 %v304
    %v1042 = vunpack.c.h.b16 %v304
    %v1043 = vunpack.c.l.b16 %v305
    %v1044 = vunpack.c.h.b16 %v305
    %v1045 = vunpack.c.l.b16 %v306
    %v1046 = vunpack.c.h.b16 %v306
    %v1047 = vunpack.c.l.b16 %v307
    %v1048 = vunpack.c.h.b16 %v307
    %v1049 = vunpack.c.l.b16 %v308
    %v1050 = vunpack.c.h.b16 %v308
    %v1051 = vunpack.c.l.b16 %v309
    %v1052 = vunpack.c.h.b16 %v309
    %v1053 = vunpack.c.l.b16 %v310
    %v1054 = vunpack.c.h.b16 %v310
    %v1055 = vunpack.c.l.b16 %v311
    %v1056 = vunpack.c.h.b16 %v311
    %v1057 = vunpack.c.l.b16 %v312
    %v1058 = vunpack.c.h.b16 %v312
    %v1059 = vunpack.c.l.b16 %v313
    %v1060 = vunpack.c.h.b16 %v313
    %v1061 = vunpack.c.l.b16 %v314
    %v1062 = vunpack.c.h.b16 %v314
    %v1063 = vunpack.c.l.b16 %v315
    %v1064 = vunpack.c.h.b16 %v315
    %v1065 = vunpack.c.l.b16 %v316
    %v1066 = vunpack.c.h.b16 %v316
    %v1067 = vunpack.c.l.b16 %v317
    %v1068 = vunpack.c.h.b16 %v317
    %v1069 = vunpack.c.l.b16 %v318
    %v1070 = vunpack.c.h.b16 %v318
    %v1071 = vunpack.c.l.b16 %v319
    %v1072 = vunpack.c.h.b16 %v319
    %v1073 = vunpack.c.l.b16 %v320
    %v1074 = vunpack.c.h.b16 %v320
    %v1075 = vunpack.c.l.b16 %v321
    %v1076 = vunpack.c.h.b16 %v321
    %v1077 = vunpack.c.l.b16 %v322
    %v1078 = vunpack.c.h.b16 %v322
    %v1079 = vunpack.c.l.b16 %v323
    %v1080 = vunpack.c.h.b16 %v323
    %v1081 = vunpack.c.l.b16 %v324
    %v1082 = vunpack.c.h.b16 %v324
    %v1083 = vunpack.c.l.b16 %v325
    %v1084 = vunpack.c.h.b16 %v325
    %v1085 = vunpack.c.l.b16 %v326
    %v1086 = vunpack.c.h.b16 %v326
    %v1087 = vunpack.c.l.b16 %v327
    %v1088 = vunpack.c.h.b16 %v327
    %v1089 = vunpack.c.l.b16 %v328
    %v1090 = vunpack.c.h.b16 %v328
    %v1091 = vunpack.c.l.b16 %v329
    %v1092 = vunpack.c.h.b16 %v329
    %v1093 = vunpack.c.l.b16 %v330
    %v1094 = vunpack.c.h.b16 %v330
    %v1095 = vunpack.c.l.b16 %v331
    %v1096 = vunpack.c.h.b16 %v331
    %v1097 = vunpack.c.l.b16 %v332
    %v1098 = vunpack.c.h.b16 %v332
    %v1099 = vunpack.c.l.b16 %v333
    %v1100 = vunpack.c.h.b16 %v333
    %v1101 = vunpack.c.l.b16 %v334
    %v1102 = vunpack.c.h.b16 %v334
    %v1103 = vunpack.c.l.b16 %v335
    %v1104 = vunpack.c.h.b16 %v335
    %v1105 = vunpack.c.l.b16 %v336
    %v1106 = vunpack.c.h.b16 %v336
    %v1107 = vunpack.c.l.b16 %v337
    %v1108 = vunpack.c.h.b16 %v337
    %v1109 = vunpack.c.l.b16 %v338
    %v1110 = vunpack.c.h.b16 %v338
    %v1111 = vunpack.c.l.b16 %v339
    %v1112 = vunpack.c.h.b16 %v339
    %v1113 = vunpack.c.l.b16 %v340
    %v1114 = vunpack.c.h.b16 %v340
    %v1115 = vunpack.c.l.b16 %v341
    %v1116 = vunpack.c.h.b16 %v341
    %v1117 = vunpack.c.l.b16 %v342
    %v1118 = vunpack.c.h.b16 %v342
    %v1119 = vunpack.c.l.b16 %v343
    %v1120 = vunpack.c.h.b16 %v343
    %v1121 = vunpack.c.l.b16 %v344
    %v1122 = vunpack.c.h.b16 %v344
    %v1123 = vpack.c.b16 %v615, %v611
    %v1124 = vpack.c.b16 %v616, %v612
    %v1125 = vpack.c.b16 %v617, %v613
    %v1126 = vpack.c.b16 %v618, %v614
    %v1127 = vpack.c.b16 %v623, %v619
    %v1128 = vpack.c.b16 %v624, %v620
    %v1129 = vpack.c.b16 %v625, %v621
    %v1130 = vpack.c.b16 %v626, %v622
    %v1131 = vpack.c.b16 %v631, %v627
    %v1132 = vpack.c.b16 %v632, %v628
    %v1133 = vpack.c.b16 %v633, %v629
    %v1134 = vpack.c.b16 %v634, %v630
    %v1135 = vpack.c.b16 %v639, %v635
    %v1136 = vpack.c.b16 %v640, %v636
    %v1137 = vpack.c.b16 %v641, %v637
    %v1138 = vpack.c.b16 %v642, %v638
    %v1139 = vpack.c.b16 %v647, %v643
    %v1140 = vpack.c.b16 %v648, %v644
    %v1141 = vpack.c.b16 %v649, %v645
    %v1142 = vpack.c.b16 %v650, %v646
    %v1143 = vpack.c.b16 %v655, %v651
    %v1144 = vpack.c.b16 %v656, %v652
    %v1145 = vpack.c.b16 %v657, %v653
    %v1146 = vpack.c.b16 %v658, %v654
    %v1147 = vpack.c.b16 %v663, %v659
    %v1148 = vpack.c.b16 %v664, %v660
    %v1149 = vpack.c.b16 %v665, %v661
    %v1150 = vpack.c.b16 %v666, %v662
    %v1151 = vpack.c.b16 %v671, %v667
    %v1152 = vpack.c.b16 %v672, %v668
    %v1153 = vpack.c.b16 %v673, %v669
    %v1154 = vpack.c.b16 %v674, %v670
    %v1155 = vpack.c.b16 %v679, %v675
    %v1156 = vpack.c.b16 %v680, %v676
    %v1157 = vpack.c.b16 %v681, %v677
    %v1158 = vpack.c.b16 %v682, %v678
    %v1159 = vpack.c.b16 %v687, %v683
    %v1160 = vpack.c.b16 %v688, %v684
    %v1161 = vpack.c.b16 %v689, %v685
    %v1162 = vpack.c.b16 %v690, %v686
    %v1163 = vpack.c.b16 %v695, %v691
    %v1164 = vpack.c.b16 %v696, %v692
    %v1165 = vpack.c.b16 %v697, %v693
    %v1166 = vpack.c.b16 %v698, %v694
    %v1167 = vpack.c.b16 %v703, %v699
    %v1168 = vpack.c.b16 %v704, %v700
    %v1169 = vpack.c.b16 %v705, %v701
    %v1170 = vpack.c.b16 %v706, %v702
    %v1171 = vpack.c.b16 %v711, %v707
    %v1172 = vpack.c.b16 %v712, %v708
    %v1173 = vpack.c.b16 %v713, %v709
    %v1174 = vpack.c.b16 %v714, %v710
    %v1175 = vpack.c.b16 %v719, %v715
    %v1176 = vpack.c.b16 %v720, %v716
    %v1177 = vpack.c.b16 %v721, %v717
    %v1178 = vpack.c.b16 %v722, %v718
    %v1179 = vpack.c.b16 %v727, %v723
    %v1180 = vpack.c.b16 %v728, %v724
    %v1181 = vpack.c.b16 %v729, %v725
    %v1182 = vpack.c.b16 %v730, %v726
    %v1183 = vpack.c.b16 %v735, %v731
    %v1184 = vpack.c.b16 %v736, %v732
    %v1185 = vpack.c.b16 %v737, %v733
    %v1186 = vpack.c.b16 %v738, %v734
    %v1187 = vpack.c.b16 %v743, %v739
    %v1188 = vpack.c.b16 %v744, %v740
    %v1189 = vpack.c.b16 %v745, %v741
    %v1190 = vpack.c.b16 %v746, %v742
    %v1191 = vpack.c.b16 %v751, %v747
    %v1192 = vpack.c.b16 %v752, %v748
    %v1193 = vpack.c.b16 %v753, %v749
    %v1194 = vpack.c.b16 %v754, %v750
    %v1195 = vpack.c.b16 %v759, %v755
    %v1196 = vpack.c.b16 %v760, %v756
    %v1197 = vpack.c.b16 %v761, %v757
    %v1198 = vpack.c.b16 %v762, %v758
    %v1199 = vpack.c.b16 %v767, %v763
    %v1200 = vpack.c.b16 %v768, %v764
    %v1201 = vpack.c.b16 %v769, %v765
    %v1202 = vpack.c.b16 %v770, %v766
    %v1203 = vpack.c.b16 %v775, %v771
    %v1204 = vpack.c.b16 %v776, %v772
    %v1205 = vpack.c.b16 %v777, %v773
    %v1206 = vpack.c.b16 %v778, %v774
    %v1207 = vpack.c.b16 %v783, %v779
    %v1208 = vpack.c.b16 %v784, %v780
    %v1209 = vpack.c.b16 %v785, %v781
    %v1210 = vpack.c.b16 %v786, %v782
    %v1211 = vpack.c.b16 %v791, %v787
    %v1212 = vpack.c.b16 %v792, %v788
    %v1213 = vpack.c.b16 %v793, %v789
    %v1214 = vpack.c.b16 %v794, %v790
    %v1215 = vpack.c.b16 %v799, %v795
    %v1216 = vpack.c.b16 %v800, %v796
    %v1217 = vpack.c.b16 %v801, %v797
    %v1218 = vpack.c.b16 %v802, %v798
    %v1219 = vpack.c.b16 %v807, %v803
    %v1220 = vpack.c.b16 %v808, %v804
    %v1221 = vpack.c.b16 %v809, %v805
    %v1222 = vpack.c.b16 %v810, %v806
    %v1223 = vpack.c.b16 %v815, %v811
    %v1224 = vpack.c.b16 %v816, %v812
    %v1225 = vpack.c.b16 %v817, %v813
    %v1226 = vpack.c.b16 %v818, %v814
    %v1227 = vpack.c.b16 %v823, %v819
    %v1228 = vpack.c.b16 %v824, %v820
    %v1229 = vpack.c.b16 %v825, %v821
    %v1230 = vpack.c.b16 %v826, %v822
    %v1231 = vpack.c.b16 %v831, %v827
    %v1232 = vpack.c.b16 %v832, %v828
    %v1233 = vpack.c.b16 %v833, %v829
    %v1234 = vpack.c.b16 %v834, %v830
    %v1235 = vpack.c.b16 %v839, %v835
    %v1236 = vpack.c.b16 %v840, %v836
    %v1237 = vpack.c.b16 %v841, %v837
    %v1238 = vpack.c.b16 %v842, %v838
    %v1239 = vpack.c.b16 %v847, %v843
    %v1240 = vpack.c.b16 %v848, %v844
    %v1241 = vpack.c.b16 %v849, %v845
    %v1242 = vpack.c.b16 %v850, %v846
    %v1243 = vpack.c.b16 %v855, %v851
    %v1244 = vpack.c.b16 %v856, %v852
    %v1245 = vpack.c.b16 %v857, %v853
    %v1246 = vpack.c.b16 %v858, %v854
    %v1247 = vpack.c.b16 %v863, %v859
    %v1248 = vpack.c.b16 %v864, %v860
    %v1249 = vpack.c.b16 %v865, %v861
    %v1250 = vpack.c.b16 %v866, %v862
    %v1251 = vpack.c.b16 %v871, %v867
    %v1252 = vpack.c.b16 %v872, %v868
    %v1253 = vpack.c.b16 %v873, %v869
    %v1254 = vpack.c.b16 %v874, %v870
    %v1255 = vpack.c.b16 %v879, %v875
    %v1256 = vpack.c.b16 %v880, %v876
    %v1257 = vpack.c.b16 %v881, %v877
    %v1258 = vpack.c.b16 %v882, %v878
    %v1259 = vpack.c.b16 %v887, %v883
    %v1260 = vpack.c.b16 %v888, %v884
    %v1261 = vpack.c.b16 %v889, %v885
    %v1262 = vpack.c.b16 %v890, %v886
    %v1263 = vpack.c.b16 %v895, %v891
    %v1264 = vpack.c.b16 %v896, %v892
    %v1265 = vpack.c.b16 %v897, %v893
    %v1266 = vpack.c.b16 %v898, %v894
    %v1267 = vpack.c.b16 %v903, %v899
    %v1268 = vpack.c.b16 %v904, %v900
    %v1269 = vpack.c.b16 %v905, %v901
    %v1270 = vpack.c.b16 %v906, %v902
    %v1271 = vpack.c.b16 %v911, %v907
    %v1272 = vpack.c.b16 %v912, %v908
    %v1273 = vpack.c.b16 %v913, %v909
    %v1274 = vpack.c.b16 %v914, %v910
    %v1275 = vpack.c.b16 %v919, %v915
    %v1276 = vpack.c.b16 %v920, %v916
    %v1277 = vpack.c.b16 %v921, %v917
    %v1278 = vpack.c.b16 %v922, %v918
    %v1279 = vpack.c.b16 %v927, %v923
    %v1280 = vpack.c.b16 %v928, %v924
    %v1281 = vpack.c.b16 %v929, %v925
    %v1282 = vpack.c.b16 %v930, %v926
    %v1283 = vpack.c.b16 %v935, %v931
    %v1284 = vpack.c.b16 %v936, %v932
    %v1285 = vpack.c.b16 %v937, %v933
    %v1286 = vpack.c.b16 %v938, %v934
    %v1287 = vpack.c.b16 %v943, %v939
    %v1288 = vpack.c.b16 %v944, %v940
    %v1289 = vpack.c.b16 %v945, %v941
    %v1290 = vpack.c.b16 %v946, %v942
    %v1291 = vpack.c.b16 %v951, %v947
    %v1292 = vpack.c.b16 %v952, %v948
    %v1293 = vpack.c.b16 %v953, %v949
    %v1294 = vpack.c.b16 %v954, %v950
    %v1295 = vpack.c.b16 %v959, %v955
    %v1296 = vpack.c.b16 %v960, %v956
    %v1297 = vpack.c.b16 %v961, %v957
    %v1298 = vpack.c.b16 %v962, %v958
    %v1299 = vpack.c.b16 %v967, %v963
    %v1300 = vpack.c.b16 %v968, %v964
    %v1301 = vpack.c.b16 %v969, %v965
    %v1302 = vpack.c.b16 %v970, %v966
    %v1303 = vpack.c.b16 %v975, %v971
    %v1304 = vpack.c.b16 %v976, %v972
    %v1305 = vpack.c.b16 %v977, %v973
    %v1306 = vpack.c.b16 %v978, %v974
    %v1307 = vpack.c.b16 %v983, %v979
    %v1308 = vpack.c.b16 %v984, %v980
    %v1309 = vpack.c.b16 %v985, %v981
    %v1310 = vpack.c.b16 %v986, %v982
    %v1311 = vpack.c.b16 %v991, %v987
    %v1312 = vpack.c.b16 %v992, %v988
    %v1313 = vpack.c.b16 %v993, %v989
    %v1314 = vpack.c.b16 %v994, %v990
    %v1315 = vpack.c.b16 %v999, %v995
    %v1316 = vpack.c.b16 %v1000, %v996
    %v1317 = vpack.c.b16 %v1001, %v997
    %v1318 = vpack.c.b16 %v1002, %v998
    %v1319 = vpack.c.b16 %v1007, %v1003
    %v1320 = vpack.c.b16 %v1008, %v1004
    %v1321 = vpack.c.b16 %v1009, %v1005
    %v1322 = vpack.c.b16 %v1010, %v1006
    %v1323 = vpack.c.b16 %v1015, %v1011
    %v1324 = vpack.c.b16 %v1016, %v1012
    %v1325 = vpack.c.b16 %v1017, %v1013
    %v1326 = vpack.c.b16 %v1018, %v1014
    %v1327 = vpack.c.b16 %v1023, %v1019
    %v1328 = vpack.c.b16 %v1024, %v1020
    %v1329 = vpack.c.b16 %v1025, %v1021
    %v1330 = vpack.c.b16 %v1026, %v1022
    %v1331 = vpack.c.b16 %v1031, %v1027
    %v1332 = vpack.c.b16 %v1032, %v1028
    %v1333 = vpack.c.b16 %v1033, %v1029
    %v1334 = vpack.c.b16 %v1034, %v1030
    %v1335 = vpack.c.b16 %v1039, %v1035
    %v1336 = vpack.c.b16 %v1040, %v1036
    %v1337 = vpack.c.b16 %v1041, %v1037
    %v1338 = vpack.c.b16 %v1042, %v1038
    %v1339 = vpack.c.b16 %v1047, %v1043
    %v1340 = vpack.c.b16 %v1048, %v1044
    %v1341 = vpack.c.b16 %v1049, %v1045
    %v1342 = vpack.c.b16 %v1050, %v1046
    %v1343 = vpack.c.b16 %v1055, %v1051
    %v1344 = vpack.c.b16 %v1056, %v1052
    %v1345 = vpack.c.b16 %v1057, %v1053
    %v1346 = vpack.c.b16 %v1058, %v1054
    %v1347 = vpack.c.b16 %v1063, %v1059
    %v1348 = vpack.c.b16 %v1064, %v1060
    %v1349 = vpack.c.b16 %v1065, %v1061
    %v1350 = vpack.c.b16 %v1066, %v1062
    %v1351 = vpack.c.b16 %v1071, %v1067
    %v1352 = vpack.c.b16 %v1072, %v1068
    %v1353 = vpack.c.b16 %v1073, %v1069
    %v1354 = vpack.c.b16 %v1074, %v1070
    %v1355 = vpack.c.b16 %v1079, %v1075
    %v1356 = vpack.c.b16 %v1080, %v1076
    %v1357 = vpack.c.b16 %v1081, %v1077
    %v1358 = vpack.c.b16 %v1082, %v1078
    %v1359 = vpack.c.b16 %v1087, %v1083
    %v1360 = vpack.c.b16 %v1088, %v1084
    %v1361 = vpack.c.b16 %v1089, %v1085
    %v1362 = vpack.c.b16 %v1090, %v1086
    %v1363 = vpack.c.b16 %v1095, %v1091
    %v1364 = vpack.c.b16 %v1096, %v1092
    %v1365 = vpack.c.b16 %v1097, %v1093
    %v1366 = vpack.c.b16 %v1098, %v1094
    %v1367 = vpack.c.b16 %v1103, %v1099
    %v1368 = vpack.c.b16 %v1104, %v1100
    %v1369 = vpack.c.b16 %v1105, %v1101
    %v1370 = vpack.c.b16 %v1106, %v1102
    %v1371 = vpack.c.b16 %v1111, %v1107
    %v1372 = vpack.c.b16 %v1112, %v1108
    %v1373 = vpack.c.b16 %v1113, %v1109
    %v1374 = vpack.c.b16 %v1114, %v1110
    %v1375 = vpack.c.b16 %v1119, %v1115
    %v1376 = vpack.c.b16 %v1120, %v1116
    %v1377 = vpack.c.b16 %v1121, %v1117
    %v1378 = vpack.c.b16 %v1122, %v1118
    %1635 = vmatpush.bf16.msra.mxu0 %v1151
    %1636 = vmatpush.bf16.msra.mxu0 %v1147
    %1637 = vmatpush.bf16.msra.mxu0 %v1143
    %1638 = vmatpush.bf16.msra.mxu0 %v1139
    %1639 = vmatpush.bf16.msra.mxu0 %v1135
    %1640 = vmatpush.bf16.msra.mxu0 %v1131
    %1641 = vmatpush.bf16.msra.mxu0 %v1127
    %1642 = vmatpush.bf16.msra.mxu0 %v1123
    %1643 = vmatmul.bf16.gmra.mxu0 %v81
    %v1644 = vpop.f32.mrf.mxu0
    %v1645 = vadd.f32 %v347, %v1644
    %v1646 = vpop.f32.mrf.mxu0
    %1647 = vdwg.mxu0
    %1648 = vmatpush.bf16.msra.mxu0 %v1183
    %1649 = vmatpush.bf16.msra.mxu0 %v1179
    %1650 = vmatpush.bf16.msra.mxu0 %v1175
    %1651 = vmatpush.bf16.msra.mxu0 %v1171
    %1652 = vmatpush.bf16.msra.mxu0 %v1167
    %1653 = vmatpush.bf16.msra.mxu0 %v1163
    %1654 = vmatpush.bf16.msra.mxu0 %v1159
    %1655 = vmatpush.bf16.msra.mxu0 %v1155
    %1656 = vmatmul.bf16.gmra.mxu0 %v82
    %v1657 = vpop.f32.mrf.mxu0
    %v1658 = vadd.f32 %v1645, %v1657
    %v1659 = vpop.f32.mrf.mxu0
    %1660 = vdwg.mxu0
    %1661 = vmatpush.bf16.msra.mxu0 %v1215
    %1662 = vmatpush.bf16.msra.mxu0 %v1211
    %1663 = vmatpush.bf16.msra.mxu0 %v1207
    %1664 = vmatpush.bf16.msra.mxu0 %v1203
    %1665 = vmatpush.bf16.msra.mxu0 %v1199
    %1666 = vmatpush.bf16.msra.mxu0 %v1195
    %1667 = vmatpush.bf16.msra.mxu0 %v1191
    %1668 = vmatpush.bf16.msra.mxu0 %v1187
    %1669 = vmatmul.bf16.gmra.mxu0 %v83
    %v1670 = vpop.f32.mrf.mxu0
    %v1671 = vadd.f32 %v1658, %v1670
    %v1672 = vpop.f32.mrf.mxu0
    %1673 = vdwg.mxu0
    %1674 = vmatpush.bf16.msra.mxu0 %v1247
    %1675 = vmatpush.bf16.msra.mxu0 %v1243
    %1676 = vmatpush.bf16.msra.mxu0 %v1239
    %1677 = vmatpush.bf16.msra.mxu0 %v1235
    %1678 = vmatpush.bf16.msra.mxu0 %v1231
    %1679 = vmatpush.bf16.msra.mxu0 %v1227
    %1680 = vmatpush.bf16.msra.mxu0 %v1223
    %1681 = vmatpush.bf16.msra.mxu0 %v1219
    %1682 = vmatmul.bf16.gmra.mxu0 %v84
    %v1683 = vpop.f32.mrf.mxu0
    %v1684 = vadd.f32 %v1671, %v1683
    %v1685 = vpop.f32.mrf.mxu0
    %1686 = vdwg.mxu0
    %1687 = vmatpush.bf16.msra.mxu0 %v1279
    %1688 = vmatpush.bf16.msra.mxu0 %v1275
    %1689 = vmatpush.bf16.msra.mxu0 %v1271
    %1690 = vmatpush.bf16.msra.mxu0 %v1267
    %1691 = vmatpush.bf16.msra.mxu0 %v1263
    %1692 = vmatpush.bf16.msra.mxu0 %v1259
    %1693 = vmatpush.bf16.msra.mxu0 %v1255
    %1694 = vmatpush.bf16.msra.mxu0 %v1251
    %1695 = vmatmul.bf16.gmra.mxu0 %v85
    %v1696 = vpop.f32.mrf.mxu0
    %v1697 = vadd.f32 %v1684, %v1696
    %v1698 = vpop.f32.mrf.mxu0
    %1699 = vdwg.mxu0
    %1700 = vmatpush.bf16.msra.mxu0 %v1311
    %1701 = vmatpush.bf16.msra.mxu0 %v1307
    %1702 = vmatpush.bf16.msra.mxu0 %v1303
    %1703 = vmatpush.bf16.msra.mxu0 %v1299
    %1704 = vmatpush.bf16.msra.mxu0 %v1295
    %1705 = vmatpush.bf16.msra.mxu0 %v1291
    %1706 = vmatpush.bf16.msra.mxu0 %v1287
    %1707 = vmatpush.bf16.msra.mxu0 %v1283
    %1708 = vmatmul.bf16.gmra.mxu0 %v86
    %v1709 = vpop.f32.mrf.mxu0
    %v1710 = vadd.f32 %v1697, %v1709
    %v1711 = vpop.f32.mrf.mxu0
    %1712 = vdwg.mxu0
    %1713 = vmatpush.bf16.msra.mxu0 %v1343
    %1714 = vmatpush.bf16.msra.mxu0 %v1339
    %1715 = vmatpush.bf16.msra.mxu0 %v1335
    %1716 = vmatpush.bf16.msra.mxu0 %v1331
    %1717 = vmatpush.bf16.msra.mxu0 %v1327
    %1718 = vmatpush.bf16.msra.mxu0 %v1323
    %1719 = vmatpush.bf16.msra.mxu0 %v1319
    %1720 = vmatpush.bf16.msra.mxu0 %v1315
    %1721 = vmatmul.bf16.gmra.mxu0 %v87
    %v1722 = vpop.f32.mrf.mxu0
    %v1723 = vadd.f32 %v1710, %v1722
    %v1724 = vpop.f32.mrf.mxu0
    %1725 = vdwg.mxu0
    %1726 = vmatpush.bf16.msra.mxu0 %v1375
    %1727 = vmatpush.bf16.msra.mxu0 %v1371
    %1728 = vmatpush.bf16.msra.mxu0 %v1367
    %1729 = vmatpush.bf16.msra.mxu0 %v1363
    %1730 = vmatpush.bf16.msra.mxu0 %v1359
    %1731 = vmatpush.bf16.msra.mxu0 %v1355
    %1732 = vmatpush.bf16.msra.mxu0 %v1351
    %1733 = vmatpush.bf16.msra.mxu0 %v1347
    %1734 = vmatmul.bf16.gmra.mxu0 %v88
    %v1735 = vpop.f32.mrf.mxu0
    %v1736 = vadd.f32 %v1723, %v1735
    %v1737 = vpop.f32.mrf.mxu0
    %1738 = vdwg.mxu0
    %1739 = vmatpush.bf16.msra.mxu0 %v1152
    %1740 = vmatpush.bf16.msra.mxu0 %v1148
    %1741 = vmatpush.bf16.msra.mxu0 %v1144
    %1742 = vmatpush.bf16.msra.mxu0 %v1140
    %1743 = vmatpush.bf16.msra.mxu0 %v1136
    %1744 = vmatpush.bf16.msra.mxu0 %v1132
    %1745 = vmatpush.bf16.msra.mxu0 %v1128
    %1746 = vmatpush.bf16.msra.mxu0 %v1124
    %1747 = vmatmul.bf16.gmra.mxu0 %v81
    %v1748 = vpop.f32.mrf.mxu0
    %v1749 = vadd.f32 %v348, %v1748
    %v1750 = vpop.f32.mrf.mxu0
    %1751 = vdwg.mxu0
    %1752 = vmatpush.bf16.msra.mxu0 %v1184
    %1753 = vmatpush.bf16.msra.mxu0 %v1180
    %1754 = vmatpush.bf16.msra.mxu0 %v1176
    %1755 = vmatpush.bf16.msra.mxu0 %v1172
    %1756 = vmatpush.bf16.msra.mxu0 %v1168
    %1757 = vmatpush.bf16.msra.mxu0 %v1164
    %1758 = vmatpush.bf16.msra.mxu0 %v1160
    %1759 = vmatpush.bf16.msra.mxu0 %v1156
    %1760 = vmatmul.bf16.gmra.mxu0 %v82
    %v1761 = vpop.f32.mrf.mxu0
    %v1762 = vadd.f32 %v1749, %v1761
    %v1763 = vpop.f32.mrf.mxu0
    %1764 = vdwg.mxu0
    %1765 = vmatpush.bf16.msra.mxu0 %v1216
    %1766 = vmatpush.bf16.msra.mxu0 %v1212
    %1767 = vmatpush.bf16.msra.mxu0 %v1208
    %1768 = vmatpush.bf16.msra.mxu0 %v1204
    %1769 = vmatpush.bf16.msra.mxu0 %v1200
    %1770 = vmatpush.bf16.msra.mxu0 %v1196
    %1771 = vmatpush.bf16.msra.mxu0 %v1192
    %1772 = vmatpush.bf16.msra.mxu0 %v1188
    %1773 = vmatmul.bf16.gmra.mxu0 %v83
    %v1774 = vpop.f32.mrf.mxu0
    %v1775 = vadd.f32 %v1762, %v1774
    %v1776 = vpop.f32.mrf.mxu0
    %1777 = vdwg.mxu0
    %1778 = vmatpush.bf16.msra.mxu0 %v1248
    %1779 = vmatpush.bf16.msra.mxu0 %v1244
    %1780 = vmatpush.bf16.msra.mxu0 %v1240
    %1781 = vmatpush.bf16.msra.mxu0 %v1236
    %1782 = vmatpush.bf16.msra.mxu0 %v1232
    %1783 = vmatpush.bf16.msra.mxu0 %v1228
    %1784 = vmatpush.bf16.msra.mxu0 %v1224
    %1785 = vmatpush.bf16.msra.mxu0 %v1220
    %1786 = vmatmul.bf16.gmra.mxu0 %v84
    %v1787 = vpop.f32.mrf.mxu0
    %v1788 = vadd.f32 %v1775, %v1787
    %v1789 = vpop.f32.mrf.mxu0
    %1790 = vdwg.mxu0
    %1791 = vmatpush.bf16.msra.mxu0 %v1280
    %1792 = vmatpush.bf16.msra.mxu0 %v1276
    %1793 = vmatpush.bf16.msra.mxu0 %v1272
    %1794 = vmatpush.bf16.msra.mxu0 %v1268
    %1795 = vmatpush.bf16.msra.mxu0 %v1264
    %1796 = vmatpush.bf16.msra.mxu0 %v1260
    %1797 = vmatpush.bf16.msra.mxu0 %v1256
    %1798 = vmatpush.bf16.msra.mxu0 %v1252
    %1799 = vmatmul.bf16.gmra.mxu0 %v85
    %v1800 = vpop.f32.mrf.mxu0
    %v1801 = vadd.f32 %v1788, %v1800
    %v1802 = vpop.f32.mrf.mxu0
    %1803 = vdwg.mxu0
    %1804 = vmatpush.bf16.msra.mxu0 %v1312
    %1805 = vmatpush.bf16.msra.mxu0 %v1308
    %1806 = vmatpush.bf16.msra.mxu0 %v1304
    %1807 = vmatpush.bf16.msra.mxu0 %v1300
    %1808 = vmatpush.bf16.msra.mxu0 %v1296
    %1809 = vmatpush.bf16.msra.mxu0 %v1292
    %1810 = vmatpush.bf16.msra.mxu0 %v1288
    %1811 = vmatpush.bf16.msra.mxu0 %v1284
    %1812 = vmatmul.bf16.gmra.mxu0 %v86
    %v1813 = vpop.f32.mrf.mxu0
    %v1814 = vadd.f32 %v1801, %v1813
    %v1815 = vpop.f32.mrf.mxu0
    %1816 = vdwg.mxu0
    %1817 = vmatpush.bf16.msra.mxu0 %v1344
    %1818 = vmatpush.bf16.msra.mxu0 %v1340
    %1819 = vmatpush.bf16.msra.mxu0 %v1336
    %1820 = vmatpush.bf16.msra.mxu0 %v1332
    %1821 = vmatpush.bf16.msra.mxu0 %v1328
    %1822 = vmatpush.bf16.msra.mxu0 %v1324
    %1823 = vmatpush.bf16.msra.mxu0 %v1320
    %1824 = vmatpush.bf16.msra.mxu0 %v1316
    %1825 = vmatmul.bf16.gmra.mxu0 %v87
    %v1826 = vpop.f32.mrf.mxu0
    %v1827 = vadd.f32 %v1814, %v1826
    %v1828 = vpop.f32.mrf.mxu0
    %1829 = vdwg.mxu0
    %1830 = vmatpush.bf16.msra.mxu0 %v1376
    %1831 = vmatpush.bf16.msra.mxu0 %v1372
    %1832 = vmatpush.bf16.msra.mxu0 %v1368
    %1833 = vmatpush.bf16.msra.mxu0 %v1364
    %1834 = vmatpush.bf16.msra.mxu0 %v1360
    %1835 = vmatpush.bf16.msra.mxu0 %v1356
    %1836 = vmatpush.bf16.msra.mxu0 %v1352
    %1837 = vmatpush.bf16.msra.mxu0 %v1348
    %1838 = vmatmul.bf16.gmra.mxu0 %v88
    %v1839 = vpop.f32.mrf.mxu0
    %v1840 = vadd.f32 %v1827, %v1839
    %v1841 = vpop.f32.mrf.mxu0
    %1842 = vdwg.mxu0
    %1843 = vmatpush.bf16.msra.mxu0 %v1153
    %1844 = vmatpush.bf16.msra.mxu0 %v1149
    %1845 = vmatpush.bf16.msra.mxu0 %v1145
    %1846 = vmatpush.bf16.msra.mxu0 %v1141
    %1847 = vmatpush.bf16.msra.mxu0 %v1137
    %1848 = vmatpush.bf16.msra.mxu0 %v1133
    %1849 = vmatpush.bf16.msra.mxu0 %v1129
    %1850 = vmatpush.bf16.msra.mxu0 %v1125
    %1851 = vmatmul.bf16.gmra.mxu0 %v81
    %v1852 = vpop.f32.mrf.mxu0
    %v1853 = vadd.f32 %v349, %v1852
    %v1854 = vpop.f32.mrf.mxu0
    %1855 = vdwg.mxu0
    %1856 = vmatpush.bf16.msra.mxu0 %v1185
    %1857 = vmatpush.bf16.msra.mxu0 %v1181
    %1858 = vmatpush.bf16.msra.mxu0 %v1177
    %1859 = vmatpush.bf16.msra.mxu0 %v1173
    %1860 = vmatpush.bf16.msra.mxu0 %v1169
    %1861 = vmatpush.bf16.msra.mxu0 %v1165
    %1862 = vmatpush.bf16.msra.mxu0 %v1161
    %1863 = vmatpush.bf16.msra.mxu0 %v1157
    %1864 = vmatmul.bf16.gmra.mxu0 %v82
    %v1865 = vpop.f32.mrf.mxu0
    %v1866 = vadd.f32 %v1853, %v1865
    %v1867 = vpop.f32.mrf.mxu0
    %1868 = vdwg.mxu0
    %1869 = vmatpush.bf16.msra.mxu0 %v1217
    %1870 = vmatpush.bf16.msra.mxu0 %v1213
    %1871 = vmatpush.bf16.msra.mxu0 %v1209
    %1872 = vmatpush.bf16.msra.mxu0 %v1205
    %1873 = vmatpush.bf16.msra.mxu0 %v1201
    %1874 = vmatpush.bf16.msra.mxu0 %v1197
    %1875 = vmatpush.bf16.msra.mxu0 %v1193
    %1876 = vmatpush.bf16.msra.mxu0 %v1189
    %1877 = vmatmul.bf16.gmra.mxu0 %v83
    %v1878 = vpop.f32.mrf.mxu0
    %v1879 = vadd.f32 %v1866, %v1878
    %v1880 = vpop.f32.mrf.mxu0
    %1881 = vdwg.mxu0
    %1882 = vmatpush.bf16.msra.mxu0 %v1249
    %1883 = vmatpush.bf16.msra.mxu0 %v1245
    %1884 = vmatpush.bf16.msra.mxu0 %v1241
    %1885 = vmatpush.bf16.msra.mxu0 %v1237
    %1886 = vmatpush.bf16.msra.mxu0 %v1233
    %1887 = vmatpush.bf16.msra.mxu0 %v1229
    %1888 = vmatpush.bf16.msra.mxu0 %v1225
    %1889 = vmatpush.bf16.msra.mxu0 %v1221
    %1890 = vmatmul.bf16.gmra.mxu0 %v84
    %v1891 = vpop.f32.mrf.mxu0
    %v1892 = vadd.f32 %v1879, %v1891
    %v1893 = vpop.f32.mrf.mxu0
    %1894 = vdwg.mxu0
    %1895 = vmatpush.bf16.msra.mxu0 %v1281
    %1896 = vmatpush.bf16.msra.mxu0 %v1277
    %1897 = vmatpush.bf16.msra.mxu0 %v1273
    %1898 = vmatpush.bf16.msra.mxu0 %v1269
    %1899 = vmatpush.bf16.msra.mxu0 %v1265
    %1900 = vmatpush.bf16.msra.mxu0 %v1261
    %1901 = vmatpush.bf16.msra.mxu0 %v1257
    %1902 = vmatpush.bf16.msra.mxu0 %v1253
    %1903 = vmatmul.bf16.gmra.mxu0 %v85
    %v1904 = vpop.f32.mrf.mxu0
    %v1905 = vadd.f32 %v1892, %v1904
    %v1906 = vpop.f32.mrf.mxu0
    %1907 = vdwg.mxu0
    %1908 = vmatpush.bf16.msra.mxu0 %v1313
    %1909 = vmatpush.bf16.msra.mxu0 %v1309
    %1910 = vmatpush.bf16.msra.mxu0 %v1305
    %1911 = vmatpush.bf16.msra.mxu0 %v1301
    %1912 = vmatpush.bf16.msra.mxu0 %v1297
    %1913 = vmatpush.bf16.msra.mxu0 %v1293
    %1914 = vmatpush.bf16.msra.mxu0 %v1289
    %1915 = vmatpush.bf16.msra.mxu0 %v1285
    %1916 = vmatmul.bf16.gmra.mxu0 %v86
    %v1917 = vpop.f32.mrf.mxu0
    %v1918 = vadd.f32 %v1905, %v1917
    %v1919 = vpop.f32.mrf.mxu0
    %1920 = vdwg.mxu0
    %1921 = vmatpush.bf16.msra.mxu0 %v1345
    %1922 = vmatpush.bf16.msra.mxu0 %v1341
    %1923 = vmatpush.bf16.msra.mxu0 %v1337
    %1924 = vmatpush.bf16.msra.mxu0 %v1333
    %1925 = vmatpush.bf16.msra.mxu0 %v1329
    %1926 = vmatpush.bf16.msra.mxu0 %v1325
    %1927 = vmatpush.bf16.msra.mxu0 %v1321
    %1928 = vmatpush.bf16.msra.mxu0 %v1317
    %1929 = vmatmul.bf16.gmra.mxu0 %v87
    %v1930 = vpop.f32.mrf.mxu0
    %v1931 = vadd.f32 %v1918, %v1930
    %v1932 = vpop.f32.mrf.mxu0
    %1933 = vdwg.mxu0
    %1934 = vmatpush.bf16.msra.mxu0 %v1377
    %1935 = vmatpush.bf16.msra.mxu0 %v1373
    %1936 = vmatpush.bf16.msra.mxu0 %v1369
    %1937 = vmatpush.bf16.msra.mxu0 %v1365
    %1938 = vmatpush.bf16.msra.mxu0 %v1361
    %1939 = vmatpush.bf16.msra.mxu0 %v1357
    %1940 = vmatpush.bf16.msra.mxu0 %v1353
    %1941 = vmatpush.bf16.msra.mxu0 %v1349
    %1942 = vmatmul.bf16.gmra.mxu0 %v88
    %v1943 = vpop.f32.mrf.mxu0
    %v1944 = vadd.f32 %v1931, %v1943
    %v1945 = vpop.f32.mrf.mxu0
    %1946 = vdwg.mxu0
    %1947 = vmatpush.bf16.msra.mxu0 %v1154
    %1948 = vmatpush.bf16.msra.mxu0 %v1150
    %1949 = vmatpush.bf16.msra.mxu0 %v1146
    %1950 = vmatpush.bf16.msra.mxu0 %v1142
    %1951 = vmatpush.bf16.msra.mxu0 %v1138
    %1952 = vmatpush.bf16.msra.mxu0 %v1134
    %1953 = vmatpush.bf16.msra.mxu0 %v1130
    %1954 = vmatpush.bf16.msra.mxu0 %v1126
    %1955 = vmatmul.bf16.gmra.mxu0 %v81
    %v1956 = vpop.f32.mrf.mxu0
    %v1957 = vadd.f32 %v350, %v1956
    %v1958 = vpop.f32.mrf.mxu0
    %1959 = vdwg.mxu0
    %1960 = vmatpush.bf16.msra.mxu0 %v1186
    %1961 = vmatpush.bf16.msra.mxu0 %v1182
    %1962 = vmatpush.bf16.msra.mxu0 %v1178
    %1963 = vmatpush.bf16.msra.mxu0 %v1174
    %1964 = vmatpush.bf16.msra.mxu0 %v1170
    %1965 = vmatpush.bf16.msra.mxu0 %v1166
    %1966 = vmatpush.bf16.msra.mxu0 %v1162
    %1967 = vmatpush.bf16.msra.mxu0 %v1158
    %1968 = vmatmul.bf16.gmra.mxu0 %v82
    %v1969 = vpop.f32.mrf.mxu0
    %v1970 = vadd.f32 %v1957, %v1969
    %v1971 = vpop.f32.mrf.mxu0
    %1972 = vdwg.mxu0
    %1973 = vmatpush.bf16.msra.mxu0 %v1218
    %1974 = vmatpush.bf16.msra.mxu0 %v1214
    %1975 = vmatpush.bf16.msra.mxu0 %v1210
    %1976 = vmatpush.bf16.msra.mxu0 %v1206
    %1977 = vmatpush.bf16.msra.mxu0 %v1202
    %1978 = vmatpush.bf16.msra.mxu0 %v1198
    %1979 = vmatpush.bf16.msra.mxu0 %v1194
    %1980 = vmatpush.bf16.msra.mxu0 %v1190
    %1981 = vmatmul.bf16.gmra.mxu0 %v83
    %v1982 = vpop.f32.mrf.mxu0
    %v1983 = vadd.f32 %v1970, %v1982
    %v1984 = vpop.f32.mrf.mxu0
    %1985 = vdwg.mxu0
    %1986 = vmatpush.bf16.msra.mxu0 %v1250
    %1987 = vmatpush.bf16.msra.mxu0 %v1246
    %1988 = vmatpush.bf16.msra.mxu0 %v1242
    %1989 = vmatpush.bf16.msra.mxu0 %v1238
    %1990 = vmatpush.bf16.msra.mxu0 %v1234
    %1991 = vmatpush.bf16.msra.mxu0 %v1230
    %1992 = vmatpush.bf16.msra.mxu0 %v1226
    %1993 = vmatpush.bf16.msra.mxu0 %v1222
    %1994 = vmatmul.bf16.gmra.mxu0 %v84
    %v1995 = vpop.f32.mrf.mxu0
    %v1996 = vadd.f32 %v1983, %v1995
    %v1997 = vpop.f32.mrf.mxu0
    %1998 = vdwg.mxu0
    %1999 = vmatpush.bf16.msra.mxu0 %v1282
    %2000 = vmatpush.bf16.msra.mxu0 %v1278
    %2001 = vmatpush.bf16.msra.mxu0 %v1274
    %2002 = vmatpush.bf16.msra.mxu0 %v1270
    %2003 = vmatpush.bf16.msra.mxu0 %v1266
    %2004 = vmatpush.bf16.msra.mxu0 %v1262
    %2005 = vmatpush.bf16.msra.mxu0 %v1258
    %2006 = vmatpush.bf16.msra.mxu0 %v1254
    %2007 = vmatmul.bf16.gmra.mxu0 %v85
    %v2008 = vpop.f32.mrf.mxu0
    %v2009 = vadd.f32 %v1996, %v2008
    %v2010 = vpop.f32.mrf.mxu0
    %2011 = vdwg.mxu0
    %2012 = vmatpush.bf16.msra.mxu0 %v1314
    %2013 = vmatpush.bf16.msra.mxu0 %v1310
    %2014 = vmatpush.bf16.msra.mxu0 %v1306
    %2015 = vmatpush.bf16.msra.mxu0 %v1302
    %2016 = vmatpush.bf16.msra.mxu0 %v1298
    %2017 = vmatpush.bf16.msra.mxu0 %v1294
    %2018 = vmatpush.bf16.msra.mxu0 %v1290
    %2019 = vmatpush.bf16.msra.mxu0 %v1286
    %2020 = vmatmul.bf16.gmra.mxu0 %v86
    %v2021 = vpop.f32.mrf.mxu0
    %v2022 = vadd.f32 %v2009, %v2021
    %v2023 = vpop.f32.mrf.mxu0
    %2024 = vdwg.mxu0
    %2025 = vmatpush.bf16.msra.mxu0 %v1346
    %2026 = vmatpush.bf16.msra.mxu0 %v1342
    %2027 = vmatpush.bf16.msra.mxu0 %v1338
    %2028 = vmatpush.bf16.msra.mxu0 %v1334
    %2029 = vmatpush.bf16.msra.mxu0 %v1330
    %2030 = vmatpush.bf16.msra.mxu0 %v1326
    %2031 = vmatpush.bf16.msra.mxu0 %v1322
    %2032 = vmatpush.bf16.msra.mxu0 %v1318
    %2033 = vmatmul.bf16.gmra.mxu0 %v87
    %v2034 = vpop.f32.mrf.mxu0
    %v2035 = vadd.f32 %v2022, %v2034
    %v2036 = vpop.f32.mrf.mxu0
    %2037 = vdwg.mxu0
    %2038 = vmatpush.bf16.msra.mxu0 %v1378
    %2039 = vmatpush.bf16.msra.mxu0 %v1374
    %2040 = vmatpush.bf16.msra.mxu0 %v1370
    %2041 = vmatpush.bf16.msra.mxu0 %v1366
    %2042 = vmatpush.bf16.msra.mxu0 %v1362
    %2043 = vmatpush.bf16.msra.mxu0 %v1358
    %2044 = vmatpush.bf16.msra.mxu0 %v1354
    %2045 = vmatpush.bf16.msra.mxu0 %v1350
    %2046 = vmatmul.bf16.gmra.mxu0 %v88
    %v2047 = vpop.f32.mrf.mxu0
    %v2048 = vadd.f32 %v2035, %v2047
    %v2049 = vpop.f32.mrf.mxu0
    %2050 = vdwg.mxu0
    %v2051 = vmax.f32 %v1736, 0.0
    %v2052 = vmax.f32 %v1840, 0.0
    %v2053 = vmax.f32 %v1944, 0.0
    %v2054 = vmax.f32 %v2048, 0.0
    %v2055 = vpack.c.bf16 %v2051, %v2051
    %v2056 = vpack.c.bf16 %v2052, %v2052
    %v2057 = vpack.c.bf16 %v2053, %v2053
    %v2058 = vpack.c.bf16 %v2054, %v2054
    %v2059 = vld [vmem:[#allocation4] sm:$0xff]
    %v2060 = vld [vmem:[#allocation4 + $0x8] sm:$0xff]
    %v2061 = vld [vmem:[#allocation4 + $0x10] sm:$0xff]
    %v2062 = vld [vmem:[#allocation4 + $0x18] sm:$0xff]
    %v2063 = vld [vmem:[#allocation4 + $0x20] sm:$0xff]
    %v2064 = vld [vmem:[#allocation4 + $0x28] sm:$0xff]
    %v2065 = vld [vmem:[#allocation4 + $0x30] sm:$0xff]
    %v2066 = vld [vmem:[#allocation4 + $0x38] sm:$0xff]
    %v2067 = vld [vmem:[#allocation4 + $0x40] sm:$0xff]
    %v2068 = vld [vmem:[#allocation4 + $0x48] sm:$0xff]
    %v2069 = vld [vmem:[#allocation4 + $0x50] sm:$0xff]
    %v2070 = vld [vmem:[#allocation4 + $0x58] sm:$0xff]
    %v2071 = vld [vmem:[#allocation4 + $0x60] sm:$0xff]
    %v2072 = vld [vmem:[#allocation4 + $0x68] sm:$0xff]
    %v2073 = vld [vmem:[#allocation4 + $0x70] sm:$0xff]
    %v2074 = vld [vmem:[#allocation4 + $0x78] sm:$0xff]
    %v2075 = vld [vmem:[#allocation4 + $0x80] sm:$0xff]
    %v2076 = vld [vmem:[#allocation4 + $0x88] sm:$0xff]
    %v2077 = vld [vmem:[#allocation4 + $0x90] sm:$0xff]
    %v2078 = vld [vmem:[#allocation4 + $0x98] sm:$0xff]
    %v2079 = vld [vmem:[#allocation4 + $0xa0] sm:$0xff]
    %v2080 = vld [vmem:[#allocation4 + $0xa8] sm:$0xff]
    %v2081 = vld [vmem:[#allocation4 + $0xb0] sm:$0xff]
    %v2082 = vld [vmem:[#allocation4 + $0xb8] sm:$0xff]
    %v2083 = vld [vmem:[#allocation4 + $0xc0] sm:$0xff]
    %v2084 = vld [vmem:[#allocation4 + $0xc8] sm:$0xff]
    %v2085 = vld [vmem:[#allocation4 + $0xd0] sm:$0xff]
    %v2086 = vld [vmem:[#allocation4 + $0xd8] sm:$0xff]
    %v2087 = vld [vmem:[#allocation4 + $0xe0] sm:$0xff]
    %v2088 = vld [vmem:[#allocation4 + $0xe8] sm:$0xff]
    %v2089 = vld [vmem:[#allocation4 + $0xf0] sm:$0xff]
    %v2090 = vld [vmem:[#allocation4 + $0xf8] sm:$0xff]
    %v2091 = vld [vmem:[#allocation4 + $0x100] sm:$0xff]
    %v2092 = vld [vmem:[#allocation4 + $0x108] sm:$0xff]
    %v2093 = vld [vmem:[#allocation4 + $0x110] sm:$0xff]
    %v2094 = vld [vmem:[#allocation4 + $0x118] sm:$0xff]
    %v2095 = vld [vmem:[#allocation4 + $0x120] sm:$0xff]
    %v2096 = vld [vmem:[#allocation4 + $0x128] sm:$0xff]
    %v2097 = vld [vmem:[#allocation4 + $0x130] sm:$0xff]
    %v2098 = vld [vmem:[#allocation4 + $0x138] sm:$0xff]
    %v2099 = vld [vmem:[#allocation4 + $0x140] sm:$0xff]
    %v2100 = vld [vmem:[#allocation4 + $0x148] sm:$0xff]
    %v2101 = vld [vmem:[#allocation4 + $0x150] sm:$0xff]
    %v2102 = vld [vmem:[#allocation4 + $0x158] sm:$0xff]
    %v2103 = vld [vmem:[#allocation4 + $0x160] sm:$0xff]
    %v2104 = vld [vmem:[#allocation4 + $0x168] sm:$0xff]
    %v2105 = vld [vmem:[#allocation4 + $0x170] sm:$0xff]
    %v2106 = vld [vmem:[#allocation4 + $0x178] sm:$0xff]
    %v2107 = vld [vmem:[#allocation4 + $0x180] sm:$0xff]
    %v2108 = vld [vmem:[#allocation4 + $0x188] sm:$0xff]
    %v2109 = vld [vmem:[#allocation4 + $0x190] sm:$0xff]
    %v2110 = vld [vmem:[#allocation4 + $0x198] sm:$0xff]
    %v2111 = vld [vmem:[#allocation4 + $0x1a0] sm:$0xff]
    %v2112 = vld [vmem:[#allocation4 + $0x1a8] sm:$0xff]
    %v2113 = vld [vmem:[#allocation4 + $0x1b0] sm:$0xff]
    %v2114 = vld [vmem:[#allocation4 + $0x1b8] sm:$0xff]
    %v2115 = vld [vmem:[#allocation4 + $0x1c0] sm:$0xff]
    %v2116 = vld [vmem:[#allocation4 + $0x1c8] sm:$0xff]
    %v2117 = vld [vmem:[#allocation4 + $0x1d0] sm:$0xff]
    %v2118 = vld [vmem:[#allocation4 + $0x1d8] sm:$0xff]
    %v2119 = vld [vmem:[#allocation4 + $0x1e0] sm:$0xff]
    %v2120 = vld [vmem:[#allocation4 + $0x1e8] sm:$0xff]
    %v2121 = vld [vmem:[#allocation4 + $0x1f0] sm:$0xff]
    %v2122 = vld [vmem:[#allocation4 + $0x1f8] sm:$0xff]
    %v2123 = vld [vmem:[%s4] sm:$0x3]
    %v2125 = vperm.slane %v2123, 0
    %v2126 = vperm.slane %v2123, 1
    %v2193 = vunpack.c.l.b16 %v2059
    %v2194 = vunpack.c.h.b16 %v2059
    %v2195 = vunpack.c.l.b16 %v2060
    %v2196 = vunpack.c.h.b16 %v2060
    %v2197 = vunpack.c.l.b16 %v2061
    %v2198 = vunpack.c.h.b16 %v2061
    %v2199 = vunpack.c.l.b16 %v2062
    %v2200 = vunpack.c.h.b16 %v2062
    %v2201 = vunpack.c.l.b16 %v2063
    %v2202 = vunpack.c.h.b16 %v2063
    %v2203 = vunpack.c.l.b16 %v2064
    %v2204 = vunpack.c.h.b16 %v2064
    %v2205 = vunpack.c.l.b16 %v2065
    %v2206 = vunpack.c.h.b16 %v2065
    %v2207 = vunpack.c.l.b16 %v2066
    %v2208 = vunpack.c.h.b16 %v2066
    %v2209 = vunpack.c.l.b16 %v2067
    %v2210 = vunpack.c.h.b16 %v2067
    %v2211 = vunpack.c.l.b16 %v2068
    %v2212 = vunpack.c.h.b16 %v2068
    %v2213 = vunpack.c.l.b16 %v2069
    %v2214 = vunpack.c.h.b16 %v2069
    %v2215 = vunpack.c.l.b16 %v2070
    %v2216 = vunpack.c.h.b16 %v2070
    %v2217 = vunpack.c.l.b16 %v2071
    %v2218 = vunpack.c.h.b16 %v2071
    %v2219 = vunpack.c.l.b16 %v2072
    %v2220 = vunpack.c.h.b16 %v2072
    %v2221 = vunpack.c.l.b16 %v2073
    %v2222 = vunpack.c.h.b16 %v2073
    %v2223 = vunpack.c.l.b16 %v2074
    %v2224 = vunpack.c.h.b16 %v2074
    %v2225 = vunpack.c.l.b16 %v2075
    %v2226 = vunpack.c.h.b16 %v2075
    %v2227 = vunpack.c.l.b16 %v2076
    %v2228 = vunpack.c.h.b16 %v2076
    %v2229 = vunpack.c.l.b16 %v2077
    %v2230 = vunpack.c.h.b16 %v2077
    %v2231 = vunpack.c.l.b16 %v2078
    %v2232 = vunpack.c.h.b16 %v2078
    %v2233 = vunpack.c.l.b16 %v2079
    %v2234 = vunpack.c.h.b16 %v2079
    %v2235 = vunpack.c.l.b16 %v2080
    %v2236 = vunpack.c.h.b16 %v2080
    %v2237 = vunpack.c.l.b16 %v2081
    %v2238 = vunpack.c.h.b16 %v2081
    %v2239 = vunpack.c.l.b16 %v2082
    %v2240 = vunpack.c.h.b16 %v2082
    %v2241 = vunpack.c.l.b16 %v2083
    %v2242 = vunpack.c.h.b16 %v2083
    %v2243 = vunpack.c.l.b16 %v2084
    %v2244 = vunpack.c.h.b16 %v2084
    %v2245 = vunpack.c.l.b16 %v2085
    %v2246 = vunpack.c.h.b16 %v2085
    %v2247 = vunpack.c.l.b16 %v2086
    %v2248 = vunpack.c.h.b16 %v2086
    %v2249 = vunpack.c.l.b16 %v2087
    %v2250 = vunpack.c.h.b16 %v2087
    %v2251 = vunpack.c.l.b16 %v2088
    %v2252 = vunpack.c.h.b16 %v2088
    %v2253 = vunpack.c.l.b16 %v2089
    %v2254 = vunpack.c.h.b16 %v2089
    %v2255 = vunpack.c.l.b16 %v2090
    %v2256 = vunpack.c.h.b16 %v2090
    %v2257 = vunpack.c.l.b16 %v2091
    %v2258 = vunpack.c.h.b16 %v2091
    %v2259 = vunpack.c.l.b16 %v2092
    %v2260 = vunpack.c.h.b16 %v2092
    %v2261 = vunpack.c.l.b16 %v2093
    %v2262 = vunpack.c.h.b16 %v2093
    %v2263 = vunpack.c.l.b16 %v2094
    %v2264 = vunpack.c.h.b16 %v2094
    %v2265 = vunpack.c.l.b16 %v2095
    %v2266 = vunpack.c.h.b16 %v2095
    %v2267 = vunpack.c.l.b16 %v2096
    %v2268 = vunpack.c.h.b16 %v2096
    %v2269 = vunpack.c.l.b16 %v2097
    %v2270 = vunpack.c.h.b16 %v2097
    %v2271 = vunpack.c.l.b16 %v2098
    %v2272 = vunpack.c.h.b16 %v2098
    %v2273 = vunpack.c.l.b16 %v2099
    %v2274 = vunpack.c.h.b16 %v2099
    %v2275 = vunpack.c.l.b16 %v2100
    %v2276 = vunpack.c.h.b16 %v2100
    %v2277 = vunpack.c.l.b16 %v2101
    %v2278 = vunpack.c.h.b16 %v2101
    %v2279 = vunpack.c.l.b16 %v2102
    %v2280 = vunpack.c.h.b16 %v2102
    %v2281 = vunpack.c.l.b16 %v2103
    %v2282 = vunpack.c.h.b16 %v2103
    %v2283 = vunpack.c.l.b16 %v2104
    %v2284 = vunpack.c.h.b16 %v2104
    %v2285 = vunpack.c.l.b16 %v2105
    %v2286 = vunpack.c.h.b16 %v2105
    %v2287 = vunpack.c.l.b16 %v2106
    %v2288 = vunpack.c.h.b16 %v2106
    %v2289 = vunpack.c.l.b16 %v2107
    %v2290 = vunpack.c.h.b16 %v2107
    %v2291 = vunpack.c.l.b16 %v2108
    %v2292 = vunpack.c.h.b16 %v2108
    %v2293 = vunpack.c.l.b16 %v2109
    %v2294 = vunpack.c.h.b16 %v2109
    %v2295 = vunpack.c.l.b16 %v2110
    %v2296 = vunpack.c.h.b16 %v2110
    %v2297 = vunpack.c.l.b16 %v2111
    %v2298 = vunpack.c.h.b16 %v2111
    %v2299 = vunpack.c.l.b16 %v2112
    %v2300 = vunpack.c.h.b16 %v2112
    %v2301 = vunpack.c.l.b16 %v2113
    %v2302 = vunpack.c.h.b16 %v2113
    %v2303 = vunpack.c.l.b16 %v2114
    %v2304 = vunpack.c.h.b16 %v2114
    %v2305 = vunpack.c.l.b16 %v2115
    %v2306 = vunpack.c.h.b16 %v2115
    %v2307 = vunpack.c.l.b16 %v2116
    %v2308 = vunpack.c.h.b16 %v2116
    %v2309 = vunpack.c.l.b16 %v2117
    %v2310 = vunpack.c.h.b16 %v2117
    %v2311 = vunpack.c.l.b16 %v2118
    %v2312 = vunpack.c.h.b16 %v2118
    %v2313 = vunpack.c.l.b16 %v2119
    %v2314 = vunpack.c.h.b16 %v2119
    %v2315 = vunpack.c.l.b16 %v2120
    %v2316 = vunpack.c.h.b16 %v2120
    %v2317 = vunpack.c.l.b16 %v2121
    %v2318 = vunpack.c.h.b16 %v2121
    %v2319 = vunpack.c.l.b16 %v2122
    %v2320 = vunpack.c.h.b16 %v2122
    %v2321 = vpack.c.b16 %v2195, %v2193
    %v2322 = vpack.c.b16 %v2196, %v2194
    %v2323 = vpack.c.b16 %v2199, %v2197
    %v2324 = vpack.c.b16 %v2200, %v2198
    %v2325 = vpack.c.b16 %v2203, %v2201
    %v2326 = vpack.c.b16 %v2204, %v2202
    %v2327 = vpack.c.b16 %v2207, %v2205
    %v2328 = vpack.c.b16 %v2208, %v2206
    %v2329 = vpack.c.b16 %v2211, %v2209
    %v2330 = vpack.c.b16 %v2212, %v2210
    %v2331 = vpack.c.b16 %v2215, %v2213
    %v2332 = vpack.c.b16 %v2216, %v2214
    %v2333 = vpack.c.b16 %v2219, %v2217
    %v2334 = vpack.c.b16 %v2220, %v2218
    %v2335 = vpack.c.b16 %v2223, %v2221
    %v2336 = vpack.c.b16 %v2224, %v2222
    %v2337 = vpack.c.b16 %v2227, %v2225
    %v2338 = vpack.c.b16 %v2228, %v2226
    %v2339 = vpack.c.b16 %v2231, %v2229
    %v2340 = vpack.c.b16 %v2232, %v2230
    %v2341 = vpack.c.b16 %v2235, %v2233
    %v2342 = vpack.c.b16 %v2236, %v2234
    %v2343 = vpack.c.b16 %v2239, %v2237
    %v2344 = vpack.c.b16 %v2240, %v2238
    %v2345 = vpack.c.b16 %v2243, %v2241
    %v2346 = vpack.c.b16 %v2244, %v2242
    %v2347 = vpack.c.b16 %v2247, %v2245
    %v2348 = vpack.c.b16 %v2248, %v2246
    %v2349 = vpack.c.b16 %v2251, %v2249
    %v2350 = vpack.c.b16 %v2252, %v2250
    %v2351 = vpack.c.b16 %v2255, %v2253
    %v2352 = vpack.c.b16 %v2256, %v2254
    %v2353 = vpack.c.b16 %v2259, %v2257
    %v2354 = vpack.c.b16 %v2260, %v2258
    %v2355 = vpack.c.b16 %v2263, %v2261
    %v2356 = vpack.c.b16 %v2264, %v2262
    %v2357 = vpack.c.b16 %v2267, %v2265
    %v2358 = vpack.c.b16 %v2268, %v2266
    %v2359 = vpack.c.b16 %v2271, %v2269
    %v2360 = vpack.c.b16 %v2272, %v2270
    %v2361 = vpack.c.b16 %v2275, %v2273
    %v2362 = vpack.c.b16 %v2276, %v2274
    %v2363 = vpack.c.b16 %v2279, %v2277
    %v2364 = vpack.c.b16 %v2280, %v2278
    %v2365 = vpack.c.b16 %v2283, %v2281
    %v2366 = vpack.c.b16 %v2284, %v2282
    %v2367 = vpack.c.b16 %v2287, %v2285
    %v2368 = vpack.c.b16 %v2288, %v2286
    %v2369 = vpack.c.b16 %v2291, %v2289
    %v2370 = vpack.c.b16 %v2292, %v2290
    %v2371 = vpack.c.b16 %v2295, %v2293
    %v2372 = vpack.c.b16 %v2296, %v2294
    %v2373 = vpack.c.b16 %v2299, %v2297
    %v2374 = vpack.c.b16 %v2300, %v2298
    %v2375 = vpack.c.b16 %v2303, %v2301
    %v2376 = vpack.c.b16 %v2304, %v2302
    %v2377 = vpack.c.b16 %v2307, %v2305
    %v2378 = vpack.c.b16 %v2308, %v2306
    %v2379 = vpack.c.b16 %v2311, %v2309
    %v2380 = vpack.c.b16 %v2312, %v2310
    %v2381 = vpack.c.b16 %v2315, %v2313
    %v2382 = vpack.c.b16 %v2316, %v2314
    %v2383 = vpack.c.b16 %v2319, %v2317
    %v2384 = vpack.c.b16 %v2320, %v2318
    %2449 = vmatpush.bf16.msra.mxu0 %v2335
    %2450 = vmatpush.bf16.msra.mxu0 %v2333
    %2451 = vmatpush.bf16.msra.mxu0 %v2331
    %2452 = vmatpush.bf16.msra.mxu0 %v2329
    %2453 = vmatpush.bf16.msra.mxu0 %v2327
    %2454 = vmatpush.bf16.msra.mxu0 %v2325
    %2455 = vmatpush.bf16.msra.mxu0 %v2323
    %2456 = vmatpush.bf16.msra.mxu0 %v2321
    %2457 = vmatmul.bf16.gmra.mxu0 %v2055
    %v2458 = vpop.f32.mrf.mxu0
    %v2459 = vadd.f32 %v2125, %v2458
    %v2460 = vpop.f32.mrf.mxu0
    %2461 = vdwg.mxu0
    %2462 = vmatpush.bf16.msra.mxu0 %v2351
    %2463 = vmatpush.bf16.msra.mxu0 %v2349
    %2464 = vmatpush.bf16.msra.mxu0 %v2347
    %2465 = vmatpush.bf16.msra.mxu0 %v2345
    %2466 = vmatpush.bf16.msra.mxu0 %v2343
    %2467 = vmatpush.bf16.msra.mxu0 %v2341
    %2468 = vmatpush.bf16.msra.mxu0 %v2339
    %2469 = vmatpush.bf16.msra.mxu0 %v2337
    %2470 = vmatmul.bf16.gmra.mxu0 %v2056
    %v2471 = vpop.f32.mrf.mxu0
    %v2472 = vadd.f32 %v2459, %v2471
    %v2473 = vpop.f32.mrf.mxu0
    %2474 = vdwg.mxu0
    %2475 = vmatpush.bf16.msra.mxu0 %v2367
    %2476 = vmatpush.bf16.msra.mxu0 %v2365
    %2477 = vmatpush.bf16.msra.mxu0 %v2363
    %2478 = vmatpush.bf16.msra.mxu0 %v2361
    %2479 = vmatpush.bf16.msra.mxu0 %v2359
    %2480 = vmatpush.bf16.msra.mxu0 %v2357
    %2481 = vmatpush.bf16.msra.mxu0 %v2355
    %2482 = vmatpush.bf16.msra.mxu0 %v2353
    %2483 = vmatmul.bf16.gmra.mxu0 %v2057
    %v2484 = vpop.f32.mrf.mxu0
    %v2485 = vadd.f32 %v2472, %v2484
    %v2486 = vpop.f32.mrf.mxu0
    %2487 = vdwg.mxu0
    %2488 = vmatpush.bf16.msra.mxu0 %v2383
    %2489 = vmatpush.bf16.msra.mxu0 %v2381
    %2490 = vmatpush.bf16.msra.mxu0 %v2379
    %2491 = vmatpush.bf16.msra.mxu0 %v2377
    %2492 = vmatpush.bf16.msra.mxu0 %v2375
    %2493 = vmatpush.bf16.msra.mxu0 %v2373
    %2494 = vmatpush.bf16.msra.mxu0 %v2371
    %2495 = vmatpush.bf16.msra.mxu0 %v2369
    %2496 = vmatmul.bf16.gmra.mxu0 %v2058
    %v2497 = vpop.f32.mrf.mxu0
    %v2498 = vadd.f32 %v2485, %v2497
    %v2499 = vpop.f32.mrf.mxu0
    %2500 = vdwg.mxu0
    %2501 = vmatpush.bf16.msra.mxu0 %v2336
    %2502 = vmatpush.bf16.msra.mxu0 %v2334
    %2503 = vmatpush.bf16.msra.mxu0 %v2332
    %2504 = vmatpush.bf16.msra.mxu0 %v2330
    %2505 = vmatpush.bf16.msra.mxu0 %v2328
    %2506 = vmatpush.bf16.msra.mxu0 %v2326
    %2507 = vmatpush.bf16.msra.mxu0 %v2324
    %2508 = vmatpush.bf16.msra.mxu0 %v2322
    %2509 = vmatmul.bf16.gmra.mxu0 %v2055
    %v2510 = vpop.f32.mrf.mxu0
    %v2511 = vadd.f32 %v2126, %v2510
    %v2512 = vpop.f32.mrf.mxu0
    %2513 = vdwg.mxu0
    %2514 = vmatpush.bf16.msra.mxu0 %v2352
    %2515 = vmatpush.bf16.msra.mxu0 %v2350
    %2516 = vmatpush.bf16.msra.mxu0 %v2348
    %2517 = vmatpush.bf16.msra.mxu0 %v2346
    %2518 = vmatpush.bf16.msra.mxu0 %v2344
    %2519 = vmatpush.bf16.msra.mxu0 %v2342
    %2520 = vmatpush.bf16.msra.mxu0 %v2340
    %2521 = vmatpush.bf16.msra.mxu0 %v2338
    %2522 = vmatmul.bf16.gmra.mxu0 %v2056
    %v2523 = vpop.f32.mrf.mxu0
    %v2524 = vadd.f32 %v2511, %v2523
    %v2525 = vpop.f32.mrf.mxu0
    %2526 = vdwg.mxu0
    %2527 = vmatpush.bf16.msra.mxu0 %v2368
    %2528 = vmatpush.bf16.msra.mxu0 %v2366
    %2529 = vmatpush.bf16.msra.mxu0 %v2364
    %2530 = vmatpush.bf16.msra.mxu0 %v2362
    %2531 = vmatpush.bf16.msra.mxu0 %v2360
    %2532 = vmatpush.bf16.msra.mxu0 %v2358
    %2533 = vmatpush.bf16.msra.mxu0 %v2356
    %2534 = vmatpush.bf16.msra.mxu0 %v2354
    %2535 = vmatmul.bf16.gmra.mxu0 %v2057
    %v2536 = vpop.f32.mrf.mxu0
    %v2537 = vadd.f32 %v2524, %v2536
    %v2538 = vpop.f32.mrf.mxu0
    %2539 = vdwg.mxu0
    %2540 = vmatpush.bf16.msra.mxu0 %v2384
    %2541 = vmatpush.bf16.msra.mxu0 %v2382
    %2542 = vmatpush.bf16.msra.mxu0 %v2380
    %2543 = vmatpush.bf16.msra.mxu0 %v2378
    %2544 = vmatpush.bf16.msra.mxu0 %v2376
    %2545 = vmatpush.bf16.msra.mxu0 %v2374
    %2546 = vmatpush.bf16.msra.mxu0 %v2372
    %2547 = vmatpush.bf16.msra.mxu0 %v2370
    %2548 = vmatmul.bf16.gmra.mxu0 %v2058
    %v2549 = vpop.f32.mrf.mxu0
    %v2550 = vadd.f32 %v2537, %v2549
    %v2551 = vpop.f32.mrf.mxu0
    %2552 = vdwg.mxu0
    %v2553 = vmax.f32 %v2498, 0.0
    %v2554 = vmax.f32 %v2550, 0.0
    %v2555 = vpack.c.bf16 %v2553, %v2553
    %v2556 = vpack.c.bf16 %v2554, %v2554
    %v2557 = vld [vmem:[%s5] sm:$0xf]
    %v2558 = vld [vmem:[%s5 + $0x4] sm:$0xf]
    %v2559 = vld [vmem:[%s5 + $0x8] sm:$0xf]
    %v2560 = vld [vmem:[%s5 + $0xc] sm:$0xf]
    %v2561 = vld [vmem:[%s5 + $0x10] sm:$0xf]
    %v2562 = vld [vmem:[%s5 + $0x14] sm:$0xf]
    %v2563 = vld [vmem:[%s5 + $0x18] sm:$0xf]
    %v2564 = vld [vmem:[%s5 + $0x1c] sm:$0xf]
    %v2565 = vld [vmem:[%s5 + $0x20] sm:$0xf]
    %v2566 = vld [vmem:[%s5 + $0x24] sm:$0xf]
    %v2567 = vld [vmem:[%s5 + $0x28] sm:$0xf]
    %v2568 = vld [vmem:[%s5 + $0x2c] sm:$0xf]
    %v2569 = vld [vmem:[%s5 + $0x30] sm:$0xf]
    %v2570 = vld [vmem:[%s5 + $0x34] sm:$0xf]
    %v2571 = vld [vmem:[%s5 + $0x38] sm:$0xf]
    %v2572 = vld [vmem:[%s5 + $0x3c] sm:$0xf]
    %v2573 = vld [vmem:[%s5 + $0x40] sm:$0xf]
    %v2574 = vld [vmem:[%s5 + $0x44] sm:$0xf]
    %v2575 = vld [vmem:[%s5 + $0x48] sm:$0xf]
    %v2576 = vld [vmem:[%s5 + $0x4c] sm:$0xf]
    %v2577 = vld [vmem:[%s5 + $0x50] sm:$0xf]
    %v2578 = vld [vmem:[%s5 + $0x54] sm:$0xf]
    %v2579 = vld [vmem:[%s5 + $0x58] sm:$0xf]
    %v2580 = vld [vmem:[%s5 + $0x5c] sm:$0xf]
    %v2581 = vld [vmem:[%s5 + $0x60] sm:$0xf]
    %v2582 = vld [vmem:[%s5 + $0x64] sm:$0xf]
    %v2583 = vld [vmem:[%s5 + $0x68] sm:$0xf]
    %v2584 = vld [vmem:[%s5 + $0x6c] sm:$0xf]
    %v2585 = vld [vmem:[%s5 + $0x70] sm:$0xf]
    %v2586 = vld [vmem:[%s5 + $0x74] sm:$0xf]
    %v2587 = vld [vmem:[%s5 + $0x78] sm:$0xf]
    %v2588 = vld [vmem:[%s5 + $0x7c] sm:$0xf]
    %v2589 = vld [vmem:[%s6] sm:$0x1]
    %v2591 = vperm.slane %v2589, 0
    %v2625 = vunpack.c.l.b16 %v2557
    %v2626 = vunpack.c.l.b16 %v2558
    %v2627 = vunpack.c.l.b16 %v2559
    %v2628 = vunpack.c.l.b16 %v2560
    %v2629 = vunpack.c.l.b16 %v2561
    %v2630 = vunpack.c.l.b16 %v2562
    %v2631 = vunpack.c.l.b16 %v2563
    %v2632 = vunpack.c.l.b16 %v2564
    %v2633 = vunpack.c.l.b16 %v2565
    %v2634 = vunpack.c.l.b16 %v2566
    %v2635 = vunpack.c.l.b16 %v2567
    %v2636 = vunpack.c.l.b16 %v2568
    %v2637 = vunpack.c.l.b16 %v2569
    %v2638 = vunpack.c.l.b16 %v2570
    %v2639 = vunpack.c.l.b16 %v2571
    %v2640 = vunpack.c.l.b16 %v2572
    %v2641 = vunpack.c.l.b16 %v2573
    %v2642 = vunpack.c.l.b16 %v2574
    %v2643 = vunpack.c.l.b16 %v2575
    %v2644 = vunpack.c.l.b16 %v2576
    %v2645 = vunpack.c.l.b16 %v2577
    %v2646 = vunpack.c.l.b16 %v2578
    %v2647 = vunpack.c.l.b16 %v2579
    %v2648 = vunpack.c.l.b16 %v2580
    %v2649 = vunpack.c.l.b16 %v2581
    %v2650 = vunpack.c.l.b16 %v2582
    %v2651 = vunpack.c.l.b16 %v2583
    %v2652 = vunpack.c.l.b16 %v2584
    %v2653 = vunpack.c.l.b16 %v2585
    %v2654 = vunpack.c.l.b16 %v2586
    %v2655 = vunpack.c.l.b16 %v2587
    %v2656 = vunpack.c.l.b16 %v2588
    %v2657 = vpack.c.b16 %v2626, %v2625
    %v2658 = vpack.c.b16 %v2628, %v2627
    %v2659 = vpack.c.b16 %v2630, %v2629
    %v2660 = vpack.c.b16 %v2632, %v2631
    %v2661 = vpack.c.b16 %v2634, %v2633
    %v2662 = vpack.c.b16 %v2636, %v2635
    %v2663 = vpack.c.b16 %v2638, %v2637
    %v2664 = vpack.c.b16 %v2640, %v2639
    %v2665 = vpack.c.b16 %v2642, %v2641
    %v2666 = vpack.c.b16 %v2644, %v2643
    %v2667 = vpack.c.b16 %v2646, %v2645
    %v2668 = vpack.c.b16 %v2648, %v2647
    %v2669 = vpack.c.b16 %v2650, %v2649
    %v2670 = vpack.c.b16 %v2652, %v2651
    %v2671 = vpack.c.b16 %v2654, %v2653
    %v2672 = vpack.c.b16 %v2656, %v2655
    %2689 = vmatpush.bf16.msra.mxu0 %v2664
    %2690 = vmatpush.bf16.msra.mxu0 %v2663
    %2691 = vmatpush.bf16.msra.mxu0 %v2662
    %2692 = vmatpush.bf16.msra.mxu0 %v2661
    %2693 = vmatpush.bf16.msra.mxu0 %v2660
    %2694 = vmatpush.bf16.msra.mxu0 %v2659
    %2695 = vmatpush.bf16.msra.mxu0 %v2658
    %2696 = vmatpush.bf16.msra.mxu0 %v2657
    %2697 = vmatmul.bf16.gmra.mxu0 %v2555
    %v2698 = vpop.f32.mrf.mxu0
    %v2699 = vadd.f32 %v2591, %v2698
    %v2700 = vpop.f32.mrf.mxu0
    %2701 = vdwg.mxu0
    %2702 = vmatpush.bf16.msra.mxu0 %v2672
    %2703 = vmatpush.bf16.msra.mxu0 %v2671
    %2704 = vmatpush.bf16.msra.mxu0 %v2670
    %2705 = vmatpush.bf16.msra.mxu0 %v2669
    %2706 = vmatpush.bf16.msra.mxu0 %v2668
    %2707 = vmatpush.bf16.msra.mxu0 %v2667
    %2708 = vmatpush.bf16.msra.mxu0 %v2666
    %2709 = vmatpush.bf16.msra.mxu0 %v2665
    %2710 = vmatmul.bf16.gmra.mxu0 %v2556
    %v2711 = vpop.f32.mrf.mxu0
    %v2712 = vadd.f32 %v2699, %v2711
    %v2713 = vpop.f32.mrf.mxu0
    %2714 = vdwg.mxu0
    %vm2715 = vcmask 66560
    %2716 = vst.msk [vmem:[%s7] sm:$0x3] %vm2715, %v2712
    // Predicated region
    $region38: #{pointnet_cls_forward.5} parent=1 // pred_check
      _
    $region39: #{pointnet_cls_forward.5} parent=1 // pred_check_branch
      %2718 = sbr.rel (0) target = $region41
    $region40: #{pointnet_cls_forward.5} parent=1 // pred_region
      _
    $region41: #{pointnet_cls_forward.5} parent=1 // pred_fallthru
      _
    // Predicated region
    $region42: #{pointnet_cls_forward.5} parent=1 // pred_check
      _
    $region43: #{pointnet_cls_forward.5} parent=1 // pred_check_branch
      %2720 = sbr.rel (0) target = $region45
    $region44: #{pointnet_cls_forward.5} parent=1 // pred_region
      _
    $region45: #{pointnet_cls_forward.5} parent=1 // pred_fallthru
      _
    %2721 = vsyncpa [#allocation3], 1
    %2722 = vsyncpa [#allocation5], 1

// kernel: pointnet_cls_forward.7
$region0: #{pointnet_cls_forward.7}
  #allocation0 [shape = 'u32[]', space=smem, size = 0x4, offset = 0x4, fixed_abs, tag = 'smem constant byte address 0x4 - core index']
  #allocation1 [shape = 'u32[72,128]{1,0:T(1,128)}', space=vmem, size = 0x9000, scoped, tag = 'internal scratch']
  %s0 = inlined_call_operand.vmem [shape: f32[2,1024], index: 0, kind: input, shape index: {}]
  %s1 = inlined_call_operand.hbm [shape: bf16[1024,512], index: 1, kind: input, shape index: {}]
  %s2 = inlined_call_operand.vmem [shape: f32[1,512], index: 2, kind: input, shape index: {}]
  %s3 = inlined_call_operand.vmem [shape: bf16[512,256], index: 3, kind: input, shape index: {}]
  %s4 = inlined_call_operand.vmem [shape: f32[1,256], index: 4, kind: input, shape index: {}]
  %s5 = inlined_call_operand.vmem [shape: bf16[256,2], index: 5, kind: input, shape index: {}]
  %s6 = inlined_call_operand.vmem [shape: f32[1,2], index: 6, kind: input, shape index: {}]
  %s7 = inlined_call_operand.hbm [shape: f32[2,2], index: 7, kind: output, shape index: {}]
  %s8 = sld [smem:[#allocation0]]
  $region42: #{pointnet_cls_forward.7} parent=0
    _
  %s10 = ssub.s32 1, %s8
  %s11 = scalar_select 0, %s10, %s8
  $region1: #{pointnet_cls_forward.7} parent=0
    #allocation2 [shape = 'u8[1048576]{0}', space=vmem, size = 0x100000, scoped, tag = 'input window, operand 1, single buffered']
    #allocation3 [shape = 's32[1]{0}', space=sflag, size = 0x4, scoped, tag = 'scoped memory for pointnet_cls_forward.7']
    #allocation4 [shape = 's32[1]{0}', space=sflag, size = 0x4, scoped, tag = 'scoped memory for pointnet_cls_forward.7']
    #allocation5 [shape = 'u8[1024]{0}', space=vmem, size = 0x400, scoped, tag = 'output window, operand 0, single buffered']
    %12 = vsyncpa [#allocation3], 0
    %13 = vsyncpa [#allocation4], 0
    // Predicated region
    $region2: #{pointnet_cls_forward.7} parent=1 // pred_check
      _
    $region3: #{pointnet_cls_forward.7} parent=1 // pred_check_branch
      %15 = sbr.rel (0) target = $region5
    $region4: #{pointnet_cls_forward.7} parent=1 // pred_region
      _
    $region5: #{pointnet_cls_forward.7} parent=1 // pred_fallthru
      _
    // Predicated region
    $region6: #{pointnet_cls_forward.7} parent=1 // pred_check
      _
    $region7: #{pointnet_cls_forward.7} parent=1 // pred_check_branch
      %17 = sbr.rel (0) target = $region9
    $region8: #{pointnet_cls_forward.7} parent=1 // pred_region
      %19 = vsyncadd [#allocation3], 0
      %s20 = sshll.u32 %s1, 4
      %s21 = int_to_ptr.hbm [resolvable:$true] %s20
      %s22 = sshll.u32 [#allocation2], 4
      %s23 = int_to_ptr.vmem [resolvable:$true] %s22
      %28 = dma.hbm_to_vmem [thread:$0]  %s21, 32768, %s23, [#allocation3], 256, 256, 16
    $region9: #{pointnet_cls_forward.7} parent=1 // pred_fallthru
      _
    // Predicated region
    $region10: #{pointnet_cls_forward.7} parent=1 // pred_check
      _
    $region11: #{pointnet_cls_forward.7} parent=1 // pred_check_branch
      %30 = sbr.rel (0) target = $region13
    $region12: #{pointnet_cls_forward.7} parent=1 // pred_region
      _
    $region13: #{pointnet_cls_forward.7} parent=1 // pred_fallthru
      _
    // Predicated region
    $region14: #{pointnet_cls_forward.7} parent=1 // pred_check
      _
    $region15: #{pointnet_cls_forward.7} parent=1 // pred_check_branch
      %32 = sbr.rel (0) target = $region17
    $region16: #{pointnet_cls_forward.7} parent=1 // pred_region
      _
    $region17: #{pointnet_cls_forward.7} parent=1 // pred_fallthru
      _
    // Predicated region
    $region18: #{pointnet_cls_forward.7} parent=1 // pred_check
      _
    $region19: #{pointnet_cls_forward.7} parent=1 // pred_check_branch
      %34 = sbr.rel (0) target = $region21
    $region20: #{pointnet_cls_forward.7} parent=1 // pred_region
      _
    $region21: #{pointnet_cls_forward.7} parent=1 // pred_fallthru
      _
    // Predicated region
    $region22: #{pointnet_cls_forward.7} parent=1 // pred_check
      _
    $region23: #{pointnet_cls_forward.7} parent=1 // pred_check_branch
      %36 = sbr.rel (0) target = $region25
    $region24: #{pointnet_cls_forward.7} parent=1 // pred_region
      _
    $region25: #{pointnet_cls_forward.7} parent=1 // pred_fallthru
      _
    // Predicated region
    $region26: #{pointnet_cls_forward.7} parent=1 // pred_check
      _
    $region27: #{pointnet_cls_forward.7} parent=1 // pred_check_branch
      %38 = sbr.rel (0) target = $region29
    $region28: #{pointnet_cls_forward.7} parent=1 // pred_region
      _
    $region29: #{pointnet_cls_forward.7} parent=1 // pred_fallthru
      _
    // Predicated region
    $region30: #{pointnet_cls_forward.7} parent=1 // pred_check
      _
    $region31: #{pointnet_cls_forward.7} parent=1 // pred_check_branch
      %40 = sbr.rel (0) target = $region33
    $region32: #{pointnet_cls_forward.7} parent=1 // pred_region
      %42 = dma.done [#allocation3], 32768
    $region33: #{pointnet_cls_forward.7} parent=1 // pred_fallthru
      _
    %v43 = vld [vmem:[%s0] sm:$0xff]
    %v44 = vld [vmem:[%s0 + $0x8] sm:$0xff]
    %47 = vst [vmem:[#allocation1] ss:$4 sm:$0xff] %v43
    %s48 = scalar_lea.vmem [#allocation1], 32
    %49 = vst [vmem:[%s48] ss:$4 sm:$0xff] %v44
    %v50 = vld.sshfl [vmem:[#allocation1] sm:$0xff pattern:$0x73625140]
    %v51 = vld.sshfl [vmem:[#allocation1 + $0x8] sm:$0xff pattern:$0x73625140]
    %v52 = vld.sshfl [vmem:[#allocation1 + $0x10] sm:$0xff pattern:$0x73625140]
    %v53 = vld.sshfl [vmem:[#allocation1 + $0x18] sm:$0xff pattern:$0x73625140]
    %v54 = vld.sshfl [vmem:[#allocation1 + $0x20] sm:$0xff pattern:$0x73625140]
    %v55 = vld.sshfl [vmem:[#allocation1 + $0x28] sm:$0xff pattern:$0x73625140]
    %v56 = vld.sshfl [vmem:[#allocation1 + $0x30] sm:$0xff pattern:$0x73625140]
    %v57 = vld.sshfl [vmem:[#allocation1 + $0x38] sm:$0xff pattern:$0x73625140]
    %v66 = vpack.c.bf16 %v50, %v50
    %v67 = vpack.c.bf16 %v51, %v51
    %v68 = vpack.c.bf16 %v52, %v52
    %v69 = vpack.c.bf16 %v53, %v53
    %v70 = vpack.c.bf16 %v54, %v54
    %v71 = vpack.c.bf16 %v55, %v55
    %v72 = vpack.c.bf16 %v56, %v56
    %v73 = vpack.c.bf16 %v57, %v57
    %v74 = vld [vmem:[#allocation2] sm:$0xff]
    %v75 = vld [vmem:[#allocation2 + $0x8] sm:$0xff]
    %v76 = vld [vmem:[#allocation2 + $0x10] sm:$0xff]
    %v77 = vld [vmem:[#allocation2 + $0x18] sm:$0xff]
    %v78 = vld [vmem:[#allocation2 + $0x20] sm:$0xff]
    %v79 = vld [vmem:[#allocation2 + $0x28] sm:$0xff]
    %v80 = vld [vmem:[#allocation2 + $0x30] sm:$0xff]
    %v81 = vld [vmem:[#allocation2 + $0x38] sm:$0xff]
    %v82 = vld [vmem:[#allocation2 + $0x40] sm:$0xff]
    %v83 = vld [vmem:[#allocation2 + $0x48] sm:$0xff]
    %v84 = vld [vmem:[#allocation2 + $0x50] sm:$0xff]
    %v85 = vld [vmem:[#allocation2 + $0x58] sm:$0xff]
    %v86 = vld [vmem:[#allocation2 + $0x60] sm:$0xff]
    %v87 = vld [vmem:[#allocation2 + $0x68] sm:$0xff]
    %v88 = vld [vmem:[#allocation2 + $0x70] sm:$0xff]
    %v89 = vld [vmem:[#allocation2 + $0x78] sm:$0xff]
    %v90 = vld [vmem:[#allocation2 + $0x80] sm:$0xff]
    %v91 = vld [vmem:[#allocation2 + $0x88] sm:$0xff]
    %v92 = vld [vmem:[#allocation2 + $0x90] sm:$0xff]
    %v93 = vld [vmem:[#allocation2 + $0x98] sm:$0xff]
    %v94 = vld [vmem:[#allocation2 + $0xa0] sm:$0xff]
    %v95 = vld [vmem:[#allocation2 + $0xa8] sm:$0xff]
    %v96 = vld [vmem:[#allocation2 + $0xb0] sm:$0xff]
    %v97 = vld [vmem:[#allocation2 + $0xb8] sm:$0xff]
    %v98 = vld [vmem:[#allocation2 + $0xc0] sm:$0xff]
    %v99 = vld [vmem:[#allocation2 + $0xc8] sm:$0xff]
    %v100 = vld [vmem:[#allocation2 + $0xd0] sm:$0xff]
    %v101 = vld [vmem:[#allocation2 + $0xd8] sm:$0xff]
    %v102 = vld [vmem:[#allocation2 + $0xe0] sm:$0xff]
    %v103 = vld [vmem:[#allocation2 + $0xe8] sm:$0xff]
    %v104 = vld [vmem:[#allocation2 + $0xf0] sm:$0xff]
    %v105 = vld [vmem:[#allocation2 + $0xf8] sm:$0xff]
    %v106 = vld [vmem:[#allocation2 + $0x100] sm:$0xff]
    %v107 = vld [vmem:[#allocation2 + $0x108] sm:$0xff]
    %v108 = vld [vmem:[#allocation2 + $0x110] sm:$0xff]
    %v109 = vld [vmem:[#allocation2 + $0x118] sm:$0xff]
    %v110 = vld [vmem:[#allocation2 + $0x120] sm:$0xff]
    %v111 = vld [vmem:[#allocation2 + $0x128] sm:$0xff]
    %v112 = vld [vmem:[#allocation2 + $0x130] sm:$0xff]
    %v113 = vld [vmem:[#allocation2 + $0x138] sm:$0xff]
    %v114 = vld [vmem:[#allocation2 + $0x140] sm:$0xff]
    %v115 = vld [vmem:[#allocation2 + $0x148] sm:$0xff]
    %v116 = vld [vmem:[#allocation2 + $0x150] sm:$0xff]
    %v117 = vld [vmem:[#allocation2 + $0x158] sm:$0xff]
    %v118 = vld [vmem:[#allocation2 + $0x160] sm:$0xff]
    %v119 = vld [vmem:[#allocation2 + $0x168] sm:$0xff]
    %v120 = vld [vmem:[#allocation2 + $0x170] sm:$0xff]
    %v121 = vld [vmem:[#allocation2 + $0x178] sm:$0xff]
    %v122 = vld [vmem:[#allocation2 + $0x180] sm:$0xff]
    %v123 = vld [vmem:[#allocation2 + $0x188] sm:$0xff]
    %v124 = vld [vmem:[#allocation2 + $0x190] sm:$0xff]
    %v125 = vld [vmem:[#allocation2 + $0x198] sm:$0xff]
    %v126 = vld [vmem:[#allocation2 + $0x1a0] sm:$0xff]
    %v127 = vld [vmem:[#allocation2 + $0x1a8] sm:$0xff]
    %v128 = vld [vmem:[#allocation2 + $0x1b0] sm:$0xff]
    %v129 = vld [vmem:[#allocation2 + $0x1b8] sm:$0xff]
    %v130 = vld [vmem:[#allocation2 + $0x1c0] sm:$0xff]
    %v131 = vld [vmem:[#allocation2 + $0x1c8] sm:$0xff]
    %v132 = vld [vmem:[#allocation2 + $0x1d0] sm:$0xff]
    %v133 = vld [vmem:[#allocation2 + $0x1d8] sm:$0xff]
    %v134 = vld [vmem:[#allocation2 + $0x1e0] sm:$0xff]
    %v135 = vld [vmem:[#allocation2 + $0x1e8] sm:$0xff]
    %v136 = vld [vmem:[#allocation2 + $0x1f0] sm:$0xff]
    %v137 = vld [vmem:[#allocation2 + $0x1f8] sm:$0xff]
    %v138 = vld [vmem:[#allocation2 + $0x200] sm:$0xff]
    %v139 = vld [vmem:[#allocation2 + $0x208] sm:$0xff]
    %v140 = vld [vmem:[#allocation2 + $0x210] sm:$0xff]
    %v141 = vld [vmem:[#allocation2 + $0x218] sm:$0xff]
    %v142 = vld [vmem:[#allocation2 + $0x220] sm:$0xff]
    %v143 = vld [vmem:[#allocation2 + $0x228] sm:$0xff]
    %v144 = vld [vmem:[#allocation2 + $0x230] sm:$0xff]
    %v145 = vld [vmem:[#allocation2 + $0x238] sm:$0xff]
    %v146 = vld [vmem:[#allocation2 + $0x240] sm:$0xff]
    %v147 = vld [vmem:[#allocation2 + $0x248] sm:$0xff]
    %v148 = vld [vmem:[#allocation2 + $0x250] sm:$0xff]
    %v149 = vld [vmem:[#allocation2 + $0x258] sm:$0xff]
    %v150 = vld [vmem:[#allocation2 + $0x260] sm:$0xff]
    %v151 = vld [vmem:[#allocation2 + $0x268] sm:$0xff]
    %v152 = vld [vmem:[#allocation2 + $0x270] sm:$0xff]
    %v153 = vld [vmem:[#allocation2 + $0x278] sm:$0xff]
    %v154 = vld [vmem:[#allocation2 + $0x280] sm:$0xff]
    %v155 = vld [vmem:[#allocation2 + $0x288] sm:$0xff]
    %v156 = vld [vmem:[#allocation2 + $0x290] sm:$0xff]
    %v157 = vld [vmem:[#allocation2 + $0x298] sm:$0xff]
    %v158 = vld [vmem:[#allocation2 + $0x2a0] sm:$0xff]
    %v159 = vld [vmem:[#allocation2 + $0x2a8] sm:$0xff]
    %v160 = vld [vmem:[#allocation2 + $0x2b0] sm:$0xff]
    %v161 = vld [vmem:[#allocation2 + $0x2b8] sm:$0xff]
    %v162 = vld [vmem:[#allocation2 + $0x2c0] sm:$0xff]
    %v163 = vld [vmem:[#allocation2 + $0x2c8] sm:$0xff]
    %v164 = vld [vmem:[#allocation2 + $0x2d0] sm:$0xff]
    %v165 = vld [vmem:[#allocation2 + $0x2d8] sm:$0xff]
    %v166 = vld [vmem:[#allocation2 + $0x2e0] sm:$0xff]
    %v167 = vld [vmem:[#allocation2 + $0x2e8] sm:$0xff]
    %v168 = vld [vmem:[#allocation2 + $0x2f0] sm:$0xff]
    %v169 = vld [vmem:[#allocation2 + $0x2f8] sm:$0xff]
    %v170 = vld [vmem:[#allocation2 + $0x300] sm:$0xff]
    %v171 = vld [vmem:[#allocation2 + $0x308] sm:$0xff]
    %v172 = vld [vmem:[#allocation2 + $0x310] sm:$0xff]
    %v173 = vld [vmem:[#allocation2 + $0x318] sm:$0xff]
    %v174 = vld [vmem:[#allocation2 + $0x320] sm:$0xff]
    %v175 = vld [vmem:[#allocation2 + $0x328] sm:$0xff]
    %v176 = vld [vmem:[#allocation2 + $0x330] sm:$0xff]
    %v177 = vld [vmem:[#allocation2 + $0x338] sm:$0xff]
    %v178 = vld [vmem:[#allocation2 + $0x340] sm:$0xff]
    %v179 = vld [vmem:[#allocation2 + $0x348] sm:$0xff]
    %v180 = vld [vmem:[#allocation2 + $0x350] sm:$0xff]
    %v181 = vld [vmem:[#allocation2 + $0x358] sm:$0xff]
    %v182 = vld [vmem:[#allocation2 + $0x360] sm:$0xff]
    %v183 = vld [vmem:[#allocation2 + $0x368] sm:$0xff]
    %v184 = vld [vmem:[#allocation2 + $0x370] sm:$0xff]
    %v185 = vld [vmem:[#allocation2 + $0x378] sm:$0xff]
    %v186 = vld [vmem:[#allocation2 + $0x380] sm:$0xff]
    %v187 = vld [vmem:[#allocation2 + $0x388] sm:$0xff]
    %v188 = vld [vmem:[#allocation2 + $0x390] sm:$0xff]
    %v189 = vld [vmem:[#allocation2 + $0x398] sm:$0xff]
    %v190 = vld [vmem:[#allocation2 + $0x3a0] sm:$0xff]
    %v191 = vld [vmem:[#allocation2 + $0x3a8] sm:$0xff]
    %v192 = vld [vmem:[#allocation2 + $0x3b0] sm:$0xff]
    %v193 = vld [vmem:[#allocation2 + $0x3b8] sm:$0xff]
    %v194 = vld [vmem:[#allocation2 + $0x3c0] sm:$0xff]
    %v195 = vld [vmem:[#allocation2 + $0x3c8] sm:$0xff]
    %v196 = vld [vmem:[#allocation2 + $0x3d0] sm:$0xff]
    %v197 = vld [vmem:[#allocation2 + $0x3d8] sm:$0xff]
    %v198 = vld [vmem:[#allocation2 + $0x3e0] sm:$0xff]
    %v199 = vld [vmem:[#allocation2 + $0x3e8] sm:$0xff]
    %v200 = vld [vmem:[#allocation2 + $0x3f0] sm:$0xff]
    %v201 = vld [vmem:[#allocation2 + $0x3f8] sm:$0xff]
    %v202 = vld [vmem:[#allocation2 + $0x400] sm:$0xff]
    %v203 = vld [vmem:[#allocation2 + $0x408] sm:$0xff]
    %v204 = vld [vmem:[#allocation2 + $0x410] sm:$0xff]
    %v205 = vld [vmem:[#allocation2 + $0x418] sm:$0xff]
    %v206 = vld [vmem:[#allocation2 + $0x420] sm:$0xff]
    %v207 = vld [vmem:[#allocation2 + $0x428] sm:$0xff]
    %v208 = vld [vmem:[#allocation2 + $0x430] sm:$0xff]
    %v209 = vld [vmem:[#allocation2 + $0x438] sm:$0xff]
    %v210 = vld [vmem:[#allocation2 + $0x440] sm:$0xff]
    %v211 = vld [vmem:[#allocation2 + $0x448] sm:$0xff]
    %v212 = vld [vmem:[#allocation2 + $0x450] sm:$0xff]
    %v213 = vld [vmem:[#allocation2 + $0x458] sm:$0xff]
    %v214 = vld [vmem:[#allocation2 + $0x460] sm:$0xff]
    %v215 = vld [vmem:[#allocation2 + $0x468] sm:$0xff]
    %v216 = vld [vmem:[#allocation2 + $0x470] sm:$0xff]
    %v217 = vld [vmem:[#allocation2 + $0x478] sm:$0xff]
    %v218 = vld [vmem:[#allocation2 + $0x480] sm:$0xff]
    %v219 = vld [vmem:[#allocation2 + $0x488] sm:$0xff]
    %v220 = vld [vmem:[#allocation2 + $0x490] sm:$0xff]
    %v221 = vld [vmem:[#allocation2 + $0x498] sm:$0xff]
    %v222 = vld [vmem:[#allocation2 + $0x4a0] sm:$0xff]
    %v223 = vld [vmem:[#allocation2 + $0x4a8] sm:$0xff]
    %v224 = vld [vmem:[#allocation2 + $0x4b0] sm:$0xff]
    %v225 = vld [vmem:[#allocation2 + $0x4b8] sm:$0xff]
    %v226 = vld [vmem:[#allocation2 + $0x4c0] sm:$0xff]
    %v227 = vld [vmem:[#allocation2 + $0x4c8] sm:$0xff]
    %v228 = vld [vmem:[#allocation2 + $0x4d0] sm:$0xff]
    %v229 = vld [vmem:[#allocation2 + $0x4d8] sm:$0xff]
    %v230 = vld [vmem:[#allocation2 + $0x4e0] sm:$0xff]
    %v231 = vld [vmem:[#allocation2 + $0x4e8] sm:$0xff]
    %v232 = vld [vmem:[#allocation2 + $0x4f0] sm:$0xff]
    %v233 = vld [vmem:[#allocation2 + $0x4f8] sm:$0xff]
    %v234 = vld [vmem:[#allocation2 + $0x500] sm:$0xff]
    %v235 = vld [vmem:[#allocation2 + $0x508] sm:$0xff]
    %v236 = vld [vmem:[#allocation2 + $0x510] sm:$0xff]
    %v237 = vld [vmem:[#allocation2 + $0x518] sm:$0xff]
    %v238 = vld [vmem:[#allocation2 + $0x520] sm:$0xff]
    %v239 = vld [vmem:[#allocation2 + $0x528] sm:$0xff]
    %v240 = vld [vmem:[#allocation2 + $0x530] sm:$0xff]
    %v241 = vld [vmem:[#allocation2 + $0x538] sm:$0xff]
    %v242 = vld [vmem:[#allocation2 + $0x540] sm:$0xff]
    %v243 = vld [vmem:[#allocation2 + $0x548] sm:$0xff]
    %v244 = vld [vmem:[#allocation2 + $0x550] sm:$0xff]
    %v245 = vld [vmem:[#allocation2 + $0x558] sm:$0xff]
    %v246 = vld [vmem:[#allocation2 + $0x560] sm:$0xff]
    %v247 = vld [vmem:[#allocation2 + $0x568] sm:$0xff]
    %v248 = vld [vmem:[#allocation2 + $0x570] sm:$0xff]
    %v249 = vld [vmem:[#allocation2 + $0x578] sm:$0xff]
    %v250 = vld [vmem:[#allocation2 + $0x580] sm:$0xff]
    %v251 = vld [vmem:[#allocation2 + $0x588] sm:$0xff]
    %v252 = vld [vmem:[#allocation2 + $0x590] sm:$0xff]
    %v253 = vld [vmem:[#allocation2 + $0x598] sm:$0xff]
    %v254 = vld [vmem:[#allocation2 + $0x5a0] sm:$0xff]
    %v255 = vld [vmem:[#allocation2 + $0x5a8] sm:$0xff]
    %v256 = vld [vmem:[#allocation2 + $0x5b0] sm:$0xff]
    %v257 = vld [vmem:[#allocation2 + $0x5b8] sm:$0xff]
    %v258 = vld [vmem:[#allocation2 + $0x5c0] sm:$0xff]
    %v259 = vld [vmem:[#allocation2 + $0x5c8] sm:$0xff]
    %v260 = vld [vmem:[#allocation2 + $0x5d0] sm:$0xff]
    %v261 = vld [vmem:[#allocation2 + $0x5d8] sm:$0xff]
    %v262 = vld [vmem:[#allocation2 + $0x5e0] sm:$0xff]
    %v263 = vld [vmem:[#allocation2 + $0x5e8] sm:$0xff]
    %v264 = vld [vmem:[#allocation2 + $0x5f0] sm:$0xff]
    %v265 = vld [vmem:[#allocation2 + $0x5f8] sm:$0xff]
    %v266 = vld [vmem:[#allocation2 + $0x600] sm:$0xff]
    %v267 = vld [vmem:[#allocation2 + $0x608] sm:$0xff]
    %v268 = vld [vmem:[#allocation2 + $0x610] sm:$0xff]
    %v269 = vld [vmem:[#allocation2 + $0x618] sm:$0xff]
    %v270 = vld [vmem:[#allocation2 + $0x620] sm:$0xff]
    %v271 = vld [vmem:[#allocation2 + $0x628] sm:$0xff]
    %v272 = vld [vmem:[#allocation2 + $0x630] sm:$0xff]
    %v273 = vld [vmem:[#allocation2 + $0x638] sm:$0xff]
    %v274 = vld [vmem:[#allocation2 + $0x640] sm:$0xff]
    %v275 = vld [vmem:[#allocation2 + $0x648] sm:$0xff]
    %v276 = vld [vmem:[#allocation2 + $0x650] sm:$0xff]
    %v277 = vld [vmem:[#allocation2 + $0x658] sm:$0xff]
    %v278 = vld [vmem:[#allocation2 + $0x660] sm:$0xff]
    %v279 = vld [vmem:[#allocation2 + $0x668] sm:$0xff]
    %v280 = vld [vmem:[#allocation2 + $0x670] sm:$0xff]
    %v281 = vld [vmem:[#allocation2 + $0x678] sm:$0xff]
    %v282 = vld [vmem:[#allocation2 + $0x680] sm:$0xff]
    %v283 = vld [vmem:[#allocation2 + $0x688] sm:$0xff]
    %v284 = vld [vmem:[#allocation2 + $0x690] sm:$0xff]
    %v285 = vld [vmem:[#allocation2 + $0x698] sm:$0xff]
    %v286 = vld [vmem:[#allocation2 + $0x6a0] sm:$0xff]
    %v287 = vld [vmem:[#allocation2 + $0x6a8] sm:$0xff]
    %v288 = vld [vmem:[#allocation2 + $0x6b0] sm:$0xff]
    %v289 = vld [vmem:[#allocation2 + $0x6b8] sm:$0xff]
    %v290 = vld [vmem:[#allocation2 + $0x6c0] sm:$0xff]
    %v291 = vld [vmem:[#allocation2 + $0x6c8] sm:$0xff]
    %v292 = vld [vmem:[#allocation2 + $0x6d0] sm:$0xff]
    %v293 = vld [vmem:[#allocation2 + $0x6d8] sm:$0xff]
    %v294 = vld [vmem:[#allocation2 + $0x6e0] sm:$0xff]
    %v295 = vld [vmem:[#allocation2 + $0x6e8] sm:$0xff]
    %v296 = vld [vmem:[#allocation2 + $0x6f0] sm:$0xff]
    %v297 = vld [vmem:[#allocation2 + $0x6f8] sm:$0xff]
    %v298 = vld [vmem:[#allocation2 + $0x700] sm:$0xff]
    %v299 = vld [vmem:[#allocation2 + $0x708] sm:$0xff]
    %v300 = vld [vmem:[#allocation2 + $0x710] sm:$0xff]
    %v301 = vld [vmem:[#allocation2 + $0x718] sm:$0xff]
    %v302 = vld [vmem:[#allocation2 + $0x720] sm:$0xff]
    %v303 = vld [vmem:[#allocation2 + $0x728] sm:$0xff]
    %v304 = vld [vmem:[#allocation2 + $0x730] sm:$0xff]
    %v305 = vld [vmem:[#allocation2 + $0x738] sm:$0xff]
    %v306 = vld [vmem:[#allocation2 + $0x740] sm:$0xff]
    %v307 = vld [vmem:[#allocation2 + $0x748] sm:$0xff]
    %v308 = vld [vmem:[#allocation2 + $0x750] sm:$0xff]
    %v309 = vld [vmem:[#allocation2 + $0x758] sm:$0xff]
    %v310 = vld [vmem:[#allocation2 + $0x760] sm:$0xff]
    %v311 = vld [vmem:[#allocation2 + $0x768] sm:$0xff]
    %v312 = vld [vmem:[#allocation2 + $0x770] sm:$0xff]
    %v313 = vld [vmem:[#allocation2 + $0x778] sm:$0xff]
    %v314 = vld [vmem:[#allocation2 + $0x780] sm:$0xff]
    %v315 = vld [vmem:[#allocation2 + $0x788] sm:$0xff]
    %v316 = vld [vmem:[#allocation2 + $0x790] sm:$0xff]
    %v317 = vld [vmem:[#allocation2 + $0x798] sm:$0xff]
    %v318 = vld [vmem:[#allocation2 + $0x7a0] sm:$0xff]
    %v319 = vld [vmem:[#allocation2 + $0x7a8] sm:$0xff]
    %v320 = vld [vmem:[#allocation2 + $0x7b0] sm:$0xff]
    %v321 = vld [vmem:[#allocation2 + $0x7b8] sm:$0xff]
    %v322 = vld [vmem:[#allocation2 + $0x7c0] sm:$0xff]
    %v323 = vld [vmem:[#allocation2 + $0x7c8] sm:$0xff]
    %v324 = vld [vmem:[#allocation2 + $0x7d0] sm:$0xff]
    %v325 = vld [vmem:[#allocation2 + $0x7d8] sm:$0xff]
    %v326 = vld [vmem:[#allocation2 + $0x7e0] sm:$0xff]
    %v327 = vld [vmem:[#allocation2 + $0x7e8] sm:$0xff]
    %v328 = vld [vmem:[#allocation2 + $0x7f0] sm:$0xff]
    %v329 = vld [vmem:[#allocation2 + $0x7f8] sm:$0xff]
    %v330 = vld [vmem:[%s2] sm:$0xf]
    %v332 = vperm.slane %v330, 0
    %v333 = vperm.slane %v330, 1
    %v334 = vperm.slane %v330, 2
    %v335 = vperm.slane %v330, 3
    %v596 = vunpack.c.l.b16 %v74
    %v597 = vunpack.c.h.b16 %v74
    %v598 = vunpack.c.l.b16 %v75
    %v599 = vunpack.c.h.b16 %v75
    %v600 = vunpack.c.l.b16 %v76
    %v601 = vunpack.c.h.b16 %v76
    %v602 = vunpack.c.l.b16 %v77
    %v603 = vunpack.c.h.b16 %v77
    %v604 = vunpack.c.l.b16 %v78
    %v605 = vunpack.c.h.b16 %v78
    %v606 = vunpack.c.l.b16 %v79
    %v607 = vunpack.c.h.b16 %v79
    %v608 = vunpack.c.l.b16 %v80
    %v609 = vunpack.c.h.b16 %v80
    %v610 = vunpack.c.l.b16 %v81
    %v611 = vunpack.c.h.b16 %v81
    %v612 = vunpack.c.l.b16 %v82
    %v613 = vunpack.c.h.b16 %v82
    %v614 = vunpack.c.l.b16 %v83
    %v615 = vunpack.c.h.b16 %v83
    %v616 = vunpack.c.l.b16 %v84
    %v617 = vunpack.c.h.b16 %v84
    %v618 = vunpack.c.l.b16 %v85
    %v619 = vunpack.c.h.b16 %v85
    %v620 = vunpack.c.l.b16 %v86
    %v621 = vunpack.c.h.b16 %v86
    %v622 = vunpack.c.l.b16 %v87
    %v623 = vunpack.c.h.b16 %v87
    %v624 = vunpack.c.l.b16 %v88
    %v625 = vunpack.c.h.b16 %v88
    %v626 = vunpack.c.l.b16 %v89
    %v627 = vunpack.c.h.b16 %v89
    %v628 = vunpack.c.l.b16 %v90
    %v629 = vunpack.c.h.b16 %v90
    %v630 = vunpack.c.l.b16 %v91
    %v631 = vunpack.c.h.b16 %v91
    %v632 = vunpack.c.l.b16 %v92
    %v633 = vunpack.c.h.b16 %v92
    %v634 = vunpack.c.l.b16 %v93
    %v635 = vunpack.c.h.b16 %v93
    %v636 = vunpack.c.l.b16 %v94
    %v637 = vunpack.c.h.b16 %v94
    %v638 = vunpack.c.l.b16 %v95
    %v639 = vunpack.c.h.b16 %v95
    %v640 = vunpack.c.l.b16 %v96
    %v641 = vunpack.c.h.b16 %v96
    %v642 = vunpack.c.l.b16 %v97
    %v643 = vunpack.c.h.b16 %v97
    %v644 = vunpack.c.l.b16 %v98
    %v645 = vunpack.c.h.b16 %v98
    %v646 = vunpack.c.l.b16 %v99
    %v647 = vunpack.c.h.b16 %v99
    %v648 = vunpack.c.l.b16 %v100
    %v649 = vunpack.c.h.b16 %v100
    %v650 = vunpack.c.l.b16 %v101
    %v651 = vunpack.c.h.b16 %v101
    %v652 = vunpack.c.l.b16 %v102
    %v653 = vunpack.c.h.b16 %v102
    %v654 = vunpack.c.l.b16 %v103
    %v655 = vunpack.c.h.b16 %v103
    %v656 = vunpack.c.l.b16 %v104
    %v657 = vunpack.c.h.b16 %v104
    %v658 = vunpack.c.l.b16 %v105
    %v659 = vunpack.c.h.b16 %v105
    %v660 = vunpack.c.l.b16 %v106
    %v661 = vunpack.c.h.b16 %v106
    %v662 = vunpack.c.l.b16 %v107
    %v663 = vunpack.c.h.b16 %v107
    %v664 = vunpack.c.l.b16 %v108
    %v665 = vunpack.c.h.b16 %v108
    %v666 = vunpack.c.l.b16 %v109
    %v667 = vunpack.c.h.b16 %v109
    %v668 = vunpack.c.l.b16 %v110
    %v669 = vunpack.c.h.b16 %v110
    %v670 = vunpack.c.l.b16 %v111
    %v671 = vunpack.c.h.b16 %v111
    %v672 = vunpack.c.l.b16 %v112
    %v673 = vunpack.c.h.b16 %v112
    %v674 = vunpack.c.l.b16 %v113
    %v675 = vunpack.c.h.b16 %v113
    %v676 = vunpack.c.l.b16 %v114
    %v677 = vunpack.c.h.b16 %v114
    %v678 = vunpack.c.l.b16 %v115
    %v679 = vunpack.c.h.b16 %v115
    %v680 = vunpack.c.l.b16 %v116
    %v681 = vunpack.c.h.b16 %v116
    %v682 = vunpack.c.l.b16 %v117
    %v683 = vunpack.c.h.b16 %v117
    %v684 = vunpack.c.l.b16 %v118
    %v685 = vunpack.c.h.b16 %v118
    %v686 = vunpack.c.l.b16 %v119
    %v687 = vunpack.c.h.b16 %v119
    %v688 = vunpack.c.l.b16 %v120
    %v689 = vunpack.c.h.b16 %v120
    %v690 = vunpack.c.l.b16 %v121
    %v691 = vunpack.c.h.b16 %v121
    %v692 = vunpack.c.l.b16 %v122
    %v693 = vunpack.c.h.b16 %v122
    %v694 = vunpack.c.l.b16 %v123
    %v695 = vunpack.c.h.b16 %v123
    %v696 = vunpack.c.l.b16 %v124
    %v697 = vunpack.c.h.b16 %v124
    %v698 = vunpack.c.l.b16 %v125
    %v699 = vunpack.c.h.b16 %v125
    %v700 = vunpack.c.l.b16 %v126
    %v701 = vunpack.c.h.b16 %v126
    %v702 = vunpack.c.l.b16 %v127
    %v703 = vunpack.c.h.b16 %v127
    %v704 = vunpack.c.l.b16 %v128
    %v705 = vunpack.c.h.b16 %v128
    %v706 = vunpack.c.l.b16 %v129
    %v707 = vunpack.c.h.b16 %v129
    %v708 = vunpack.c.l.b16 %v130
    %v709 = vunpack.c.h.b16 %v130
    %v710 = vunpack.c.l.b16 %v131
    %v711 = vunpack.c.h.b16 %v131
    %v712 = vunpack.c.l.b16 %v132
    %v713 = vunpack.c.h.b16 %v132
    %v714 = vunpack.c.l.b16 %v133
    %v715 = vunpack.c.h.b16 %v133
    %v716 = vunpack.c.l.b16 %v134
    %v717 = vunpack.c.h.b16 %v134
    %v718 = vunpack.c.l.b16 %v135
    %v719 = vunpack.c.h.b16 %v135
    %v720 = vunpack.c.l.b16 %v136
    %v721 = vunpack.c.h.b16 %v136
    %v722 = vunpack.c.l.b16 %v137
    %v723 = vunpack.c.h.b16 %v137
    %v724 = vunpack.c.l.b16 %v138
    %v725 = vunpack.c.h.b16 %v138
    %v726 = vunpack.c.l.b16 %v139
    %v727 = vunpack.c.h.b16 %v139
    %v728 = vunpack.c.l.b16 %v140
    %v729 = vunpack.c.h.b16 %v140
    %v730 = vunpack.c.l.b16 %v141
    %v731 = vunpack.c.h.b16 %v141
    %v732 = vunpack.c.l.b16 %v142
    %v733 = vunpack.c.h.b16 %v142
    %v734 = vunpack.c.l.b16 %v143
    %v735 = vunpack.c.h.b16 %v143
    %v736 = vunpack.c.l.b16 %v144
    %v737 = vunpack.c.h.b16 %v144
    %v738 = vunpack.c.l.b16 %v145
    %v739 = vunpack.c.h.b16 %v145
    %v740 = vunpack.c.l.b16 %v146
    %v741 = vunpack.c.h.b16 %v146
    %v742 = vunpack.c.l.b16 %v147
    %v743 = vunpack.c.h.b16 %v147
    %v744 = vunpack.c.l.b16 %v148
    %v745 = vunpack.c.h.b16 %v148
    %v746 = vunpack.c.l.b16 %v149
    %v747 = vunpack.c.h.b16 %v149
    %v748 = vunpack.c.l.b16 %v150
    %v749 = vunpack.c.h.b16 %v150
    %v750 = vunpack.c.l.b16 %v151
    %v751 = vunpack.c.h.b16 %v151
    %v752 = vunpack.c.l.b16 %v152
    %v753 = vunpack.c.h.b16 %v152
    %v754 = vunpack.c.l.b16 %v153
    %v755 = vunpack.c.h.b16 %v153
    %v756 = vunpack.c.l.b16 %v154
    %v757 = vunpack.c.h.b16 %v154
    %v758 = vunpack.c.l.b16 %v155
    %v759 = vunpack.c.h.b16 %v155
    %v760 = vunpack.c.l.b16 %v156
    %v761 = vunpack.c.h.b16 %v156
    %v762 = vunpack.c.l.b16 %v157
    %v763 = vunpack.c.h.b16 %v157
    %v764 = vunpack.c.l.b16 %v158
    %v765 = vunpack.c.h.b16 %v158
    %v766 = vunpack.c.l.b16 %v159
    %v767 = vunpack.c.h.b16 %v159
    %v768 = vunpack.c.l.b16 %v160
    %v769 = vunpack.c.h.b16 %v160
    %v770 = vunpack.c.l.b16 %v161
    %v771 = vunpack.c.h.b16 %v161
    %v772 = vunpack.c.l.b16 %v162
    %v773 = vunpack.c.h.b16 %v162
    %v774 = vunpack.c.l.b16 %v163
    %v775 = vunpack.c.h.b16 %v163
    %v776 = vunpack.c.l.b16 %v164
    %v777 = vunpack.c.h.b16 %v164
    %v778 = vunpack.c.l.b16 %v165
    %v779 = vunpack.c.h.b16 %v165
    %v780 = vunpack.c.l.b16 %v166
    %v781 = vunpack.c.h.b16 %v166
    %v782 = vunpack.c.l.b16 %v167
    %v783 = vunpack.c.h.b16 %v167
    %v784 = vunpack.c.l.b16 %v168
    %v785 = vunpack.c.h.b16 %v168
    %v786 = vunpack.c.l.b16 %v169
    %v787 = vunpack.c.h.b16 %v169
    %v788 = vunpack.c.l.b16 %v170
    %v789 = vunpack.c.h.b16 %v170
    %v790 = vunpack.c.l.b16 %v171
    %v791 = vunpack.c.h.b16 %v171
    %v792 = vunpack.c.l.b16 %v172
    %v793 = vunpack.c.h.b16 %v172
    %v794 = vunpack.c.l.b16 %v173
    %v795 = vunpack.c.h.b16 %v173
    %v796 = vunpack.c.l.b16 %v174
    %v797 = vunpack.c.h.b16 %v174
    %v798 = vunpack.c.l.b16 %v175
    %v799 = vunpack.c.h.b16 %v175
    %v800 = vunpack.c.l.b16 %v176
    %v801 = vunpack.c.h.b16 %v176
    %v802 = vunpack.c.l.b16 %v177
    %v803 = vunpack.c.h.b16 %v177
    %v804 = vunpack.c.l.b16 %v178
    %v805 = vunpack.c.h.b16 %v178
    %v806 = vunpack.c.l.b16 %v179
    %v807 = vunpack.c.h.b16 %v179
    %v808 = vunpack.c.l.b16 %v180
    %v809 = vunpack.c.h.b16 %v180
    %v810 = vunpack.c.l.b16 %v181
    %v811 = vunpack.c.h.b16 %v181
    %v812 = vunpack.c.l.b16 %v182
    %v813 = vunpack.c.h.b16 %v182
    %v814 = vunpack.c.l.b16 %v183
    %v815 = vunpack.c.h.b16 %v183
    %v816 = vunpack.c.l.b16 %v184
    %v817 = vunpack.c.h.b16 %v184
    %v818 = vunpack.c.l.b16 %v185
    %v819 = vunpack.c.h.b16 %v185
    %v820 = vunpack.c.l.b16 %v186
    %v821 = vunpack.c.h.b16 %v186
    %v822 = vunpack.c.l.b16 %v187
    %v823 = vunpack.c.h.b16 %v187
    %v824 = vunpack.c.l.b16 %v188
    %v825 = vunpack.c.h.b16 %v188
    %v826 = vunpack.c.l.b16 %v189
    %v827 = vunpack.c.h.b16 %v189
    %v828 = vunpack.c.l.b16 %v190
    %v829 = vunpack.c.h.b16 %v190
    %v830 = vunpack.c.l.b16 %v191
    %v831 = vunpack.c.h.b16 %v191
    %v832 = vunpack.c.l.b16 %v192
    %v833 = vunpack.c.h.b16 %v192
    %v834 = vunpack.c.l.b16 %v193
    %v835 = vunpack.c.h.b16 %v193
    %v836 = vunpack.c.l.b16 %v194
    %v837 = vunpack.c.h.b16 %v194
    %v838 = vunpack.c.l.b16 %v195
    %v839 = vunpack.c.h.b16 %v195
    %v840 = vunpack.c.l.b16 %v196
    %v841 = vunpack.c.h.b16 %v196
    %v842 = vunpack.c.l.b16 %v197
    %v843 = vunpack.c.h.b16 %v197
    %v844 = vunpack.c.l.b16 %v198
    %v845 = vunpack.c.h.b16 %v198
    %v846 = vunpack.c.l.b16 %v199
    %v847 = vunpack.c.h.b16 %v199
    %v848 = vunpack.c.l.b16 %v200
    %v849 = vunpack.c.h.b16 %v200
    %v850 = vunpack.c.l.b16 %v201
    %v851 = vunpack.c.h.b16 %v201
    %v852 = vunpack.c.l.b16 %v202
    %v853 = vunpack.c.h.b16 %v202
    %v854 = vunpack.c.l.b16 %v203
    %v855 = vunpack.c.h.b16 %v203
    %v856 = vunpack.c.l.b16 %v204
    %v857 = vunpack.c.h.b16 %v204
    %v858 = vunpack.c.l.b16 %v205
    %v859 = vunpack.c.h.b16 %v205
    %v860 = vunpack.c.l.b16 %v206
    %v861 = vunpack.c.h.b16 %v206
    %v862 = vunpack.c.l.b16 %v207
    %v863 = vunpack.c.h.b16 %v207
    %v864 = vunpack.c.l.b16 %v208
    %v865 = vunpack.c.h.b16 %v208
    %v866 = vunpack.c.l.b16 %v209
    %v867 = vunpack.c.h.b16 %v209
    %v868 = vunpack.c.l.b16 %v210
    %v869 = vunpack.c.h.b16 %v210
    %v870 = vunpack.c.l.b16 %v211
    %v871 = vunpack.c.h.b16 %v211
    %v872 = vunpack.c.l.b16 %v212
    %v873 = vunpack.c.h.b16 %v212
    %v874 = vunpack.c.l.b16 %v213
    %v875 = vunpack.c.h.b16 %v213
    %v876 = vunpack.c.l.b16 %v214
    %v877 = vunpack.c.h.b16 %v214
    %v878 = vunpack.c.l.b16 %v215
    %v879 = vunpack.c.h.b16 %v215
    %v880 = vunpack.c.l.b16 %v216
    %v881 = vunpack.c.h.b16 %v216
    %v882 = vunpack.c.l.b16 %v217
    %v883 = vunpack.c.h.b16 %v217
    %v884 = vunpack.c.l.b16 %v218
    %v885 = vunpack.c.h.b16 %v218
    %v886 = vunpack.c.l.b16 %v219
    %v887 = vunpack.c.h.b16 %v219
    %v888 = vunpack.c.l.b16 %v220
    %v889 = vunpack.c.h.b16 %v220
    %v890 = vunpack.c.l.b16 %v221
    %v891 = vunpack.c.h.b16 %v221
    %v892 = vunpack.c.l.b16 %v222
    %v893 = vunpack.c.h.b16 %v222
    %v894 = vunpack.c.l.b16 %v223
    %v895 = vunpack.c.h.b16 %v223
    %v896 = vunpack.c.l.b16 %v224
    %v897 = vunpack.c.h.b16 %v224
    %v898 = vunpack.c.l.b16 %v225
    %v899 = vunpack.c.h.b16 %v225
    %v900 = vunpack.c.l.b16 %v226
    %v901 = vunpack.c.h.b16 %v226
    %v902 = vunpack.c.l.b16 %v227
    %v903 = vunpack.c.h.b16 %v227
    %v904 = vunpack.c.l.b16 %v228
    %v905 = vunpack.c.h.b16 %v228
    %v906 = vunpack.c.l.b16 %v229
    %v907 = vunpack.c.h.b16 %v229
    %v908 = vunpack.c.l.b16 %v230
    %v909 = vunpack.c.h.b16 %v230
    %v910 = vunpack.c.l.b16 %v231
    %v911 = vunpack.c.h.b16 %v231
    %v912 = vunpack.c.l.b16 %v232
    %v913 = vunpack.c.h.b16 %v232
    %v914 = vunpack.c.l.b16 %v233
    %v915 = vunpack.c.h.b16 %v233
    %v916 = vunpack.c.l.b16 %v234
    %v917 = vunpack.c.h.b16 %v234
    %v918 = vunpack.c.l.b16 %v235
    %v919 = vunpack.c.h.b16 %v235
    %v920 = vunpack.c.l.b16 %v236
    %v921 = vunpack.c.h.b16 %v236
    %v922 = vunpack.c.l.b16 %v237
    %v923 = vunpack.c.h.b16 %v237
    %v924 = vunpack.c.l.b16 %v238
    %v925 = vunpack.c.h.b16 %v238
    %v926 = vunpack.c.l.b16 %v239
    %v927 = vunpack.c.h.b16 %v239
    %v928 = vunpack.c.l.b16 %v240
    %v929 = vunpack.c.h.b16 %v240
    %v930 = vunpack.c.l.b16 %v241
    %v931 = vunpack.c.h.b16 %v241
    %v932 = vunpack.c.l.b16 %v242
    %v933 = vunpack.c.h.b16 %v242
    %v934 = vunpack.c.l.b16 %v243
    %v935 = vunpack.c.h.b16 %v243
    %v936 = vunpack.c.l.b16 %v244
    %v937 = vunpack.c.h.b16 %v244
    %v938 = vunpack.c.l.b16 %v245
    %v939 = vunpack.c.h.b16 %v245
    %v940 = vunpack.c.l.b16 %v246
    %v941 = vunpack.c.h.b16 %v246
    %v942 = vunpack.c.l.b16 %v247
    %v943 = vunpack.c.h.b16 %v247
    %v944 = vunpack.c.l.b16 %v248
    %v945 = vunpack.c.h.b16 %v248
    %v946 = vunpack.c.l.b16 %v249
    %v947 = vunpack.c.h.b16 %v249
    %v948 = vunpack.c.l.b16 %v250
    %v949 = vunpack.c.h.b16 %v250
    %v950 = vunpack.c.l.b16 %v251
    %v951 = vunpack.c.h.b16 %v251
    %v952 = vunpack.c.l.b16 %v252
    %v953 = vunpack.c.h.b16 %v252
    %v954 = vunpack.c.l.b16 %v253
    %v955 = vunpack.c.h.b16 %v253
    %v956 = vunpack.c.l.b16 %v254
    %v957 = vunpack.c.h.b16 %v254
    %v958 = vunpack.c.l.b16 %v255
    %v959 = vunpack.c.h.b16 %v255
    %v960 = vunpack.c.l.b16 %v256
    %v961 = vunpack.c.h.b16 %v256
    %v962 = vunpack.c.l.b16 %v257
    %v963 = vunpack.c.h.b16 %v257
    %v964 = vunpack.c.l.b16 %v258
    %v965 = vunpack.c.h.b16 %v258
    %v966 = vunpack.c.l.b16 %v259
    %v967 = vunpack.c.h.b16 %v259
    %v968 = vunpack.c.l.b16 %v260
    %v969 = vunpack.c.h.b16 %v260
    %v970 = vunpack.c.l.b16 %v261
    %v971 = vunpack.c.h.b16 %v261
    %v972 = vunpack.c.l.b16 %v262
    %v973 = vunpack.c.h.b16 %v262
    %v974 = vunpack.c.l.b16 %v263
    %v975 = vunpack.c.h.b16 %v263
    %v976 = vunpack.c.l.b16 %v264
    %v977 = vunpack.c.h.b16 %v264
    %v978 = vunpack.c.l.b16 %v265
    %v979 = vunpack.c.h.b16 %v265
    %v980 = vunpack.c.l.b16 %v266
    %v981 = vunpack.c.h.b16 %v266
    %v982 = vunpack.c.l.b16 %v267
    %v983 = vunpack.c.h.b16 %v267
    %v984 = vunpack.c.l.b16 %v268
    %v985 = vunpack.c.h.b16 %v268
    %v986 = vunpack.c.l.b16 %v269
    %v987 = vunpack.c.h.b16 %v269
    %v988 = vunpack.c.l.b16 %v270
    %v989 = vunpack.c.h.b16 %v270
    %v990 = vunpack.c.l.b16 %v271
    %v991 = vunpack.c.h.b16 %v271
    %v992 = vunpack.c.l.b16 %v272
    %v993 = vunpack.c.h.b16 %v272
    %v994 = vunpack.c.l.b16 %v273
    %v995 = vunpack.c.h.b16 %v273
    %v996 = vunpack.c.l.b16 %v274
    %v997 = vunpack.c.h.b16 %v274
    %v998 = vunpack.c.l.b16 %v275
    %v999 = vunpack.c.h.b16 %v275
    %v1000 = vunpack.c.l.b16 %v276
    %v1001 = vunpack.c.h.b16 %v276
    %v1002 = vunpack.c.l.b16 %v277
    %v1003 = vunpack.c.h.b16 %v277
    %v1004 = vunpack.c.l.b16 %v278
    %v1005 = vunpack.c.h.b16 %v278
    %v1006 = vunpack.c.l.b16 %v279
    %v1007 = vunpack.c.h.b16 %v279
    %v1008 = vunpack.c.l.b16 %v280
    %v1009 = vunpack.c.h.b16 %v280
    %v1010 = vunpack.c.l.b16 %v281
    %v1011 = vunpack.c.h.b16 %v281
    %v1012 = vunpack.c.l.b16 %v282
    %v1013 = vunpack.c.h.b16 %v282
    %v1014 = vunpack.c.l.b16 %v283
    %v1015 = vunpack.c.h.b16 %v283
    %v1016 = vunpack.c.l.b16 %v284
    %v1017 = vunpack.c.h.b16 %v284
    %v1018 = vunpack.c.l.b16 %v285
    %v1019 = vunpack.c.h.b16 %v285
    %v1020 = vunpack.c.l.b16 %v286
    %v1021 = vunpack.c.h.b16 %v286
    %v1022 = vunpack.c.l.b16 %v287
    %v1023 = vunpack.c.h.b16 %v287
    %v1024 = vunpack.c.l.b16 %v288
    %v1025 = vunpack.c.h.b16 %v288
    %v1026 = vunpack.c.l.b16 %v289
    %v1027 = vunpack.c.h.b16 %v289
    %v1028 = vunpack.c.l.b16 %v290
    %v1029 = vunpack.c.h.b16 %v290
    %v1030 = vunpack.c.l.b16 %v291
    %v1031 = vunpack.c.h.b16 %v291
    %v1032 = vunpack.c.l.b16 %v292
    %v1033 = vunpack.c.h.b16 %v292
    %v1034 = vunpack.c.l.b16 %v293
    %v1035 = vunpack.c.h.b16 %v293
    %v1036 = vunpack.c.l.b16 %v294
    %v1037 = vunpack.c.h.b16 %v294
    %v1038 = vunpack.c.l.b16 %v295
    %v1039 = vunpack.c.h.b16 %v295
    %v1040 = vunpack.c.l.b16 %v296
    %v1041 = vunpack.c.h.b16 %v296
    %v1042 = vunpack.c.l.b16 %v297
    %v1043 = vunpack.c.h.b16 %v297
    %v1044 = vunpack.c.l.b16 %v298
    %v1045 = vunpack.c.h.b16 %v298
    %v1046 = vunpack.c.l.b16 %v299
    %v1047 = vunpack.c.h.b16 %v299
    %v1048 = vunpack.c.l.b16 %v300
    %v1049 = vunpack.c.h.b16 %v300
    %v1050 = vunpack.c.l.b16 %v301
    %v1051 = vunpack.c.h.b16 %v301
    %v1052 = vunpack.c.l.b16 %v302
    %v1053 = vunpack.c.h.b16 %v302
    %v1054 = vunpack.c.l.b16 %v303
    %v1055 = vunpack.c.h.b16 %v303
    %v1056 = vunpack.c.l.b16 %v304
    %v1057 = vunpack.c.h.b16 %v304
    %v1058 = vunpack.c.l.b16 %v305
    %v1059 = vunpack.c.h.b16 %v305
    %v1060 = vunpack.c.l.b16 %v306
    %v1061 = vunpack.c.h.b16 %v306
    %v1062 = vunpack.c.l.b16 %v307
    %v1063 = vunpack.c.h.b16 %v307
    %v1064 = vunpack.c.l.b16 %v308
    %v1065 = vunpack.c.h.b16 %v308
    %v1066 = vunpack.c.l.b16 %v309
    %v1067 = vunpack.c.h.b16 %v309
    %v1068 = vunpack.c.l.b16 %v310
    %v1069 = vunpack.c.h.b16 %v310
    %v1070 = vunpack.c.l.b16 %v311
    %v1071 = vunpack.c.h.b16 %v311
    %v1072 = vunpack.c.l.b16 %v312
    %v1073 = vunpack.c.h.b16 %v312
    %v1074 = vunpack.c.l.b16 %v313
    %v1075 = vunpack.c.h.b16 %v313
    %v1076 = vunpack.c.l.b16 %v314
    %v1077 = vunpack.c.h.b16 %v314
    %v1078 = vunpack.c.l.b16 %v315
    %v1079 = vunpack.c.h.b16 %v315
    %v1080 = vunpack.c.l.b16 %v316
    %v1081 = vunpack.c.h.b16 %v316
    %v1082 = vunpack.c.l.b16 %v317
    %v1083 = vunpack.c.h.b16 %v317
    %v1084 = vunpack.c.l.b16 %v318
    %v1085 = vunpack.c.h.b16 %v318
    %v1086 = vunpack.c.l.b16 %v319
    %v1087 = vunpack.c.h.b16 %v319
    %v1088 = vunpack.c.l.b16 %v320
    %v1089 = vunpack.c.h.b16 %v320
    %v1090 = vunpack.c.l.b16 %v321
    %v1091 = vunpack.c.h.b16 %v321
    %v1092 = vunpack.c.l.b16 %v322
    %v1093 = vunpack.c.h.b16 %v322
    %v1094 = vunpack.c.l.b16 %v323
    %v1095 = vunpack.c.h.b16 %v323
    %v1096 = vunpack.c.l.b16 %v324
    %v1097 = vunpack.c.h.b16 %v324
    %v1098 = vunpack.c.l.b16 %v325
    %v1099 = vunpack.c.h.b16 %v325
    %v1100 = vunpack.c.l.b16 %v326
    %v1101 = vunpack.c.h.b16 %v326
    %v1102 = vunpack.c.l.b16 %v327
    %v1103 = vunpack.c.h.b16 %v327
    %v1104 = vunpack.c.l.b16 %v328
    %v1105 = vunpack.c.h.b16 %v328
    %v1106 = vunpack.c.l.b16 %v329
    %v1107 = vunpack.c.h.b16 %v329
    %v1108 = vpack.c.b16 %v600, %v596
    %v1109 = vpack.c.b16 %v601, %v597
    %v1110 = vpack.c.b16 %v602, %v598
    %v1111 = vpack.c.b16 %v603, %v599
    %v1112 = vpack.c.b16 %v608, %v604
    %v1113 = vpack.c.b16 %v609, %v605
    %v1114 = vpack.c.b16 %v610, %v606
    %v1115 = vpack.c.b16 %v611, %v607
    %v1116 = vpack.c.b16 %v616, %v612
    %v1117 = vpack.c.b16 %v617, %v613
    %v1118 = vpack.c.b16 %v618, %v614
    %v1119 = vpack.c.b16 %v619, %v615
    %v1120 = vpack.c.b16 %v624, %v620
    %v1121 = vpack.c.b16 %v625, %v621
    %v1122 = vpack.c.b16 %v626, %v622
    %v1123 = vpack.c.b16 %v627, %v623
    %v1124 = vpack.c.b16 %v632, %v628
    %v1125 = vpack.c.b16 %v633, %v629
    %v1126 = vpack.c.b16 %v634, %v630
    %v1127 = vpack.c.b16 %v635, %v631
    %v1128 = vpack.c.b16 %v640, %v636
    %v1129 = vpack.c.b16 %v641, %v637
    %v1130 = vpack.c.b16 %v642, %v638
    %v1131 = vpack.c.b16 %v643, %v639
    %v1132 = vpack.c.b16 %v648, %v644
    %v1133 = vpack.c.b16 %v649, %v645
    %v1134 = vpack.c.b16 %v650, %v646
    %v1135 = vpack.c.b16 %v651, %v647
    %v1136 = vpack.c.b16 %v656, %v652
    %v1137 = vpack.c.b16 %v657, %v653
    %v1138 = vpack.c.b16 %v658, %v654
    %v1139 = vpack.c.b16 %v659, %v655
    %v1140 = vpack.c.b16 %v664, %v660
    %v1141 = vpack.c.b16 %v665, %v661
    %v1142 = vpack.c.b16 %v666, %v662
    %v1143 = vpack.c.b16 %v667, %v663
    %v1144 = vpack.c.b16 %v672, %v668
    %v1145 = vpack.c.b16 %v673, %v669
    %v1146 = vpack.c.b16 %v674, %v670
    %v1147 = vpack.c.b16 %v675, %v671
    %v1148 = vpack.c.b16 %v680, %v676
    %v1149 = vpack.c.b16 %v681, %v677
    %v1150 = vpack.c.b16 %v682, %v678
    %v1151 = vpack.c.b16 %v683, %v679
    %v1152 = vpack.c.b16 %v688, %v684
    %v1153 = vpack.c.b16 %v689, %v685
    %v1154 = vpack.c.b16 %v690, %v686
    %v1155 = vpack.c.b16 %v691, %v687
    %v1156 = vpack.c.b16 %v696, %v692
    %v1157 = vpack.c.b16 %v697, %v693
    %v1158 = vpack.c.b16 %v698, %v694
    %v1159 = vpack.c.b16 %v699, %v695
    %v1160 = vpack.c.b16 %v704, %v700
    %v1161 = vpack.c.b16 %v705, %v701
    %v1162 = vpack.c.b16 %v706, %v702
    %v1163 = vpack.c.b16 %v707, %v703
    %v1164 = vpack.c.b16 %v712, %v708
    %v1165 = vpack.c.b16 %v713, %v709
    %v1166 = vpack.c.b16 %v714, %v710
    %v1167 = vpack.c.b16 %v715, %v711
    %v1168 = vpack.c.b16 %v720, %v716
    %v1169 = vpack.c.b16 %v721, %v717
    %v1170 = vpack.c.b16 %v722, %v718
    %v1171 = vpack.c.b16 %v723, %v719
    %v1172 = vpack.c.b16 %v728, %v724
    %v1173 = vpack.c.b16 %v729, %v725
    %v1174 = vpack.c.b16 %v730, %v726
    %v1175 = vpack.c.b16 %v731, %v727
    %v1176 = vpack.c.b16 %v736, %v732
    %v1177 = vpack.c.b16 %v737, %v733
    %v1178 = vpack.c.b16 %v738, %v734
    %v1179 = vpack.c.b16 %v739, %v735
    %v1180 = vpack.c.b16 %v744, %v740
    %v1181 = vpack.c.b16 %v745, %v741
    %v1182 = vpack.c.b16 %v746, %v742
    %v1183 = vpack.c.b16 %v747, %v743
    %v1184 = vpack.c.b16 %v752, %v748
    %v1185 = vpack.c.b16 %v753, %v749
    %v1186 = vpack.c.b16 %v754, %v750
    %v1187 = vpack.c.b16 %v755, %v751
    %v1188 = vpack.c.b16 %v760, %v756
    %v1189 = vpack.c.b16 %v761, %v757
    %v1190 = vpack.c.b16 %v762, %v758
    %v1191 = vpack.c.b16 %v763, %v759
    %v1192 = vpack.c.b16 %v768, %v764
    %v1193 = vpack.c.b16 %v769, %v765
    %v1194 = vpack.c.b16 %v770, %v766
    %v1195 = vpack.c.b16 %v771, %v767
    %v1196 = vpack.c.b16 %v776, %v772
    %v1197 = vpack.c.b16 %v777, %v773
    %v1198 = vpack.c.b16 %v778, %v774
    %v1199 = vpack.c.b16 %v779, %v775
    %v1200 = vpack.c.b16 %v784, %v780
    %v1201 = vpack.c.b16 %v785, %v781
    %v1202 = vpack.c.b16 %v786, %v782
    %v1203 = vpack.c.b16 %v787, %v783
    %v1204 = vpack.c.b16 %v792, %v788
    %v1205 = vpack.c.b16 %v793, %v789
    %v1206 = vpack.c.b16 %v794, %v790
    %v1207 = vpack.c.b16 %v795, %v791
    %v1208 = vpack.c.b16 %v800, %v796
    %v1209 = vpack.c.b16 %v801, %v797
    %v1210 = vpack.c.b16 %v802, %v798
    %v1211 = vpack.c.b16 %v803, %v799
    %v1212 = vpack.c.b16 %v808, %v804
    %v1213 = vpack.c.b16 %v809, %v805
    %v1214 = vpack.c.b16 %v810, %v806
    %v1215 = vpack.c.b16 %v811, %v807
    %v1216 = vpack.c.b16 %v816, %v812
    %v1217 = vpack.c.b16 %v817, %v813
    %v1218 = vpack.c.b16 %v818, %v814
    %v1219 = vpack.c.b16 %v819, %v815
    %v1220 = vpack.c.b16 %v824, %v820
    %v1221 = vpack.c.b16 %v825, %v821
    %v1222 = vpack.c.b16 %v826, %v822
    %v1223 = vpack.c.b16 %v827, %v823
    %v1224 = vpack.c.b16 %v832, %v828
    %v1225 = vpack.c.b16 %v833, %v829
    %v1226 = vpack.c.b16 %v834, %v830
    %v1227 = vpack.c.b16 %v835, %v831
    %v1228 = vpack.c.b16 %v840, %v836
    %v1229 = vpack.c.b16 %v841, %v837
    %v1230 = vpack.c.b16 %v842, %v838
    %v1231 = vpack.c.b16 %v843, %v839
    %v1232 = vpack.c.b16 %v848, %v844
    %v1233 = vpack.c.b16 %v849, %v845
    %v1234 = vpack.c.b16 %v850, %v846
    %v1235 = vpack.c.b16 %v851, %v847
    %v1236 = vpack.c.b16 %v856, %v852
    %v1237 = vpack.c.b16 %v857, %v853
    %v1238 = vpack.c.b16 %v858, %v854
    %v1239 = vpack.c.b16 %v859, %v855
    %v1240 = vpack.c.b16 %v864, %v860
    %v1241 = vpack.c.b16 %v865, %v861
    %v1242 = vpack.c.b16 %v866, %v862
    %v1243 = vpack.c.b16 %v867, %v863
    %v1244 = vpack.c.b16 %v872, %v868
    %v1245 = vpack.c.b16 %v873, %v869
    %v1246 = vpack.c.b16 %v874, %v870
    %v1247 = vpack.c.b16 %v875, %v871
    %v1248 = vpack.c.b16 %v880, %v876
    %v1249 = vpack.c.b16 %v881, %v877
    %v1250 = vpack.c.b16 %v882, %v878
    %v1251 = vpack.c.b16 %v883, %v879
    %v1252 = vpack.c.b16 %v888, %v884
    %v1253 = vpack.c.b16 %v889, %v885
    %v1254 = vpack.c.b16 %v890, %v886
    %v1255 = vpack.c.b16 %v891, %v887
    %v1256 = vpack.c.b16 %v896, %v892
    %v1257 = vpack.c.b16 %v897, %v893
    %v1258 = vpack.c.b16 %v898, %v894
    %v1259 = vpack.c.b16 %v899, %v895
    %v1260 = vpack.c.b16 %v904, %v900
    %v1261 = vpack.c.b16 %v905, %v901
    %v1262 = vpack.c.b16 %v906, %v902
    %v1263 = vpack.c.b16 %v907, %v903
    %v1264 = vpack.c.b16 %v912, %v908
    %v1265 = vpack.c.b16 %v913, %v909
    %v1266 = vpack.c.b16 %v914, %v910
    %v1267 = vpack.c.b16 %v915, %v911
    %v1268 = vpack.c.b16 %v920, %v916
    %v1269 = vpack.c.b16 %v921, %v917
    %v1270 = vpack.c.b16 %v922, %v918
    %v1271 = vpack.c.b16 %v923, %v919
    %v1272 = vpack.c.b16 %v928, %v924
    %v1273 = vpack.c.b16 %v929, %v925
    %v1274 = vpack.c.b16 %v930, %v926
    %v1275 = vpack.c.b16 %v931, %v927
    %v1276 = vpack.c.b16 %v936, %v932
    %v1277 = vpack.c.b16 %v937, %v933
    %v1278 = vpack.c.b16 %v938, %v934
    %v1279 = vpack.c.b16 %v939, %v935
    %v1280 = vpack.c.b16 %v944, %v940
    %v1281 = vpack.c.b16 %v945, %v941
    %v1282 = vpack.c.b16 %v946, %v942
    %v1283 = vpack.c.b16 %v947, %v943
    %v1284 = vpack.c.b16 %v952, %v948
    %v1285 = vpack.c.b16 %v953, %v949
    %v1286 = vpack.c.b16 %v954, %v950
    %v1287 = vpack.c.b16 %v955, %v951
    %v1288 = vpack.c.b16 %v960, %v956
    %v1289 = vpack.c.b16 %v961, %v957
    %v1290 = vpack.c.b16 %v962, %v958
    %v1291 = vpack.c.b16 %v963, %v959
    %v1292 = vpack.c.b16 %v968, %v964
    %v1293 = vpack.c.b16 %v969, %v965
    %v1294 = vpack.c.b16 %v970, %v966
    %v1295 = vpack.c.b16 %v971, %v967
    %v1296 = vpack.c.b16 %v976, %v972
    %v1297 = vpack.c.b16 %v977, %v973
    %v1298 = vpack.c.b16 %v978, %v974
    %v1299 = vpack.c.b16 %v979, %v975
    %v1300 = vpack.c.b16 %v984, %v980
    %v1301 = vpack.c.b16 %v985, %v981
    %v1302 = vpack.c.b16 %v986, %v982
    %v1303 = vpack.c.b16 %v987, %v983
    %v1304 = vpack.c.b16 %v992, %v988
    %v1305 = vpack.c.b16 %v993, %v989
    %v1306 = vpack.c.b16 %v994, %v990
    %v1307 = vpack.c.b16 %v995, %v991
    %v1308 = vpack.c.b16 %v1000, %v996
    %v1309 = vpack.c.b16 %v1001, %v997
    %v1310 = vpack.c.b16 %v1002, %v998
    %v1311 = vpack.c.b16 %v1003, %v999
    %v1312 = vpack.c.b16 %v1008, %v1004
    %v1313 = vpack.c.b16 %v1009, %v1005
    %v1314 = vpack.c.b16 %v1010, %v1006
    %v1315 = vpack.c.b16 %v1011, %v1007
    %v1316 = vpack.c.b16 %v1016, %v1012
    %v1317 = vpack.c.b16 %v1017, %v1013
    %v1318 = vpack.c.b16 %v1018, %v1014
    %v1319 = vpack.c.b16 %v1019, %v1015
    %v1320 = vpack.c.b16 %v1024, %v1020
    %v1321 = vpack.c.b16 %v1025, %v1021
    %v1322 = vpack.c.b16 %v1026, %v1022
    %v1323 = vpack.c.b16 %v1027, %v1023
    %v1324 = vpack.c.b16 %v1032, %v1028
    %v1325 = vpack.c.b16 %v1033, %v1029
    %v1326 = vpack.c.b16 %v1034, %v1030
    %v1327 = vpack.c.b16 %v1035, %v1031
    %v1328 = vpack.c.b16 %v1040, %v1036
    %v1329 = vpack.c.b16 %v1041, %v1037
    %v1330 = vpack.c.b16 %v1042, %v1038
    %v1331 = vpack.c.b16 %v1043, %v1039
    %v1332 = vpack.c.b16 %v1048, %v1044
    %v1333 = vpack.c.b16 %v1049, %v1045
    %v1334 = vpack.c.b16 %v1050, %v1046
    %v1335 = vpack.c.b16 %v1051, %v1047
    %v1336 = vpack.c.b16 %v1056, %v1052
    %v1337 = vpack.c.b16 %v1057, %v1053
    %v1338 = vpack.c.b16 %v1058, %v1054
    %v1339 = vpack.c.b16 %v1059, %v1055
    %v1340 = vpack.c.b16 %v1064, %v1060
    %v1341 = vpack.c.b16 %v1065, %v1061
    %v1342 = vpack.c.b16 %v1066, %v1062
    %v1343 = vpack.c.b16 %v1067, %v1063
    %v1344 = vpack.c.b16 %v1072, %v1068
    %v1345 = vpack.c.b16 %v1073, %v1069
    %v1346 = vpack.c.b16 %v1074, %v1070
    %v1347 = vpack.c.b16 %v1075, %v1071
    %v1348 = vpack.c.b16 %v1080, %v1076
    %v1349 = vpack.c.b16 %v1081, %v1077
    %v1350 = vpack.c.b16 %v1082, %v1078
    %v1351 = vpack.c.b16 %v1083, %v1079
    %v1352 = vpack.c.b16 %v1088, %v1084
    %v1353 = vpack.c.b16 %v1089, %v1085
    %v1354 = vpack.c.b16 %v1090, %v1086
    %v1355 = vpack.c.b16 %v1091, %v1087
    %v1356 = vpack.c.b16 %v1096, %v1092
    %v1357 = vpack.c.b16 %v1097, %v1093
    %v1358 = vpack.c.b16 %v1098, %v1094
    %v1359 = vpack.c.b16 %v1099, %v1095
    %v1360 = vpack.c.b16 %v1104, %v1100
    %v1361 = vpack.c.b16 %v1105, %v1101
    %v1362 = vpack.c.b16 %v1106, %v1102
    %v1363 = vpack.c.b16 %v1107, %v1103
    %1620 = vmatpush.bf16.msra.mxu0 %v1136
    %1621 = vmatpush.bf16.msra.mxu0 %v1132
    %1622 = vmatpush.bf16.msra.mxu0 %v1128
    %1623 = vmatpush.bf16.msra.mxu0 %v1124
    %1624 = vmatpush.bf16.msra.mxu0 %v1120
    %1625 = vmatpush.bf16.msra.mxu0 %v1116
    %1626 = vmatpush.bf16.msra.mxu0 %v1112
    %1627 = vmatpush.bf16.msra.mxu0 %v1108
    %1628 = vmatmul.bf16.gmra.mxu0 %v66
    %v1629 = vpop.f32.mrf.mxu0
    %v1630 = vadd.f32 %v332, %v1629
    %v1631 = vpop.f32.mrf.mxu0
    %1632 = vdwg.mxu0
    %1633 = vmatpush.bf16.msra.mxu0 %v1168
    %1634 = vmatpush.bf16.msra.mxu0 %v1164
    %1635 = vmatpush.bf16.msra.mxu0 %v1160
    %1636 = vmatpush.bf16.msra.mxu0 %v1156
    %1637 = vmatpush.bf16.msra.mxu0 %v1152
    %1638 = vmatpush.bf16.msra.mxu0 %v1148
    %1639 = vmatpush.bf16.msra.mxu0 %v1144
    %1640 = vmatpush.bf16.msra.mxu0 %v1140
    %1641 = vmatmul.bf16.gmra.mxu0 %v67
    %v1642 = vpop.f32.mrf.mxu0
    %v1643 = vadd.f32 %v1630, %v1642
    %v1644 = vpop.f32.mrf.mxu0
    %1645 = vdwg.mxu0
    %1646 = vmatpush.bf16.msra.mxu0 %v1200
    %1647 = vmatpush.bf16.msra.mxu0 %v1196
    %1648 = vmatpush.bf16.msra.mxu0 %v1192
    %1649 = vmatpush.bf16.msra.mxu0 %v1188
    %1650 = vmatpush.bf16.msra.mxu0 %v1184
    %1651 = vmatpush.bf16.msra.mxu0 %v1180
    %1652 = vmatpush.bf16.msra.mxu0 %v1176
    %1653 = vmatpush.bf16.msra.mxu0 %v1172
    %1654 = vmatmul.bf16.gmra.mxu0 %v68
    %v1655 = vpop.f32.mrf.mxu0
    %v1656 = vadd.f32 %v1643, %v1655
    %v1657 = vpop.f32.mrf.mxu0
    %1658 = vdwg.mxu0
    %1659 = vmatpush.bf16.msra.mxu0 %v1232
    %1660 = vmatpush.bf16.msra.mxu0 %v1228
    %1661 = vmatpush.bf16.msra.mxu0 %v1224
    %1662 = vmatpush.bf16.msra.mxu0 %v1220
    %1663 = vmatpush.bf16.msra.mxu0 %v1216
    %1664 = vmatpush.bf16.msra.mxu0 %v1212
    %1665 = vmatpush.bf16.msra.mxu0 %v1208
    %1666 = vmatpush.bf16.msra.mxu0 %v1204
    %1667 = vmatmul.bf16.gmra.mxu0 %v69
    %v1668 = vpop.f32.mrf.mxu0
    %v1669 = vadd.f32 %v1656, %v1668
    %v1670 = vpop.f32.mrf.mxu0
    %1671 = vdwg.mxu0
    %1672 = vmatpush.bf16.msra.mxu0 %v1264
    %1673 = vmatpush.bf16.msra.mxu0 %v1260
    %1674 = vmatpush.bf16.msra.mxu0 %v1256
    %1675 = vmatpush.bf16.msra.mxu0 %v1252
    %1676 = vmatpush.bf16.msra.mxu0 %v1248
    %1677 = vmatpush.bf16.msra.mxu0 %v1244
    %1678 = vmatpush.bf16.msra.mxu0 %v1240
    %1679 = vmatpush.bf16.msra.mxu0 %v1236
    %1680 = vmatmul.bf16.gmra.mxu0 %v70
    %v1681 = vpop.f32.mrf.mxu0
    %v1682 = vadd.f32 %v1669, %v1681
    %v1683 = vpop.f32.mrf.mxu0
    %1684 = vdwg.mxu0
    %1685 = vmatpush.bf16.msra.mxu0 %v1296
    %1686 = vmatpush.bf16.msra.mxu0 %v1292
    %1687 = vmatpush.bf16.msra.mxu0 %v1288
    %1688 = vmatpush.bf16.msra.mxu0 %v1284
    %1689 = vmatpush.bf16.msra.mxu0 %v1280
    %1690 = vmatpush.bf16.msra.mxu0 %v1276
    %1691 = vmatpush.bf16.msra.mxu0 %v1272
    %1692 = vmatpush.bf16.msra.mxu0 %v1268
    %1693 = vmatmul.bf16.gmra.mxu0 %v71
    %v1694 = vpop.f32.mrf.mxu0
    %v1695 = vadd.f32 %v1682, %v1694
    %v1696 = vpop.f32.mrf.mxu0
    %1697 = vdwg.mxu0
    %1698 = vmatpush.bf16.msra.mxu0 %v1328
    %1699 = vmatpush.bf16.msra.mxu0 %v1324
    %1700 = vmatpush.bf16.msra.mxu0 %v1320
    %1701 = vmatpush.bf16.msra.mxu0 %v1316
    %1702 = vmatpush.bf16.msra.mxu0 %v1312
    %1703 = vmatpush.bf16.msra.mxu0 %v1308
    %1704 = vmatpush.bf16.msra.mxu0 %v1304
    %1705 = vmatpush.bf16.msra.mxu0 %v1300
    %1706 = vmatmul.bf16.gmra.mxu0 %v72
    %v1707 = vpop.f32.mrf.mxu0
    %v1708 = vadd.f32 %v1695, %v1707
    %v1709 = vpop.f32.mrf.mxu0
    %1710 = vdwg.mxu0
    %1711 = vmatpush.bf16.msra.mxu0 %v1360
    %1712 = vmatpush.bf16.msra.mxu0 %v1356
    %1713 = vmatpush.bf16.msra.mxu0 %v1352
    %1714 = vmatpush.bf16.msra.mxu0 %v1348
    %1715 = vmatpush.bf16.msra.mxu0 %v1344
    %1716 = vmatpush.bf16.msra.mxu0 %v1340
    %1717 = vmatpush.bf16.msra.mxu0 %v1336
    %1718 = vmatpush.bf16.msra.mxu0 %v1332
    %1719 = vmatmul.bf16.gmra.mxu0 %v73
    %v1720 = vpop.f32.mrf.mxu0
    %v1721 = vadd.f32 %v1708, %v1720
    %v1722 = vpop.f32.mrf.mxu0
    %1723 = vdwg.mxu0
    %1724 = vmatpush.bf16.msra.mxu0 %v1137
    %1725 = vmatpush.bf16.msra.mxu0 %v1133
    %1726 = vmatpush.bf16.msra.mxu0 %v1129
    %1727 = vmatpush.bf16.msra.mxu0 %v1125
    %1728 = vmatpush.bf16.msra.mxu0 %v1121
    %1729 = vmatpush.bf16.msra.mxu0 %v1117
    %1730 = vmatpush.bf16.msra.mxu0 %v1113
    %1731 = vmatpush.bf16.msra.mxu0 %v1109
    %1732 = vmatmul.bf16.gmra.mxu0 %v66
    %v1733 = vpop.f32.mrf.mxu0
    %v1734 = vadd.f32 %v333, %v1733
    %v1735 = vpop.f32.mrf.mxu0
    %1736 = vdwg.mxu0
    %1737 = vmatpush.bf16.msra.mxu0 %v1169
    %1738 = vmatpush.bf16.msra.mxu0 %v1165
    %1739 = vmatpush.bf16.msra.mxu0 %v1161
    %1740 = vmatpush.bf16.msra.mxu0 %v1157
    %1741 = vmatpush.bf16.msra.mxu0 %v1153
    %1742 = vmatpush.bf16.msra.mxu0 %v1149
    %1743 = vmatpush.bf16.msra.mxu0 %v1145
    %1744 = vmatpush.bf16.msra.mxu0 %v1141
    %1745 = vmatmul.bf16.gmra.mxu0 %v67
    %v1746 = vpop.f32.mrf.mxu0
    %v1747 = vadd.f32 %v1734, %v1746
    %v1748 = vpop.f32.mrf.mxu0
    %1749 = vdwg.mxu0
    %1750 = vmatpush.bf16.msra.mxu0 %v1201
    %1751 = vmatpush.bf16.msra.mxu0 %v1197
    %1752 = vmatpush.bf16.msra.mxu0 %v1193
    %1753 = vmatpush.bf16.msra.mxu0 %v1189
    %1754 = vmatpush.bf16.msra.mxu0 %v1185
    %1755 = vmatpush.bf16.msra.mxu0 %v1181
    %1756 = vmatpush.bf16.msra.mxu0 %v1177
    %1757 = vmatpush.bf16.msra.mxu0 %v1173
    %1758 = vmatmul.bf16.gmra.mxu0 %v68
    %v1759 = vpop.f32.mrf.mxu0
    %v1760 = vadd.f32 %v1747, %v1759
    %v1761 = vpop.f32.mrf.mxu0
    %1762 = vdwg.mxu0
    %1763 = vmatpush.bf16.msra.mxu0 %v1233
    %1764 = vmatpush.bf16.msra.mxu0 %v1229
    %1765 = vmatpush.bf16.msra.mxu0 %v1225
    %1766 = vmatpush.bf16.msra.mxu0 %v1221
    %1767 = vmatpush.bf16.msra.mxu0 %v1217
    %1768 = vmatpush.bf16.msra.mxu0 %v1213
    %1769 = vmatpush.bf16.msra.mxu0 %v1209
    %1770 = vmatpush.bf16.msra.mxu0 %v1205
    %1771 = vmatmul.bf16.gmra.mxu0 %v69
    %v1772 = vpop.f32.mrf.mxu0
    %v1773 = vadd.f32 %v1760, %v1772
    %v1774 = vpop.f32.mrf.mxu0
    %1775 = vdwg.mxu0
    %1776 = vmatpush.bf16.msra.mxu0 %v1265
    %1777 = vmatpush.bf16.msra.mxu0 %v1261
    %1778 = vmatpush.bf16.msra.mxu0 %v1257
    %1779 = vmatpush.bf16.msra.mxu0 %v1253
    %1780 = vmatpush.bf16.msra.mxu0 %v1249
    %1781 = vmatpush.bf16.msra.mxu0 %v1245
    %1782 = vmatpush.bf16.msra.mxu0 %v1241
    %1783 = vmatpush.bf16.msra.mxu0 %v1237
    %1784 = vmatmul.bf16.gmra.mxu0 %v70
    %v1785 = vpop.f32.mrf.mxu0
    %v1786 = vadd.f32 %v1773, %v1785
    %v1787 = vpop.f32.mrf.mxu0
    %1788 = vdwg.mxu0
    %1789 = vmatpush.bf16.msra.mxu0 %v1297
    %1790 = vmatpush.bf16.msra.mxu0 %v1293
    %1791 = vmatpush.bf16.msra.mxu0 %v1289
    %1792 = vmatpush.bf16.msra.mxu0 %v1285
    %1793 = vmatpush.bf16.msra.mxu0 %v1281
    %1794 = vmatpush.bf16.msra.mxu0 %v1277
    %1795 = vmatpush.bf16.msra.mxu0 %v1273
    %1796 = vmatpush.bf16.msra.mxu0 %v1269
    %1797 = vmatmul.bf16.gmra.mxu0 %v71
    %v1798 = vpop.f32.mrf.mxu0
    %v1799 = vadd.f32 %v1786, %v1798
    %v1800 = vpop.f32.mrf.mxu0
    %1801 = vdwg.mxu0
    %1802 = vmatpush.bf16.msra.mxu0 %v1329
    %1803 = vmatpush.bf16.msra.mxu0 %v1325
    %1804 = vmatpush.bf16.msra.mxu0 %v1321
    %1805 = vmatpush.bf16.msra.mxu0 %v1317
    %1806 = vmatpush.bf16.msra.mxu0 %v1313
    %1807 = vmatpush.bf16.msra.mxu0 %v1309
    %1808 = vmatpush.bf16.msra.mxu0 %v1305
    %1809 = vmatpush.bf16.msra.mxu0 %v1301
    %1810 = vmatmul.bf16.gmra.mxu0 %v72
    %v1811 = vpop.f32.mrf.mxu0
    %v1812 = vadd.f32 %v1799, %v1811
    %v1813 = vpop.f32.mrf.mxu0
    %1814 = vdwg.mxu0
    %1815 = vmatpush.bf16.msra.mxu0 %v1361
    %1816 = vmatpush.bf16.msra.mxu0 %v1357
    %1817 = vmatpush.bf16.msra.mxu0 %v1353
    %1818 = vmatpush.bf16.msra.mxu0 %v1349
    %1819 = vmatpush.bf16.msra.mxu0 %v1345
    %1820 = vmatpush.bf16.msra.mxu0 %v1341
    %1821 = vmatpush.bf16.msra.mxu0 %v1337
    %1822 = vmatpush.bf16.msra.mxu0 %v1333
    %1823 = vmatmul.bf16.gmra.mxu0 %v73
    %v1824 = vpop.f32.mrf.mxu0
    %v1825 = vadd.f32 %v1812, %v1824
    %v1826 = vpop.f32.mrf.mxu0
    %1827 = vdwg.mxu0
    %1828 = vmatpush.bf16.msra.mxu0 %v1138
    %1829 = vmatpush.bf16.msra.mxu0 %v1134
    %1830 = vmatpush.bf16.msra.mxu0 %v1130
    %1831 = vmatpush.bf16.msra.mxu0 %v1126
    %1832 = vmatpush.bf16.msra.mxu0 %v1122
    %1833 = vmatpush.bf16.msra.mxu0 %v1118
    %1834 = vmatpush.bf16.msra.mxu0 %v1114
    %1835 = vmatpush.bf16.msra.mxu0 %v1110
    %1836 = vmatmul.bf16.gmra.mxu0 %v66
    %v1837 = vpop.f32.mrf.mxu0
    %v1838 = vadd.f32 %v334, %v1837
    %v1839 = vpop.f32.mrf.mxu0
    %1840 = vdwg.mxu0
    %1841 = vmatpush.bf16.msra.mxu0 %v1170
    %1842 = vmatpush.bf16.msra.mxu0 %v1166
    %1843 = vmatpush.bf16.msra.mxu0 %v1162
    %1844 = vmatpush.bf16.msra.mxu0 %v1158
    %1845 = vmatpush.bf16.msra.mxu0 %v1154
    %1846 = vmatpush.bf16.msra.mxu0 %v1150
    %1847 = vmatpush.bf16.msra.mxu0 %v1146
    %1848 = vmatpush.bf16.msra.mxu0 %v1142
    %1849 = vmatmul.bf16.gmra.mxu0 %v67
    %v1850 = vpop.f32.mrf.mxu0
    %v1851 = vadd.f32 %v1838, %v1850
    %v1852 = vpop.f32.mrf.mxu0
    %1853 = vdwg.mxu0
    %1854 = vmatpush.bf16.msra.mxu0 %v1202
    %1855 = vmatpush.bf16.msra.mxu0 %v1198
    %1856 = vmatpush.bf16.msra.mxu0 %v1194
    %1857 = vmatpush.bf16.msra.mxu0 %v1190
    %1858 = vmatpush.bf16.msra.mxu0 %v1186
    %1859 = vmatpush.bf16.msra.mxu0 %v1182
    %1860 = vmatpush.bf16.msra.mxu0 %v1178
    %1861 = vmatpush.bf16.msra.mxu0 %v1174
    %1862 = vmatmul.bf16.gmra.mxu0 %v68
    %v1863 = vpop.f32.mrf.mxu0
    %v1864 = vadd.f32 %v1851, %v1863
    %v1865 = vpop.f32.mrf.mxu0
    %1866 = vdwg.mxu0
    %1867 = vmatpush.bf16.msra.mxu0 %v1234
    %1868 = vmatpush.bf16.msra.mxu0 %v1230
    %1869 = vmatpush.bf16.msra.mxu0 %v1226
    %1870 = vmatpush.bf16.msra.mxu0 %v1222
    %1871 = vmatpush.bf16.msra.mxu0 %v1218
    %1872 = vmatpush.bf16.msra.mxu0 %v1214
    %1873 = vmatpush.bf16.msra.mxu0 %v1210
    %1874 = vmatpush.bf16.msra.mxu0 %v1206
    %1875 = vmatmul.bf16.gmra.mxu0 %v69
    %v1876 = vpop.f32.mrf.mxu0
    %v1877 = vadd.f32 %v1864, %v1876
    %v1878 = vpop.f32.mrf.mxu0
    %1879 = vdwg.mxu0
    %1880 = vmatpush.bf16.msra.mxu0 %v1266
    %1881 = vmatpush.bf16.msra.mxu0 %v1262
    %1882 = vmatpush.bf16.msra.mxu0 %v1258
    %1883 = vmatpush.bf16.msra.mxu0 %v1254
    %1884 = vmatpush.bf16.msra.mxu0 %v1250
    %1885 = vmatpush.bf16.msra.mxu0 %v1246
    %1886 = vmatpush.bf16.msra.mxu0 %v1242
    %1887 = vmatpush.bf16.msra.mxu0 %v1238
    %1888 = vmatmul.bf16.gmra.mxu0 %v70
    %v1889 = vpop.f32.mrf.mxu0
    %v1890 = vadd.f32 %v1877, %v1889
    %v1891 = vpop.f32.mrf.mxu0
    %1892 = vdwg.mxu0
    %1893 = vmatpush.bf16.msra.mxu0 %v1298
    %1894 = vmatpush.bf16.msra.mxu0 %v1294
    %1895 = vmatpush.bf16.msra.mxu0 %v1290
    %1896 = vmatpush.bf16.msra.mxu0 %v1286
    %1897 = vmatpush.bf16.msra.mxu0 %v1282
    %1898 = vmatpush.bf16.msra.mxu0 %v1278
    %1899 = vmatpush.bf16.msra.mxu0 %v1274
    %1900 = vmatpush.bf16.msra.mxu0 %v1270
    %1901 = vmatmul.bf16.gmra.mxu0 %v71
    %v1902 = vpop.f32.mrf.mxu0
    %v1903 = vadd.f32 %v1890, %v1902
    %v1904 = vpop.f32.mrf.mxu0
    %1905 = vdwg.mxu0
    %1906 = vmatpush.bf16.msra.mxu0 %v1330
    %1907 = vmatpush.bf16.msra.mxu0 %v1326
    %1908 = vmatpush.bf16.msra.mxu0 %v1322
    %1909 = vmatpush.bf16.msra.mxu0 %v1318
    %1910 = vmatpush.bf16.msra.mxu0 %v1314
    %1911 = vmatpush.bf16.msra.mxu0 %v1310
    %1912 = vmatpush.bf16.msra.mxu0 %v1306
    %1913 = vmatpush.bf16.msra.mxu0 %v1302
    %1914 = vmatmul.bf16.gmra.mxu0 %v72
    %v1915 = vpop.f32.mrf.mxu0
    %v1916 = vadd.f32 %v1903, %v1915
    %v1917 = vpop.f32.mrf.mxu0
    %1918 = vdwg.mxu0
    %1919 = vmatpush.bf16.msra.mxu0 %v1362
    %1920 = vmatpush.bf16.msra.mxu0 %v1358
    %1921 = vmatpush.bf16.msra.mxu0 %v1354
    %1922 = vmatpush.bf16.msra.mxu0 %v1350
    %1923 = vmatpush.bf16.msra.mxu0 %v1346
    %1924 = vmatpush.bf16.msra.mxu0 %v1342
    %1925 = vmatpush.bf16.msra.mxu0 %v1338
    %1926 = vmatpush.bf16.msra.mxu0 %v1334
    %1927 = vmatmul.bf16.gmra.mxu0 %v73
    %v1928 = vpop.f32.mrf.mxu0
    %v1929 = vadd.f32 %v1916, %v1928
    %v1930 = vpop.f32.mrf.mxu0
    %1931 = vdwg.mxu0
    %1932 = vmatpush.bf16.msra.mxu0 %v1139
    %1933 = vmatpush.bf16.msra.mxu0 %v1135
    %1934 = vmatpush.bf16.msra.mxu0 %v1131
    %1935 = vmatpush.bf16.msra.mxu0 %v1127
    %1936 = vmatpush.bf16.msra.mxu0 %v1123
    %1937 = vmatpush.bf16.msra.mxu0 %v1119
    %1938 = vmatpush.bf16.msra.mxu0 %v1115
    %1939 = vmatpush.bf16.msra.mxu0 %v1111
    %1940 = vmatmul.bf16.gmra.mxu0 %v66
    %v1941 = vpop.f32.mrf.mxu0
    %v1942 = vadd.f32 %v335, %v1941
    %v1943 = vpop.f32.mrf.mxu0
    %1944 = vdwg.mxu0
    %1945 = vmatpush.bf16.msra.mxu0 %v1171
    %1946 = vmatpush.bf16.msra.mxu0 %v1167
    %1947 = vmatpush.bf16.msra.mxu0 %v1163
    %1948 = vmatpush.bf16.msra.mxu0 %v1159
    %1949 = vmatpush.bf16.msra.mxu0 %v1155
    %1950 = vmatpush.bf16.msra.mxu0 %v1151
    %1951 = vmatpush.bf16.msra.mxu0 %v1147
    %1952 = vmatpush.bf16.msra.mxu0 %v1143
    %1953 = vmatmul.bf16.gmra.mxu0 %v67
    %v1954 = vpop.f32.mrf.mxu0
    %v1955 = vadd.f32 %v1942, %v1954
    %v1956 = vpop.f32.mrf.mxu0
    %1957 = vdwg.mxu0
    %1958 = vmatpush.bf16.msra.mxu0 %v1203
    %1959 = vmatpush.bf16.msra.mxu0 %v1199
    %1960 = vmatpush.bf16.msra.mxu0 %v1195
    %1961 = vmatpush.bf16.msra.mxu0 %v1191
    %1962 = vmatpush.bf16.msra.mxu0 %v1187
    %1963 = vmatpush.bf16.msra.mxu0 %v1183
    %1964 = vmatpush.bf16.msra.mxu0 %v1179
    %1965 = vmatpush.bf16.msra.mxu0 %v1175
    %1966 = vmatmul.bf16.gmra.mxu0 %v68
    %v1967 = vpop.f32.mrf.mxu0
    %v1968 = vadd.f32 %v1955, %v1967
    %v1969 = vpop.f32.mrf.mxu0
    %1970 = vdwg.mxu0
    %1971 = vmatpush.bf16.msra.mxu0 %v1235
    %1972 = vmatpush.bf16.msra.mxu0 %v1231
    %1973 = vmatpush.bf16.msra.mxu0 %v1227
    %1974 = vmatpush.bf16.msra.mxu0 %v1223
    %1975 = vmatpush.bf16.msra.mxu0 %v1219
    %1976 = vmatpush.bf16.msra.mxu0 %v1215
    %1977 = vmatpush.bf16.msra.mxu0 %v1211
    %1978 = vmatpush.bf16.msra.mxu0 %v1207
    %1979 = vmatmul.bf16.gmra.mxu0 %v69
    %v1980 = vpop.f32.mrf.mxu0
    %v1981 = vadd.f32 %v1968, %v1980
    %v1982 = vpop.f32.mrf.mxu0
    %1983 = vdwg.mxu0
    %1984 = vmatpush.bf16.msra.mxu0 %v1267
    %1985 = vmatpush.bf16.msra.mxu0 %v1263
    %1986 = vmatpush.bf16.msra.mxu0 %v1259
    %1987 = vmatpush.bf16.msra.mxu0 %v1255
    %1988 = vmatpush.bf16.msra.mxu0 %v1251
    %1989 = vmatpush.bf16.msra.mxu0 %v1247
    %1990 = vmatpush.bf16.msra.mxu0 %v1243
    %1991 = vmatpush.bf16.msra.mxu0 %v1239
    %1992 = vmatmul.bf16.gmra.mxu0 %v70
    %v1993 = vpop.f32.mrf.mxu0
    %v1994 = vadd.f32 %v1981, %v1993
    %v1995 = vpop.f32.mrf.mxu0
    %1996 = vdwg.mxu0
    %1997 = vmatpush.bf16.msra.mxu0 %v1299
    %1998 = vmatpush.bf16.msra.mxu0 %v1295
    %1999 = vmatpush.bf16.msra.mxu0 %v1291
    %2000 = vmatpush.bf16.msra.mxu0 %v1287
    %2001 = vmatpush.bf16.msra.mxu0 %v1283
    %2002 = vmatpush.bf16.msra.mxu0 %v1279
    %2003 = vmatpush.bf16.msra.mxu0 %v1275
    %2004 = vmatpush.bf16.msra.mxu0 %v1271
    %2005 = vmatmul.bf16.gmra.mxu0 %v71
    %v2006 = vpop.f32.mrf.mxu0
    %v2007 = vadd.f32 %v1994, %v2006
    %v2008 = vpop.f32.mrf.mxu0
    %2009 = vdwg.mxu0
    %2010 = vmatpush.bf16.msra.mxu0 %v1331
    %2011 = vmatpush.bf16.msra.mxu0 %v1327
    %2012 = vmatpush.bf16.msra.mxu0 %v1323
    %2013 = vmatpush.bf16.msra.mxu0 %v1319
    %2014 = vmatpush.bf16.msra.mxu0 %v1315
    %2015 = vmatpush.bf16.msra.mxu0 %v1311
    %2016 = vmatpush.bf16.msra.mxu0 %v1307
    %2017 = vmatpush.bf16.msra.mxu0 %v1303
    %2018 = vmatmul.bf16.gmra.mxu0 %v72
    %v2019 = vpop.f32.mrf.mxu0
    %v2020 = vadd.f32 %v2007, %v2019
    %v2021 = vpop.f32.mrf.mxu0
    %2022 = vdwg.mxu0
    %2023 = vmatpush.bf16.msra.mxu0 %v1363
    %2024 = vmatpush.bf16.msra.mxu0 %v1359
    %2025 = vmatpush.bf16.msra.mxu0 %v1355
    %2026 = vmatpush.bf16.msra.mxu0 %v1351
    %2027 = vmatpush.bf16.msra.mxu0 %v1347
    %2028 = vmatpush.bf16.msra.mxu0 %v1343
    %2029 = vmatpush.bf16.msra.mxu0 %v1339
    %2030 = vmatpush.bf16.msra.mxu0 %v1335
    %2031 = vmatmul.bf16.gmra.mxu0 %v73
    %v2032 = vpop.f32.mrf.mxu0
    %v2033 = vadd.f32 %v2020, %v2032
    %v2034 = vpop.f32.mrf.mxu0
    %2035 = vdwg.mxu0
    %v2036 = vmax.f32 %v1721, 0.0
    %v2037 = vmax.f32 %v1825, 0.0
    %v2038 = vmax.f32 %v1929, 0.0
    %v2039 = vmax.f32 %v2033, 0.0
    %v2040 = vpack.c.bf16 %v2036, %v2036
    %v2041 = vpack.c.bf16 %v2037, %v2037
    %v2042 = vpack.c.bf16 %v2038, %v2038
    %v2043 = vpack.c.bf16 %v2039, %v2039
    %v2044 = vld [vmem:[%s3] sm:$0xff]
    %v2045 = vld [vmem:[%s3 + $0x8] sm:$0xff]
    %v2046 = vld [vmem:[%s3 + $0x10] sm:$0xff]
    %v2047 = vld [vmem:[%s3 + $0x18] sm:$0xff]
    %v2048 = vld [vmem:[%s3 + $0x20] sm:$0xff]
    %v2049 = vld [vmem:[%s3 + $0x28] sm:$0xff]
    %v2050 = vld [vmem:[%s3 + $0x30] sm:$0xff]
    %v2051 = vld [vmem:[%s3 + $0x38] sm:$0xff]
    %v2052 = vld [vmem:[%s3 + $0x40] sm:$0xff]
    %v2053 = vld [vmem:[%s3 + $0x48] sm:$0xff]
    %v2054 = vld [vmem:[%s3 + $0x50] sm:$0xff]
    %v2055 = vld [vmem:[%s3 + $0x58] sm:$0xff]
    %v2056 = vld [vmem:[%s3 + $0x60] sm:$0xff]
    %v2057 = vld [vmem:[%s3 + $0x68] sm:$0xff]
    %v2058 = vld [vmem:[%s3 + $0x70] sm:$0xff]
    %v2059 = vld [vmem:[%s3 + $0x78] sm:$0xff]
    %v2060 = vld [vmem:[%s3 + $0x80] sm:$0xff]
    %v2061 = vld [vmem:[%s3 + $0x88] sm:$0xff]
    %v2062 = vld [vmem:[%s3 + $0x90] sm:$0xff]
    %v2063 = vld [vmem:[%s3 + $0x98] sm:$0xff]
    %v2064 = vld [vmem:[%s3 + $0xa0] sm:$0xff]
    %v2065 = vld [vmem:[%s3 + $0xa8] sm:$0xff]
    %v2066 = vld [vmem:[%s3 + $0xb0] sm:$0xff]
    %v2067 = vld [vmem:[%s3 + $0xb8] sm:$0xff]
    %v2068 = vld [vmem:[%s3 + $0xc0] sm:$0xff]
    %v2069 = vld [vmem:[%s3 + $0xc8] sm:$0xff]
    %v2070 = vld [vmem:[%s3 + $0xd0] sm:$0xff]
    %v2071 = vld [vmem:[%s3 + $0xd8] sm:$0xff]
    %v2072 = vld [vmem:[%s3 + $0xe0] sm:$0xff]
    %v2073 = vld [vmem:[%s3 + $0xe8] sm:$0xff]
    %v2074 = vld [vmem:[%s3 + $0xf0] sm:$0xff]
    %v2075 = vld [vmem:[%s3 + $0xf8] sm:$0xff]
    %v2076 = vld [vmem:[%s3 + $0x100] sm:$0xff]
    %v2077 = vld [vmem:[%s3 + $0x108] sm:$0xff]
    %v2078 = vld [vmem:[%s3 + $0x110] sm:$0xff]
    %v2079 = vld [vmem:[%s3 + $0x118] sm:$0xff]
    %v2080 = vld [vmem:[%s3 + $0x120] sm:$0xff]
    %v2081 = vld [vmem:[%s3 + $0x128] sm:$0xff]
    %v2082 = vld [vmem:[%s3 + $0x130] sm:$0xff]
    %v2083 = vld [vmem:[%s3 + $0x138] sm:$0xff]
    %v2084 = vld [vmem:[%s3 + $0x140] sm:$0xff]
    %v2085 = vld [vmem:[%s3 + $0x148] sm:$0xff]
    %v2086 = vld [vmem:[%s3 + $0x150] sm:$0xff]
    %v2087 = vld [vmem:[%s3 + $0x158] sm:$0xff]
    %v2088 = vld [vmem:[%s3 + $0x160] sm:$0xff]
    %v2089 = vld [vmem:[%s3 + $0x168] sm:$0xff]
    %v2090 = vld [vmem:[%s3 + $0x170] sm:$0xff]
    %v2091 = vld [vmem:[%s3 + $0x178] sm:$0xff]
    %v2092 = vld [vmem:[%s3 + $0x180] sm:$0xff]
    %v2093 = vld [vmem:[%s3 + $0x188] sm:$0xff]
    %v2094 = vld [vmem:[%s3 + $0x190] sm:$0xff]
    %v2095 = vld [vmem:[%s3 + $0x198] sm:$0xff]
    %v2096 = vld [vmem:[%s3 + $0x1a0] sm:$0xff]
    %v2097 = vld [vmem:[%s3 + $0x1a8] sm:$0xff]
    %v2098 = vld [vmem:[%s3 + $0x1b0] sm:$0xff]
    %v2099 = vld [vmem:[%s3 + $0x1b8] sm:$0xff]
    %v2100 = vld [vmem:[%s3 + $0x1c0] sm:$0xff]
    %v2101 = vld [vmem:[%s3 + $0x1c8] sm:$0xff]
    %v2102 = vld [vmem:[%s3 + $0x1d0] sm:$0xff]
    %v2103 = vld [vmem:[%s3 + $0x1d8] sm:$0xff]
    %v2104 = vld [vmem:[%s3 + $0x1e0] sm:$0xff]
    %v2105 = vld [vmem:[%s3 + $0x1e8] sm:$0xff]
    %v2106 = vld [vmem:[%s3 + $0x1f0] sm:$0xff]
    %v2107 = vld [vmem:[%s3 + $0x1f8] sm:$0xff]
    %v2108 = vld [vmem:[%s4] sm:$0x3]
    %v2110 = vperm.slane %v2108, 0
    %v2111 = vperm.slane %v2108, 1
    %v2178 = vunpack.c.l.b16 %v2044
    %v2179 = vunpack.c.h.b16 %v2044
    %v2180 = vunpack.c.l.b16 %v2045
    %v2181 = vunpack.c.h.b16 %v2045
    %v2182 = vunpack.c.l.b16 %v2046
    %v2183 = vunpack.c.h.b16 %v2046
    %v2184 = vunpack.c.l.b16 %v2047
    %v2185 = vunpack.c.h.b16 %v2047
    %v2186 = vunpack.c.l.b16 %v2048
    %v2187 = vunpack.c.h.b16 %v2048
    %v2188 = vunpack.c.l.b16 %v2049
    %v2189 = vunpack.c.h.b16 %v2049
    %v2190 = vunpack.c.l.b16 %v2050
    %v2191 = vunpack.c.h.b16 %v2050
    %v2192 = vunpack.c.l.b16 %v2051
    %v2193 = vunpack.c.h.b16 %v2051
    %v2194 = vunpack.c.l.b16 %v2052
    %v2195 = vunpack.c.h.b16 %v2052
    %v2196 = vunpack.c.l.b16 %v2053
    %v2197 = vunpack.c.h.b16 %v2053
    %v2198 = vunpack.c.l.b16 %v2054
    %v2199 = vunpack.c.h.b16 %v2054
    %v2200 = vunpack.c.l.b16 %v2055
    %v2201 = vunpack.c.h.b16 %v2055
    %v2202 = vunpack.c.l.b16 %v2056
    %v2203 = vunpack.c.h.b16 %v2056
    %v2204 = vunpack.c.l.b16 %v2057
    %v2205 = vunpack.c.h.b16 %v2057
    %v2206 = vunpack.c.l.b16 %v2058
    %v2207 = vunpack.c.h.b16 %v2058
    %v2208 = vunpack.c.l.b16 %v2059
    %v2209 = vunpack.c.h.b16 %v2059
    %v2210 = vunpack.c.l.b16 %v2060
    %v2211 = vunpack.c.h.b16 %v2060
    %v2212 = vunpack.c.l.b16 %v2061
    %v2213 = vunpack.c.h.b16 %v2061
    %v2214 = vunpack.c.l.b16 %v2062
    %v2215 = vunpack.c.h.b16 %v2062
    %v2216 = vunpack.c.l.b16 %v2063
    %v2217 = vunpack.c.h.b16 %v2063
    %v2218 = vunpack.c.l.b16 %v2064
    %v2219 = vunpack.c.h.b16 %v2064
    %v2220 = vunpack.c.l.b16 %v2065
    %v2221 = vunpack.c.h.b16 %v2065
    %v2222 = vunpack.c.l.b16 %v2066
    %v2223 = vunpack.c.h.b16 %v2066
    %v2224 = vunpack.c.l.b16 %v2067
    %v2225 = vunpack.c.h.b16 %v2067
    %v2226 = vunpack.c.l.b16 %v2068
    %v2227 = vunpack.c.h.b16 %v2068
    %v2228 = vunpack.c.l.b16 %v2069
    %v2229 = vunpack.c.h.b16 %v2069
    %v2230 = vunpack.c.l.b16 %v2070
    %v2231 = vunpack.c.h.b16 %v2070
    %v2232 = vunpack.c.l.b16 %v2071
    %v2233 = vunpack.c.h.b16 %v2071
    %v2234 = vunpack.c.l.b16 %v2072
    %v2235 = vunpack.c.h.b16 %v2072
    %v2236 = vunpack.c.l.b16 %v2073
    %v2237 = vunpack.c.h.b16 %v2073
    %v2238 = vunpack.c.l.b16 %v2074
    %v2239 = vunpack.c.h.b16 %v2074
    %v2240 = vunpack.c.l.b16 %v2075
    %v2241 = vunpack.c.h.b16 %v2075
    %v2242 = vunpack.c.l.b16 %v2076
    %v2243 = vunpack.c.h.b16 %v2076
    %v2244 = vunpack.c.l.b16 %v2077
    %v2245 = vunpack.c.h.b16 %v2077
    %v2246 = vunpack.c.l.b16 %v2078
    %v2247 = vunpack.c.h.b16 %v2078
    %v2248 = vunpack.c.l.b16 %v2079
    %v2249 = vunpack.c.h.b16 %v2079
    %v2250 = vunpack.c.l.b16 %v2080
    %v2251 = vunpack.c.h.b16 %v2080
    %v2252 = vunpack.c.l.b16 %v2081
    %v2253 = vunpack.c.h.b16 %v2081
    %v2254 = vunpack.c.l.b16 %v2082
    %v2255 = vunpack.c.h.b16 %v2082
    %v2256 = vunpack.c.l.b16 %v2083
    %v2257 = vunpack.c.h.b16 %v2083
    %v2258 = vunpack.c.l.b16 %v2084
    %v2259 = vunpack.c.h.b16 %v2084
    %v2260 = vunpack.c.l.b16 %v2085
    %v2261 = vunpack.c.h.b16 %v2085
    %v2262 = vunpack.c.l.b16 %v2086
    %v2263 = vunpack.c.h.b16 %v2086
    %v2264 = vunpack.c.l.b16 %v2087
    %v2265 = vunpack.c.h.b16 %v2087
    %v2266 = vunpack.c.l.b16 %v2088
    %v2267 = vunpack.c.h.b16 %v2088
    %v2268 = vunpack.c.l.b16 %v2089
    %v2269 = vunpack.c.h.b16 %v2089
    %v2270 = vunpack.c.l.b16 %v2090
    %v2271 = vunpack.c.h.b16 %v2090
    %v2272 = vunpack.c.l.b16 %v2091
    %v2273 = vunpack.c.h.b16 %v2091
    %v2274 = vunpack.c.l.b16 %v2092
    %v2275 = vunpack.c.h.b16 %v2092
    %v2276 = vunpack.c.l.b16 %v2093
    %v2277 = vunpack.c.h.b16 %v2093
    %v2278 = vunpack.c.l.b16 %v2094
    %v2279 = vunpack.c.h.b16 %v2094
    %v2280 = vunpack.c.l.b16 %v2095
    %v2281 = vunpack.c.h.b16 %v2095
    %v2282 = vunpack.c.l.b16 %v2096
    %v2283 = vunpack.c.h.b16 %v2096
    %v2284 = vunpack.c.l.b16 %v2097
    %v2285 = vunpack.c.h.b16 %v2097
    %v2286 = vunpack.c.l.b16 %v2098
    %v2287 = vunpack.c.h.b16 %v2098
    %v2288 = vunpack.c.l.b16 %v2099
    %v2289 = vunpack.c.h.b16 %v2099
    %v2290 = vunpack.c.l.b16 %v2100
    %v2291 = vunpack.c.h.b16 %v2100
    %v2292 = vunpack.c.l.b16 %v2101
    %v2293 = vunpack.c.h.b16 %v2101
    %v2294 = vunpack.c.l.b16 %v2102
    %v2295 = vunpack.c.h.b16 %v2102
    %v2296 = vunpack.c.l.b16 %v2103
    %v2297 = vunpack.c.h.b16 %v2103
    %v2298 = vunpack.c.l.b16 %v2104
    %v2299 = vunpack.c.h.b16 %v2104
    %v2300 = vunpack.c.l.b16 %v2105
    %v2301 = vunpack.c.h.b16 %v2105
    %v2302 = vunpack.c.l.b16 %v2106
    %v2303 = vunpack.c.h.b16 %v2106
    %v2304 = vunpack.c.l.b16 %v2107
    %v2305 = vunpack.c.h.b16 %v2107
    %v2306 = vpack.c.b16 %v2180, %v2178
    %v2307 = vpack.c.b16 %v2181, %v2179
    %v2308 = vpack.c.b16 %v2184, %v2182
    %v2309 = vpack.c.b16 %v2185, %v2183
    %v2310 = vpack.c.b16 %v2188, %v2186
    %v2311 = vpack.c.b16 %v2189, %v2187
    %v2312 = vpack.c.b16 %v2192, %v2190
    %v2313 = vpack.c.b16 %v2193, %v2191
    %v2314 = vpack.c.b16 %v2196, %v2194
    %v2315 = vpack.c.b16 %v2197, %v2195
    %v2316 = vpack.c.b16 %v2200, %v2198
    %v2317 = vpack.c.b16 %v2201, %v2199
    %v2318 = vpack.c.b16 %v2204, %v2202
    %v2319 = vpack.c.b16 %v2205, %v2203
    %v2320 = vpack.c.b16 %v2208, %v2206
    %v2321 = vpack.c.b16 %v2209, %v2207
    %v2322 = vpack.c.b16 %v2212, %v2210
    %v2323 = vpack.c.b16 %v2213, %v2211
    %v2324 = vpack.c.b16 %v2216, %v2214
    %v2325 = vpack.c.b16 %v2217, %v2215
    %v2326 = vpack.c.b16 %v2220, %v2218
    %v2327 = vpack.c.b16 %v2221, %v2219
    %v2328 = vpack.c.b16 %v2224, %v2222
    %v2329 = vpack.c.b16 %v2225, %v2223
    %v2330 = vpack.c.b16 %v2228, %v2226
    %v2331 = vpack.c.b16 %v2229, %v2227
    %v2332 = vpack.c.b16 %v2232, %v2230
    %v2333 = vpack.c.b16 %v2233, %v2231
    %v2334 = vpack.c.b16 %v2236, %v2234
    %v2335 = vpack.c.b16 %v2237, %v2235
    %v2336 = vpack.c.b16 %v2240, %v2238
    %v2337 = vpack.c.b16 %v2241, %v2239
    %v2338 = vpack.c.b16 %v2244, %v2242
    %v2339 = vpack.c.b16 %v2245, %v2243
    %v2340 = vpack.c.b16 %v2248, %v2246
    %v2341 = vpack.c.b16 %v2249, %v2247
    %v2342 = vpack.c.b16 %v2252, %v2250
    %v2343 = vpack.c.b16 %v2253, %v2251
    %v2344 = vpack.c.b16 %v2256, %v2254
    %v2345 = vpack.c.b16 %v2257, %v2255
    %v2346 = vpack.c.b16 %v2260, %v2258
    %v2347 = vpack.c.b16 %v2261, %v2259
    %v2348 = vpack.c.b16 %v2264, %v2262
    %v2349 = vpack.c.b16 %v2265, %v2263
    %v2350 = vpack.c.b16 %v2268, %v2266
    %v2351 = vpack.c.b16 %v2269, %v2267
    %v2352 = vpack.c.b16 %v2272, %v2270
    %v2353 = vpack.c.b16 %v2273, %v2271
    %v2354 = vpack.c.b16 %v2276, %v2274
    %v2355 = vpack.c.b16 %v2277, %v2275
    %v2356 = vpack.c.b16 %v2280, %v2278
    %v2357 = vpack.c.b16 %v2281, %v2279
    %v2358 = vpack.c.b16 %v2284, %v2282
    %v2359 = vpack.c.b16 %v2285, %v2283
    %v2360 = vpack.c.b16 %v2288, %v2286
    %v2361 = vpack.c.b16 %v2289, %v2287
    %v2362 = vpack.c.b16 %v2292, %v2290
    %v2363 = vpack.c.b16 %v2293, %v2291
    %v2364 = vpack.c.b16 %v2296, %v2294
    %v2365 = vpack.c.b16 %v2297, %v2295
    %v2366 = vpack.c.b16 %v2300, %v2298
    %v2367 = vpack.c.b16 %v2301, %v2299
    %v2368 = vpack.c.b16 %v2304, %v2302
    %v2369 = vpack.c.b16 %v2305, %v2303
    %2434 = vmatpush.bf16.msra.mxu0 %v2320
    %2435 = vmatpush.bf16.msra.mxu0 %v2318
    %2436 = vmatpush.bf16.msra.mxu0 %v2316
    %2437 = vmatpush.bf16.msra.mxu0 %v2314
    %2438 = vmatpush.bf16.msra.mxu0 %v2312
    %2439 = vmatpush.bf16.msra.mxu0 %v2310
    %2440 = vmatpush.bf16.msra.mxu0 %v2308
    %2441 = vmatpush.bf16.msra.mxu0 %v2306
    %2442 = vmatmul.bf16.gmra.mxu0 %v2040
    %v2443 = vpop.f32.mrf.mxu0
    %v2444 = vadd.f32 %v2110, %v2443
    %v2445 = vpop.f32.mrf.mxu0
    %2446 = vdwg.mxu0
    %2447 = vmatpush.bf16.msra.mxu0 %v2336
    %2448 = vmatpush.bf16.msra.mxu0 %v2334
    %2449 = vmatpush.bf16.msra.mxu0 %v2332
    %2450 = vmatpush.bf16.msra.mxu0 %v2330
    %2451 = vmatpush.bf16.msra.mxu0 %v2328
    %2452 = vmatpush.bf16.msra.mxu0 %v2326
    %2453 = vmatpush.bf16.msra.mxu0 %v2324
    %2454 = vmatpush.bf16.msra.mxu0 %v2322
    %2455 = vmatmul.bf16.gmra.mxu0 %v2041
    %v2456 = vpop.f32.mrf.mxu0
    %v2457 = vadd.f32 %v2444, %v2456
    %v2458 = vpop.f32.mrf.mxu0
    %2459 = vdwg.mxu0
    %2460 = vmatpush.bf16.msra.mxu0 %v2352
    %2461 = vmatpush.bf16.msra.mxu0 %v2350
    %2462 = vmatpush.bf16.msra.mxu0 %v2348
    %2463 = vmatpush.bf16.msra.mxu0 %v2346
    %2464 = vmatpush.bf16.msra.mxu0 %v2344
    %2465 = vmatpush.bf16.msra.mxu0 %v2342
    %2466 = vmatpush.bf16.msra.mxu0 %v2340
    %2467 = vmatpush.bf16.msra.mxu0 %v2338
    %2468 = vmatmul.bf16.gmra.mxu0 %v2042
    %v2469 = vpop.f32.mrf.mxu0
    %v2470 = vadd.f32 %v2457, %v2469
    %v2471 = vpop.f32.mrf.mxu0
    %2472 = vdwg.mxu0
    %2473 = vmatpush.bf16.msra.mxu0 %v2368
    %2474 = vmatpush.bf16.msra.mxu0 %v2366
    %2475 = vmatpush.bf16.msra.mxu0 %v2364
    %2476 = vmatpush.bf16.msra.mxu0 %v2362
    %2477 = vmatpush.bf16.msra.mxu0 %v2360
    %2478 = vmatpush.bf16.msra.mxu0 %v2358
    %2479 = vmatpush.bf16.msra.mxu0 %v2356
    %2480 = vmatpush.bf16.msra.mxu0 %v2354
    %2481 = vmatmul.bf16.gmra.mxu0 %v2043
    %v2482 = vpop.f32.mrf.mxu0
    %v2483 = vadd.f32 %v2470, %v2482
    %v2484 = vpop.f32.mrf.mxu0
    %2485 = vdwg.mxu0
    %2486 = vmatpush.bf16.msra.mxu0 %v2321
    %2487 = vmatpush.bf16.msra.mxu0 %v2319
    %2488 = vmatpush.bf16.msra.mxu0 %v2317
    %2489 = vmatpush.bf16.msra.mxu0 %v2315
    %2490 = vmatpush.bf16.msra.mxu0 %v2313
    %2491 = vmatpush.bf16.msra.mxu0 %v2311
    %2492 = vmatpush.bf16.msra.mxu0 %v2309
    %2493 = vmatpush.bf16.msra.mxu0 %v2307
    %2494 = vmatmul.bf16.gmra.mxu0 %v2040
    %v2495 = vpop.f32.mrf.mxu0
    %v2496 = vadd.f32 %v2111, %v2495
    %v2497 = vpop.f32.mrf.mxu0
    %2498 = vdwg.mxu0
    %2499 = vmatpush.bf16.msra.mxu0 %v2337
    %2500 = vmatpush.bf16.msra.mxu0 %v2335
    %2501 = vmatpush.bf16.msra.mxu0 %v2333
    %2502 = vmatpush.bf16.msra.mxu0 %v2331
    %2503 = vmatpush.bf16.msra.mxu0 %v2329
    %2504 = vmatpush.bf16.msra.mxu0 %v2327
    %2505 = vmatpush.bf16.msra.mxu0 %v2325
    %2506 = vmatpush.bf16.msra.mxu0 %v2323
    %2507 = vmatmul.bf16.gmra.mxu0 %v2041
    %v2508 = vpop.f32.mrf.mxu0
    %v2509 = vadd.f32 %v2496, %v2508
    %v2510 = vpop.f32.mrf.mxu0
    %2511 = vdwg.mxu0
    %2512 = vmatpush.bf16.msra.mxu0 %v2353
    %2513 = vmatpush.bf16.msra.mxu0 %v2351
    %2514 = vmatpush.bf16.msra.mxu0 %v2349
    %2515 = vmatpush.bf16.msra.mxu0 %v2347
    %2516 = vmatpush.bf16.msra.mxu0 %v2345
    %2517 = vmatpush.bf16.msra.mxu0 %v2343
    %2518 = vmatpush.bf16.msra.mxu0 %v2341
    %2519 = vmatpush.bf16.msra.mxu0 %v2339
    %2520 = vmatmul.bf16.gmra.mxu0 %v2042
    %v2521 = vpop.f32.mrf.mxu0
    %v2522 = vadd.f32 %v2509, %v2521
    %v2523 = vpop.f32.mrf.mxu0
    %2524 = vdwg.mxu0
    %2525 = vmatpush.bf16.msra.mxu0 %v2369
    %2526 = vmatpush.bf16.msra.mxu0 %v2367
    %2527 = vmatpush.bf16.msra.mxu0 %v2365
    %2528 = vmatpush.bf16.msra.mxu0 %v2363
    %2529 = vmatpush.bf16.msra.mxu0 %v2361
    %2530 = vmatpush.bf16.msra.mxu0 %v2359
    %2531 = vmatpush.bf16.msra.mxu0 %v2357
    %2532 = vmatpush.bf16.msra.mxu0 %v2355
    %2533 = vmatmul.bf16.gmra.mxu0 %v2043
    %v2534 = vpop.f32.mrf.mxu0
    %v2535 = vadd.f32 %v2522, %v2534
    %v2536 = vpop.f32.mrf.mxu0
    %2537 = vdwg.mxu0
    %v2538 = vmax.f32 %v2483, 0.0
    %v2539 = vmax.f32 %v2535, 0.0
    %v2540 = vpack.c.bf16 %v2538, %v2538
    %v2541 = vpack.c.bf16 %v2539, %v2539
    %v2542 = vld [vmem:[%s5] sm:$0xf]
    %v2543 = vld [vmem:[%s5 + $0x4] sm:$0xf]
    %v2544 = vld [vmem:[%s5 + $0x8] sm:$0xf]
    %v2545 = vld [vmem:[%s5 + $0xc] sm:$0xf]
    %v2546 = vld [vmem:[%s5 + $0x10] sm:$0xf]
    %v2547 = vld [vmem:[%s5 + $0x14] sm:$0xf]
    %v2548 = vld [vmem:[%s5 + $0x18] sm:$0xf]
    %v2549 = vld [vmem:[%s5 + $0x1c] sm:$0xf]
    %v2550 = vld [vmem:[%s5 + $0x20] sm:$0xf]
    %v2551 = vld [vmem:[%s5 + $0x24] sm:$0xf]
    %v2552 = vld [vmem:[%s5 + $0x28] sm:$0xf]
    %v2553 = vld [vmem:[%s5 + $0x2c] sm:$0xf]
    %v2554 = vld [vmem:[%s5 + $0x30] sm:$0xf]
    %v2555 = vld [vmem:[%s5 + $0x34] sm:$0xf]
    %v2556 = vld [vmem:[%s5 + $0x38] sm:$0xf]
    %v2557 = vld [vmem:[%s5 + $0x3c] sm:$0xf]
    %v2558 = vld [vmem:[%s5 + $0x40] sm:$0xf]
    %v2559 = vld [vmem:[%s5 + $0x44] sm:$0xf]
    %v2560 = vld [vmem:[%s5 + $0x48] sm:$0xf]
    %v2561 = vld [vmem:[%s5 + $0x4c] sm:$0xf]
    %v2562 = vld [vmem:[%s5 + $0x50] sm:$0xf]
    %v2563 = vld [vmem:[%s5 + $0x54] sm:$0xf]
    %v2564 = vld [vmem:[%s5 + $0x58] sm:$0xf]
    %v2565 = vld [vmem:[%s5 + $0x5c] sm:$0xf]
    %v2566 = vld [vmem:[%s5 + $0x60] sm:$0xf]
    %v2567 = vld [vmem:[%s5 + $0x64] sm:$0xf]
    %v2568 = vld [vmem:[%s5 + $0x68] sm:$0xf]
    %v2569 = vld [vmem:[%s5 + $0x6c] sm:$0xf]
    %v2570 = vld [vmem:[%s5 + $0x70] sm:$0xf]
    %v2571 = vld [vmem:[%s5 + $0x74] sm:$0xf]
    %v2572 = vld [vmem:[%s5 + $0x78] sm:$0xf]
    %v2573 = vld [vmem:[%s5 + $0x7c] sm:$0xf]
    %v2574 = vld [vmem:[%s6] sm:$0x1]
    %v2576 = vperm.slane %v2574, 0
    %v2610 = vunpack.c.l.b16 %v2542
    %v2611 = vunpack.c.l.b16 %v2543
    %v2612 = vunpack.c.l.b16 %v2544
    %v2613 = vunpack.c.l.b16 %v2545
    %v2614 = vunpack.c.l.b16 %v2546
    %v2615 = vunpack.c.l.b16 %v2547
    %v2616 = vunpack.c.l.b16 %v2548
    %v2617 = vunpack.c.l.b16 %v2549
    %v2618 = vunpack.c.l.b16 %v2550
    %v2619 = vunpack.c.l.b16 %v2551
    %v2620 = vunpack.c.l.b16 %v2552
    %v2621 = vunpack.c.l.b16 %v2553
    %v2622 = vunpack.c.l.b16 %v2554
    %v2623 = vunpack.c.l.b16 %v2555
    %v2624 = vunpack.c.l.b16 %v2556
    %v2625 = vunpack.c.l.b16 %v2557
    %v2626 = vunpack.c.l.b16 %v2558
    %v2627 = vunpack.c.l.b16 %v2559
    %v2628 = vunpack.c.l.b16 %v2560
    %v2629 = vunpack.c.l.b16 %v2561
    %v2630 = vunpack.c.l.b16 %v2562
    %v2631 = vunpack.c.l.b16 %v2563
    %v2632 = vunpack.c.l.b16 %v2564
    %v2633 = vunpack.c.l.b16 %v2565
    %v2634 = vunpack.c.l.b16 %v2566
    %v2635 = vunpack.c.l.b16 %v2567
    %v2636 = vunpack.c.l.b16 %v2568
    %v2637 = vunpack.c.l.b16 %v2569
    %v2638 = vunpack.c.l.b16 %v2570
    %v2639 = vunpack.c.l.b16 %v2571
    %v2640 = vunpack.c.l.b16 %v2572
    %v2641 = vunpack.c.l.b16 %v2573
    %v2642 = vpack.c.b16 %v2611, %v2610
    %v2643 = vpack.c.b16 %v2613, %v2612
    %v2644 = vpack.c.b16 %v2615, %v2614
    %v2645 = vpack.c.b16 %v2617, %v2616
    %v2646 = vpack.c.b16 %v2619, %v2618
    %v2647 = vpack.c.b16 %v2621, %v2620
    %v2648 = vpack.c.b16 %v2623, %v2622
    %v2649 = vpack.c.b16 %v2625, %v2624
    %v2650 = vpack.c.b16 %v2627, %v2626
    %v2651 = vpack.c.b16 %v2629, %v2628
    %v2652 = vpack.c.b16 %v2631, %v2630
    %v2653 = vpack.c.b16 %v2633, %v2632
    %v2654 = vpack.c.b16 %v2635, %v2634
    %v2655 = vpack.c.b16 %v2637, %v2636
    %v2656 = vpack.c.b16 %v2639, %v2638
    %v2657 = vpack.c.b16 %v2641, %v2640
    %2674 = vmatpush.bf16.msra.mxu0 %v2649
    %2675 = vmatpush.bf16.msra.mxu0 %v2648
    %2676 = vmatpush.bf16.msra.mxu0 %v2647
    %2677 = vmatpush.bf16.msra.mxu0 %v2646
    %2678 = vmatpush.bf16.msra.mxu0 %v2645
    %2679 = vmatpush.bf16.msra.mxu0 %v2644
    %2680 = vmatpush.bf16.msra.mxu0 %v2643
    %2681 = vmatpush.bf16.msra.mxu0 %v2642
    %2682 = vmatmul.bf16.gmra.mxu0 %v2540
    %v2683 = vpop.f32.mrf.mxu0
    %v2684 = vadd.f32 %v2576, %v2683
    %v2685 = vpop.f32.mrf.mxu0
    %2686 = vdwg.mxu0
    %2687 = vmatpush.bf16.msra.mxu0 %v2657
    %2688 = vmatpush.bf16.msra.mxu0 %v2656
    %2689 = vmatpush.bf16.msra.mxu0 %v2655
    %2690 = vmatpush.bf16.msra.mxu0 %v2654
    %2691 = vmatpush.bf16.msra.mxu0 %v2653
    %2692 = vmatpush.bf16.msra.mxu0 %v2652
    %2693 = vmatpush.bf16.msra.mxu0 %v2651
    %2694 = vmatpush.bf16.msra.mxu0 %v2650
    %2695 = vmatmul.bf16.gmra.mxu0 %v2541
    %v2696 = vpop.f32.mrf.mxu0
    %v2697 = vadd.f32 %v2684, %v2696
    %v2698 = vpop.f32.mrf.mxu0
    %2699 = vdwg.mxu0
    %vm2700 = vcmask 9216
    %v2701 = vsel %vm2700, %v2697, -inf
    %2702 = vmax.xlane.f32.xlu0 %v2701
    %v2703 = vpop.xlane.xlu0 %2702
    %v2704 = vsub.f32 %v2697, %v2703
    %v2705 = vmul.f32 %v2704, 1.442695
    %v2706 = vpow.pop %v2705
    %v2707 = vsel %vm2700, %v2706, 0.0
    %2708 = vadd.xlane.f32.xlu0 %v2707
    %v2709 = vpop.xlane.xlu0 %2708
    %v2710 = vlog2.pop %v2709
    %v2711 = vmul.f32 %v2710, 0.6931472
    %v2712 = vadd.f32 %v2703, %v2711
    %v2713 = vsub.f32 %v2697, %v2712
    %2714 = vst.msk [vmem:[#allocation5] sm:$0x3] %vm2700, %v2713
    // Predicated region
    $region34: #{pointnet_cls_forward.7} parent=1 // pred_check
      _
    $region35: #{pointnet_cls_forward.7} parent=1 // pred_check_branch
      %2716 = sbr.rel (0) target = $region37
    $region36: #{pointnet_cls_forward.7} parent=1 // pred_region
      %2718 = vsyncadd [#allocation4], 0
      %s2720 = sshll.u32 [#allocation5], 4
      %s2721 = int_to_ptr.vmem [resolvable:$true] %s2720
      %s2722 = sshll.u32 %s7, 4
      %s2723 = int_to_ptr.hbm [resolvable:$true] %s2722
      %2725 = dma.vmem_to_hbm [thread:$0]  %s2721, 32, %s2723, [#allocation4]
    $region37: #{pointnet_cls_forward.7} parent=1 // pred_fallthru
      _
    // Predicated region
    $region38: #{pointnet_cls_forward.7} parent=1 // pred_check
      _
    $region39: #{pointnet_cls_forward.7} parent=1 // pred_check_branch
      %2727 = sbr.rel (0) target = $region41
    $region40: #{pointnet_cls_forward.7} parent=1 // pred_region
      %2729 = dma.done [#allocation4], 32
    $region41: #{pointnet_cls_forward.7} parent=1 // pred_fallthru
      _
    %2730 = vsyncpa [#allocation3], 1
    %2731 = vsyncpa [#allocation4], 1

</llo_original>
